<compile_context>
chip_gen: v7x
topology: tpu7x:2x2x1
jax: 0.10.0
libtpu: 0.0.40
codegen_flags: <defaults>
</compile_context>

<pallas_src>
import functools
import math

import jax
import jax.numpy as jnp
from jax.experimental import pallas as pl
from jax.experimental.pallas import tpu as pltpu


def _layer_norm(x, gamma, beta, eps=1e-12):
    # Matches torch: mean / biased variance over the last dim; rsqrt on the EUP.
    mean = jnp.mean(x, axis=-1, keepdims=True)
    centered = x - mean
    var = jnp.mean(centered * centered, axis=-1, keepdims=True)
    return gamma * (centered * jax.lax.rsqrt(var + eps)) + beta


def _encoder_layer_kernel(n_head,
                          x_ref, wq_ref, bq_ref, wkv_ref, bkv_ref, wc_ref, bc_ref,
                          g1_ref, be1_ref, w1_ref, b1_ref, w2_ref, b2_ref,
                          g2_ref, be2_ref,
                          o_ref, k_sc, v_sc):
    d_model = x_ref.shape[2]
    tq = o_ref.shape[1]
    dh = d_model // n_head
    scale = 1.0 / math.sqrt(dh)
    mxu_dtype = wq_ref.dtype           # bf16 by default; f32 if compute_dtype=None

    def linear(a, w_ref, b_ref):
        # MXU matmul: operands in mxu_dtype, f32 accumulation, f32 bias add.
        return (jnp.dot(a.astype(mxu_dtype), w_ref[...],
                        preferred_element_type=jnp.float32) + b_ref[...])

    # ---- K/V: computed once per batch element, cached head-major in VMEM ----
    @pl.when(pl.program_id(1) == 0)
    def _():
        xkv = x_ref[0]                                    # (L, D)
        kv = linear(xkv, wkv_ref, bkv_ref)                # (L, 2D): one wide MXU matmul
        for h in range(n_head):                           # static lane slices, once/batch
            k_sc[h] = kv[:, h * dh:(h + 1) * dh].astype(k_sc.dtype)
            v_sc[h] = kv[:, d_model + h * dh:d_model + (h + 1) * dh].astype(v_sc.dtype)

    # ---- query tile: rows sliced in-kernel (no duplicated x DMA) ----
    row0 = pl.multiple_of(pl.program_id(1) * tq, tq)
    xq = x_ref[0, pl.ds(row0, tq), :].astype(jnp.float32)  # (TQ, D); also the residual

    # 1/sqrt(dh) folded into q: one (TQ, D) multiply instead of H (TQ, L) ones.
    q = (linear(xq, wq_ref, bq_ref) * scale).astype(mxu_dtype)
    qh = jnp.stack([q[:, h * dh:(h + 1) * dh] for h in range(n_head)], axis=0)  # (H,TQ,dh)

    # ---- attention: head-batched MXU contractions, f32 softmax ----
    s = jnp.einsum("hqd,hkd->hqk", qh, k_sc[...],
                   preferred_element_type=jnp.float32)            # (H, TQ, L)
    s = s - jnp.max(s, axis=-1, keepdims=True)
    p = jnp.exp(s)                                                # EUP
    p = p * pl.reciprocal(jnp.sum(p, axis=-1, keepdims=True), approx=False)
    ctx = jnp.einsum("hqk,hkd->hqd", p.astype(mxu_dtype), v_sc[...],
                     preferred_element_type=jnp.float32)          # (H, TQ, dh)
    merged = jnp.concatenate([ctx[h] for h in range(n_head)], axis=-1)  # (TQ, D)
    attn = linear(merged, wc_ref, bc_ref)

    # ---- residual + LN + FFN + residual + LN (all elementwise in f32) ----
    x1 = _layer_norm(attn + xq, g1_ref[...], be1_ref[...])
    hid = jnp.maximum(linear(x1, w1_ref, b1_ref), 0.0)
    y = linear(hid, w2_ref, b2_ref)
    out = _layer_norm(y + x1, g2_ref[...], be2_ref[...])
    o_ref[0] = out.astype(o_ref.dtype)


def _pick_q_tile(L, q_tile):
    # Largest divisor of L that is <= q_tile and sublane-friendly (multiple of 8);
    # otherwise fall back to a single tile per batch element (TQ = L).
    for t in range(min(q_tile, L), 7, -1):
        if L % t == 0 and t % 8 == 0:
            return t
    return L


def _vmem_ceiling_bytes():
    # ~85% of the physical per-core VMEM (v5e/v6e: 128 MiB, v7x: 64 MiB); the rest
    # is headroom for Mosaic internal scratch / semaphores.
    try:
        cap = int(pltpu.get_tpu_info().vmem_capacity_bytes)
    except Exception:
        cap = 64 << 20            # conservative default = v7x physical VMEM
    return int(cap * 0.85)


def _vmem_limit_bytes(L, TQ, D, F, n_head, x_itemsize, w_itemsize, single_buffer):
    def rup(n, m):
        return -(-n // m) * m
    dh = D // n_head
    Dp, Fp, dhp, D2p = rup(D, 128), rup(F, 128), rup(dh, 128), rup(2 * D, 128)
    Ls, Ts = rup(L, 16), rup(TQ, 16)
    weights = w_itemsize * (2 * D * Dp + D * D2p + D * Fp + F * Dp)
    biases = 4 * 8 * (6 * Dp + D2p + Fp)
    io_blocks = 2 * x_itemsize * (Ls + Ts) * Dp              # double-buffered x / out
    kv_scratch = 2 * w_itemsize * n_head * Ls * dhp
    interm = 4 * (2 * n_head * Ts * rup(L, 128)              # scores + probs (f32)
                  + 2 * n_head * Ts * dhp                    # qh + ctx
                  + Ls * D2p                                 # K/V projection result
                  + 6 * Ts * Dp + 2 * Ts * Fp)               # f32 activations
    need = ((1 if single_buffer else 2) * weights + biases + io_blocks
            + kv_scratch + interm + (8 << 20))               # headroom
    return int(min(max(need, 32 << 20), _vmem_ceiling_bytes()))


def encoder_layer(x, params, n_head, *, q_tile=256, compute_dtype=jnp.bfloat16):
    """Fused transformer encoder layer forward.  x: (B, L, D).  Dropout = identity."""
    B, L, D = x.shape
    F = params["w1"].shape[1]
    assert D % n_head == 0, "d_model must be divisible by n_head"
    dh = D // n_head
    f32 = jnp.float32
    w_dtype = jnp.dtype(compute_dtype) if compute_dtype is not None else jnp.dtype(x.dtype)

    # Host-side packing: fuse wk|wv into one wide weight; matmul weights stored in
    # the MXU operand dtype (bf16 by default), biases / LN params stay f32.
    wq = params["wq"].astype(w_dtype)
    wkv = jnp.concatenate([params["wk"], params["wv"]], axis=1).astype(w_dtype)
    wc = params["wc"].astype(w_dtype)
    w1 = params["w1"].astype(w_dtype)
    w2 = params["w2"].astype(w_dtype)
    bq = params["bq"].astype(f32)
    bkv = jnp.concatenate([params["bk"], params["bv"]], axis=1).astype(f32)
    bc = params["bc"].astype(f32)
    b1 = params["b1"].astype(f32)
    b2 = params["b2"].astype(f32)
    g1, be1 = params["gamma1"].astype(f32), params["beta1"].astype(f32)
    g2, be2 = params["gamma2"].astype(f32), params["beta2"].astype(f32)

    TQ = _pick_q_tile(L, q_tile)
    grid = (B, L // TQ)
    kernel = functools.partial(_encoder_layer_kernel, n_head)
    operands = (x, wq, bq, wkv, bkv, wc, bc, g1, be1, w1, b1, w2, b2, g2, be2)

    def build(single_buffer_weights):
        def wspec(shape):
            idx = lambda b, t: (0,) * len(shape)
            if single_buffer_weights:
                # Constant index map -> one resident copy suffices; halves weight VMEM.
                return pl.BlockSpec(shape, idx, pipeline_mode=pl.Buffered(1))
            return pl.BlockSpec(shape, idx)

        in_specs = [
            pl.BlockSpec((1, L, D), lambda b, t: (b, 0, 0)),   # x: K/V source + query rows
            wspec((D, D)), wspec((1, D)),                      # wq, bq
            wspec((D, 2 * D)), wspec((1, 2 * D)),              # wkv, bkv (fused k|v)
            wspec((D, D)), wspec((1, D)),                      # wc, bc
            wspec((1, D)), wspec((1, D)),                      # gamma1, beta1
            wspec((D, F)), wspec((1, F)),                      # w1, b1
            wspec((F, D)), wspec((1, D)),                      # w2, b2
            wspec((1, D)), wspec((1, D)),                      # gamma2, beta2
        ]
        out_spec = pl.BlockSpec((1, TQ, D), lambda b, t: (b, t, 0))
        scratch = [pltpu.VMEM((n_head, L, dh), w_dtype),       # K cache (head-major)
                   pltpu.VMEM((n_head, L, dh), w_dtype)]       # V cache (head-major)

        vmem_limit = _vmem_limit_bytes(L, TQ, D, F, n_head,
                                       jnp.dtype(x.dtype).itemsize,
                                       w_dtype.itemsize, single_buffer_weights)
        return pl.pallas_call(
            kernel,
            out_shape=jax.ShapeDtypeStruct((B, L, D), x.dtype),
            grid_spec=pltpu.PrefetchScalarGridSpec(
                num_scalar_prefetch=0, grid=grid,
                in_specs=in_specs, out_specs=out_spec,
                scratch_shapes=scratch),
            compiler_params=pltpu.CompilerParams(
                # Batch sharded across TensorCores (v7x); the query-tile axis must
                # stay sequential because the K/V scratch persists across it.
                dimension_semantics=("parallel", "arbitrary"),
                vmem_limit_bytes=vmem_limit),
        )

    try:
        return build(True)(*operands)
    except Exception:
        # pl.Buffered(1) not supported on this JAX build -> default double buffering.
        return build(False)(*operands)


def make_params(key, d_model, ffn_hidden):
    ks = jax.random.split(key, 8)
    s = 1.0 / math.sqrt(d_model)
    sf = 1.0 / math.sqrt(ffn_hidden)
    p = {
        "wq": jax.random.uniform(ks[0], (d_model, d_model), jnp.float32, -s, s),
        "bq": jax.random.uniform(ks[1], (1, d_model), jnp.float32, -s, s),
        "wk": jax.random.uniform(ks[2], (d_model, d_model), jnp.float32, -s, s),
        "bk": jax.random.uniform(ks[3], (1, d_model), jnp.float32, -s, s),
        "wv": jax.random.uniform(ks[4], (d_model, d_model), jnp.float32, -s, s),
        "bv": jax.random.uniform(ks[5], (1, d_model), jnp.float32, -s, s),
        "wc": jax.random.uniform(ks[6], (d_model, d_model), jnp.float32, -s, s),
        "bc": jax.random.uniform(ks[7], (1, d_model), jnp.float32, -s, s),
        "gamma1": jnp.ones((1, d_model), jnp.float32),
        "beta1": jnp.zeros((1, d_model), jnp.float32),
        "gamma2": jnp.ones((1, d_model), jnp.float32),
        "beta2": jnp.zeros((1, d_model), jnp.float32),
    }
    kf = jax.random.split(jax.random.fold_in(key, 7), 4)
    p["w1"] = jax.random.uniform(kf[0], (d_model, ffn_hidden), jnp.float32, -s, s)
    p["b1"] = jax.random.uniform(kf[1], (1, ffn_hidden), jnp.float32, -s, s)
    p["w2"] = jax.random.uniform(kf[2], (ffn_hidden, d_model), jnp.float32, -sf, sf)
    p["b2"] = jax.random.uniform(kf[3], (1, d_model), jnp.float32, -sf, sf)
    return p


def reference(x, p, n_head):
    """Pure-JAX reference matching the PyTorch forward (dropout = identity)."""
    B, L, D = x.shape
    dh = D // n_head

    def ln(z, g, b, eps=1e-12):
        m = z.mean(-1, keepdims=True)
        v = ((z - m) ** 2).mean(-1, keepdims=True)
        return g * ((z - m) / jnp.sqrt(v + eps)) + b

    q = x @ p["wq"] + p["bq"]
    k = x @ p["wk"] + p["bk"]
    v = x @ p["wv"] + p["bv"]

    def split(t):
        return t.reshape(B, L, n_head, dh).transpose(0, 2, 1, 3)

    qh, kh, vh = split(q), split(k), split(v)
    score = jnp.einsum("bhld,bhmd->bhlm", qh, kh) / math.sqrt(dh)
    score = jax.nn.softmax(score, axis=-1)
    out = jnp.einsum("bhlm,bhmd->bhld", score, vh)
    out = out.transpose(0, 2, 1, 3).reshape(B, L, D)
    out = out @ p["wc"] + p["bc"]
    x1 = ln(out + x, p["gamma1"], p["beta1"])
    h1 = jnp.maximum(x1 @ p["w1"] + p["b1"], 0.0)
    y = h1 @ p["w2"] + p["b2"]
    return ln(y + x1, p["gamma2"], p["beta2"])


if __name__ == "__main__":
    # Small but lane/sublane-friendly shapes: D, L multiples of 128 / 8.
    B, L, D, H, F = 2, 128, 128, 4, 256
    key = jax.random.PRNGKey(0)
    kx, kp = jax.random.split(key)
    x = jax.random.normal(kx, (B, L, D), jnp.float32)
    params = make_params(kp, D, F)

    ref = reference(x, params, n_head=H)

    # f32 MXU-operand path, single query tile per batch element.
    out_f32 = jax.block_until_ready(encoder_layer(x, params, n_head=H, compute_dtype=None))
    assert out_f32.shape == (B, L, D)
    err = float(jnp.max(jnp.abs(out_f32 - ref)))
    assert err < 1e-2, f"f32 max err {err}"

    # f32 path with query tiling (grid = (B, 2)) -> exercises the cached-KV carry.
    out_t = jax.block_until_ready(
        encoder_layer(x, params, n_head=H, q_tile=64, compute_dtype=None))
    err_t = float(jnp.max(jnp.abs(out_t - ref)))
    assert err_t < 1e-2, f"tiled max err {err_t}"

    # Default bf16 MXU-operand path: compare against the reference with
    # bf16-rounded parameters (activations stay f32 in the kernel's elementwise math).
    pb = {k: v.astype(jnp.bfloat16).astype(jnp.float32) for k, v in params.items()}
    ref_b = reference(x, pb, n_head=H)
    out_b = jax.block_until_ready(
        encoder_layer(x, params, n_head=H, q_tile=64)).astype(jnp.float32)
    err_b = float(jnp.max(jnp.abs(out_b - ref_b)))
    assert err_b < 1e-1, f"bf16 max err {err_b}"

    print("KERNEL_OK")
</pallas_src>

<mosaic_0001>
module attributes {stable_mosaic.version = 11 : i64} {
  func.func @_encoder_layer_kernel(%arg0: i32, %arg1: i32, %arg2: memref<1x128x128xf32, #tpu.memory_space<vmem>>, %arg3: memref<128x128xf32, #tpu.memory_space<vmem>>, %arg4: memref<1x128xf32, #tpu.memory_space<vmem>>, %arg5: memref<128x256xf32, #tpu.memory_space<vmem>>, %arg6: memref<1x256xf32, #tpu.memory_space<vmem>>, %arg7: memref<128x128xf32, #tpu.memory_space<vmem>>, %arg8: memref<1x128xf32, #tpu.memory_space<vmem>>, %arg9: memref<1x128xf32, #tpu.memory_space<vmem>>, %arg10: memref<1x128xf32, #tpu.memory_space<vmem>>, %arg11: memref<128x256xf32, #tpu.memory_space<vmem>>, %arg12: memref<1x256xf32, #tpu.memory_space<vmem>>, %arg13: memref<256x128xf32, #tpu.memory_space<vmem>>, %arg14: memref<1x128xf32, #tpu.memory_space<vmem>>, %arg15: memref<1x128xf32, #tpu.memory_space<vmem>>, %arg16: memref<1x128xf32, #tpu.memory_space<vmem>>, %arg17: memref<1x128x128xf32, #tpu.memory_space<vmem>>, %arg18: memref<4x128x32xf32, #tpu.memory_space<vmem>>, %arg19: memref<4x128x32xf32, #tpu.memory_space<vmem>>) attributes {dimension_semantics = [#tpu.dimension_semantics<parallel>, #tpu.dimension_semantics<arbitrary>], iteration_bounds = array<i64: 2, 1>, scalar_prefetch = 0 : i64, scratch_operands = 2 : i64, tpu.core_type = #tpu.core_type<tc>, window_params = [{transform_indices = @transform_0, window_bounds = array<i64: 1, 128, 128>}, {pipeline_mode = #tpu.pipeline_mode<synchronous>, transform_indices = @transform_1, window_bounds = array<i64: 128, 128>}, {pipeline_mode = #tpu.pipeline_mode<synchronous>, transform_indices = @transform_2, window_bounds = array<i64: 1, 128>}, {pipeline_mode = #tpu.pipeline_mode<synchronous>, transform_indices = @transform_3, window_bounds = array<i64: 128, 256>}, {pipeline_mode = #tpu.pipeline_mode<synchronous>, transform_indices = @transform_4, window_bounds = array<i64: 1, 256>}, {pipeline_mode = #tpu.pipeline_mode<synchronous>, transform_indices = @transform_5, window_bounds = array<i64: 128, 128>}, {pipeline_mode = #tpu.pipeline_mode<synchronous>, transform_indices = @transform_6, window_bounds = array<i64: 1, 128>}, {pipeline_mode = #tpu.pipeline_mode<synchronous>, transform_indices = @transform_7, window_bounds = array<i64: 1, 128>}, {pipeline_mode = #tpu.pipeline_mode<synchronous>, transform_indices = @transform_8, window_bounds = array<i64: 1, 128>}, {pipeline_mode = #tpu.pipeline_mode<synchronous>, transform_indices = @transform_9, window_bounds = array<i64: 128, 256>}, {pipeline_mode = #tpu.pipeline_mode<synchronous>, transform_indices = @transform_10, window_bounds = array<i64: 1, 256>}, {pipeline_mode = #tpu.pipeline_mode<synchronous>, transform_indices = @transform_11, window_bounds = array<i64: 256, 128>}, {pipeline_mode = #tpu.pipeline_mode<synchronous>, transform_indices = @transform_12, window_bounds = array<i64: 1, 128>}, {pipeline_mode = #tpu.pipeline_mode<synchronous>, transform_indices = @transform_13, window_bounds = array<i64: 1, 128>}, {pipeline_mode = #tpu.pipeline_mode<synchronous>, transform_indices = @transform_14, window_bounds = array<i64: 1, 128>}, {transform_indices = @transform_15, window_bounds = array<i64: 1, 128, 128>}]} {
    %c0_i32 = arith.constant 0 : i32
    %0 = arith.cmpi eq, %arg1, %c0_i32 : i32
    %1 = arith.extui %0 : i1 to i32
    %c0_i32_0 = arith.constant 0 : i32
    %2 = arith.cmpi ne, %1, %c0_i32_0 : i32
    scf.if %2 {
      %c0_54 = arith.constant 0 : index
      %c0_55 = arith.constant 0 : index
      %c0_56 = arith.constant 0 : index
      %113 = vector.load %arg2[%c0_54, %c0_55, %c0_56] : memref<1x128x128xf32, #tpu.memory_space<vmem>>, vector<1x128x128xf32>
      %114 = vector.shape_cast %113 : vector<1x128x128xf32> to vector<128x128xf32>
      %c0_57 = arith.constant 0 : index
      %c0_58 = arith.constant 0 : index
      %115 = vector.load %arg5[%c0_57, %c0_58] : memref<128x256xf32, #tpu.memory_space<vmem>>, vector<128x256xf32>
      %cst_59 = arith.constant dense<0.000000e+00> : vector<128x256xf32>
      %116 = tpu.matmul %114, %115, %cst_59 {dimension_numbers = #tpu.dot_dimension_numbers<[1], [0], [0], [1], [0, 0, 1, 1], [], []>} : vector<128x128xf32>, vector<128x256xf32>, vector<128x256xf32> -> vector<128x256xf32>
      %c0_60 = arith.constant 0 : index
      %c0_61 = arith.constant 0 : index
      %117 = vector.load %arg6[%c0_60, %c0_61] : memref<1x256xf32, #tpu.memory_space<vmem>>, vector<1x256xf32>
      %118 = vector.broadcast %117 : vector<1x256xf32> to vector<128x256xf32>
      %119 = arith.addf %116, %118 : vector<128x256xf32>
      %120 = vector.extract_strided_slice %119 {offsets = [0, 0], sizes = [128, 32], strides = [1, 1]} : vector<128x256xf32> to vector<128x32xf32>
      %c0_62 = arith.constant 0 : index
      %c0_63 = arith.constant 0 : index
      %c0_64 = arith.constant 0 : index
      %121 = vector.load %arg18[%c0_62, %c0_63, %c0_64] : memref<4x128x32xf32, #tpu.memory_space<vmem>>, vector<1x128x32xf32>
      %122 = vector.shape_cast %121 : vector<1x128x32xf32> to vector<128x32xf32>
      %123 = vector.shape_cast %120 : vector<128x32xf32> to vector<1x128x32xf32>
      tpu.vector_store %arg18[%c0_62, %c0_63, %c0_64], %123 {strides = array<i32>} : memref<4x128x32xf32, #tpu.memory_space<vmem>>, vector<1x128x32xf32>,
      %124 = vector.extract_strided_slice %119 {offsets = [0, 128], sizes = [128, 32], strides = [1, 1]} : vector<128x256xf32> to vector<128x32xf32>
      %c0_65 = arith.constant 0 : index
      %c0_66 = arith.constant 0 : index
      %c0_67 = arith.constant 0 : index
      %125 = vector.load %arg19[%c0_65, %c0_66, %c0_67] : memref<4x128x32xf32, #tpu.memory_space<vmem>>, vector<1x128x32xf32>
      %126 = vector.shape_cast %125 : vector<1x128x32xf32> to vector<128x32xf32>
      %127 = vector.shape_cast %124 : vector<128x32xf32> to vector<1x128x32xf32>
      tpu.vector_store %arg19[%c0_65, %c0_66, %c0_67], %127 {strides = array<i32>} : memref<4x128x32xf32, #tpu.memory_space<vmem>>, vector<1x128x32xf32>,
      %128 = vector.extract_strided_slice %119 {offsets = [0, 32], sizes = [128, 32], strides = [1, 1]} : vector<128x256xf32> to vector<128x32xf32>
      %c1 = arith.constant 1 : index
      %c0_68 = arith.constant 0 : index
      %c0_69 = arith.constant 0 : index
      %129 = vector.load %arg18[%c1, %c0_68, %c0_69] : memref<4x128x32xf32, #tpu.memory_space<vmem>>, vector<1x128x32xf32>
      %130 = vector.shape_cast %129 : vector<1x128x32xf32> to vector<128x32xf32>
      %131 = vector.shape_cast %128 : vector<128x32xf32> to vector<1x128x32xf32>
      tpu.vector_store %arg18[%c1, %c0_68, %c0_69], %131 {strides = array<i32>} : memref<4x128x32xf32, #tpu.memory_space<vmem>>, vector<1x128x32xf32>,
      %132 = vector.extract_strided_slice %119 {offsets = [0, 160], sizes = [128, 32], strides = [1, 1]} : vector<128x256xf32> to vector<128x32xf32>
      %c1_70 = arith.constant 1 : index
      %c0_71 = arith.constant 0 : index
      %c0_72 = arith.constant 0 : index
      %133 = vector.load %arg19[%c1_70, %c0_71, %c0_72] : memref<4x128x32xf32, #tpu.memory_space<vmem>>, vector<1x128x32xf32>
      %134 = vector.shape_cast %133 : vector<1x128x32xf32> to vector<128x32xf32>
      %135 = vector.shape_cast %132 : vector<128x32xf32> to vector<1x128x32xf32>
      tpu.vector_store %arg19[%c1_70, %c0_71, %c0_72], %135 {strides = array<i32>} : memref<4x128x32xf32, #tpu.memory_space<vmem>>, vector<1x128x32xf32>,
      %136 = vector.extract_strided_slice %119 {offsets = [0, 64], sizes = [128, 32], strides = [1, 1]} : vector<128x256xf32> to vector<128x32xf32>
      %c2 = arith.constant 2 : index
      %c0_73 = arith.constant 0 : index
      %c0_74 = arith.constant 0 : index
      %137 = vector.load %arg18[%c2, %c0_73, %c0_74] : memref<4x128x32xf32, #tpu.memory_space<vmem>>, vector<1x128x32xf32>
      %138 = vector.shape_cast %137 : vector<1x128x32xf32> to vector<128x32xf32>
      %139 = vector.shape_cast %136 : vector<128x32xf32> to vector<1x128x32xf32>
      tpu.vector_store %arg18[%c2, %c0_73, %c0_74], %139 {strides = array<i32>} : memref<4x128x32xf32, #tpu.memory_space<vmem>>, vector<1x128x32xf32>,
      %140 = vector.extract_strided_slice %119 {offsets = [0, 192], sizes = [128, 32], strides = [1, 1]} : vector<128x256xf32> to vector<128x32xf32>
      %c2_75 = arith.constant 2 : index
      %c0_76 = arith.constant 0 : index
      %c0_77 = arith.constant 0 : index
      %141 = vector.load %arg19[%c2_75, %c0_76, %c0_77] : memref<4x128x32xf32, #tpu.memory_space<vmem>>, vector<1x128x32xf32>
      %142 = vector.shape_cast %141 : vector<1x128x32xf32> to vector<128x32xf32>
      %143 = vector.shape_cast %140 : vector<128x32xf32> to vector<1x128x32xf32>
      tpu.vector_store %arg19[%c2_75, %c0_76, %c0_77], %143 {strides = array<i32>} : memref<4x128x32xf32, #tpu.memory_space<vmem>>, vector<1x128x32xf32>,
      %144 = vector.extract_strided_slice %119 {offsets = [0, 96], sizes = [128, 32], strides = [1, 1]} : vector<128x256xf32> to vector<128x32xf32>
      %c3 = arith.constant 3 : index
      %c0_78 = arith.constant 0 : index
      %c0_79 = arith.constant 0 : index
      %145 = vector.load %arg18[%c3, %c0_78, %c0_79] : memref<4x128x32xf32, #tpu.memory_space<vmem>>, vector<1x128x32xf32>
      %146 = vector.shape_cast %145 : vector<1x128x32xf32> to vector<128x32xf32>
      %147 = vector.shape_cast %144 : vector<128x32xf32> to vector<1x128x32xf32>
      tpu.vector_store %arg18[%c3, %c0_78, %c0_79], %147 {strides = array<i32>} : memref<4x128x32xf32, #tpu.memory_space<vmem>>, vector<1x128x32xf32>,
      %148 = vector.extract_strided_slice %119 {offsets = [0, 224], sizes = [128, 32], strides = [1, 1]} : vector<128x256xf32> to vector<128x32xf32>
      %c3_80 = arith.constant 3 : index
      %c0_81 = arith.constant 0 : index
      %c0_82 = arith.constant 0 : index
      %149 = vector.load %arg19[%c3_80, %c0_81, %c0_82] : memref<4x128x32xf32, #tpu.memory_space<vmem>>, vector<1x128x32xf32>
      %150 = vector.shape_cast %149 : vector<1x128x32xf32> to vector<128x32xf32>
      %151 = vector.shape_cast %148 : vector<128x32xf32> to vector<1x128x32xf32>
      tpu.vector_store %arg19[%c3_80, %c0_81, %c0_82], %151 {strides = array<i32>} : memref<4x128x32xf32, #tpu.memory_space<vmem>>, vector<1x128x32xf32>,
    } else {
    }
    %c128_i32 = arith.constant 128 : i32
    %3 = arith.muli %arg1, %c128_i32 : i32
    %4 = tpu.assume_multiple %3, 128 : i32
    %c0 = arith.constant 0 : index
    %5 = arith.index_cast %4 : i32 to index
    %c0_1 = arith.constant 0 : index
    %6 = vector.load %arg2[%c0, %5, %c0_1] : memref<1x128x128xf32, #tpu.memory_space<vmem>>, vector<1x128x128xf32>
    %7 = vector.shape_cast %6 : vector<1x128x128xf32> to vector<128x128xf32>
    %c0_2 = arith.constant 0 : index
    %c0_3 = arith.constant 0 : index
    %8 = vector.load %arg3[%c0_2, %c0_3] : memref<128x128xf32, #tpu.memory_space<vmem>>, vector<128x128xf32>
    %cst = arith.constant dense<0.000000e+00> : vector<128x128xf32>
    %9 = tpu.matmul %7, %8, %cst {dimension_numbers = #tpu.dot_dimension_numbers<[1], [0], [0], [1], [0, 0, 1, 1], [], []>} : vector<128x128xf32>, vector<128x128xf32>, vector<128x128xf32> -> vector<128x128xf32>
    %c0_4 = arith.constant 0 : index
    %c0_5 = arith.constant 0 : index
    %10 = vector.load %arg4[%c0_4, %c0_5] : memref<1x128xf32, #tpu.memory_space<vmem>>, vector<1x128xf32>
    %11 = vector.broadcast %10 : vector<1x128xf32> to vector<128x128xf32>
    %12 = arith.addf %9, %11 : vector<128x128xf32>
    %cst_6 = arith.constant 0.176776692 : f32
    %13 = vector.broadcast %cst_6 : f32 to vector<128x128xf32>
    %14 = arith.mulf %12, %13 : vector<128x128xf32>
    %15 = vector.extract_strided_slice %14 {offsets = [0, 0], sizes = [128, 32], strides = [1, 1]} : vector<128x128xf32> to vector<128x32xf32>
    %16 = vector.extract_strided_slice %14 {offsets = [0, 32], sizes = [128, 32], strides = [1, 1]} : vector<128x128xf32> to vector<128x32xf32>
    %17 = vector.extract_strided_slice %14 {offsets = [0, 64], sizes = [128, 32], strides = [1, 1]} : vector<128x128xf32> to vector<128x32xf32>
    %18 = vector.extract_strided_slice %14 {offsets = [0, 96], sizes = [128, 32], strides = [1, 1]} : vector<128x128xf32> to vector<128x32xf32>
    %19 = vector.shape_cast %15 : vector<128x32xf32> to vector<1x128x32xf32>
    %20 = vector.shape_cast %16 : vector<128x32xf32> to vector<1x128x32xf32>
    %21 = vector.shape_cast %17 : vector<128x32xf32> to vector<1x128x32xf32>
    %22 = vector.shape_cast %18 : vector<128x32xf32> to vector<1x128x32xf32>
    %23 = tpu.concatenate %19, %20, %21, %22 in 0 : vector<1x128x32xf32>, vector<1x128x32xf32>, vector<1x128x32xf32>, vector<1x128x32xf32> -> vector<4x128x32xf32>
    %c0_7 = arith.constant 0 : index
    %c0_8 = arith.constant 0 : index
    %c0_9 = arith.constant 0 : index
    %24 = vector.load %arg18[%c0_7, %c0_8, %c0_9] : memref<4x128x32xf32, #tpu.memory_space<vmem>>, vector<4x128x32xf32>
    "tpu.trace_start"() <{level = 10 : i32, message = "hqd,hkd->hqk"}> : () -> ()
    %cst_10 = arith.constant dense<0.000000e+00> : vector<4x128x128xf32>
    %25 = tpu.matmul %23, %24, %cst_10 {dimension_numbers = #tpu.dot_dimension_numbers<[2], [2], [1], [1], [0, 0, 0, 1, 1, 1], [0], [0]>} : vector<4x128x32xf32>, vector<4x128x32xf32>, vector<4x128x128xf32> -> vector<4x128x128xf32>
    "tpu.trace_stop"() : () -> ()
    %cst_11 = arith.constant dense<0xFF800000> : vector<4x128xf32>
    %26 = vector.multi_reduction <maximumf>, %25, %cst_11 [2] : vector<4x128x128xf32> to vector<4x128xf32>
    %27 = vector.shape_cast %26 : vector<4x128xf32> to vector<4x128x1xf32>
    %28 = vector.broadcast %27 : vector<4x128x1xf32> to vector<4x128x128xf32>
    %29 = arith.subf %25, %28 : vector<4x128x128xf32>
    %30 = math.exp %29 : vector<4x128x128xf32>
    %cst_12 = arith.constant dense<0.000000e+00> : vector<4x128xf32>
    %31 = vector.multi_reduction <add>, %30, %cst_12 [2] : vector<4x128x128xf32> to vector<4x128xf32>
    %32 = vector.shape_cast %31 : vector<4x128xf32> to vector<4x128x1xf32>
    %33 = tpu.reciprocal %32 : vector<4x128x1xf32> -> vector<4x128x1xf32>
    %34 = vector.broadcast %33 : vector<4x128x1xf32> to vector<4x128x128xf32>
    %35 = arith.mulf %30, %34 : vector<4x128x128xf32>
    %c0_13 = arith.constant 0 : index
    %c0_14 = arith.constant 0 : index
    %c0_15 = arith.constant 0 : index
    %36 = vector.load %arg19[%c0_13, %c0_14, %c0_15] : memref<4x128x32xf32, #tpu.memory_space<vmem>>, vector<4x128x32xf32>
    "tpu.trace_start"() <{level = 10 : i32, message = "hqk,hkd->hqd"}> : () -> ()
    %cst_16 = arith.constant dense<0.000000e+00> : vector<4x128x32xf32>
    %37 = tpu.matmul %35, %36, %cst_16 {dimension_numbers = #tpu.dot_dimension_numbers<[2], [1], [1], [2], [0, 0, 0, 1, 1, 2], [0], [0]>} : vector<4x128x128xf32>, vector<4x128x32xf32>, vector<4x128x32xf32> -> vector<4x128x32xf32>
    "tpu.trace_stop"() : () -> ()
    %38 = vector.extract_strided_slice %37 {offsets = [0, 0, 0], sizes = [1, 128, 32], strides = [1, 1, 1]} : vector<4x128x32xf32> to vector<1x128x32xf32>
    %39 = vector.shape_cast %38 : vector<1x128x32xf32> to vector<128x32xf32>
    %40 = vector.extract_strided_slice %37 {offsets = [1, 0, 0], sizes = [1, 128, 32], strides = [1, 1, 1]} : vector<4x128x32xf32> to vector<1x128x32xf32>
    %41 = vector.shape_cast %40 : vector<1x128x32xf32> to vector<128x32xf32>
    %42 = vector.extract_strided_slice %37 {offsets = [2, 0, 0], sizes = [1, 128, 32], strides = [1, 1, 1]} : vector<4x128x32xf32> to vector<1x128x32xf32>
    %43 = vector.shape_cast %42 : vector<1x128x32xf32> to vector<128x32xf32>
    %44 = vector.extract_strided_slice %37 {offsets = [3, 0, 0], sizes = [1, 128, 32], strides = [1, 1, 1]} : vector<4x128x32xf32> to vector<1x128x32xf32>
    %45 = vector.shape_cast %44 : vector<1x128x32xf32> to vector<128x32xf32>
    %46 = tpu.concatenate %39, %41, %43, %45 in 1 : vector<128x32xf32>, vector<128x32xf32>, vector<128x32xf32>, vector<128x32xf32> -> vector<128x128xf32>
    %c0_17 = arith.constant 0 : index
    %c0_18 = arith.constant 0 : index
    %47 = vector.load %arg7[%c0_17, %c0_18] : memref<128x128xf32, #tpu.memory_space<vmem>>, vector<128x128xf32>
    %cst_19 = arith.constant dense<0.000000e+00> : vector<128x128xf32>
    %48 = tpu.matmul %46, %47, %cst_19 {dimension_numbers = #tpu.dot_dimension_numbers<[1], [0], [0], [1], [0, 0, 1, 1], [], []>} : vector<128x128xf32>, vector<128x128xf32>, vector<128x128xf32> -> vector<128x128xf32>
    %c0_20 = arith.constant 0 : index
    %c0_21 = arith.constant 0 : index
    %49 = vector.load %arg8[%c0_20, %c0_21] : memref<1x128xf32, #tpu.memory_space<vmem>>, vector<1x128xf32>
    %50 = vector.broadcast %49 : vector<1x128xf32> to vector<128x128xf32>
    %51 = arith.addf %48, %50 : vector<128x128xf32>
    %52 = arith.addf %51, %7 : vector<128x128xf32>
    %c0_22 = arith.constant 0 : index
    %c0_23 = arith.constant 0 : index
    %53 = vector.load %arg9[%c0_22, %c0_23] : memref<1x128xf32, #tpu.memory_space<vmem>>, vector<1x128xf32>
    %c0_24 = arith.constant 0 : index
    %c0_25 = arith.constant 0 : index
    %54 = vector.load %arg10[%c0_24, %c0_25] : memref<1x128xf32, #tpu.memory_space<vmem>>, vector<1x128xf32>
    %cst_26 = arith.constant dense<0.000000e+00> : vector<128xf32>
    %55 = vector.multi_reduction <add>, %52, %cst_26 [1] : vector<128x128xf32> to vector<128xf32>
    %56 = vector.shape_cast %55 : vector<128xf32> to vector<128x1xf32>
    %cst_27 = arith.constant 1.280000e+02 : f32
    %57 = vector.broadcast %cst_27 : f32 to vector<128x1xf32>
    %58 = arith.divf %56, %57 : vector<128x1xf32>
    %59 = vector.broadcast %58 : vector<128x1xf32> to vector<128x128xf32>
    %60 = arith.subf %52, %59 : vector<128x128xf32>
    %61 = arith.mulf %60, %60 : vector<128x128xf32>
    %cst_28 = arith.constant dense<0.000000e+00> : vector<128xf32>
    %62 = vector.multi_reduction <add>, %61, %cst_28 [1] : vector<128x128xf32> to vector<128xf32>
    %63 = vector.shape_cast %62 : vector<128xf32> to vector<128x1xf32>
    %cst_29 = arith.constant 1.280000e+02 : f32
    %64 = vector.broadcast %cst_29 : f32 to vector<128x1xf32>
    %65 = arith.divf %63, %64 : vector<128x1xf32>
    %cst_30 = arith.constant 9.99999996E-13 : f32
    %66 = vector.broadcast %cst_30 : f32 to vector<128x1xf32>
    %67 = arith.addf %65, %66 : vector<128x1xf32>
    %68 = math.rsqrt %67 : vector<128x1xf32>
    %69 = vector.broadcast %68 : vector<128x1xf32> to vector<128x128xf32>
    %70 = arith.mulf %60, %69 : vector<128x128xf32>
    %71 = vector.broadcast %53 : vector<1x128xf32> to vector<128x128xf32>
    %72 = arith.mulf %71, %70 : vector<128x128xf32>
    %73 = vector.broadcast %54 : vector<1x128xf32> to vector<128x128xf32>
    %74 = arith.addf %72, %73 : vector<128x128xf32>
    %c0_31 = arith.constant 0 : index
    %c0_32 = arith.constant 0 : index
    %75 = vector.load %arg11[%c0_31, %c0_32] : memref<128x256xf32, #tpu.memory_space<vmem>>, vector<128x256xf32>
    %cst_33 = arith.constant dense<0.000000e+00> : vector<128x256xf32>
    %76 = tpu.matmul %74, %75, %cst_33 {dimension_numbers = #tpu.dot_dimension_numbers<[1], [0], [0], [1], [0, 0, 1, 1], [], []>} : vector<128x128xf32>, vector<128x256xf32>, vector<128x256xf32> -> vector<128x256xf32>
    %c0_34 = arith.constant 0 : index
    %c0_35 = arith.constant 0 : index
    %77 = vector.load %arg12[%c0_34, %c0_35] : memref<1x256xf32, #tpu.memory_space<vmem>>, vector<1x256xf32>
    %78 = vector.broadcast %77 : vector<1x256xf32> to vector<128x256xf32>
    %79 = arith.addf %76, %78 : vector<128x256xf32>
    %cst_36 = arith.constant 0.000000e+00 : f32
    %80 = vector.broadcast %cst_36 : f32 to vector<128x256xf32>
    %81 = arith.maximumf %79, %80 : vector<128x256xf32>
    %c0_37 = arith.constant 0 : index
    %c0_38 = arith.constant 0 : index
    %82 = vector.load %arg13[%c0_37, %c0_38] : memref<256x128xf32, #tpu.memory_space<vmem>>, vector<256x128xf32>
    %cst_39 = arith.constant dense<0.000000e+00> : vector<128x128xf32>
    %83 = tpu.matmul %81, %82, %cst_39 {dimension_numbers = #tpu.dot_dimension_numbers<[1], [0], [0], [1], [0, 0, 1, 1], [], []>} : vector<128x256xf32>, vector<256x128xf32>, vector<128x128xf32> -> vector<128x128xf32>
    %c0_40 = arith.constant 0 : index
    %c0_41 = arith.constant 0 : index
    %84 = vector.load %arg14[%c0_40, %c0_41] : memref<1x128xf32, #tpu.memory_space<vmem>>, vector<1x128xf32>
    %85 = vector.broadcast %84 : vector<1x128xf32> to vector<128x128xf32>
    %86 = arith.addf %83, %85 : vector<128x128xf32>
    %87 = arith.addf %86, %74 : vector<128x128xf32>
    %c0_42 = arith.constant 0 : index
    %c0_43 = arith.constant 0 : index
    %88 = vector.load %arg15[%c0_42, %c0_43] : memref<1x128xf32, #tpu.memory_space<vmem>>, vector<1x128xf32>
    %c0_44 = arith.constant 0 : index
    %c0_45 = arith.constant 0 : index
    %89 = vector.load %arg16[%c0_44, %c0_45] : memref<1x128xf32, #tpu.memory_space<vmem>>, vector<1x128xf32>
    %cst_46 = arith.constant dense<0.000000e+00> : vector<128xf32>
    %90 = vector.multi_reduction <add>, %87, %cst_46 [1] : vector<128x128xf32> to vector<128xf32>
    %91 = vector.shape_cast %90 : vector<128xf32> to vector<128x1xf32>
    %cst_47 = arith.constant 1.280000e+02 : f32
    %92 = vector.broadcast %cst_47 : f32 to vector<128x1xf32>
    %93 = arith.divf %91, %92 : vector<128x1xf32>
    %94 = vector.broadcast %93 : vector<128x1xf32> to vector<128x128xf32>
    %95 = arith.subf %87, %94 : vector<128x128xf32>
    %96 = arith.mulf %95, %95 : vector<128x128xf32>
    %cst_48 = arith.constant dense<0.000000e+00> : vector<128xf32>
    %97 = vector.multi_reduction <add>, %96, %cst_48 [1] : vector<128x128xf32> to vector<128xf32>
    %98 = vector.shape_cast %97 : vector<128xf32> to vector<128x1xf32>
    %cst_49 = arith.constant 1.280000e+02 : f32
    %99 = vector.broadcast %cst_49 : f32 to vector<128x1xf32>
    %100 = arith.divf %98, %99 : vector<128x1xf32>
    %cst_50 = arith.constant 9.99999996E-13 : f32
    %101 = vector.broadcast %cst_50 : f32 to vector<128x1xf32>
    %102 = arith.addf %100, %101 : vector<128x1xf32>
    %103 = math.rsqrt %102 : vector<128x1xf32>
    %104 = vector.broadcast %103 : vector<128x1xf32> to vector<128x128xf32>
    %105 = arith.mulf %95, %104 : vector<128x128xf32>
    %106 = vector.broadcast %88 : vector<1x128xf32> to vector<128x128xf32>
    %107 = arith.mulf %106, %105 : vector<128x128xf32>
    %108 = vector.broadcast %89 : vector<1x128xf32> to vector<128x128xf32>
    %109 = arith.addf %107, %108 : vector<128x128xf32>
    %c0_51 = arith.constant 0 : index
    %c0_52 = arith.constant 0 : index
    %c0_53 = arith.constant 0 : index
    %110 = vector.load %arg17[%c0_51, %c0_52, %c0_53] : memref<1x128x128xf32, #tpu.memory_space<vmem>>, vector<1x128x128xf32>
    %111 = vector.shape_cast %110 : vector<1x128x128xf32> to vector<128x128xf32>
    %112 = vector.shape_cast %109 : vector<128x128xf32> to vector<1x128x128xf32>
    tpu.vector_store %arg17[%c0_51, %c0_52, %c0_53], %112 {strides = array<i32>} : memref<1x128x128xf32, #tpu.memory_space<vmem>>, vector<1x128x128xf32>,
    return
  }
  func.func @transform_0(%arg0: i32, %arg1: i32) -> (i32, i32, i32) {
    %c0_i32 = arith.constant 0 : i32
    %c0_i32_0 = arith.constant 0 : i32
    %c0_i32_1 = arith.constant 0 : i32
    return %arg0, %c0_i32, %c0_i32_0 : i32, i32, i32
  }
  func.func @transform_1(%arg0: i32, %arg1: i32) -> (i32, i32) {
    %c0_i32 = arith.constant 0 : i32
    %c0_i32_0 = arith.constant 0 : i32
    %c0_i32_1 = arith.constant 0 : i32
    return %c0_i32, %c0_i32_0 : i32, i32
  }
  func.func @transform_2(%arg0: i32, %arg1: i32) -> (i32, i32) {
    %c0_i32 = arith.constant 0 : i32
    %c0_i32_0 = arith.constant 0 : i32
    %c0_i32_1 = arith.constant 0 : i32
    return %c0_i32, %c0_i32_0 : i32, i32
  }
  func.func @transform_3(%arg0: i32, %arg1: i32) -> (i32, i32) {
    %c0_i32 = arith.constant 0 : i32
    %c0_i32_0 = arith.constant 0 : i32
    %c0_i32_1 = arith.constant 0 : i32
    return %c0_i32, %c0_i32_0 : i32, i32
  }
  func.func @transform_4(%arg0: i32, %arg1: i32) -> (i32, i32) {
    %c0_i32 = arith.constant 0 : i32
    %c0_i32_0 = arith.constant 0 : i32
    %c0_i32_1 = arith.constant 0 : i32
    return %c0_i32, %c0_i32_0 : i32, i32
  }
  func.func @transform_5(%arg0: i32, %arg1: i32) -> (i32, i32) {
    %c0_i32 = arith.constant 0 : i32
    %c0_i32_0 = arith.constant 0 : i32
    %c0_i32_1 = arith.constant 0 : i32
    return %c0_i32, %c0_i32_0 : i32, i32
  }
  func.func @transform_6(%arg0: i32, %arg1: i32) -> (i32, i32) {
    %c0_i32 = arith.constant 0 : i32
    %c0_i32_0 = arith.constant 0 : i32
    %c0_i32_1 = arith.constant 0 : i32
    return %c0_i32, %c0_i32_0 : i32, i32
  }
  func.func @transform_7(%arg0: i32, %arg1: i32) -> (i32, i32) {
    %c0_i32 = arith.constant 0 : i32
    %c0_i32_0 = arith.constant 0 : i32
    %c0_i32_1 = arith.constant 0 : i32
    return %c0_i32, %c0_i32_0 : i32, i32
  }
  func.func @transform_8(%arg0: i32, %arg1: i32) -> (i32, i32) {
    %c0_i32 = arith.constant 0 : i32
    %c0_i32_0 = arith.constant 0 : i32
    %c0_i32_1 = arith.constant 0 : i32
    return %c0_i32, %c0_i32_0 : i32, i32
  }
  func.func @transform_9(%arg0: i32, %arg1: i32) -> (i32, i32) {
    %c0_i32 = arith.constant 0 : i32
    %c0_i32_0 = arith.constant 0 : i32
    %c0_i32_1 = arith.constant 0 : i32
    return %c0_i32, %c0_i32_0 : i32, i32
  }
  func.func @transform_10(%arg0: i32, %arg1: i32) -> (i32, i32) {
    %c0_i32 = arith.constant 0 : i32
    %c0_i32_0 = arith.constant 0 : i32
    %c0_i32_1 = arith.constant 0 : i32
    return %c0_i32, %c0_i32_0 : i32, i32
  }
  func.func @transform_11(%arg0: i32, %arg1: i32) -> (i32, i32) {
    %c0_i32 = arith.constant 0 : i32
    %c0_i32_0 = arith.constant 0 : i32
    %c0_i32_1 = arith.constant 0 : i32
    return %c0_i32, %c0_i32_0 : i32, i32
  }
  func.func @transform_12(%arg0: i32, %arg1: i32) -> (i32, i32) {
    %c0_i32 = arith.constant 0 : i32
    %c0_i32_0 = arith.constant 0 : i32
    %c0_i32_1 = arith.constant 0 : i32
    return %c0_i32, %c0_i32_0 : i32, i32
  }
  func.func @transform_13(%arg0: i32, %arg1: i32) -> (i32, i32) {
    %c0_i32 = arith.constant 0 : i32
    %c0_i32_0 = arith.constant 0 : i32
    %c0_i32_1 = arith.constant 0 : i32
    return %c0_i32, %c0_i32_0 : i32, i32
  }
  func.func @transform_14(%arg0: i32, %arg1: i32) -> (i32, i32) {
    %c0_i32 = arith.constant 0 : i32
    %c0_i32_0 = arith.constant 0 : i32
    %c0_i32_1 = arith.constant 0 : i32
    return %c0_i32, %c0_i32_0 : i32, i32
  }
  func.func @transform_15(%arg0: i32, %arg1: i32) -> (i32, i32, i32) {
    %c0_i32 = arith.constant 0 : i32
    %c0_i32_0 = arith.constant 0 : i32
    return %arg0, %arg1, %c0_i32 : i32, i32, i32
  }
}

module attributes {stable_mosaic.version = 11 : i64} {
  func.func @_encoder_layer_kernel(%arg0: i32, %arg1: i32, %arg2: memref<1x128x128xf32, #tpu.memory_space<vmem>>, %arg3: memref<128x128xf32, #tpu.memory_space<vmem>>, %arg4: memref<1x128xf32, #tpu.memory_space<vmem>>, %arg5: memref<128x256xf32, #tpu.memory_space<vmem>>, %arg6: memref<1x256xf32, #tpu.memory_space<vmem>>, %arg7: memref<128x128xf32, #tpu.memory_space<vmem>>, %arg8: memref<1x128xf32, #tpu.memory_space<vmem>>, %arg9: memref<1x128xf32, #tpu.memory_space<vmem>>, %arg10: memref<1x128xf32, #tpu.memory_space<vmem>>, %arg11: memref<128x256xf32, #tpu.memory_space<vmem>>, %arg12: memref<1x256xf32, #tpu.memory_space<vmem>>, %arg13: memref<256x128xf32, #tpu.memory_space<vmem>>, %arg14: memref<1x128xf32, #tpu.memory_space<vmem>>, %arg15: memref<1x128xf32, #tpu.memory_space<vmem>>, %arg16: memref<1x128xf32, #tpu.memory_space<vmem>>, %arg17: memref<1x128x128xf32, #tpu.memory_space<vmem>>, %arg18: memref<4x128x32xf32, #tpu.memory_space<vmem>>, %arg19: memref<4x128x32xf32, #tpu.memory_space<vmem>>) attributes {dimension_semantics = [#tpu.dimension_semantics<parallel>, #tpu.dimension_semantics<arbitrary>], iteration_bounds = array<i64: 2, 1>, scalar_prefetch = 0 : i64, scratch_operands = 2 : i64, tpu.core_type = #tpu.core_type<tc>, window_params = [{transform_indices = @transform_0, window_bounds = array<i64: 1, 128, 128>}, {pipeline_mode = #tpu.pipeline_mode<synchronous>, transform_indices = @transform_1, window_bounds = array<i64: 128, 128>}, {pipeline_mode = #tpu.pipeline_mode<synchronous>, transform_indices = @transform_2, window_bounds = array<i64: 1, 128>}, {pipeline_mode = #tpu.pipeline_mode<synchronous>, transform_indices = @transform_3, window_bounds = array<i64: 128, 256>}, {pipeline_mode = #tpu.pipeline_mode<synchronous>, transform_indices = @transform_4, window_bounds = array<i64: 1, 256>}, {pipeline_mode = #tpu.pipeline_mode<synchronous>, transform_indices = @transform_5, window_bounds = array<i64: 128, 128>}, {pipeline_mode = #tpu.pipeline_mode<synchronous>, transform_indices = @transform_6, window_bounds = array<i64: 1, 128>}, {pipeline_mode = #tpu.pipeline_mode<synchronous>, transform_indices = @transform_7, window_bounds = array<i64: 1, 128>}, {pipeline_mode = #tpu.pipeline_mode<synchronous>, transform_indices = @transform_8, window_bounds = array<i64: 1, 128>}, {pipeline_mode = #tpu.pipeline_mode<synchronous>, transform_indices = @transform_9, window_bounds = array<i64: 128, 256>}, {pipeline_mode = #tpu.pipeline_mode<synchronous>, transform_indices = @transform_10, window_bounds = array<i64: 1, 256>}, {pipeline_mode = #tpu.pipeline_mode<synchronous>, transform_indices = @transform_11, window_bounds = array<i64: 256, 128>}, {pipeline_mode = #tpu.pipeline_mode<synchronous>, transform_indices = @transform_12, window_bounds = array<i64: 1, 128>}, {pipeline_mode = #tpu.pipeline_mode<synchronous>, transform_indices = @transform_13, window_bounds = array<i64: 1, 128>}, {pipeline_mode = #tpu.pipeline_mode<synchronous>, transform_indices = @transform_14, window_bounds = array<i64: 1, 128>}, {transform_indices = @transform_15, window_bounds = array<i64: 1, 128, 128>}]} {
    %c0_i32 = arith.constant 0 : i32
    %0 = arith.cmpi eq, %arg1, %c0_i32 : i32
    %1 = arith.extui %0 : i1 to i32
    %c0_i32_0 = arith.constant 0 : i32
    %2 = arith.cmpi ne, %1, %c0_i32_0 : i32
    scf.if %2 {
      %c0_54 = arith.constant 0 : index
      %c0_55 = arith.constant 0 : index
      %c0_56 = arith.constant 0 : index
      %113 = vector.load %arg2[%c0_54, %c0_55, %c0_56] : memref<1x128x128xf32, #tpu.memory_space<vmem>>, vector<1x128x128xf32>
      %114 = vector.shape_cast %113 : vector<1x128x128xf32> to vector<128x128xf32>
      %c0_57 = arith.constant 0 : index
      %c0_58 = arith.constant 0 : index
      %115 = vector.load %arg5[%c0_57, %c0_58] : memref<128x256xf32, #tpu.memory_space<vmem>>, vector<128x256xf32>
      %cst_59 = arith.constant dense<0.000000e+00> : vector<128x256xf32>
      %116 = tpu.matmul %114, %115, %cst_59 {dimension_numbers = #tpu.dot_dimension_numbers<[1], [0], [0], [1], [0, 0, 1, 1], [], []>} : vector<128x128xf32>, vector<128x256xf32>, vector<128x256xf32> -> vector<128x256xf32>
      %c0_60 = arith.constant 0 : index
      %c0_61 = arith.constant 0 : index
      %117 = vector.load %arg6[%c0_60, %c0_61] : memref<1x256xf32, #tpu.memory_space<vmem>>, vector<1x256xf32>
      %118 = vector.broadcast %117 : vector<1x256xf32> to vector<128x256xf32>
      %119 = arith.addf %116, %118 : vector<128x256xf32>
      %120 = vector.extract_strided_slice %119 {offsets = [0, 0], sizes = [128, 32], strides = [1, 1]} : vector<128x256xf32> to vector<128x32xf32>
      %c0_62 = arith.constant 0 : index
      %c0_63 = arith.constant 0 : index
      %c0_64 = arith.constant 0 : index
      %121 = vector.load %arg18[%c0_62, %c0_63, %c0_64] : memref<4x128x32xf32, #tpu.memory_space<vmem>>, vector<1x128x32xf32>
      %122 = vector.shape_cast %121 : vector<1x128x32xf32> to vector<128x32xf32>
      %123 = vector.shape_cast %120 : vector<128x32xf32> to vector<1x128x32xf32>
      tpu.vector_store %arg18[%c0_62, %c0_63, %c0_64], %123 {strides = array<i32>} : memref<4x128x32xf32, #tpu.memory_space<vmem>>, vector<1x128x32xf32>,
      %124 = vector.extract_strided_slice %119 {offsets = [0, 128], sizes = [128, 32], strides = [1, 1]} : vector<128x256xf32> to vector<128x32xf32>
      %c0_65 = arith.constant 0 : index
      %c0_66 = arith.constant 0 : index
      %c0_67 = arith.constant 0 : index
      %125 = vector.load %arg19[%c0_65, %c0_66, %c0_67] : memref<4x128x32xf32, #tpu.memory_space<vmem>>, vector<1x128x32xf32>
      %126 = vector.shape_cast %125 : vector<1x128x32xf32> to vector<128x32xf32>
      %127 = vector.shape_cast %124 : vector<128x32xf32> to vector<1x128x32xf32>
      tpu.vector_store %arg19[%c0_65, %c0_66, %c0_67], %127 {strides = array<i32>} : memref<4x128x32xf32, #tpu.memory_space<vmem>>, vector<1x128x32xf32>,
      %128 = vector.extract_strided_slice %119 {offsets = [0, 32], sizes = [128, 32], strides = [1, 1]} : vector<128x256xf32> to vector<128x32xf32>
      %c1 = arith.constant 1 : index
      %c0_68 = arith.constant 0 : index
      %c0_69 = arith.constant 0 : index
      %129 = vector.load %arg18[%c1, %c0_68, %c0_69] : memref<4x128x32xf32, #tpu.memory_space<vmem>>, vector<1x128x32xf32>
      %130 = vector.shape_cast %129 : vector<1x128x32xf32> to vector<128x32xf32>
      %131 = vector.shape_cast %128 : vector<128x32xf32> to vector<1x128x32xf32>
      tpu.vector_store %arg18[%c1, %c0_68, %c0_69], %131 {strides = array<i32>} : memref<4x128x32xf32, #tpu.memory_space<vmem>>, vector<1x128x32xf32>,
      %132 = vector.extract_strided_slice %119 {offsets = [0, 160], sizes = [128, 32], strides = [1, 1]} : vector<128x256xf32> to vector<128x32xf32>
      %c1_70 = arith.constant 1 : index
      %c0_71 = arith.constant 0 : index
      %c0_72 = arith.constant 0 : index
      %133 = vector.load %arg19[%c1_70, %c0_71, %c0_72] : memref<4x128x32xf32, #tpu.memory_space<vmem>>, vector<1x128x32xf32>
      %134 = vector.shape_cast %133 : vector<1x128x32xf32> to vector<128x32xf32>
      %135 = vector.shape_cast %132 : vector<128x32xf32> to vector<1x128x32xf32>
      tpu.vector_store %arg19[%c1_70, %c0_71, %c0_72], %135 {strides = array<i32>} : memref<4x128x32xf32, #tpu.memory_space<vmem>>, vector<1x128x32xf32>,
      %136 = vector.extract_strided_slice %119 {offsets = [0, 64], sizes = [128, 32], strides = [1, 1]} : vector<128x256xf32> to vector<128x32xf32>
      %c2 = arith.constant 2 : index
      %c0_73 = arith.constant 0 : index
      %c0_74 = arith.constant 0 : index
      %137 = vector.load %arg18[%c2, %c0_73, %c0_74] : memref<4x128x32xf32, #tpu.memory_space<vmem>>, vector<1x128x32xf32>
      %138 = vector.shape_cast %137 : vector<1x128x32xf32> to vector<128x32xf32>
      %139 = vector.shape_cast %136 : vector<128x32xf32> to vector<1x128x32xf32>
      tpu.vector_store %arg18[%c2, %c0_73, %c0_74], %139 {strides = array<i32>} : memref<4x128x32xf32, #tpu.memory_space<vmem>>, vector<1x128x32xf32>,
      %140 = vector.extract_strided_slice %119 {offsets = [0, 192], sizes = [128, 32], strides = [1, 1]} : vector<128x256xf32> to vector<128x32xf32>
      %c2_75 = arith.constant 2 : index
      %c0_76 = arith.constant 0 : index
      %c0_77 = arith.constant 0 : index
      %141 = vector.load %arg19[%c2_75, %c0_76, %c0_77] : memref<4x128x32xf32, #tpu.memory_space<vmem>>, vector<1x128x32xf32>
      %142 = vector.shape_cast %141 : vector<1x128x32xf32> to vector<128x32xf32>
      %143 = vector.shape_cast %140 : vector<128x32xf32> to vector<1x128x32xf32>
      tpu.vector_store %arg19[%c2_75, %c0_76, %c0_77], %143 {strides = array<i32>} : memref<4x128x32xf32, #tpu.memory_space<vmem>>, vector<1x128x32xf32>,
      %144 = vector.extract_strided_slice %119 {offsets = [0, 96], sizes = [128, 32], strides = [1, 1]} : vector<128x256xf32> to vector<128x32xf32>
      %c3 = arith.constant 3 : index
      %c0_78 = arith.constant 0 : index
      %c0_79 = arith.constant 0 : index
      %145 = vector.load %arg18[%c3, %c0_78, %c0_79] : memref<4x128x32xf32, #tpu.memory_space<vmem>>, vector<1x128x32xf32>
      %146 = vector.shape_cast %145 : vector<1x128x32xf32> to vector<128x32xf32>
      %147 = vector.shape_cast %144 : vector<128x32xf32> to vector<1x128x32xf32>
      tpu.vector_store %arg18[%c3, %c0_78, %c0_79], %147 {strides = array<i32>} : memref<4x128x32xf32, #tpu.memory_space<vmem>>, vector<1x128x32xf32>,
      %148 = vector.extract_strided_slice %119 {offsets = [0, 224], sizes = [128, 32], strides = [1, 1]} : vector<128x256xf32> to vector<128x32xf32>
      %c3_80 = arith.constant 3 : index
      %c0_81 = arith.constant 0 : index
      %c0_82 = arith.constant 0 : index
      %149 = vector.load %arg19[%c3_80, %c0_81, %c0_82] : memref<4x128x32xf32, #tpu.memory_space<vmem>>, vector<1x128x32xf32>
      %150 = vector.shape_cast %149 : vector<1x128x32xf32> to vector<128x32xf32>
      %151 = vector.shape_cast %148 : vector<128x32xf32> to vector<1x128x32xf32>
      tpu.vector_store %arg19[%c3_80, %c0_81, %c0_82], %151 {strides = array<i32>} : memref<4x128x32xf32, #tpu.memory_space<vmem>>, vector<1x128x32xf32>,
    } else {
    }
    %c128_i32 = arith.constant 128 : i32
    %3 = arith.muli %arg1, %c128_i32 : i32
    %4 = tpu.assume_multiple %3, 128 : i32
    %c0 = arith.constant 0 : index
    %5 = arith.index_cast %4 : i32 to index
    %c0_1 = arith.constant 0 : index
    %6 = vector.load %arg2[%c0, %5, %c0_1] : memref<1x128x128xf32, #tpu.memory_space<vmem>>, vector<1x128x128xf32>
    %7 = vector.shape_cast %6 : vector<1x128x128xf32> to vector<128x128xf32>
    %c0_2 = arith.constant 0 : index
    %c0_3 = arith.constant 0 : index
    %8 = vector.load %arg3[%c0_2, %c0_3] : memref<128x128xf32, #tpu.memory_space<vmem>>, vector<128x128xf32>
    %cst = arith.constant dense<0.000000e+00> : vector<128x128xf32>
    %9 = tpu.matmul %7, %8, %cst {dimension_numbers = #tpu.dot_dimension_numbers<[1], [0], [0], [1], [0, 0, 1, 1], [], []>} : vector<128x128xf32>, vector<128x128xf32>, vector<128x128xf32> -> vector<128x128xf32>
    %c0_4 = arith.constant 0 : index
    %c0_5 = arith.constant 0 : index
    %10 = vector.load %arg4[%c0_4, %c0_5] : memref<1x128xf32, #tpu.memory_space<vmem>>, vector<1x128xf32>
    %11 = vector.broadcast %10 : vector<1x128xf32> to vector<128x128xf32>
    %12 = arith.addf %9, %11 : vector<128x128xf32>
    %cst_6 = arith.constant 0.176776692 : f32
    %13 = vector.broadcast %cst_6 : f32 to vector<128x128xf32>
    %14 = arith.mulf %12, %13 : vector<128x128xf32>
    %15 = vector.extract_strided_slice %14 {offsets = [0, 0], sizes = [128, 32], strides = [1, 1]} : vector<128x128xf32> to vector<128x32xf32>
    %16 = vector.extract_strided_slice %14 {offsets = [0, 32], sizes = [128, 32], strides = [1, 1]} : vector<128x128xf32> to vector<128x32xf32>
    %17 = vector.extract_strided_slice %14 {offsets = [0, 64], sizes = [128, 32], strides = [1, 1]} : vector<128x128xf32> to vector<128x32xf32>
    %18 = vector.extract_strided_slice %14 {offsets = [0, 96], sizes = [128, 32], strides = [1, 1]} : vector<128x128xf32> to vector<128x32xf32>
    %19 = vector.shape_cast %15 : vector<128x32xf32> to vector<1x128x32xf32>
    %20 = vector.shape_cast %16 : vector<128x32xf32> to vector<1x128x32xf32>
    %21 = vector.shape_cast %17 : vector<128x32xf32> to vector<1x128x32xf32>
    %22 = vector.shape_cast %18 : vector<128x32xf32> to vector<1x128x32xf32>
    %23 = tpu.concatenate %19, %20, %21, %22 in 0 : vector<1x128x32xf32>, vector<1x128x32xf32>, vector<1x128x32xf32>, vector<1x128x32xf32> -> vector<4x128x32xf32>
    %c0_7 = arith.constant 0 : index
    %c0_8 = arith.constant 0 : index
    %c0_9 = arith.constant 0 : index
    %24 = vector.load %arg18[%c0_7, %c0_8, %c0_9] : memref<4x128x32xf32, #tpu.memory_space<vmem>>, vector<4x128x32xf32>
    "tpu.trace_start"() <{level = 10 : i32, message = "hqd,hkd->hqk"}> : () -> ()
    %cst_10 = arith.constant dense<0.000000e+00> : vector<4x128x128xf32>
    %25 = tpu.matmul %23, %24, %cst_10 {dimension_numbers = #tpu.dot_dimension_numbers<[2], [2], [1], [1], [0, 0, 0, 1, 1, 1], [0], [0]>} : vector<4x128x32xf32>, vector<4x128x32xf32>, vector<4x128x128xf32> -> vector<4x128x128xf32>
    "tpu.trace_stop"() : () -> ()
    %cst_11 = arith.constant dense<0xFF800000> : vector<4x128xf32>
    %26 = vector.multi_reduction <maximumf>, %25, %cst_11 [2] : vector<4x128x128xf32> to vector<4x128xf32>
    %27 = vector.shape_cast %26 : vector<4x128xf32> to vector<4x128x1xf32>
    %28 = vector.broadcast %27 : vector<4x128x1xf32> to vector<4x128x128xf32>
    %29 = arith.subf %25, %28 : vector<4x128x128xf32>
    %30 = math.exp %29 : vector<4x128x128xf32>
    %cst_12 = arith.constant dense<0.000000e+00> : vector<4x128xf32>
    %31 = vector.multi_reduction <add>, %30, %cst_12 [2] : vector<4x128x128xf32> to vector<4x128xf32>
    %32 = vector.shape_cast %31 : vector<4x128xf32> to vector<4x128x1xf32>
    %33 = tpu.reciprocal %32 : vector<4x128x1xf32> -> vector<4x128x1xf32>
    %34 = vector.broadcast %33 : vector<4x128x1xf32> to vector<4x128x128xf32>
    %35 = arith.mulf %30, %34 : vector<4x128x128xf32>
    %c0_13 = arith.constant 0 : index
    %c0_14 = arith.constant 0 : index
    %c0_15 = arith.constant 0 : index
    %36 = vector.load %arg19[%c0_13, %c0_14, %c0_15] : memref<4x128x32xf32, #tpu.memory_space<vmem>>, vector<4x128x32xf32>
    "tpu.trace_start"() <{level = 10 : i32, message = "hqk,hkd->hqd"}> : () -> ()
    %cst_16 = arith.constant dense<0.000000e+00> : vector<4x128x32xf32>
    %37 = tpu.matmul %35, %36, %cst_16 {dimension_numbers = #tpu.dot_dimension_numbers<[2], [1], [1], [2], [0, 0, 0, 1, 1, 2], [0], [0]>} : vector<4x128x128xf32>, vector<4x128x32xf32>, vector<4x128x32xf32> -> vector<4x128x32xf32>
    "tpu.trace_stop"() : () -> ()
    %38 = vector.extract_strided_slice %37 {offsets = [0, 0, 0], sizes = [1, 128, 32], strides = [1, 1, 1]} : vector<4x128x32xf32> to vector<1x128x32xf32>
    %39 = vector.shape_cast %38 : vector<1x128x32xf32> to vector<128x32xf32>
    %40 = vector.extract_strided_slice %37 {offsets = [1, 0, 0], sizes = [1, 128, 32], strides = [1, 1, 1]} : vector<4x128x32xf32> to vector<1x128x32xf32>
    %41 = vector.shape_cast %40 : vector<1x128x32xf32> to vector<128x32xf32>
    %42 = vector.extract_strided_slice %37 {offsets = [2, 0, 0], sizes = [1, 128, 32], strides = [1, 1, 1]} : vector<4x128x32xf32> to vector<1x128x32xf32>
    %43 = vector.shape_cast %42 : vector<1x128x32xf32> to vector<128x32xf32>
    %44 = vector.extract_strided_slice %37 {offsets = [3, 0, 0], sizes = [1, 128, 32], strides = [1, 1, 1]} : vector<4x128x32xf32> to vector<1x128x32xf32>
    %45 = vector.shape_cast %44 : vector<1x128x32xf32> to vector<128x32xf32>
    %46 = tpu.concatenate %39, %41, %43, %45 in 1 : vector<128x32xf32>, vector<128x32xf32>, vector<128x32xf32>, vector<128x32xf32> -> vector<128x128xf32>
    %c0_17 = arith.constant 0 : index
    %c0_18 = arith.constant 0 : index
    %47 = vector.load %arg7[%c0_17, %c0_18] : memref<128x128xf32, #tpu.memory_space<vmem>>, vector<128x128xf32>
    %cst_19 = arith.constant dense<0.000000e+00> : vector<128x128xf32>
    %48 = tpu.matmul %46, %47, %cst_19 {dimension_numbers = #tpu.dot_dimension_numbers<[1], [0], [0], [1], [0, 0, 1, 1], [], []>} : vector<128x128xf32>, vector<128x128xf32>, vector<128x128xf32> -> vector<128x128xf32>
    %c0_20 = arith.constant 0 : index
    %c0_21 = arith.constant 0 : index
    %49 = vector.load %arg8[%c0_20, %c0_21] : memref<1x128xf32, #tpu.memory_space<vmem>>, vector<1x128xf32>
    %50 = vector.broadcast %49 : vector<1x128xf32> to vector<128x128xf32>
    %51 = arith.addf %48, %50 : vector<128x128xf32>
    %52 = arith.addf %51, %7 : vector<128x128xf32>
    %c0_22 = arith.constant 0 : index
    %c0_23 = arith.constant 0 : index
    %53 = vector.load %arg9[%c0_22, %c0_23] : memref<1x128xf32, #tpu.memory_space<vmem>>, vector<1x128xf32>
    %c0_24 = arith.constant 0 : index
    %c0_25 = arith.constant 0 : index
    %54 = vector.load %arg10[%c0_24, %c0_25] : memref<1x128xf32, #tpu.memory_space<vmem>>, vector<1x128xf32>
    %cst_26 = arith.constant dense<0.000000e+00> : vector<128xf32>
    %55 = vector.multi_reduction <add>, %52, %cst_26 [1] : vector<128x128xf32> to vector<128xf32>
    %56 = vector.shape_cast %55 : vector<128xf32> to vector<128x1xf32>
    %cst_27 = arith.constant 1.280000e+02 : f32
    %57 = vector.broadcast %cst_27 : f32 to vector<128x1xf32>
    %58 = arith.divf %56, %57 : vector<128x1xf32>
    %59 = vector.broadcast %58 : vector<128x1xf32> to vector<128x128xf32>
    %60 = arith.subf %52, %59 : vector<128x128xf32>
    %61 = arith.mulf %60, %60 : vector<128x128xf32>
    %cst_28 = arith.constant dense<0.000000e+00> : vector<128xf32>
    %62 = vector.multi_reduction <add>, %61, %cst_28 [1] : vector<128x128xf32> to vector<128xf32>
    %63 = vector.shape_cast %62 : vector<128xf32> to vector<128x1xf32>
    %cst_29 = arith.constant 1.280000e+02 : f32
    %64 = vector.broadcast %cst_29 : f32 to vector<128x1xf32>
    %65 = arith.divf %63, %64 : vector<128x1xf32>
    %cst_30 = arith.constant 9.99999996E-13 : f32
    %66 = vector.broadcast %cst_30 : f32 to vector<128x1xf32>
    %67 = arith.addf %65, %66 : vector<128x1xf32>
    %68 = math.rsqrt %67 : vector<128x1xf32>
    %69 = vector.broadcast %68 : vector<128x1xf32> to vector<128x128xf32>
    %70 = arith.mulf %60, %69 : vector<128x128xf32>
    %71 = vector.broadcast %53 : vector<1x128xf32> to vector<128x128xf32>
    %72 = arith.mulf %71, %70 : vector<128x128xf32>
    %73 = vector.broadcast %54 : vector<1x128xf32> to vector<128x128xf32>
    %74 = arith.addf %72, %73 : vector<128x128xf32>
    %c0_31 = arith.constant 0 : index
    %c0_32 = arith.constant 0 : index
    %75 = vector.load %arg11[%c0_31, %c0_32] : memref<128x256xf32, #tpu.memory_space<vmem>>, vector<128x256xf32>
    %cst_33 = arith.constant dense<0.000000e+00> : vector<128x256xf32>
    %76 = tpu.matmul %74, %75, %cst_33 {dimension_numbers = #tpu.dot_dimension_numbers<[1], [0], [0], [1], [0, 0, 1, 1], [], []>} : vector<128x128xf32>, vector<128x256xf32>, vector<128x256xf32> -> vector<128x256xf32>
    %c0_34 = arith.constant 0 : index
    %c0_35 = arith.constant 0 : index
    %77 = vector.load %arg12[%c0_34, %c0_35] : memref<1x256xf32, #tpu.memory_space<vmem>>, vector<1x256xf32>
    %78 = vector.broadcast %77 : vector<1x256xf32> to vector<128x256xf32>
    %79 = arith.addf %76, %78 : vector<128x256xf32>
    %cst_36 = arith.constant 0.000000e+00 : f32
    %80 = vector.broadcast %cst_36 : f32 to vector<128x256xf32>
    %81 = arith.maximumf %79, %80 : vector<128x256xf32>
    %c0_37 = arith.constant 0 : index
    %c0_38 = arith.constant 0 : index
    %82 = vector.load %arg13[%c0_37, %c0_38] : memref<256x128xf32, #tpu.memory_space<vmem>>, vector<256x128xf32>
    %cst_39 = arith.constant dense<0.000000e+00> : vector<128x128xf32>
    %83 = tpu.matmul %81, %82, %cst_39 {dimension_numbers = #tpu.dot_dimension_numbers<[1], [0], [0], [1], [0, 0, 1, 1], [], []>} : vector<128x256xf32>, vector<256x128xf32>, vector<128x128xf32> -> vector<128x128xf32>
    %c0_40 = arith.constant 0 : index
    %c0_41 = arith.constant 0 : index
    %84 = vector.load %arg14[%c0_40, %c0_41] : memref<1x128xf32, #tpu.memory_space<vmem>>, vector<1x128xf32>
    %85 = vector.broadcast %84 : vector<1x128xf32> to vector<128x128xf32>
    %86 = arith.addf %83, %85 : vector<128x128xf32>
    %87 = arith.addf %86, %74 : vector<128x128xf32>
    %c0_42 = arith.constant 0 : index
    %c0_43 = arith.constant 0 : index
    %88 = vector.load %arg15[%c0_42, %c0_43] : memref<1x128xf32, #tpu.memory_space<vmem>>, vector<1x128xf32>
    %c0_44 = arith.constant 0 : index
    %c0_45 = arith.constant 0 : index
    %89 = vector.load %arg16[%c0_44, %c0_45] : memref<1x128xf32, #tpu.memory_space<vmem>>, vector<1x128xf32>
    %cst_46 = arith.constant dense<0.000000e+00> : vector<128xf32>
    %90 = vector.multi_reduction <add>, %87, %cst_46 [1] : vector<128x128xf32> to vector<128xf32>
    %91 = vector.shape_cast %90 : vector<128xf32> to vector<128x1xf32>
    %cst_47 = arith.constant 1.280000e+02 : f32
    %92 = vector.broadcast %cst_47 : f32 to vector<128x1xf32>
    %93 = arith.divf %91, %92 : vector<128x1xf32>
    %94 = vector.broadcast %93 : vector<128x1xf32> to vector<128x128xf32>
    %95 = arith.subf %87, %94 : vector<128x128xf32>
    %96 = arith.mulf %95, %95 : vector<128x128xf32>
    %cst_48 = arith.constant dense<0.000000e+00> : vector<128xf32>
    %97 = vector.multi_reduction <add>, %96, %cst_48 [1] : vector<128x128xf32> to vector<128xf32>
    %98 = vector.shape_cast %97 : vector<128xf32> to vector<128x1xf32>
    %cst_49 = arith.constant 1.280000e+02 : f32
    %99 = vector.broadcast %cst_49 : f32 to vector<128x1xf32>
    %100 = arith.divf %98, %99 : vector<128x1xf32>
    %cst_50 = arith.constant 9.99999996E-13 : f32
    %101 = vector.broadcast %cst_50 : f32 to vector<128x1xf32>
    %102 = arith.addf %100, %101 : vector<128x1xf32>
    %103 = math.rsqrt %102 : vector<128x1xf32>
    %104 = vector.broadcast %103 : vector<128x1xf32> to vector<128x128xf32>
    %105 = arith.mulf %95, %104 : vector<128x128xf32>
    %106 = vector.broadcast %88 : vector<1x128xf32> to vector<128x128xf32>
    %107 = arith.mulf %106, %105 : vector<128x128xf32>
    %108 = vector.broadcast %89 : vector<1x128xf32> to vector<128x128xf32>
    %109 = arith.addf %107, %108 : vector<128x128xf32>
    %c0_51 = arith.constant 0 : index
    %c0_52 = arith.constant 0 : index
    %c0_53 = arith.constant 0 : index
    %110 = vector.load %arg17[%c0_51, %c0_52, %c0_53] : memref<1x128x128xf32, #tpu.memory_space<vmem>>, vector<1x128x128xf32>
    %111 = vector.shape_cast %110 : vector<1x128x128xf32> to vector<128x128xf32>
    %112 = vector.shape_cast %109 : vector<128x128xf32> to vector<1x128x128xf32>
    tpu.vector_store %arg17[%c0_51, %c0_52, %c0_53], %112 {strides = array<i32>} : memref<1x128x128xf32, #tpu.memory_space<vmem>>, vector<1x128x128xf32>,
    return
  }
  func.func @transform_0(%arg0: i32, %arg1: i32) -> (i32, i32, i32) {
    %c0_i32 = arith.constant 0 : i32
    %c0_i32_0 = arith.constant 0 : i32
    %c0_i32_1 = arith.constant 0 : i32
    return %arg0, %c0_i32, %c0_i32_0 : i32, i32, i32
  }
  func.func @transform_1(%arg0: i32, %arg1: i32) -> (i32, i32) {
    %c0_i32 = arith.constant 0 : i32
    %c0_i32_0 = arith.constant 0 : i32
    %c0_i32_1 = arith.constant 0 : i32
    return %c0_i32, %c0_i32_0 : i32, i32
  }
  func.func @transform_2(%arg0: i32, %arg1: i32) -> (i32, i32) {
    %c0_i32 = arith.constant 0 : i32
    %c0_i32_0 = arith.constant 0 : i32
    %c0_i32_1 = arith.constant 0 : i32
    return %c0_i32, %c0_i32_0 : i32, i32
  }
  func.func @transform_3(%arg0: i32, %arg1: i32) -> (i32, i32) {
    %c0_i32 = arith.constant 0 : i32
    %c0_i32_0 = arith.constant 0 : i32
    %c0_i32_1 = arith.constant 0 : i32
    return %c0_i32, %c0_i32_0 : i32, i32
  }
  func.func @transform_4(%arg0: i32, %arg1: i32) -> (i32, i32) {
    %c0_i32 = arith.constant 0 : i32
    %c0_i32_0 = arith.constant 0 : i32
    %c0_i32_1 = arith.constant 0 : i32
    return %c0_i32, %c0_i32_0 : i32, i32
  }
  func.func @transform_5(%arg0: i32, %arg1: i32) -> (i32, i32) {
    %c0_i32 = arith.constant 0 : i32
    %c0_i32_0 = arith.constant 0 : i32
    %c0_i32_1 = arith.constant 0 : i32
    return %c0_i32, %c0_i32_0 : i32, i32
  }
  func.func @transform_6(%arg0: i32, %arg1: i32) -> (i32, i32) {
    %c0_i32 = arith.constant 0 : i32
    %c0_i32_0 = arith.constant 0 : i32
    %c0_i32_1 = arith.constant 0 : i32
    return %c0_i32, %c0_i32_0 : i32, i32
  }
  func.func @transform_7(%arg0: i32, %arg1: i32) -> (i32, i32) {
    %c0_i32 = arith.constant 0 : i32
    %c0_i32_0 = arith.constant 0 : i32
    %c0_i32_1 = arith.constant 0 : i32
    return %c0_i32, %c0_i32_0 : i32, i32
  }
  func.func @transform_8(%arg0: i32, %arg1: i32) -> (i32, i32) {
    %c0_i32 = arith.constant 0 : i32
    %c0_i32_0 = arith.constant 0 : i32
    %c0_i32_1 = arith.constant 0 : i32
    return %c0_i32, %c0_i32_0 : i32, i32
  }
  func.func @transform_9(%arg0: i32, %arg1: i32) -> (i32, i32) {
    %c0_i32 = arith.constant 0 : i32
    %c0_i32_0 = arith.constant 0 : i32
    %c0_i32_1 = arith.constant 0 : i32
    return %c0_i32, %c0_i32_0 : i32, i32
  }
  func.func @transform_10(%arg0: i32, %arg1: i32) -> (i32, i32) {
    %c0_i32 = arith.constant 0 : i32
    %c0_i32_0 = arith.constant 0 : i32
    %c0_i32_1 = arith.constant 0 : i32
    return %c0_i32, %c0_i32_0 : i32, i32
  }
  func.func @transform_11(%arg0: i32, %arg1: i32) -> (i32, i32) {
    %c0_i32 = arith.constant 0 : i32
    %c0_i32_0 = arith.constant 0 : i32
    %c0_i32_1 = arith.constant 0 : i32
    return %c0_i32, %c0_i32_0 : i32, i32
  }
  func.func @transform_12(%arg0: i32, %arg1: i32) -> (i32, i32) {
    %c0_i32 = arith.constant 0 : i32
    %c0_i32_0 = arith.constant 0 : i32
    %c0_i32_1 = arith.constant 0 : i32
    return %c0_i32, %c0_i32_0 : i32, i32
  }
  func.func @transform_13(%arg0: i32, %arg1: i32) -> (i32, i32) {
    %c0_i32 = arith.constant 0 : i32
    %c0_i32_0 = arith.constant 0 : i32
    %c0_i32_1 = arith.constant 0 : i32
    return %c0_i32, %c0_i32_0 : i32, i32
  }
  func.func @transform_14(%arg0: i32, %arg1: i32) -> (i32, i32) {
    %c0_i32 = arith.constant 0 : i32
    %c0_i32_0 = arith.constant 0 : i32
    %c0_i32_1 = arith.constant 0 : i32
    return %c0_i32, %c0_i32_0 : i32, i32
  }
  func.func @transform_15(%arg0: i32, %arg1: i32) -> (i32, i32, i32) {
    %c0_i32 = arith.constant 0 : i32
    %c0_i32_0 = arith.constant 0 : i32
    return %arg0, %arg1, %c0_i32 : i32, i32, i32
  }
}

</mosaic_0001>

<llo_original>
// kernel: tpu_custom_call.1
$region0: #{tpu_custom_call.1}
  #allocation0 [shape = 'u32[]', space=smem, size = 0x4, offset = 0x4, fixed_abs, tag = 'smem constant byte address 0x4 - core index']
  #allocation1 [shape = 'u32[144,128]{1,0:T(1,128)}', space=vmem, size = 0x12000, scoped, tag = 'internal scratch']
  #allocation2 [shape = 'f32[4,128,32]{2,1,0:T(8,128)}', space=vmem, size = 0x40000, scoped, tag = 'scratch operand']
  #allocation3 [shape = 'f32[4,128,32]{2,1,0:T(8,128)}', space=vmem, size = 0x40000, scoped, tag = 'scratch operand']
  %s0 = inlined_call_operand.hbm [shape: f32[2,128,128], index: 0, kind: input, shape index: {}]
  %s1 = inlined_call_operand.hbm [shape: f32[128,128], index: 1, kind: input, shape index: {}]
  %s2 = inlined_call_operand.vmem [shape: f32[1,128], index: 2, kind: input, shape index: {}]
  %s3 = inlined_call_operand.hbm [shape: f32[128,256], index: 3, kind: input, shape index: {}]
  %s4 = inlined_call_operand.vmem [shape: f32[1,256], index: 4, kind: input, shape index: {}]
  %s5 = inlined_call_operand.hbm [shape: f32[128,128], index: 5, kind: input, shape index: {}]
  %s6 = inlined_call_operand.vmem [shape: f32[1,128], index: 6, kind: input, shape index: {}]
  %s7 = inlined_call_operand.vmem [shape: f32[1,128], index: 7, kind: input, shape index: {}]
  %s8 = inlined_call_operand.vmem [shape: f32[1,128], index: 8, kind: input, shape index: {}]
  %s9 = inlined_call_operand.hbm [shape: f32[128,256], index: 9, kind: input, shape index: {}]
  %s10 = inlined_call_operand.vmem [shape: f32[1,256], index: 10, kind: input, shape index: {}]
  %s11 = inlined_call_operand.hbm [shape: f32[256,128], index: 11, kind: input, shape index: {}]
  %s12 = inlined_call_operand.vmem [shape: f32[1,128], index: 12, kind: input, shape index: {}]
  %s13 = inlined_call_operand.vmem [shape: f32[1,128], index: 13, kind: input, shape index: {}]
  %s14 = inlined_call_operand.vmem [shape: f32[1,128], index: 14, kind: input, shape index: {}]
  %s15 = inlined_call_operand.hbm [shape: f32[2,128,128], index: 15, kind: output, shape index: {}]
  %s16 = sld [smem:[#allocation0]]
  $region121: #{tpu_custom_call.1} parent=0
    _
  %s18 = ssub.s32 1, %s16
  %s19 = scalar_select 0, %s18, %s16
  $region1: #{tpu_custom_call.1} parent=0
    #allocation4 [shape = 'u8[131072]{0}', space=vmem, size = 0x20000, scoped, tag = 'input window, operand 0']
    #allocation5 [shape = 's32[2]{0}', space=sflag, size = 0x8, scoped, tag = 'scoped memory for tpu_custom_call.1']
    #allocation6 [shape = 's32[2]{0}', space=sflag, size = 0x8, scoped, tag = 'scoped memory for tpu_custom_call.1']
    #allocation7 [shape = 'u8[65536]{0}', space=vmem, size = 0x10000, scoped, tag = 'input window, operand 1, single buffered']
    #allocation8 [shape = 's32[1]{0}', space=sflag, size = 0x4, scoped, tag = 'scoped memory for tpu_custom_call.1']
    #allocation9 [shape = 'u8[131072]{0}', space=vmem, size = 0x20000, scoped, tag = 'input window, operand 3, single buffered']
    #allocation10 [shape = 'u8[65536]{0}', space=vmem, size = 0x10000, scoped, tag = 'input window, operand 5, single buffered']
    #allocation11 [shape = 's32[1]{0}', space=sflag, size = 0x4, scoped, tag = 'scoped memory for tpu_custom_call.1']
    #allocation12 [shape = 'u8[131072]{0}', space=vmem, size = 0x20000, scoped, tag = 'input window, operand 9, single buffered']
    #allocation13 [shape = 'u8[131072]{0}', space=vmem, size = 0x20000, scoped, tag = 'input window, operand 11, single buffered']
    #allocation14 [shape = 's32[1]{0}', space=sflag, size = 0x4, scoped, tag = 'scoped memory for tpu_custom_call.1']
    #allocation15 [shape = 'u8[131072]{0}', space=vmem, size = 0x20000, scoped, tag = 'output window, operand 0']
    %20 = vsyncpa [#allocation5], 0
    %s21 = scalar_lea.sflag [#allocation5], 1
    %22 = vsyncpa %s21, 0
    %23 = vsyncpa [#allocation8], 0
    %24 = vsyncpa [#allocation11], 0
    %25 = vsyncpa [#allocation14], 0
    %26 = vsyncpa [#allocation6], 0
    %s27 = scalar_lea.sflag [#allocation6], 1
    %28 = vsyncpa %s27, 0
    loop: start=0, step=1, limit=4
    $region2: #{tpu_custom_call.1} parent=1 // loop_pre_header
      _
    $region3: #{tpu_custom_call.1} parent=1 // loop_header
      %s30 = sphi 0, %s34
      %p31 = scmp.ge.s32.totalorder %s30, 4
      %s37 = sphi 0, %s49
      %s38 = sphi 0, %s45
      %s39 = sphi 0, %s37
      %s40 = sphi 0, %s38
      %s41 = sphi 0, %s39
      %s42 = sphi 0, %s40
      %s52 = sphi 0, %s54
      %s55 = sphi 0, %s52
      %s56 = sphi 0, %s55
      %s72 = sphi 0, %s56
      %s76 = sphi 0, %s76
      %s78 = sphi 0, %s76
      %s79 = sphi 0, %s78
      %s93 = sphi 0, %s79
      %s97 = sphi 0, %s97
      %s99 = sphi 0, %s97
      %s100 = sphi 0, %s99
      %s114 = sphi 0, %s100
      %s118 = sphi 0, %s118
      %s120 = sphi 0, %s118
      %s121 = sphi 0, %s120
      %s135 = sphi 0, %s121
      %s139 = sphi 0, %s139
      %s141 = sphi 0, %s139
      %s142 = sphi 0, %s141
      %s156 = sphi 0, %s142
      %s160 = sphi 0, %s160
      %s162 = sphi 0, %s160
      %s163 = sphi 0, %s162
      %s177 = sphi 0, %s163
      %s181 = sphi 0, %s181
      %s183 = sphi 0, %s181
      %s184 = sphi 0, %s183
      %s198 = sphi 0, %s184
      %s202 = sphi 0, %s202
      %s204 = sphi 0, %s202
      %s205 = sphi 0, %s204
      %s219 = sphi 0, %s205
      %s223 = sphi 0, %s223
      %s225 = sphi 0, %s223
      %s226 = sphi 0, %s225
      %s240 = sphi 0, %s226
      %s244 = sphi 0, %s244
      %s246 = sphi 0, %s244
      %s247 = sphi 0, %s246
      %s261 = sphi 0, %s247
      %s265 = sphi 0, %s265
      %s267 = sphi 0, %s265
      %s268 = sphi 0, %s267
      %s282 = sphi 0, %s268
      %s286 = sphi 0, %s286
      %s288 = sphi 0, %s286
      %s289 = sphi 0, %s288
      %s303 = sphi 0, %s289
      %s307 = sphi 0, %s307
      %s309 = sphi 0, %s307
      %s310 = sphi 0, %s309
      %s324 = sphi 0, %s310
      %s328 = sphi 0, %s328
      %s330 = sphi 0, %s328
      %s331 = sphi 0, %s330
      %s345 = sphi 0, %s331
      %s349 = sphi 0, %s349
      %s351 = sphi 0, %s349
      %s352 = sphi 0, %s351
      %s366 = sphi 0, %s352
      %s374 = sphi 0, %s376
      %s377 = sphi 0, %s374
      %s378 = sphi 0, %s377
      %s394 = sphi 0, %s378
    $region4: #{tpu_custom_call.1} parent=1 // loop_header_branch
      %33 = sbr.rel (%p31) target = $region8
    $region5: #{tpu_custom_call.1} parent=1 // loop_body
      %s35 = ssub.s32 %s30, 1
      %s36 = ssub.s32 %s30, 2
      %s43 = sadd.s32 1, %s38
      %p44 = scmp.ge.s32.totalorder %s43, 1
      %s45 = scalar_select %p44, 0, %s43
      %s46 = sadd.s32 1, %s37
      %s47 = scalar_select %p44, %s46, %s37
      %p48 = scmp.ge.s32.totalorder %s47, 2
      %s49 = scalar_select %p48, 0, %s47
      %s50 = ssub.s32 %s37, %s49
      %p51 = scmp.eq.s32.totalorder %s50, 0
      %s53 = sadd.s32 %s52, 1
      %s54 = scalar_select %p51, %s52, %s53
      %p57 = pneg %p51
      %p58 = scmp.eq.s32.totalorder %s30, 1
      %p59 = por %p57, %p58
      %p60 = scmp.ne.s32.totalorder %s52, %s55
      %p61 = scmp.eq.s32.totalorder %s30, 0
      %p62 = por %p60, %p61
      %p63 = scmp.ne.s32.totalorder %s52, %s55
      %p64 = scmp.eq.s32.totalorder %s35, 1
      %p65 = por %p63, %p64
      %p66 = scmp.ne.s32.totalorder %s55, %s56
      %p67 = scmp.eq.s32.totalorder %s35, 0
      %p68 = por %p66, %p67
      %p69 = scmp.ne.s32.totalorder %s55, %s56
      %p70 = scmp.eq.s32.totalorder %s36, 1
      %p71 = por %p69, %p70
      %p73 = scmp.ne.s32.totalorder %s56, %s72
      %p74 = scmp.eq.s32.totalorder %s36, 0
      %p75 = por %p73, %p74
      %s77 = sadd.s32 %s76, 1
      %p80 = scmp.eq.s32.totalorder %s30, 1
      %p81 = scmp.ne.s32.totalorder %s76, %s78
      %p82 = scmp.eq.s32.totalorder %s30, 0
      %p83 = por %p81, %p82
      %p84 = scmp.ne.s32.totalorder %s76, %s78
      %p85 = scmp.eq.s32.totalorder %s35, 1
      %p86 = por %p84, %p85
      %p87 = scmp.ne.s32.totalorder %s78, %s79
      %p88 = scmp.eq.s32.totalorder %s35, 0
      %p89 = por %p87, %p88
      %p90 = scmp.ne.s32.totalorder %s78, %s79
      %p91 = scmp.eq.s32.totalorder %s36, 1
      %p92 = por %p90, %p91
      %p94 = scmp.ne.s32.totalorder %s79, %s93
      %p95 = scmp.eq.s32.totalorder %s36, 0
      %p96 = por %p94, %p95
      %s98 = sadd.s32 %s97, 1
      %p101 = scmp.eq.s32.totalorder %s30, 1
      %p102 = scmp.ne.s32.totalorder %s97, %s99
      %p103 = scmp.eq.s32.totalorder %s30, 0
      %p104 = por %p102, %p103
      %p105 = scmp.ne.s32.totalorder %s97, %s99
      %p106 = scmp.eq.s32.totalorder %s35, 1
      %p107 = por %p105, %p106
      %p108 = scmp.ne.s32.totalorder %s99, %s100
      %p109 = scmp.eq.s32.totalorder %s35, 0
      %p110 = por %p108, %p109
      %p111 = scmp.ne.s32.totalorder %s99, %s100
      %p112 = scmp.eq.s32.totalorder %s36, 1
      %p113 = por %p111, %p112
      %p115 = scmp.ne.s32.totalorder %s100, %s114
      %p116 = scmp.eq.s32.totalorder %s36, 0
      %p117 = por %p115, %p116
      %s119 = sadd.s32 %s118, 1
      %p122 = scmp.eq.s32.totalorder %s30, 1
      %p123 = scmp.ne.s32.totalorder %s118, %s120
      %p124 = scmp.eq.s32.totalorder %s30, 0
      %p125 = por %p123, %p124
      %p126 = scmp.ne.s32.totalorder %s118, %s120
      %p127 = scmp.eq.s32.totalorder %s35, 1
      %p128 = por %p126, %p127
      %p129 = scmp.ne.s32.totalorder %s120, %s121
      %p130 = scmp.eq.s32.totalorder %s35, 0
      %p131 = por %p129, %p130
      %p132 = scmp.ne.s32.totalorder %s120, %s121
      %p133 = scmp.eq.s32.totalorder %s36, 1
      %p134 = por %p132, %p133
      %p136 = scmp.ne.s32.totalorder %s121, %s135
      %p137 = scmp.eq.s32.totalorder %s36, 0
      %p138 = por %p136, %p137
      %s140 = sadd.s32 %s139, 1
      %p143 = scmp.eq.s32.totalorder %s30, 1
      %p144 = scmp.ne.s32.totalorder %s139, %s141
      %p145 = scmp.eq.s32.totalorder %s30, 0
      %p146 = por %p144, %p145
      %p147 = scmp.ne.s32.totalorder %s139, %s141
      %p148 = scmp.eq.s32.totalorder %s35, 1
      %p149 = por %p147, %p148
      %p150 = scmp.ne.s32.totalorder %s141, %s142
      %p151 = scmp.eq.s32.totalorder %s35, 0
      %p152 = por %p150, %p151
      %p153 = scmp.ne.s32.totalorder %s141, %s142
      %p154 = scmp.eq.s32.totalorder %s36, 1
      %p155 = por %p153, %p154
      %p157 = scmp.ne.s32.totalorder %s142, %s156
      %p158 = scmp.eq.s32.totalorder %s36, 0
      %p159 = por %p157, %p158
      %s161 = sadd.s32 %s160, 1
      %p164 = scmp.eq.s32.totalorder %s30, 1
      %p165 = scmp.ne.s32.totalorder %s160, %s162
      %p166 = scmp.eq.s32.totalorder %s30, 0
      %p167 = por %p165, %p166
      %p168 = scmp.ne.s32.totalorder %s160, %s162
      %p169 = scmp.eq.s32.totalorder %s35, 1
      %p170 = por %p168, %p169
      %p171 = scmp.ne.s32.totalorder %s162, %s163
      %p172 = scmp.eq.s32.totalorder %s35, 0
      %p173 = por %p171, %p172
      %p174 = scmp.ne.s32.totalorder %s162, %s163
      %p175 = scmp.eq.s32.totalorder %s36, 1
      %p176 = por %p174, %p175
      %p178 = scmp.ne.s32.totalorder %s163, %s177
      %p179 = scmp.eq.s32.totalorder %s36, 0
      %p180 = por %p178, %p179
      %s182 = sadd.s32 %s181, 1
      %p185 = scmp.eq.s32.totalorder %s30, 1
      %p186 = scmp.ne.s32.totalorder %s181, %s183
      %p187 = scmp.eq.s32.totalorder %s30, 0
      %p188 = por %p186, %p187
      %p189 = scmp.ne.s32.totalorder %s181, %s183
      %p190 = scmp.eq.s32.totalorder %s35, 1
      %p191 = por %p189, %p190
      %p192 = scmp.ne.s32.totalorder %s183, %s184
      %p193 = scmp.eq.s32.totalorder %s35, 0
      %p194 = por %p192, %p193
      %p195 = scmp.ne.s32.totalorder %s183, %s184
      %p196 = scmp.eq.s32.totalorder %s36, 1
      %p197 = por %p195, %p196
      %p199 = scmp.ne.s32.totalorder %s184, %s198
      %p200 = scmp.eq.s32.totalorder %s36, 0
      %p201 = por %p199, %p200
      %s203 = sadd.s32 %s202, 1
      %p206 = scmp.eq.s32.totalorder %s30, 1
      %p207 = scmp.ne.s32.totalorder %s202, %s204
      %p208 = scmp.eq.s32.totalorder %s30, 0
      %p209 = por %p207, %p208
      %p210 = scmp.ne.s32.totalorder %s202, %s204
      %p211 = scmp.eq.s32.totalorder %s35, 1
      %p212 = por %p210, %p211
      %p213 = scmp.ne.s32.totalorder %s204, %s205
      %p214 = scmp.eq.s32.totalorder %s35, 0
      %p215 = por %p213, %p214
      %p216 = scmp.ne.s32.totalorder %s204, %s205
      %p217 = scmp.eq.s32.totalorder %s36, 1
      %p218 = por %p216, %p217
      %p220 = scmp.ne.s32.totalorder %s205, %s219
      %p221 = scmp.eq.s32.totalorder %s36, 0
      %p222 = por %p220, %p221
      %s224 = sadd.s32 %s223, 1
      %p227 = scmp.eq.s32.totalorder %s30, 1
      %p228 = scmp.ne.s32.totalorder %s223, %s225
      %p229 = scmp.eq.s32.totalorder %s30, 0
      %p230 = por %p228, %p229
      %p231 = scmp.ne.s32.totalorder %s223, %s225
      %p232 = scmp.eq.s32.totalorder %s35, 1
      %p233 = por %p231, %p232
      %p234 = scmp.ne.s32.totalorder %s225, %s226
      %p235 = scmp.eq.s32.totalorder %s35, 0
      %p236 = por %p234, %p235
      %p237 = scmp.ne.s32.totalorder %s225, %s226
      %p238 = scmp.eq.s32.totalorder %s36, 1
      %p239 = por %p237, %p238
      %p241 = scmp.ne.s32.totalorder %s226, %s240
      %p242 = scmp.eq.s32.totalorder %s36, 0
      %p243 = por %p241, %p242
      %s245 = sadd.s32 %s244, 1
      %p248 = scmp.eq.s32.totalorder %s30, 1
      %p249 = scmp.ne.s32.totalorder %s244, %s246
      %p250 = scmp.eq.s32.totalorder %s30, 0
      %p251 = por %p249, %p250
      %p252 = scmp.ne.s32.totalorder %s244, %s246
      %p253 = scmp.eq.s32.totalorder %s35, 1
      %p254 = por %p252, %p253
      %p255 = scmp.ne.s32.totalorder %s246, %s247
      %p256 = scmp.eq.s32.totalorder %s35, 0
      %p257 = por %p255, %p256
      %p258 = scmp.ne.s32.totalorder %s246, %s247
      %p259 = scmp.eq.s32.totalorder %s36, 1
      %p260 = por %p258, %p259
      %p262 = scmp.ne.s32.totalorder %s247, %s261
      %p263 = scmp.eq.s32.totalorder %s36, 0
      %p264 = por %p262, %p263
      %s266 = sadd.s32 %s265, 1
      %p269 = scmp.eq.s32.totalorder %s30, 1
      %p270 = scmp.ne.s32.totalorder %s265, %s267
      %p271 = scmp.eq.s32.totalorder %s30, 0
      %p272 = por %p270, %p271
      %p273 = scmp.ne.s32.totalorder %s265, %s267
      %p274 = scmp.eq.s32.totalorder %s35, 1
      %p275 = por %p273, %p274
      %p276 = scmp.ne.s32.totalorder %s267, %s268
      %p277 = scmp.eq.s32.totalorder %s35, 0
      %p278 = por %p276, %p277
      %p279 = scmp.ne.s32.totalorder %s267, %s268
      %p280 = scmp.eq.s32.totalorder %s36, 1
      %p281 = por %p279, %p280
      %p283 = scmp.ne.s32.totalorder %s268, %s282
      %p284 = scmp.eq.s32.totalorder %s36, 0
      %p285 = por %p283, %p284
      %s287 = sadd.s32 %s286, 1
      %p290 = scmp.eq.s32.totalorder %s30, 1
      %p291 = scmp.ne.s32.totalorder %s286, %s288
      %p292 = scmp.eq.s32.totalorder %s30, 0
      %p293 = por %p291, %p292
      %p294 = scmp.ne.s32.totalorder %s286, %s288
      %p295 = scmp.eq.s32.totalorder %s35, 1
      %p296 = por %p294, %p295
      %p297 = scmp.ne.s32.totalorder %s288, %s289
      %p298 = scmp.eq.s32.totalorder %s35, 0
      %p299 = por %p297, %p298
      %p300 = scmp.ne.s32.totalorder %s288, %s289
      %p301 = scmp.eq.s32.totalorder %s36, 1
      %p302 = por %p300, %p301
      %p304 = scmp.ne.s32.totalorder %s289, %s303
      %p305 = scmp.eq.s32.totalorder %s36, 0
      %p306 = por %p304, %p305
      %s308 = sadd.s32 %s307, 1
      %p311 = scmp.eq.s32.totalorder %s30, 1
      %p312 = scmp.ne.s32.totalorder %s307, %s309
      %p313 = scmp.eq.s32.totalorder %s30, 0
      %p314 = por %p312, %p313
      %p315 = scmp.ne.s32.totalorder %s307, %s309
      %p316 = scmp.eq.s32.totalorder %s35, 1
      %p317 = por %p315, %p316
      %p318 = scmp.ne.s32.totalorder %s309, %s310
      %p319 = scmp.eq.s32.totalorder %s35, 0
      %p320 = por %p318, %p319
      %p321 = scmp.ne.s32.totalorder %s309, %s310
      %p322 = scmp.eq.s32.totalorder %s36, 1
      %p323 = por %p321, %p322
      %p325 = scmp.ne.s32.totalorder %s310, %s324
      %p326 = scmp.eq.s32.totalorder %s36, 0
      %p327 = por %p325, %p326
      %s329 = sadd.s32 %s328, 1
      %p332 = scmp.eq.s32.totalorder %s30, 1
      %p333 = scmp.ne.s32.totalorder %s328, %s330
      %p334 = scmp.eq.s32.totalorder %s30, 0
      %p335 = por %p333, %p334
      %p336 = scmp.ne.s32.totalorder %s328, %s330
      %p337 = scmp.eq.s32.totalorder %s35, 1
      %p338 = por %p336, %p337
      %p339 = scmp.ne.s32.totalorder %s330, %s331
      %p340 = scmp.eq.s32.totalorder %s35, 0
      %p341 = por %p339, %p340
      %p342 = scmp.ne.s32.totalorder %s330, %s331
      %p343 = scmp.eq.s32.totalorder %s36, 1
      %p344 = por %p342, %p343
      %p346 = scmp.ne.s32.totalorder %s331, %s345
      %p347 = scmp.eq.s32.totalorder %s36, 0
      %p348 = por %p346, %p347
      %s350 = sadd.s32 %s349, 1
      %p353 = scmp.eq.s32.totalorder %s30, 1
      %p354 = scmp.ne.s32.totalorder %s349, %s351
      %p355 = scmp.eq.s32.totalorder %s30, 0
      %p356 = por %p354, %p355
      %p357 = scmp.ne.s32.totalorder %s349, %s351
      %p358 = scmp.eq.s32.totalorder %s35, 1
      %p359 = por %p357, %p358
      %p360 = scmp.ne.s32.totalorder %s351, %s352
      %p361 = scmp.eq.s32.totalorder %s35, 0
      %p362 = por %p360, %p361
      %p363 = scmp.ne.s32.totalorder %s351, %s352
      %p364 = scmp.eq.s32.totalorder %s36, 1
      %p365 = por %p363, %p364
      %p367 = scmp.ne.s32.totalorder %s352, %s366
      %p368 = scmp.eq.s32.totalorder %s36, 0
      %p369 = por %p367, %p368
      %s370 = ssub.s32 %s37, %s49
      %s371 = ssub.s32 %s38, %s45
      %s372 = sor.u32 %s370, %s371
      %p373 = scmp.eq.s32.totalorder %s372, 0
      %s375 = sadd.s32 %s374, 1
      %s376 = scalar_select %p373, %s374, %s375
      %p379 = pneg %p373
      %p380 = scmp.eq.s32.totalorder %s30, 1
      %p381 = por %p379, %p380
      %p382 = scmp.ne.s32.totalorder %s374, %s377
      %p383 = scmp.eq.s32.totalorder %s30, 0
      %p384 = por %p382, %p383
      %p385 = scmp.ne.s32.totalorder %s374, %s377
      %p386 = scmp.eq.s32.totalorder %s35, 1
      %p387 = por %p385, %p386
      %p388 = scmp.ne.s32.totalorder %s377, %s378
      %p389 = scmp.eq.s32.totalorder %s35, 0
      %p390 = por %p388, %p389
      %p391 = scmp.ne.s32.totalorder %s377, %s378
      %p392 = scmp.eq.s32.totalorder %s36, 1
      %p393 = por %p391, %p392
      %p395 = scmp.ne.s32.totalorder %s378, %s394
      %p396 = scmp.eq.s32.totalorder %s36, 0
      %p397 = por %p395, %p396
      %p398 = scmp.le.s32.totalorder 1, %s30
      %p399 = scmp.lt.s32.totalorder %s30, 3
      %p400 = pnand %p398, %p399
      %p401 = pneg %p400
      // Predicated region
      $region9: #{tpu_custom_call.1} parent=5 // pred_check
        _
      $region10: #{tpu_custom_call.1} parent=5 // pred_check_branch
        %403 = sbr.rel (%p400) target = $region12
      $region11: #{tpu_custom_call.1} parent=5 // pred_region
        %s404 = ssub.s32 %s30, 1
        // Predicated region
        $region13: #{tpu_custom_call.1} parent=11 // pred_check
          %p405 = pneg %p89
        $region14: #{tpu_custom_call.1} parent=11 // pred_check_branch
          %407 = sbr.rel (%p405) target = $region16
        $region15: #{tpu_custom_call.1} parent=11 // pred_region
          %s409 = ssub.s32 2048, 2048
          %410 = vsyncadd [#allocation8], %s409
          %s411 = sshll.u32 [#allocation7], 4
          %s412 = int_to_ptr.vmem [resolvable:$true] %s411
          %417 = dma.hbm_to_vmem [thread:$0]  %s1, 2048, %s412, [#allocation8], 128, 128, 8
        $region16: #{tpu_custom_call.1} parent=11 // pred_fallthru
          _
        // Predicated region
        $region17: #{tpu_custom_call.1} parent=11 // pred_check
          %p418 = pneg %p110
        $region18: #{tpu_custom_call.1} parent=11 // pred_check_branch
          %420 = sbr.rel (%p418) target = $region20
        $region19: #{tpu_custom_call.1} parent=11 // pred_region
          _
        $region20: #{tpu_custom_call.1} parent=11 // pred_fallthru
          _
        // Predicated region
        $region21: #{tpu_custom_call.1} parent=11 // pred_check
          %p421 = pneg %p131
        $region22: #{tpu_custom_call.1} parent=11 // pred_check_branch
          %423 = sbr.rel (%p421) target = $region24
        $region23: #{tpu_custom_call.1} parent=11 // pred_region
          %s425 = ssub.s32 4096, 4096
          %426 = vsyncadd [#allocation8], %s425
          %s427 = sshll.u32 [#allocation9], 4
          %s428 = int_to_ptr.vmem [resolvable:$true] %s427
          %433 = dma.hbm_to_vmem [thread:$0]  %s3, 4096, %s428, [#allocation8], 256, 256, 16
        $region24: #{tpu_custom_call.1} parent=11 // pred_fallthru
          _
        // Predicated region
        $region25: #{tpu_custom_call.1} parent=11 // pred_check
          %p434 = pneg %p152
        $region26: #{tpu_custom_call.1} parent=11 // pred_check_branch
          %436 = sbr.rel (%p434) target = $region28
        $region27: #{tpu_custom_call.1} parent=11 // pred_region
          _
        $region28: #{tpu_custom_call.1} parent=11 // pred_fallthru
          _
        // Predicated region
        $region29: #{tpu_custom_call.1} parent=11 // pred_check
          %p437 = pneg %p173
        $region30: #{tpu_custom_call.1} parent=11 // pred_check_branch
          %439 = sbr.rel (%p437) target = $region32
        $region31: #{tpu_custom_call.1} parent=11 // pred_region
          %s441 = ssub.s32 2048, 2048
          %442 = vsyncadd [#allocation11], %s441
          %s443 = sshll.u32 [#allocation10], 4
          %s444 = int_to_ptr.vmem [resolvable:$true] %s443
          %449 = dma.hbm_to_vmem [thread:$0]  %s5, 2048, %s444, [#allocation11], 128, 128, 8
        $region32: #{tpu_custom_call.1} parent=11 // pred_fallthru
          _
        // Predicated region
        $region33: #{tpu_custom_call.1} parent=11 // pred_check
          %p450 = pneg %p194
        $region34: #{tpu_custom_call.1} parent=11 // pred_check_branch
          %452 = sbr.rel (%p450) target = $region36
        $region35: #{tpu_custom_call.1} parent=11 // pred_region
          _
        $region36: #{tpu_custom_call.1} parent=11 // pred_fallthru
          _
        // Predicated region
        $region37: #{tpu_custom_call.1} parent=11 // pred_check
          %p453 = pneg %p215
        $region38: #{tpu_custom_call.1} parent=11 // pred_check_branch
          %455 = sbr.rel (%p453) target = $region40
        $region39: #{tpu_custom_call.1} parent=11 // pred_region
          _
        $region40: #{tpu_custom_call.1} parent=11 // pred_fallthru
          _
        // Predicated region
        $region41: #{tpu_custom_call.1} parent=11 // pred_check
          %p456 = pneg %p236
        $region42: #{tpu_custom_call.1} parent=11 // pred_check_branch
          %458 = sbr.rel (%p456) target = $region44
        $region43: #{tpu_custom_call.1} parent=11 // pred_region
          _
        $region44: #{tpu_custom_call.1} parent=11 // pred_fallthru
          _
        // Predicated region
        $region45: #{tpu_custom_call.1} parent=11 // pred_check
          %p459 = pneg %p257
        $region46: #{tpu_custom_call.1} parent=11 // pred_check_branch
          %461 = sbr.rel (%p459) target = $region48
        $region47: #{tpu_custom_call.1} parent=11 // pred_region
          %s463 = ssub.s32 4096, 4096
          %464 = vsyncadd [#allocation11], %s463
          %s465 = sshll.u32 [#allocation12], 4
          %s466 = int_to_ptr.vmem [resolvable:$true] %s465
          %471 = dma.hbm_to_vmem [thread:$0]  %s9, 4096, %s466, [#allocation11], 256, 256, 16
        $region48: #{tpu_custom_call.1} parent=11 // pred_fallthru
          _
        // Predicated region
        $region49: #{tpu_custom_call.1} parent=11 // pred_check
          %p472 = pneg %p278
        $region50: #{tpu_custom_call.1} parent=11 // pred_check_branch
          %474 = sbr.rel (%p472) target = $region52
        $region51: #{tpu_custom_call.1} parent=11 // pred_region
          _
        $region52: #{tpu_custom_call.1} parent=11 // pred_fallthru
          _
        // Predicated region
        $region53: #{tpu_custom_call.1} parent=11 // pred_check
          %p475 = pneg %p299
        $region54: #{tpu_custom_call.1} parent=11 // pred_check_branch
          %477 = sbr.rel (%p475) target = $region56
        $region55: #{tpu_custom_call.1} parent=11 // pred_region
          %s479 = ssub.s32 4096, 4096
          %480 = vsyncadd [#allocation14], %s479
          %s481 = sshll.u32 [#allocation13], 4
          %s482 = int_to_ptr.vmem [resolvable:$true] %s481
          %487 = dma.hbm_to_vmem [thread:$0]  %s11, 4096, %s482, [#allocation14], 128, 128, 8
        $region56: #{tpu_custom_call.1} parent=11 // pred_fallthru
          _
        // Predicated region
        $region57: #{tpu_custom_call.1} parent=11 // pred_check
          %p488 = pneg %p320
        $region58: #{tpu_custom_call.1} parent=11 // pred_check_branch
          %490 = sbr.rel (%p488) target = $region60
        $region59: #{tpu_custom_call.1} parent=11 // pred_region
          _
        $region60: #{tpu_custom_call.1} parent=11 // pred_fallthru
          _
        // Predicated region
        $region61: #{tpu_custom_call.1} parent=11 // pred_check
          %p491 = pneg %p341
        $region62: #{tpu_custom_call.1} parent=11 // pred_check_branch
          %493 = sbr.rel (%p491) target = $region64
        $region63: #{tpu_custom_call.1} parent=11 // pred_region
          _
        $region64: #{tpu_custom_call.1} parent=11 // pred_fallthru
          _
        // Predicated region
        $region65: #{tpu_custom_call.1} parent=11 // pred_check
          %p494 = pneg %p362
        $region66: #{tpu_custom_call.1} parent=11 // pred_check_branch
          %496 = sbr.rel (%p494) target = $region68
        $region67: #{tpu_custom_call.1} parent=11 // pred_region
          _
        $region68: #{tpu_custom_call.1} parent=11 // pred_fallthru
          _
      $region12: #{tpu_custom_call.1} parent=5 // pred_fallthru
        _
      %p497 = scmp.lt.s32.totalorder %s30, 2
      // Predicated region
      $region69: #{tpu_custom_call.1} parent=5 // pred_check
        %p498 = pneg %p497
      $region70: #{tpu_custom_call.1} parent=5 // pred_check_branch
        %500 = sbr.rel (%p498) target = $region72
      $region71: #{tpu_custom_call.1} parent=5 // pred_region
        // Predicated region
        $region73: #{tpu_custom_call.1} parent=71 // pred_check
          %p501 = pneg %p62
        $region74: #{tpu_custom_call.1} parent=71 // pred_check_branch
          %503 = sbr.rel (%p501) target = $region76
        $region75: #{tpu_custom_call.1} parent=71 // pred_region
          %s504 = sand.u32 %s52, 1
          %s505 = scalar_lea.sflag [#allocation5], %s504
          %s506 = sand.u32 %s52, 1
          %s507 = smul.addr %s506, 128
          %s508 = scalar_lea.vmem [#allocation4], %s507
          %s510 = ssub.s32 2048, 2048
          %511 = vsyncadd %s505, %s510
          %s512 = smul.addr %s37, 16
          %s513 = smul.addr %s512, 128
          %s514 = scalar_lea.hbm %s0, %s513
          %s515 = sshll.u32 %s508, 4
          %s516 = int_to_ptr.vmem [resolvable:$true] %s515
          %521 = dma.hbm_to_vmem [thread:$0]  %s514, 2048, %s516, %s505, 128, 128, 8
        $region76: #{tpu_custom_call.1} parent=71 // pred_fallthru
          _
      $region72: #{tpu_custom_call.1} parent=5 // pred_fallthru
        _
      %p522 = scmp.le.s32.totalorder 1, %s30
      %p523 = scmp.lt.s32.totalorder %s30, 3
      %p524 = pnand %p522, %p523
      %p525 = pneg %p524
      // Predicated region
      $region77: #{tpu_custom_call.1} parent=5 // pred_check
        _
      $region78: #{tpu_custom_call.1} parent=5 // pred_check_branch
        %527 = sbr.rel (%p524) target = $region80
      $region79: #{tpu_custom_call.1} parent=5 // pred_region
        %s528 = ssub.s32 %s30, 1
        %s529 = sand.u32 %s55, 1
        %s530 = scalar_lea.sflag [#allocation5], %s529
        %s531 = sand.u32 %s55, 1
        %s532 = smul.addr %s531, 128
        %s533 = scalar_lea.vmem [#allocation4], %s532
        // Predicated region
        $region81: #{tpu_custom_call.1} parent=79 // pred_check
          %p534 = pneg %p68
        $region82: #{tpu_custom_call.1} parent=79 // pred_check_branch
          %536 = sbr.rel (%p534) target = $region84
        $region83: #{tpu_custom_call.1} parent=79 // pred_region
          %537 = dma.done %s530, 2048
        $region84: #{tpu_custom_call.1} parent=79 // pred_fallthru
          _
        // Predicated region
        $region85: #{tpu_custom_call.1} parent=79 // pred_check
          %p538 = pneg %p89
        $region86: #{tpu_custom_call.1} parent=79 // pred_check_branch
          %540 = sbr.rel (%p538) target = $region88
        $region87: #{tpu_custom_call.1} parent=79 // pred_region
          %541 = dma.done [#allocation8], 2048
        $region88: #{tpu_custom_call.1} parent=79 // pred_fallthru
          _
        // Predicated region
        $region89: #{tpu_custom_call.1} parent=79 // pred_check
          %p542 = pneg %p131
        $region90: #{tpu_custom_call.1} parent=79 // pred_check_branch
          %544 = sbr.rel (%p542) target = $region92
        $region91: #{tpu_custom_call.1} parent=79 // pred_region
          %545 = dma.done [#allocation8], 4096
        $region92: #{tpu_custom_call.1} parent=79 // pred_fallthru
          _
        // Predicated region
        $region93: #{tpu_custom_call.1} parent=79 // pred_check
          %p546 = pneg %p173
        $region94: #{tpu_custom_call.1} parent=79 // pred_check_branch
          %548 = sbr.rel (%p546) target = $region96
        $region95: #{tpu_custom_call.1} parent=79 // pred_region
          %549 = dma.done [#allocation11], 2048
        $region96: #{tpu_custom_call.1} parent=79 // pred_fallthru
          _
        // Predicated region
        $region97: #{tpu_custom_call.1} parent=79 // pred_check
          %p550 = pneg %p257
        $region98: #{tpu_custom_call.1} parent=79 // pred_check_branch
          %552 = sbr.rel (%p550) target = $region100
        $region99: #{tpu_custom_call.1} parent=79 // pred_region
          %553 = dma.done [#allocation11], 4096
        $region100: #{tpu_custom_call.1} parent=79 // pred_fallthru
          _
        // Predicated region
        $region101: #{tpu_custom_call.1} parent=79 // pred_check
          %p554 = pneg %p299
        $region102: #{tpu_custom_call.1} parent=79 // pred_check_branch
          %556 = sbr.rel (%p554) target = $region104
        $region103: #{tpu_custom_call.1} parent=79 // pred_region
          %557 = dma.done [#allocation14], 4096
        $region104: #{tpu_custom_call.1} parent=79 // pred_fallthru
          _
        %s558 = sand.u32 %s55, 1
        %s559 = scalar_lea.sflag [#allocation5], %s558
        %s560 = sand.u32 %s55, 1
        %s561 = smul.addr %s560, 128
        %s562 = scalar_lea.vmem [#allocation4], %s561
        %p563 = pneg %p68
        %p564 = pneg %p65
        %p565 = pneg %p89
        %p566 = pneg %p86
        %p567 = pneg %p110
        %p568 = pneg %p107
        %p569 = pneg %p131
        %p570 = pneg %p128
        %p571 = pneg %p152
        %p572 = pneg %p149
        %p573 = pneg %p173
        %p574 = pneg %p170
        %p575 = pneg %p194
        %p576 = pneg %p191
        %p577 = pneg %p215
        %p578 = pneg %p212
        %p579 = pneg %p236
        %p580 = pneg %p233
        %p581 = pneg %p257
        %p582 = pneg %p254
        %p583 = pneg %p278
        %p584 = pneg %p275
        %p585 = pneg %p299
        %p586 = pneg %p296
        %p587 = pneg %p320
        %p588 = pneg %p317
        %p589 = pneg %p341
        %p590 = pneg %p338
        %p591 = pneg %p362
        %p592 = pneg %p359
        %p593 = pneg %p390
        %p594 = pneg %p387
        %s595 = sand.u32 %s377, 1
        %s596 = scalar_lea.sflag [#allocation6], %s595
        %s597 = sand.u32 %s377, 1
        %s598 = smul.addr %s597, 128
        %s599 = scalar_lea.vmem [#allocation15], %s598
        %s600 = smul.u32 16, %s40
        %p601 = scmp.eq.s32.totalorder %s40, 0
        // Predicated region
        $region105: #{tpu_custom_call.1} parent=79 // pred_check
          %p602 = pneg %p601
        $region106: #{tpu_custom_call.1} parent=79 // pred_check_branch
          %604 = sbr.rel (%p602) target = $region108
        $region107: #{tpu_custom_call.1} parent=79 // pred_region
          %v605 = vld [vmem:[%s533] sm:$0xff]
          %v606 = vld [vmem:[%s533 + $0x8] sm:$0xff]
          %v607 = vld [vmem:[%s533 + $0x10] sm:$0xff]
          %v608 = vld [vmem:[%s533 + $0x18] sm:$0xff]
          %v609 = vld [vmem:[%s533 + $0x20] sm:$0xff]
          %v610 = vld [vmem:[%s533 + $0x28] sm:$0xff]
          %v611 = vld [vmem:[%s533 + $0x30] sm:$0xff]
          %v612 = vld [vmem:[%s533 + $0x38] sm:$0xff]
          %v613 = vld [vmem:[%s533 + $0x40] sm:$0xff]
          %v614 = vld [vmem:[%s533 + $0x48] sm:$0xff]
          %v615 = vld [vmem:[%s533 + $0x50] sm:$0xff]
          %v616 = vld [vmem:[%s533 + $0x58] sm:$0xff]
          %v617 = vld [vmem:[%s533 + $0x60] sm:$0xff]
          %v618 = vld [vmem:[%s533 + $0x68] sm:$0xff]
          %v619 = vld [vmem:[%s533 + $0x70] sm:$0xff]
          %v620 = vld [vmem:[%s533 + $0x78] sm:$0xff]
          %v621 = vld [vmem:[#allocation9] sm:$0xff]
          %v622 = vld [vmem:[#allocation9 + $0x8] sm:$0xff]
          %v623 = vld [vmem:[#allocation9 + $0x10] sm:$0xff]
          %v624 = vld [vmem:[#allocation9 + $0x18] sm:$0xff]
          %v625 = vld [vmem:[#allocation9 + $0x20] sm:$0xff]
          %v626 = vld [vmem:[#allocation9 + $0x28] sm:$0xff]
          %v627 = vld [vmem:[#allocation9 + $0x30] sm:$0xff]
          %v628 = vld [vmem:[#allocation9 + $0x38] sm:$0xff]
          %v629 = vld [vmem:[#allocation9 + $0x40] sm:$0xff]
          %v630 = vld [vmem:[#allocation9 + $0x48] sm:$0xff]
          %v631 = vld [vmem:[#allocation9 + $0x50] sm:$0xff]
          %v632 = vld [vmem:[#allocation9 + $0x58] sm:$0xff]
          %v633 = vld [vmem:[#allocation9 + $0x60] sm:$0xff]
          %v634 = vld [vmem:[#allocation9 + $0x68] sm:$0xff]
          %v635 = vld [vmem:[#allocation9 + $0x70] sm:$0xff]
          %v636 = vld [vmem:[#allocation9 + $0x78] sm:$0xff]
          %v637 = vld [vmem:[#allocation9 + $0x80] sm:$0xff]
          %v638 = vld [vmem:[#allocation9 + $0x88] sm:$0xff]
          %v639 = vld [vmem:[#allocation9 + $0x90] sm:$0xff]
          %v640 = vld [vmem:[#allocation9 + $0x98] sm:$0xff]
          %v641 = vld [vmem:[#allocation9 + $0xa0] sm:$0xff]
          %v642 = vld [vmem:[#allocation9 + $0xa8] sm:$0xff]
          %v643 = vld [vmem:[#allocation9 + $0xb0] sm:$0xff]
          %v644 = vld [vmem:[#allocation9 + $0xb8] sm:$0xff]
          %v645 = vld [vmem:[#allocation9 + $0xc0] sm:$0xff]
          %v646 = vld [vmem:[#allocation9 + $0xc8] sm:$0xff]
          %v647 = vld [vmem:[#allocation9 + $0xd0] sm:$0xff]
          %v648 = vld [vmem:[#allocation9 + $0xd8] sm:$0xff]
          %v649 = vld [vmem:[#allocation9 + $0xe0] sm:$0xff]
          %v650 = vld [vmem:[#allocation9 + $0xe8] sm:$0xff]
          %v651 = vld [vmem:[#allocation9 + $0xf0] sm:$0xff]
          %v652 = vld [vmem:[#allocation9 + $0xf8] sm:$0xff]
          %v653 = vld [vmem:[%s4] sm:$0x3]
          %v655 = vlaneseq
          %v656 = vshrl.u32 %v655, 7
          %v657 = vsub.s32 0, %v656
          %v658 = vrot.slane %v653, %v657
          %v659 = vlaneseq
          %v660 = vshrl.u32 %v659, 7
          %v661 = vsub.s32 1, %v660
          %v662 = vrot.slane %v653, %v661
          %665 = vmatprep.subr.mxu0 %v622
          %666 = vmatpush1.msra.mxu0 %v621
          %667 = vmatprep.subr.mxu0 %v624
          %668 = vmatpush1.msra.mxu0 %v623
          %669 = vmatprep.subr.mxu0 %v626
          %670 = vmatpush1.msra.mxu0 %v625
          %671 = vmatprep.subr.mxu0 %v628
          %672 = vmatpush1.msra.mxu0 %v627
          %673 = vmatprep.subr.mxu0 %v630
          %674 = vmatpush1.msra.mxu0 %v629
          %675 = vmatprep.subr.mxu0 %v632
          %676 = vmatpush1.msra.mxu0 %v631
          %677 = vmatprep.subr.mxu0 %v634
          %678 = vmatpush1.msra.mxu0 %v633
          %679 = vmatprep.subr.mxu0 %v636
          %680 = vmatpush1.msra.mxu0 %v635
          %681 = vmatprep.subr.mxu0 %v638
          %682 = vmatpush1.msra.mxu0 %v637
          %683 = vmatprep.subr.mxu0 %v640
          %684 = vmatpush1.msra.mxu0 %v639
          %685 = vmatprep.subr.mxu0 %v642
          %686 = vmatpush1.msra.mxu0 %v641
          %687 = vmatprep.subr.mxu0 %v644
          %688 = vmatpush1.msra.mxu0 %v643
          %689 = vmatprep.subr.mxu0 %v646
          %690 = vmatpush1.msra.mxu0 %v645
          %691 = vmatprep.subr.mxu0 %v648
          %692 = vmatpush1.msra.mxu0 %v647
          %693 = vmatprep.subr.mxu0 %v650
          %694 = vmatpush1.msra.mxu0 %v649
          %695 = vmatprep.subr.mxu0 %v652
          %696 = vmatpush1.msra.mxu0 %v651
          %697 = vmatprep.subr.mxu0 0.0
          %698 = vmatpush1.msra.mxu0 0.0
          %699 = vmatprep.subr.mxu0 0.0
          %700 = vmatpush1.msra.mxu0 0.0
          %701 = vmatprep.subr.mxu0 0.0
          %702 = vmatpush1.msra.mxu0 0.0
          %703 = vmatprep.subr.mxu0 0.0
          %704 = vmatpush1.msra.mxu0 0.0
          %705 = vmatprep.subr.mxu0 0.0
          %706 = vmatpush1.msra.mxu0 0.0
          %707 = vmatprep.subr.mxu0 0.0
          %708 = vmatpush1.msra.mxu0 0.0
          %709 = vmatprep.subr.mxu0 0.0
          %710 = vmatpush1.msra.mxu0 0.0
          %711 = vmatprep.subr.mxu0 0.0
          %712 = vmatpush1.msra.mxu0 0.0
          %713 = vmatprep.subr.mxu0 0.0
          %714 = vmatpush1.msra.mxu0 0.0
          %715 = vmatprep.subr.mxu0 0.0
          %716 = vmatpush1.msra.mxu0 0.0
          %717 = vmatprep.subr.mxu0 0.0
          %718 = vmatpush1.msra.mxu0 0.0
          %719 = vmatprep.subr.mxu0 0.0
          %720 = vmatpush1.msra.mxu0 0.0
          %721 = vmatprep.subr.mxu0 0.0
          %722 = vmatpush1.msra.mxu0 0.0
          %723 = vmatprep.subr.mxu0 0.0
          %724 = vmatpush1.msra.mxu0 0.0
          %725 = vmatprep.subr.mxu0 0.0
          %726 = vmatpush1.msra.mxu0 0.0
          %727 = vmatprep.subr.mxu0 0.0
          %728 = vmatpush1.msra.mxu0 0.0
          %729 = vmatprep.mubr.f32.mxu0 0.0
          %730 = vmatmul.mubr.f32.gmra.mrb[0].mxu0 %v605
          %v731 = vpop.f32.mrb[0].mxu0
          %v732 = vadd.f32 %v658, %v731
          %v733 = vpop.f32.mrb[0].mxu0
          %v734 = vadd.f32 %v662, %v733
          %735 = vmatprep.mubr.f32.mxu0 0.0
          %736 = vmatmul.mubr.f32.gmra.mrb[0].mxu0 %v606
          %v737 = vpop.f32.mrb[0].mxu0
          %v738 = vadd.f32 %v658, %v737
          %v739 = vpop.f32.mrb[0].mxu0
          %v740 = vadd.f32 %v662, %v739
          %741 = vmatprep.mubr.f32.mxu0 0.0
          %742 = vmatmul.mubr.f32.gmra.mrb[0].mxu0 %v607
          %v743 = vpop.f32.mrb[0].mxu0
          %v744 = vadd.f32 %v658, %v743
          %v745 = vpop.f32.mrb[0].mxu0
          %v746 = vadd.f32 %v662, %v745
          %747 = vmatprep.mubr.f32.mxu0 0.0
          %748 = vmatmul.mubr.f32.gmra.mrb[0].mxu0 %v608
          %v749 = vpop.f32.mrb[0].mxu0
          %v750 = vadd.f32 %v658, %v749
          %v751 = vpop.f32.mrb[0].mxu0
          %v752 = vadd.f32 %v662, %v751
          %753 = vmatprep.mubr.f32.mxu0 0.0
          %754 = vmatmul.mubr.f32.gmra.mrb[0].mxu0 %v609
          %v755 = vpop.f32.mrb[0].mxu0
          %v756 = vadd.f32 %v658, %v755
          %v757 = vpop.f32.mrb[0].mxu0
          %v758 = vadd.f32 %v662, %v757
          %759 = vmatprep.mubr.f32.mxu0 0.0
          %760 = vmatmul.mubr.f32.gmra.mrb[0].mxu0 %v610
          %v761 = vpop.f32.mrb[0].mxu0
          %v762 = vadd.f32 %v658, %v761
          %v763 = vpop.f32.mrb[0].mxu0
          %v764 = vadd.f32 %v662, %v763
          %765 = vmatprep.mubr.f32.mxu0 0.0
          %766 = vmatmul.mubr.f32.gmra.mrb[0].mxu0 %v611
          %v767 = vpop.f32.mrb[0].mxu0
          %v768 = vadd.f32 %v658, %v767
          %v769 = vpop.f32.mrb[0].mxu0
          %v770 = vadd.f32 %v662, %v769
          %771 = vmatprep.mubr.f32.mxu0 0.0
          %772 = vmatmul.mubr.f32.gmra.mrb[0].mxu0 %v612
          %v773 = vpop.f32.mrb[0].mxu0
          %v774 = vadd.f32 %v658, %v773
          %v775 = vpop.f32.mrb[0].mxu0
          %v776 = vadd.f32 %v662, %v775
          %777 = vmatprep.mubr.f32.mxu0 0.0
          %778 = vmatmul.mubr.f32.gmra.mrb[0].mxu0 %v613
          %v779 = vpop.f32.mrb[0].mxu0
          %v780 = vadd.f32 %v658, %v779
          %v781 = vpop.f32.mrb[0].mxu0
          %v782 = vadd.f32 %v662, %v781
          %783 = vmatprep.mubr.f32.mxu0 0.0
          %784 = vmatmul.mubr.f32.gmra.mrb[0].mxu0 %v614
          %v785 = vpop.f32.mrb[0].mxu0
          %v786 = vadd.f32 %v658, %v785
          %v787 = vpop.f32.mrb[0].mxu0
          %v788 = vadd.f32 %v662, %v787
          %789 = vmatprep.mubr.f32.mxu0 0.0
          %790 = vmatmul.mubr.f32.gmra.mrb[0].mxu0 %v615
          %v791 = vpop.f32.mrb[0].mxu0
          %v792 = vadd.f32 %v658, %v791
          %v793 = vpop.f32.mrb[0].mxu0
          %v794 = vadd.f32 %v662, %v793
          %795 = vmatprep.mubr.f32.mxu0 0.0
          %796 = vmatmul.mubr.f32.gmra.mrb[0].mxu0 %v616
          %v797 = vpop.f32.mrb[0].mxu0
          %v798 = vadd.f32 %v658, %v797
          %v799 = vpop.f32.mrb[0].mxu0
          %v800 = vadd.f32 %v662, %v799
          %801 = vmatprep.mubr.f32.mxu0 0.0
          %802 = vmatmul.mubr.f32.gmra.mrb[0].mxu0 %v617
          %v803 = vpop.f32.mrb[0].mxu0
          %v804 = vadd.f32 %v658, %v803
          %v805 = vpop.f32.mrb[0].mxu0
          %v806 = vadd.f32 %v662, %v805
          %807 = vmatprep.mubr.f32.mxu0 0.0
          %808 = vmatmul.mubr.f32.gmra.mrb[0].mxu0 %v618
          %v809 = vpop.f32.mrb[0].mxu0
          %v810 = vadd.f32 %v658, %v809
          %v811 = vpop.f32.mrb[0].mxu0
          %v812 = vadd.f32 %v662, %v811
          %813 = vmatprep.mubr.f32.mxu0 0.0
          %814 = vmatmul.mubr.f32.gmra.mrb[0].mxu0 %v619
          %v815 = vpop.f32.mrb[0].mxu0
          %v816 = vadd.f32 %v658, %v815
          %v817 = vpop.f32.mrb[0].mxu0
          %v818 = vadd.f32 %v662, %v817
          %819 = vmatprep.mubr.f32.mxu0 0.0
          %820 = vmatmul.mubr.f32.gmra.mrb[0].mxu0 %v620
          %v821 = vpop.f32.mrb[0].mxu0
          %v822 = vadd.f32 %v658, %v821
          %v823 = vpop.f32.mrb[0].mxu0
          %v824 = vadd.f32 %v662, %v823
          %825 = vdwg.mxu0
          %vm826 = vcmask 261120
          %827 = vst.msk [vmem:[#allocation2] sm:$0xff] %vm826, %v732
          %828 = vst.msk [vmem:[#allocation2 + $0x8] sm:$0xff] %vm826, %v738
          %829 = vst.msk [vmem:[#allocation2 + $0x10] sm:$0xff] %vm826, %v744
          %830 = vst.msk [vmem:[#allocation2 + $0x18] sm:$0xff] %vm826, %v750
          %831 = vst.msk [vmem:[#allocation2 + $0x20] sm:$0xff] %vm826, %v756
          %832 = vst.msk [vmem:[#allocation2 + $0x28] sm:$0xff] %vm826, %v762
          %833 = vst.msk [vmem:[#allocation2 + $0x30] sm:$0xff] %vm826, %v768
          %834 = vst.msk [vmem:[#allocation2 + $0x38] sm:$0xff] %vm826, %v774
          %835 = vst.msk [vmem:[#allocation2 + $0x40] sm:$0xff] %vm826, %v780
          %836 = vst.msk [vmem:[#allocation2 + $0x48] sm:$0xff] %vm826, %v786
          %837 = vst.msk [vmem:[#allocation2 + $0x50] sm:$0xff] %vm826, %v792
          %838 = vst.msk [vmem:[#allocation2 + $0x58] sm:$0xff] %vm826, %v798
          %839 = vst.msk [vmem:[#allocation2 + $0x60] sm:$0xff] %vm826, %v804
          %840 = vst.msk [vmem:[#allocation2 + $0x68] sm:$0xff] %vm826, %v810
          %841 = vst.msk [vmem:[#allocation2 + $0x70] sm:$0xff] %vm826, %v816
          %842 = vst.msk [vmem:[#allocation2 + $0x78] sm:$0xff] %vm826, %v822
          %843 = vst.msk [vmem:[#allocation3] sm:$0xff] %vm826, %v734
          %844 = vst.msk [vmem:[#allocation3 + $0x8] sm:$0xff] %vm826, %v740
          %845 = vst.msk [vmem:[#allocation3 + $0x10] sm:$0xff] %vm826, %v746
          %846 = vst.msk [vmem:[#allocation3 + $0x18] sm:$0xff] %vm826, %v752
          %847 = vst.msk [vmem:[#allocation3 + $0x20] sm:$0xff] %vm826, %v758
          %848 = vst.msk [vmem:[#allocation3 + $0x28] sm:$0xff] %vm826, %v764
          %849 = vst.msk [vmem:[#allocation3 + $0x30] sm:$0xff] %vm826, %v770
          %850 = vst.msk [vmem:[#allocation3 + $0x38] sm:$0xff] %vm826, %v776
          %851 = vst.msk [vmem:[#allocation3 + $0x40] sm:$0xff] %vm826, %v782
          %852 = vst.msk [vmem:[#allocation3 + $0x48] sm:$0xff] %vm826, %v788
          %853 = vst.msk [vmem:[#allocation3 + $0x50] sm:$0xff] %vm826, %v794
          %854 = vst.msk [vmem:[#allocation3 + $0x58] sm:$0xff] %vm826, %v800
          %855 = vst.msk [vmem:[#allocation3 + $0x60] sm:$0xff] %vm826, %v806
          %856 = vst.msk [vmem:[#allocation3 + $0x68] sm:$0xff] %vm826, %v812
          %857 = vst.msk [vmem:[#allocation3 + $0x70] sm:$0xff] %vm826, %v818
          %858 = vst.msk [vmem:[#allocation3 + $0x78] sm:$0xff] %vm826, %v824
          %875 = vrot.lane.b32.xlu0 %v732, 96
          %v876 = vpop.permute.xlu0 %875
          %877 = vrot.lane.b32.xlu0 %v738, 96
          %v878 = vpop.permute.xlu0 %877
          %879 = vrot.lane.b32.xlu0 %v744, 96
          %v880 = vpop.permute.xlu0 %879
          %881 = vrot.lane.b32.xlu0 %v750, 96
          %v882 = vpop.permute.xlu0 %881
          %883 = vrot.lane.b32.xlu0 %v756, 96
          %v884 = vpop.permute.xlu0 %883
          %885 = vrot.lane.b32.xlu0 %v762, 96
          %v886 = vpop.permute.xlu0 %885
          %887 = vrot.lane.b32.xlu0 %v768, 96
          %v888 = vpop.permute.xlu0 %887
          %889 = vrot.lane.b32.xlu0 %v774, 96
          %v890 = vpop.permute.xlu0 %889
          %891 = vrot.lane.b32.xlu0 %v780, 96
          %v892 = vpop.permute.xlu0 %891
          %893 = vrot.lane.b32.xlu0 %v786, 96
          %v894 = vpop.permute.xlu0 %893
          %895 = vrot.lane.b32.xlu0 %v792, 96
          %v896 = vpop.permute.xlu0 %895
          %897 = vrot.lane.b32.xlu0 %v798, 96
          %v898 = vpop.permute.xlu0 %897
          %899 = vrot.lane.b32.xlu0 %v804, 96
          %v900 = vpop.permute.xlu0 %899
          %901 = vrot.lane.b32.xlu0 %v810, 96
          %v902 = vpop.permute.xlu0 %901
          %903 = vrot.lane.b32.xlu0 %v816, 96
          %v904 = vpop.permute.xlu0 %903
          %905 = vrot.lane.b32.xlu0 %v822, 96
          %v906 = vpop.permute.xlu0 %905
          %s923 = scalar_lea.vmem [#allocation2], 128
          %924 = vst.msk [vmem:[%s923] sm:$0xff] %vm826, %v876
          %925 = vst.msk [vmem:[%s923 + $0x8] sm:$0xff] %vm826, %v878
          %926 = vst.msk [vmem:[%s923 + $0x10] sm:$0xff] %vm826, %v880
          %927 = vst.msk [vmem:[%s923 + $0x18] sm:$0xff] %vm826, %v882
          %928 = vst.msk [vmem:[%s923 + $0x20] sm:$0xff] %vm826, %v884
          %929 = vst.msk [vmem:[%s923 + $0x28] sm:$0xff] %vm826, %v886
          %930 = vst.msk [vmem:[%s923 + $0x30] sm:$0xff] %vm826, %v888
          %931 = vst.msk [vmem:[%s923 + $0x38] sm:$0xff] %vm826, %v890
          %932 = vst.msk [vmem:[%s923 + $0x40] sm:$0xff] %vm826, %v892
          %933 = vst.msk [vmem:[%s923 + $0x48] sm:$0xff] %vm826, %v894
          %934 = vst.msk [vmem:[%s923 + $0x50] sm:$0xff] %vm826, %v896
          %935 = vst.msk [vmem:[%s923 + $0x58] sm:$0xff] %vm826, %v898
          %936 = vst.msk [vmem:[%s923 + $0x60] sm:$0xff] %vm826, %v900
          %937 = vst.msk [vmem:[%s923 + $0x68] sm:$0xff] %vm826, %v902
          %938 = vst.msk [vmem:[%s923 + $0x70] sm:$0xff] %vm826, %v904
          %939 = vst.msk [vmem:[%s923 + $0x78] sm:$0xff] %vm826, %v906
          %956 = vrot.lane.b32.xlu0 %v734, 96
          %v957 = vpop.permute.xlu0 %956
          %958 = vrot.lane.b32.xlu0 %v740, 96
          %v959 = vpop.permute.xlu0 %958
          %960 = vrot.lane.b32.xlu0 %v746, 96
          %v961 = vpop.permute.xlu0 %960
          %962 = vrot.lane.b32.xlu0 %v752, 96
          %v963 = vpop.permute.xlu0 %962
          %964 = vrot.lane.b32.xlu0 %v758, 96
          %v965 = vpop.permute.xlu0 %964
          %966 = vrot.lane.b32.xlu0 %v764, 96
          %v967 = vpop.permute.xlu0 %966
          %968 = vrot.lane.b32.xlu0 %v770, 96
          %v969 = vpop.permute.xlu0 %968
          %970 = vrot.lane.b32.xlu0 %v776, 96
          %v971 = vpop.permute.xlu0 %970
          %972 = vrot.lane.b32.xlu0 %v782, 96
          %v973 = vpop.permute.xlu0 %972
          %974 = vrot.lane.b32.xlu0 %v788, 96
          %v975 = vpop.permute.xlu0 %974
          %976 = vrot.lane.b32.xlu0 %v794, 96
          %v977 = vpop.permute.xlu0 %976
          %978 = vrot.lane.b32.xlu0 %v800, 96
          %v979 = vpop.permute.xlu0 %978
          %980 = vrot.lane.b32.xlu0 %v806, 96
          %v981 = vpop.permute.xlu0 %980
          %982 = vrot.lane.b32.xlu0 %v812, 96
          %v983 = vpop.permute.xlu0 %982
          %984 = vrot.lane.b32.xlu0 %v818, 96
          %v985 = vpop.permute.xlu0 %984
          %986 = vrot.lane.b32.xlu0 %v824, 96
          %v987 = vpop.permute.xlu0 %986
          %s1004 = scalar_lea.vmem [#allocation3], 128
          %1005 = vst.msk [vmem:[%s1004] sm:$0xff] %vm826, %v957
          %1006 = vst.msk [vmem:[%s1004 + $0x8] sm:$0xff] %vm826, %v959
          %1007 = vst.msk [vmem:[%s1004 + $0x10] sm:$0xff] %vm826, %v961
          %1008 = vst.msk [vmem:[%s1004 + $0x18] sm:$0xff] %vm826, %v963
          %1009 = vst.msk [vmem:[%s1004 + $0x20] sm:$0xff] %vm826, %v965
          %1010 = vst.msk [vmem:[%s1004 + $0x28] sm:$0xff] %vm826, %v967
          %1011 = vst.msk [vmem:[%s1004 + $0x30] sm:$0xff] %vm826, %v969
          %1012 = vst.msk [vmem:[%s1004 + $0x38] sm:$0xff] %vm826, %v971
          %1013 = vst.msk [vmem:[%s1004 + $0x40] sm:$0xff] %vm826, %v973
          %1014 = vst.msk [vmem:[%s1004 + $0x48] sm:$0xff] %vm826, %v975
          %1015 = vst.msk [vmem:[%s1004 + $0x50] sm:$0xff] %vm826, %v977
          %1016 = vst.msk [vmem:[%s1004 + $0x58] sm:$0xff] %vm826, %v979
          %1017 = vst.msk [vmem:[%s1004 + $0x60] sm:$0xff] %vm826, %v981
          %1018 = vst.msk [vmem:[%s1004 + $0x68] sm:$0xff] %vm826, %v983
          %1019 = vst.msk [vmem:[%s1004 + $0x70] sm:$0xff] %vm826, %v985
          %1020 = vst.msk [vmem:[%s1004 + $0x78] sm:$0xff] %vm826, %v987
          %1021 = vrot.lane.b32.xlu0 %v732, 64
          %v1022 = vpop.permute.xlu0 %1021
          %1023 = vrot.lane.b32.xlu0 %v738, 64
          %v1024 = vpop.permute.xlu0 %1023
          %1025 = vrot.lane.b32.xlu0 %v744, 64
          %v1026 = vpop.permute.xlu0 %1025
          %1027 = vrot.lane.b32.xlu0 %v750, 64
          %v1028 = vpop.permute.xlu0 %1027
          %1029 = vrot.lane.b32.xlu0 %v756, 64
          %v1030 = vpop.permute.xlu0 %1029
          %1031 = vrot.lane.b32.xlu0 %v762, 64
          %v1032 = vpop.permute.xlu0 %1031
          %1033 = vrot.lane.b32.xlu0 %v768, 64
          %v1034 = vpop.permute.xlu0 %1033
          %1035 = vrot.lane.b32.xlu0 %v774, 64
          %v1036 = vpop.permute.xlu0 %1035
          %1037 = vrot.lane.b32.xlu0 %v780, 64
          %v1038 = vpop.permute.xlu0 %1037
          %1039 = vrot.lane.b32.xlu0 %v786, 64
          %v1040 = vpop.permute.xlu0 %1039
          %1041 = vrot.lane.b32.xlu0 %v792, 64
          %v1042 = vpop.permute.xlu0 %1041
          %1043 = vrot.lane.b32.xlu0 %v798, 64
          %v1044 = vpop.permute.xlu0 %1043
          %1045 = vrot.lane.b32.xlu0 %v804, 64
          %v1046 = vpop.permute.xlu0 %1045
          %1047 = vrot.lane.b32.xlu0 %v810, 64
          %v1048 = vpop.permute.xlu0 %1047
          %1049 = vrot.lane.b32.xlu0 %v816, 64
          %v1050 = vpop.permute.xlu0 %1049
          %1051 = vrot.lane.b32.xlu0 %v822, 64
          %v1052 = vpop.permute.xlu0 %1051
          %s1069 = scalar_lea.vmem [#allocation2], 256
          %1070 = vst.msk [vmem:[%s1069] sm:$0xff] %vm826, %v1022
          %1071 = vst.msk [vmem:[%s1069 + $0x8] sm:$0xff] %vm826, %v1024
          %1072 = vst.msk [vmem:[%s1069 + $0x10] sm:$0xff] %vm826, %v1026
          %1073 = vst.msk [vmem:[%s1069 + $0x18] sm:$0xff] %vm826, %v1028
          %1074 = vst.msk [vmem:[%s1069 + $0x20] sm:$0xff] %vm826, %v1030
          %1075 = vst.msk [vmem:[%s1069 + $0x28] sm:$0xff] %vm826, %v1032
          %1076 = vst.msk [vmem:[%s1069 + $0x30] sm:$0xff] %vm826, %v1034
          %1077 = vst.msk [vmem:[%s1069 + $0x38] sm:$0xff] %vm826, %v1036
          %1078 = vst.msk [vmem:[%s1069 + $0x40] sm:$0xff] %vm826, %v1038
          %1079 = vst.msk [vmem:[%s1069 + $0x48] sm:$0xff] %vm826, %v1040
          %1080 = vst.msk [vmem:[%s1069 + $0x50] sm:$0xff] %vm826, %v1042
          %1081 = vst.msk [vmem:[%s1069 + $0x58] sm:$0xff] %vm826, %v1044
          %1082 = vst.msk [vmem:[%s1069 + $0x60] sm:$0xff] %vm826, %v1046
          %1083 = vst.msk [vmem:[%s1069 + $0x68] sm:$0xff] %vm826, %v1048
          %1084 = vst.msk [vmem:[%s1069 + $0x70] sm:$0xff] %vm826, %v1050
          %1085 = vst.msk [vmem:[%s1069 + $0x78] sm:$0xff] %vm826, %v1052
          %1086 = vrot.lane.b32.xlu0 %v734, 64
          %v1087 = vpop.permute.xlu0 %1086
          %1088 = vrot.lane.b32.xlu0 %v740, 64
          %v1089 = vpop.permute.xlu0 %1088
          %1090 = vrot.lane.b32.xlu0 %v746, 64
          %v1091 = vpop.permute.xlu0 %1090
          %1092 = vrot.lane.b32.xlu0 %v752, 64
          %v1093 = vpop.permute.xlu0 %1092
          %1094 = vrot.lane.b32.xlu0 %v758, 64
          %v1095 = vpop.permute.xlu0 %1094
          %1096 = vrot.lane.b32.xlu0 %v764, 64
          %v1097 = vpop.permute.xlu0 %1096
          %1098 = vrot.lane.b32.xlu0 %v770, 64
          %v1099 = vpop.permute.xlu0 %1098
          %1100 = vrot.lane.b32.xlu0 %v776, 64
          %v1101 = vpop.permute.xlu0 %1100
          %1102 = vrot.lane.b32.xlu0 %v782, 64
          %v1103 = vpop.permute.xlu0 %1102
          %1104 = vrot.lane.b32.xlu0 %v788, 64
          %v1105 = vpop.permute.xlu0 %1104
          %1106 = vrot.lane.b32.xlu0 %v794, 64
          %v1107 = vpop.permute.xlu0 %1106
          %1108 = vrot.lane.b32.xlu0 %v800, 64
          %v1109 = vpop.permute.xlu0 %1108
          %1110 = vrot.lane.b32.xlu0 %v806, 64
          %v1111 = vpop.permute.xlu0 %1110
          %1112 = vrot.lane.b32.xlu0 %v812, 64
          %v1113 = vpop.permute.xlu0 %1112
          %1114 = vrot.lane.b32.xlu0 %v818, 64
          %v1115 = vpop.permute.xlu0 %1114
          %1116 = vrot.lane.b32.xlu0 %v824, 64
          %v1117 = vpop.permute.xlu0 %1116
          %s1134 = scalar_lea.vmem [#allocation3], 256
          %1135 = vst.msk [vmem:[%s1134] sm:$0xff] %vm826, %v1087
          %1136 = vst.msk [vmem:[%s1134 + $0x8] sm:$0xff] %vm826, %v1089
          %1137 = vst.msk [vmem:[%s1134 + $0x10] sm:$0xff] %vm826, %v1091
          %1138 = vst.msk [vmem:[%s1134 + $0x18] sm:$0xff] %vm826, %v1093
          %1139 = vst.msk [vmem:[%s1134 + $0x20] sm:$0xff] %vm826, %v1095
          %1140 = vst.msk [vmem:[%s1134 + $0x28] sm:$0xff] %vm826, %v1097
          %1141 = vst.msk [vmem:[%s1134 + $0x30] sm:$0xff] %vm826, %v1099
          %1142 = vst.msk [vmem:[%s1134 + $0x38] sm:$0xff] %vm826, %v1101
          %1143 = vst.msk [vmem:[%s1134 + $0x40] sm:$0xff] %vm826, %v1103
          %1144 = vst.msk [vmem:[%s1134 + $0x48] sm:$0xff] %vm826, %v1105
          %1145 = vst.msk [vmem:[%s1134 + $0x50] sm:$0xff] %vm826, %v1107
          %1146 = vst.msk [vmem:[%s1134 + $0x58] sm:$0xff] %vm826, %v1109
          %1147 = vst.msk [vmem:[%s1134 + $0x60] sm:$0xff] %vm826, %v1111
          %1148 = vst.msk [vmem:[%s1134 + $0x68] sm:$0xff] %vm826, %v1113
          %1149 = vst.msk [vmem:[%s1134 + $0x70] sm:$0xff] %vm826, %v1115
          %1150 = vst.msk [vmem:[%s1134 + $0x78] sm:$0xff] %vm826, %v1117
          %1151 = vrot.lane.b32.xlu0 %v732, 32
          %v1152 = vpop.permute.xlu0 %1151
          %1153 = vrot.lane.b32.xlu0 %v738, 32
          %v1154 = vpop.permute.xlu0 %1153
          %1155 = vrot.lane.b32.xlu0 %v744, 32
          %v1156 = vpop.permute.xlu0 %1155
          %1157 = vrot.lane.b32.xlu0 %v750, 32
          %v1158 = vpop.permute.xlu0 %1157
          %1159 = vrot.lane.b32.xlu0 %v756, 32
          %v1160 = vpop.permute.xlu0 %1159
          %1161 = vrot.lane.b32.xlu0 %v762, 32
          %v1162 = vpop.permute.xlu0 %1161
          %1163 = vrot.lane.b32.xlu0 %v768, 32
          %v1164 = vpop.permute.xlu0 %1163
          %1165 = vrot.lane.b32.xlu0 %v774, 32
          %v1166 = vpop.permute.xlu0 %1165
          %1167 = vrot.lane.b32.xlu0 %v780, 32
          %v1168 = vpop.permute.xlu0 %1167
          %1169 = vrot.lane.b32.xlu0 %v786, 32
          %v1170 = vpop.permute.xlu0 %1169
          %1171 = vrot.lane.b32.xlu0 %v792, 32
          %v1172 = vpop.permute.xlu0 %1171
          %1173 = vrot.lane.b32.xlu0 %v798, 32
          %v1174 = vpop.permute.xlu0 %1173
          %1175 = vrot.lane.b32.xlu0 %v804, 32
          %v1176 = vpop.permute.xlu0 %1175
          %1177 = vrot.lane.b32.xlu0 %v810, 32
          %v1178 = vpop.permute.xlu0 %1177
          %1179 = vrot.lane.b32.xlu0 %v816, 32
          %v1180 = vpop.permute.xlu0 %1179
          %1181 = vrot.lane.b32.xlu0 %v822, 32
          %v1182 = vpop.permute.xlu0 %1181
          %s1199 = scalar_lea.vmem [#allocation2], 384
          %1200 = vst.msk [vmem:[%s1199] sm:$0xff] %vm826, %v1152
          %1201 = vst.msk [vmem:[%s1199 + $0x8] sm:$0xff] %vm826, %v1154
          %1202 = vst.msk [vmem:[%s1199 + $0x10] sm:$0xff] %vm826, %v1156
          %1203 = vst.msk [vmem:[%s1199 + $0x18] sm:$0xff] %vm826, %v1158
          %1204 = vst.msk [vmem:[%s1199 + $0x20] sm:$0xff] %vm826, %v1160
          %1205 = vst.msk [vmem:[%s1199 + $0x28] sm:$0xff] %vm826, %v1162
          %1206 = vst.msk [vmem:[%s1199 + $0x30] sm:$0xff] %vm826, %v1164
          %1207 = vst.msk [vmem:[%s1199 + $0x38] sm:$0xff] %vm826, %v1166
          %1208 = vst.msk [vmem:[%s1199 + $0x40] sm:$0xff] %vm826, %v1168
          %1209 = vst.msk [vmem:[%s1199 + $0x48] sm:$0xff] %vm826, %v1170
          %1210 = vst.msk [vmem:[%s1199 + $0x50] sm:$0xff] %vm826, %v1172
          %1211 = vst.msk [vmem:[%s1199 + $0x58] sm:$0xff] %vm826, %v1174
          %1212 = vst.msk [vmem:[%s1199 + $0x60] sm:$0xff] %vm826, %v1176
          %1213 = vst.msk [vmem:[%s1199 + $0x68] sm:$0xff] %vm826, %v1178
          %1214 = vst.msk [vmem:[%s1199 + $0x70] sm:$0xff] %vm826, %v1180
          %1215 = vst.msk [vmem:[%s1199 + $0x78] sm:$0xff] %vm826, %v1182
          %1216 = vrot.lane.b32.xlu0 %v734, 32
          %v1217 = vpop.permute.xlu0 %1216
          %1218 = vrot.lane.b32.xlu0 %v740, 32
          %v1219 = vpop.permute.xlu0 %1218
          %1220 = vrot.lane.b32.xlu0 %v746, 32
          %v1221 = vpop.permute.xlu0 %1220
          %1222 = vrot.lane.b32.xlu0 %v752, 32
          %v1223 = vpop.permute.xlu0 %1222
          %1224 = vrot.lane.b32.xlu0 %v758, 32
          %v1225 = vpop.permute.xlu0 %1224
          %1226 = vrot.lane.b32.xlu0 %v764, 32
          %v1227 = vpop.permute.xlu0 %1226
          %1228 = vrot.lane.b32.xlu0 %v770, 32
          %v1229 = vpop.permute.xlu0 %1228
          %1230 = vrot.lane.b32.xlu0 %v776, 32
          %v1231 = vpop.permute.xlu0 %1230
          %1232 = vrot.lane.b32.xlu0 %v782, 32
          %v1233 = vpop.permute.xlu0 %1232
          %1234 = vrot.lane.b32.xlu0 %v788, 32
          %v1235 = vpop.permute.xlu0 %1234
          %1236 = vrot.lane.b32.xlu0 %v794, 32
          %v1237 = vpop.permute.xlu0 %1236
          %1238 = vrot.lane.b32.xlu0 %v800, 32
          %v1239 = vpop.permute.xlu0 %1238
          %1240 = vrot.lane.b32.xlu0 %v806, 32
          %v1241 = vpop.permute.xlu0 %1240
          %1242 = vrot.lane.b32.xlu0 %v812, 32
          %v1243 = vpop.permute.xlu0 %1242
          %1244 = vrot.lane.b32.xlu0 %v818, 32
          %v1245 = vpop.permute.xlu0 %1244
          %1246 = vrot.lane.b32.xlu0 %v824, 32
          %v1247 = vpop.permute.xlu0 %1246
          %s1264 = scalar_lea.vmem [#allocation3], 384
          %1265 = vst.msk [vmem:[%s1264] sm:$0xff] %vm826, %v1217
          %1266 = vst.msk [vmem:[%s1264 + $0x8] sm:$0xff] %vm826, %v1219
          %1267 = vst.msk [vmem:[%s1264 + $0x10] sm:$0xff] %vm826, %v1221
          %1268 = vst.msk [vmem:[%s1264 + $0x18] sm:$0xff] %vm826, %v1223
          %1269 = vst.msk [vmem:[%s1264 + $0x20] sm:$0xff] %vm826, %v1225
          %1270 = vst.msk [vmem:[%s1264 + $0x28] sm:$0xff] %vm826, %v1227
          %1271 = vst.msk [vmem:[%s1264 + $0x30] sm:$0xff] %vm826, %v1229
          %1272 = vst.msk [vmem:[%s1264 + $0x38] sm:$0xff] %vm826, %v1231
          %1273 = vst.msk [vmem:[%s1264 + $0x40] sm:$0xff] %vm826, %v1233
          %1274 = vst.msk [vmem:[%s1264 + $0x48] sm:$0xff] %vm826, %v1235
          %1275 = vst.msk [vmem:[%s1264 + $0x50] sm:$0xff] %vm826, %v1237
          %1276 = vst.msk [vmem:[%s1264 + $0x58] sm:$0xff] %vm826, %v1239
          %1277 = vst.msk [vmem:[%s1264 + $0x60] sm:$0xff] %vm826, %v1241
          %1278 = vst.msk [vmem:[%s1264 + $0x68] sm:$0xff] %vm826, %v1243
          %1279 = vst.msk [vmem:[%s1264 + $0x70] sm:$0xff] %vm826, %v1245
          %1280 = vst.msk [vmem:[%s1264 + $0x78] sm:$0xff] %vm826, %v1247
        $region108: #{tpu_custom_call.1} parent=79 // pred_fallthru
          _
        %s1281 = smul.u32 %s40, 128
        %s1282 = scalar_lea.vmem %s533, %s1281 [#allocation4]
        %v1283 = vld [vmem:[%s1282] sm:$0xff]
        %v1284 = vld [vmem:[%s1282 + $0x8] sm:$0xff]
        %v1285 = vld [vmem:[%s1282 + $0x10] sm:$0xff]
        %v1286 = vld [vmem:[%s1282 + $0x18] sm:$0xff]
        %v1287 = vld [vmem:[%s1282 + $0x20] sm:$0xff]
        %v1288 = vld [vmem:[%s1282 + $0x28] sm:$0xff]
        %v1289 = vld [vmem:[%s1282 + $0x30] sm:$0xff]
        %v1290 = vld [vmem:[%s1282 + $0x38] sm:$0xff]
        %v1291 = vld [vmem:[%s1282 + $0x40] sm:$0xff]
        %v1292 = vld [vmem:[%s1282 + $0x48] sm:$0xff]
        %v1293 = vld [vmem:[%s1282 + $0x50] sm:$0xff]
        %v1294 = vld [vmem:[%s1282 + $0x58] sm:$0xff]
        %v1295 = vld [vmem:[%s1282 + $0x60] sm:$0xff]
        %v1296 = vld [vmem:[%s1282 + $0x68] sm:$0xff]
        %v1297 = vld [vmem:[%s1282 + $0x70] sm:$0xff]
        %v1298 = vld [vmem:[%s1282 + $0x78] sm:$0xff]
        %v1299 = vld [vmem:[#allocation7] sm:$0xff]
        %v1300 = vld [vmem:[#allocation7 + $0x8] sm:$0xff]
        %v1301 = vld [vmem:[#allocation7 + $0x10] sm:$0xff]
        %v1302 = vld [vmem:[#allocation7 + $0x18] sm:$0xff]
        %v1303 = vld [vmem:[#allocation7 + $0x20] sm:$0xff]
        %v1304 = vld [vmem:[#allocation7 + $0x28] sm:$0xff]
        %v1305 = vld [vmem:[#allocation7 + $0x30] sm:$0xff]
        %v1306 = vld [vmem:[#allocation7 + $0x38] sm:$0xff]
        %v1307 = vld [vmem:[#allocation7 + $0x40] sm:$0xff]
        %v1308 = vld [vmem:[#allocation7 + $0x48] sm:$0xff]
        %v1309 = vld [vmem:[#allocation7 + $0x50] sm:$0xff]
        %v1310 = vld [vmem:[#allocation7 + $0x58] sm:$0xff]
        %v1311 = vld [vmem:[#allocation7 + $0x60] sm:$0xff]
        %v1312 = vld [vmem:[#allocation7 + $0x68] sm:$0xff]
        %v1313 = vld [vmem:[#allocation7 + $0x70] sm:$0xff]
        %v1314 = vld [vmem:[#allocation7 + $0x78] sm:$0xff]
        %v1315 = vld [vmem:[%s2] sm:$0x1]
        %v1317 = vlaneseq
        %v1318 = vshrl.u32 %v1317, 7
        %v1319 = vsub.s32 0, %v1318
        %v1320 = vrot.slane %v1315, %v1319
        %1322 = vmatprep.subr.mxu0 0.0
        %1323 = vmatpush1.msra.mxu0 %v1299
        %1324 = vmatprep.subr.mxu0 0.0
        %1325 = vmatpush1.msra.mxu0 %v1300
        %1326 = vmatprep.subr.mxu0 0.0
        %1327 = vmatpush1.msra.mxu0 %v1301
        %1328 = vmatprep.subr.mxu0 0.0
        %1329 = vmatpush1.msra.mxu0 %v1302
        %1330 = vmatprep.subr.mxu0 0.0
        %1331 = vmatpush1.msra.mxu0 %v1303
        %1332 = vmatprep.subr.mxu0 0.0
        %1333 = vmatpush1.msra.mxu0 %v1304
        %1334 = vmatprep.subr.mxu0 0.0
        %1335 = vmatpush1.msra.mxu0 %v1305
        %1336 = vmatprep.subr.mxu0 0.0
        %1337 = vmatpush1.msra.mxu0 %v1306
        %1338 = vmatprep.subr.mxu0 0.0
        %1339 = vmatpush1.msra.mxu0 %v1307
        %1340 = vmatprep.subr.mxu0 0.0
        %1341 = vmatpush1.msra.mxu0 %v1308
        %1342 = vmatprep.subr.mxu0 0.0
        %1343 = vmatpush1.msra.mxu0 %v1309
        %1344 = vmatprep.subr.mxu0 0.0
        %1345 = vmatpush1.msra.mxu0 %v1310
        %1346 = vmatprep.subr.mxu0 0.0
        %1347 = vmatpush1.msra.mxu0 %v1311
        %1348 = vmatprep.subr.mxu0 0.0
        %1349 = vmatpush1.msra.mxu0 %v1312
        %1350 = vmatprep.subr.mxu0 0.0
        %1351 = vmatpush1.msra.mxu0 %v1313
        %1352 = vmatprep.subr.mxu0 0.0
        %1353 = vmatpush1.msra.mxu0 %v1314
        %1354 = vmatprep.subr.mxu0 0.0
        %1355 = vmatpush1.msra.mxu0 0.0
        %1356 = vmatprep.subr.mxu0 0.0
        %1357 = vmatpush1.msra.mxu0 0.0
        %1358 = vmatprep.subr.mxu0 0.0
        %1359 = vmatpush1.msra.mxu0 0.0
        %1360 = vmatprep.subr.mxu0 0.0
        %1361 = vmatpush1.msra.mxu0 0.0
        %1362 = vmatprep.subr.mxu0 0.0
        %1363 = vmatpush1.msra.mxu0 0.0
        %1364 = vmatprep.subr.mxu0 0.0
        %1365 = vmatpush1.msra.mxu0 0.0
        %1366 = vmatprep.subr.mxu0 0.0
        %1367 = vmatpush1.msra.mxu0 0.0
        %1368 = vmatprep.subr.mxu0 0.0
        %1369 = vmatpush1.msra.mxu0 0.0
        %1370 = vmatprep.subr.mxu0 0.0
        %1371 = vmatpush1.msra.mxu0 0.0
        %1372 = vmatprep.subr.mxu0 0.0
        %1373 = vmatpush1.msra.mxu0 0.0
        %1374 = vmatprep.subr.mxu0 0.0
        %1375 = vmatpush1.msra.mxu0 0.0
        %1376 = vmatprep.subr.mxu0 0.0
        %1377 = vmatpush1.msra.mxu0 0.0
        %1378 = vmatprep.subr.mxu0 0.0
        %1379 = vmatpush1.msra.mxu0 0.0
        %1380 = vmatprep.subr.mxu0 0.0
        %1381 = vmatpush1.msra.mxu0 0.0
        %1382 = vmatprep.subr.mxu0 0.0
        %1383 = vmatpush1.msra.mxu0 0.0
        %1384 = vmatprep.subr.mxu0 0.0
        %1385 = vmatpush1.msra.mxu0 0.0
        %1386 = vmatprep.mubr.f32.mxu0 0.0
        %1387 = vmatmul.mubr.f32.gmra.mrb[0].mxu0 %v1283
        %v1388 = vpop.f32.mrb[0].mxu0
        %v1389 = vadd.f32 %v1320, %v1388
        %v1390 = vpop.f32.mrb[0].mxu0
        %1391 = vmatprep.mubr.f32.mxu0 0.0
        %1392 = vmatmul.mubr.f32.gmra.mrb[0].mxu0 %v1284
        %v1393 = vpop.f32.mrb[0].mxu0
        %v1394 = vadd.f32 %v1320, %v1393
        %v1395 = vpop.f32.mrb[0].mxu0
        %1396 = vmatprep.mubr.f32.mxu0 0.0
        %1397 = vmatmul.mubr.f32.gmra.mrb[0].mxu0 %v1285
        %v1398 = vpop.f32.mrb[0].mxu0
        %v1399 = vadd.f32 %v1320, %v1398
        %v1400 = vpop.f32.mrb[0].mxu0
        %1401 = vmatprep.mubr.f32.mxu0 0.0
        %1402 = vmatmul.mubr.f32.gmra.mrb[0].mxu0 %v1286
        %v1403 = vpop.f32.mrb[0].mxu0
        %v1404 = vadd.f32 %v1320, %v1403
        %v1405 = vpop.f32.mrb[0].mxu0
        %1406 = vmatprep.mubr.f32.mxu0 0.0
        %1407 = vmatmul.mubr.f32.gmra.mrb[0].mxu0 %v1287
        %v1408 = vpop.f32.mrb[0].mxu0
        %v1409 = vadd.f32 %v1320, %v1408
        %v1410 = vpop.f32.mrb[0].mxu0
        %1411 = vmatprep.mubr.f32.mxu0 0.0
        %1412 = vmatmul.mubr.f32.gmra.mrb[0].mxu0 %v1288
        %v1413 = vpop.f32.mrb[0].mxu0
        %v1414 = vadd.f32 %v1320, %v1413
        %v1415 = vpop.f32.mrb[0].mxu0
        %1416 = vmatprep.mubr.f32.mxu0 0.0
        %1417 = vmatmul.mubr.f32.gmra.mrb[0].mxu0 %v1289
        %v1418 = vpop.f32.mrb[0].mxu0
        %v1419 = vadd.f32 %v1320, %v1418
        %v1420 = vpop.f32.mrb[0].mxu0
        %1421 = vmatprep.mubr.f32.mxu0 0.0
        %1422 = vmatmul.mubr.f32.gmra.mrb[0].mxu0 %v1290
        %v1423 = vpop.f32.mrb[0].mxu0
        %v1424 = vadd.f32 %v1320, %v1423
        %v1425 = vpop.f32.mrb[0].mxu0
        %1426 = vmatprep.mubr.f32.mxu0 0.0
        %1427 = vmatmul.mubr.f32.gmra.mrb[0].mxu0 %v1291
        %v1428 = vpop.f32.mrb[0].mxu0
        %v1429 = vadd.f32 %v1320, %v1428
        %v1430 = vpop.f32.mrb[0].mxu0
        %1431 = vmatprep.mubr.f32.mxu0 0.0
        %1432 = vmatmul.mubr.f32.gmra.mrb[0].mxu0 %v1292
        %v1433 = vpop.f32.mrb[0].mxu0
        %v1434 = vadd.f32 %v1320, %v1433
        %v1435 = vpop.f32.mrb[0].mxu0
        %1436 = vmatprep.mubr.f32.mxu0 0.0
        %1437 = vmatmul.mubr.f32.gmra.mrb[0].mxu0 %v1293
        %v1438 = vpop.f32.mrb[0].mxu0
        %v1439 = vadd.f32 %v1320, %v1438
        %v1440 = vpop.f32.mrb[0].mxu0
        %1441 = vmatprep.mubr.f32.mxu0 0.0
        %1442 = vmatmul.mubr.f32.gmra.mrb[0].mxu0 %v1294
        %v1443 = vpop.f32.mrb[0].mxu0
        %v1444 = vadd.f32 %v1320, %v1443
        %v1445 = vpop.f32.mrb[0].mxu0
        %1446 = vmatprep.mubr.f32.mxu0 0.0
        %1447 = vmatmul.mubr.f32.gmra.mrb[0].mxu0 %v1295
        %v1448 = vpop.f32.mrb[0].mxu0
        %v1449 = vadd.f32 %v1320, %v1448
        %v1450 = vpop.f32.mrb[0].mxu0
        %1451 = vmatprep.mubr.f32.mxu0 0.0
        %1452 = vmatmul.mubr.f32.gmra.mrb[0].mxu0 %v1296
        %v1453 = vpop.f32.mrb[0].mxu0
        %v1454 = vadd.f32 %v1320, %v1453
        %v1455 = vpop.f32.mrb[0].mxu0
        %1456 = vmatprep.mubr.f32.mxu0 0.0
        %1457 = vmatmul.mubr.f32.gmra.mrb[0].mxu0 %v1297
        %v1458 = vpop.f32.mrb[0].mxu0
        %v1459 = vadd.f32 %v1320, %v1458
        %v1460 = vpop.f32.mrb[0].mxu0
        %1461 = vmatprep.mubr.f32.mxu0 0.0
        %1462 = vmatmul.mubr.f32.gmra.mrb[0].mxu0 %v1298
        %v1463 = vpop.f32.mrb[0].mxu0
        %v1464 = vadd.f32 %v1320, %v1463
        %v1465 = vpop.f32.mrb[0].mxu0
        %1466 = vdwg.mxu0
        %v1467 = vmul.f32 %v1389, 0.17677669
        %v1468 = vmul.f32 %v1394, 0.17677669
        %v1469 = vmul.f32 %v1399, 0.17677669
        %v1470 = vmul.f32 %v1404, 0.17677669
        %v1471 = vmul.f32 %v1409, 0.17677669
        %v1472 = vmul.f32 %v1414, 0.17677669
        %v1473 = vmul.f32 %v1419, 0.17677669
        %v1474 = vmul.f32 %v1424, 0.17677669
        %v1475 = vmul.f32 %v1429, 0.17677669
        %v1476 = vmul.f32 %v1434, 0.17677669
        %v1477 = vmul.f32 %v1439, 0.17677669
        %v1478 = vmul.f32 %v1444, 0.17677669
        %v1479 = vmul.f32 %v1449, 0.17677669
        %v1480 = vmul.f32 %v1454, 0.17677669
        %v1481 = vmul.f32 %v1459, 0.17677669
        %v1482 = vmul.f32 %v1464, 0.17677669
        %1499 = vrot.lane.b32.xlu0 %v1467, 96
        %v1500 = vpop.permute.xlu0 %1499
        %1501 = vrot.lane.b32.xlu0 %v1468, 96
        %v1502 = vpop.permute.xlu0 %1501
        %1503 = vrot.lane.b32.xlu0 %v1469, 96
        %v1504 = vpop.permute.xlu0 %1503
        %1505 = vrot.lane.b32.xlu0 %v1470, 96
        %v1506 = vpop.permute.xlu0 %1505
        %1507 = vrot.lane.b32.xlu0 %v1471, 96
        %v1508 = vpop.permute.xlu0 %1507
        %1509 = vrot.lane.b32.xlu0 %v1472, 96
        %v1510 = vpop.permute.xlu0 %1509
        %1511 = vrot.lane.b32.xlu0 %v1473, 96
        %v1512 = vpop.permute.xlu0 %1511
        %1513 = vrot.lane.b32.xlu0 %v1474, 96
        %v1514 = vpop.permute.xlu0 %1513
        %1515 = vrot.lane.b32.xlu0 %v1475, 96
        %v1516 = vpop.permute.xlu0 %1515
        %1517 = vrot.lane.b32.xlu0 %v1476, 96
        %v1518 = vpop.permute.xlu0 %1517
        %1519 = vrot.lane.b32.xlu0 %v1477, 96
        %v1520 = vpop.permute.xlu0 %1519
        %1521 = vrot.lane.b32.xlu0 %v1478, 96
        %v1522 = vpop.permute.xlu0 %1521
        %1523 = vrot.lane.b32.xlu0 %v1479, 96
        %v1524 = vpop.permute.xlu0 %1523
        %1525 = vrot.lane.b32.xlu0 %v1480, 96
        %v1526 = vpop.permute.xlu0 %1525
        %1527 = vrot.lane.b32.xlu0 %v1481, 96
        %v1528 = vpop.permute.xlu0 %1527
        %1529 = vrot.lane.b32.xlu0 %v1482, 96
        %v1530 = vpop.permute.xlu0 %1529
        %1531 = vrot.lane.b32.xlu0 %v1467, 64
        %v1532 = vpop.permute.xlu0 %1531
        %1533 = vrot.lane.b32.xlu0 %v1468, 64
        %v1534 = vpop.permute.xlu0 %1533
        %1535 = vrot.lane.b32.xlu0 %v1469, 64
        %v1536 = vpop.permute.xlu0 %1535
        %1537 = vrot.lane.b32.xlu0 %v1470, 64
        %v1538 = vpop.permute.xlu0 %1537
        %1539 = vrot.lane.b32.xlu0 %v1471, 64
        %v1540 = vpop.permute.xlu0 %1539
        %1541 = vrot.lane.b32.xlu0 %v1472, 64
        %v1542 = vpop.permute.xlu0 %1541
        %1543 = vrot.lane.b32.xlu0 %v1473, 64
        %v1544 = vpop.permute.xlu0 %1543
        %1545 = vrot.lane.b32.xlu0 %v1474, 64
        %v1546 = vpop.permute.xlu0 %1545
        %1547 = vrot.lane.b32.xlu0 %v1475, 64
        %v1548 = vpop.permute.xlu0 %1547
        %1549 = vrot.lane.b32.xlu0 %v1476, 64
        %v1550 = vpop.permute.xlu0 %1549
        %1551 = vrot.lane.b32.xlu0 %v1477, 64
        %v1552 = vpop.permute.xlu0 %1551
        %1553 = vrot.lane.b32.xlu0 %v1478, 64
        %v1554 = vpop.permute.xlu0 %1553
        %1555 = vrot.lane.b32.xlu0 %v1479, 64
        %v1556 = vpop.permute.xlu0 %1555
        %1557 = vrot.lane.b32.xlu0 %v1480, 64
        %v1558 = vpop.permute.xlu0 %1557
        %1559 = vrot.lane.b32.xlu0 %v1481, 64
        %v1560 = vpop.permute.xlu0 %1559
        %1561 = vrot.lane.b32.xlu0 %v1482, 64
        %v1562 = vpop.permute.xlu0 %1561
        %1563 = vrot.lane.b32.xlu0 %v1467, 32
        %v1564 = vpop.permute.xlu0 %1563
        %1565 = vrot.lane.b32.xlu0 %v1468, 32
        %v1566 = vpop.permute.xlu0 %1565
        %1567 = vrot.lane.b32.xlu0 %v1469, 32
        %v1568 = vpop.permute.xlu0 %1567
        %1569 = vrot.lane.b32.xlu0 %v1470, 32
        %v1570 = vpop.permute.xlu0 %1569
        %1571 = vrot.lane.b32.xlu0 %v1471, 32
        %v1572 = vpop.permute.xlu0 %1571
        %1573 = vrot.lane.b32.xlu0 %v1472, 32
        %v1574 = vpop.permute.xlu0 %1573
        %1575 = vrot.lane.b32.xlu0 %v1473, 32
        %v1576 = vpop.permute.xlu0 %1575
        %1577 = vrot.lane.b32.xlu0 %v1474, 32
        %v1578 = vpop.permute.xlu0 %1577
        %1579 = vrot.lane.b32.xlu0 %v1475, 32
        %v1580 = vpop.permute.xlu0 %1579
        %1581 = vrot.lane.b32.xlu0 %v1476, 32
        %v1582 = vpop.permute.xlu0 %1581
        %1583 = vrot.lane.b32.xlu0 %v1477, 32
        %v1584 = vpop.permute.xlu0 %1583
        %1585 = vrot.lane.b32.xlu0 %v1478, 32
        %v1586 = vpop.permute.xlu0 %1585
        %1587 = vrot.lane.b32.xlu0 %v1479, 32
        %v1588 = vpop.permute.xlu0 %1587
        %1589 = vrot.lane.b32.xlu0 %v1480, 32
        %v1590 = vpop.permute.xlu0 %1589
        %1591 = vrot.lane.b32.xlu0 %v1481, 32
        %v1592 = vpop.permute.xlu0 %1591
        %1593 = vrot.lane.b32.xlu0 %v1482, 32
        %v1594 = vpop.permute.xlu0 %1593
        %v1595 = vld [vmem:[#allocation2] sm:$0xff]
        %v1596 = vld [vmem:[#allocation2 + $0x8] sm:$0xff]
        %v1597 = vld [vmem:[#allocation2 + $0x10] sm:$0xff]
        %v1598 = vld [vmem:[#allocation2 + $0x18] sm:$0xff]
        %v1599 = vld [vmem:[#allocation2 + $0x20] sm:$0xff]
        %v1600 = vld [vmem:[#allocation2 + $0x28] sm:$0xff]
        %v1601 = vld [vmem:[#allocation2 + $0x30] sm:$0xff]
        %v1602 = vld [vmem:[#allocation2 + $0x38] sm:$0xff]
        %v1603 = vld [vmem:[#allocation2 + $0x40] sm:$0xff]
        %v1604 = vld [vmem:[#allocation2 + $0x48] sm:$0xff]
        %v1605 = vld [vmem:[#allocation2 + $0x50] sm:$0xff]
        %v1606 = vld [vmem:[#allocation2 + $0x58] sm:$0xff]
        %v1607 = vld [vmem:[#allocation2 + $0x60] sm:$0xff]
        %v1608 = vld [vmem:[#allocation2 + $0x68] sm:$0xff]
        %v1609 = vld [vmem:[#allocation2 + $0x70] sm:$0xff]
        %v1610 = vld [vmem:[#allocation2 + $0x78] sm:$0xff]
        %v1611 = vld [vmem:[#allocation2 + $0x80] sm:$0xff]
        %v1612 = vld [vmem:[#allocation2 + $0x88] sm:$0xff]
        %v1613 = vld [vmem:[#allocation2 + $0x90] sm:$0xff]
        %v1614 = vld [vmem:[#allocation2 + $0x98] sm:$0xff]
        %v1615 = vld [vmem:[#allocation2 + $0xa0] sm:$0xff]
        %v1616 = vld [vmem:[#allocation2 + $0xa8] sm:$0xff]
        %v1617 = vld [vmem:[#allocation2 + $0xb0] sm:$0xff]
        %v1618 = vld [vmem:[#allocation2 + $0xb8] sm:$0xff]
        %v1619 = vld [vmem:[#allocation2 + $0xc0] sm:$0xff]
        %v1620 = vld [vmem:[#allocation2 + $0xc8] sm:$0xff]
        %v1621 = vld [vmem:[#allocation2 + $0xd0] sm:$0xff]
        %v1622 = vld [vmem:[#allocation2 + $0xd8] sm:$0xff]
        %v1623 = vld [vmem:[#allocation2 + $0xe0] sm:$0xff]
        %v1624 = vld [vmem:[#allocation2 + $0xe8] sm:$0xff]
        %v1625 = vld [vmem:[#allocation2 + $0xf0] sm:$0xff]
        %v1626 = vld [vmem:[#allocation2 + $0xf8] sm:$0xff]
        %v1627 = vld [vmem:[#allocation2 + $0x100] sm:$0xff]
        %v1628 = vld [vmem:[#allocation2 + $0x108] sm:$0xff]
        %v1629 = vld [vmem:[#allocation2 + $0x110] sm:$0xff]
        %v1630 = vld [vmem:[#allocation2 + $0x118] sm:$0xff]
        %v1631 = vld [vmem:[#allocation2 + $0x120] sm:$0xff]
        %v1632 = vld [vmem:[#allocation2 + $0x128] sm:$0xff]
        %v1633 = vld [vmem:[#allocation2 + $0x130] sm:$0xff]
        %v1634 = vld [vmem:[#allocation2 + $0x138] sm:$0xff]
        %v1635 = vld [vmem:[#allocation2 + $0x140] sm:$0xff]
        %v1636 = vld [vmem:[#allocation2 + $0x148] sm:$0xff]
        %v1637 = vld [vmem:[#allocation2 + $0x150] sm:$0xff]
        %v1638 = vld [vmem:[#allocation2 + $0x158] sm:$0xff]
        %v1639 = vld [vmem:[#allocation2 + $0x160] sm:$0xff]
        %v1640 = vld [vmem:[#allocation2 + $0x168] sm:$0xff]
        %v1641 = vld [vmem:[#allocation2 + $0x170] sm:$0xff]
        %v1642 = vld [vmem:[#allocation2 + $0x178] sm:$0xff]
        %v1643 = vld [vmem:[#allocation2 + $0x180] sm:$0xff]
        %v1644 = vld [vmem:[#allocation2 + $0x188] sm:$0xff]
        %v1645 = vld [vmem:[#allocation2 + $0x190] sm:$0xff]
        %v1646 = vld [vmem:[#allocation2 + $0x198] sm:$0xff]
        %v1647 = vld [vmem:[#allocation2 + $0x1a0] sm:$0xff]
        %v1648 = vld [vmem:[#allocation2 + $0x1a8] sm:$0xff]
        %v1649 = vld [vmem:[#allocation2 + $0x1b0] sm:$0xff]
        %v1650 = vld [vmem:[#allocation2 + $0x1b8] sm:$0xff]
        %v1651 = vld [vmem:[#allocation2 + $0x1c0] sm:$0xff]
        %v1652 = vld [vmem:[#allocation2 + $0x1c8] sm:$0xff]
        %v1653 = vld [vmem:[#allocation2 + $0x1d0] sm:$0xff]
        %v1654 = vld [vmem:[#allocation2 + $0x1d8] sm:$0xff]
        %v1655 = vld [vmem:[#allocation2 + $0x1e0] sm:$0xff]
        %v1656 = vld [vmem:[#allocation2 + $0x1e8] sm:$0xff]
        %v1657 = vld [vmem:[#allocation2 + $0x1f0] sm:$0xff]
        %v1658 = vld [vmem:[#allocation2 + $0x1f8] sm:$0xff]
        %vm1659 = vcmask 261120
        %v1660 = vsel %vm1659, %v1467, 0
        %v1662 = vsel %vm1659, %v1468, 0
        %v1664 = vsel %vm1659, %v1469, 0
        %v1666 = vsel %vm1659, %v1470, 0
        %v1668 = vsel %vm1659, %v1471, 0
        %v1670 = vsel %vm1659, %v1472, 0
        %v1672 = vsel %vm1659, %v1473, 0
        %v1674 = vsel %vm1659, %v1474, 0
        %v1676 = vsel %vm1659, %v1475, 0
        %v1678 = vsel %vm1659, %v1476, 0
        %v1680 = vsel %vm1659, %v1477, 0
        %v1682 = vsel %vm1659, %v1478, 0
        %v1684 = vsel %vm1659, %v1479, 0
        %v1686 = vsel %vm1659, %v1480, 0
        %v1688 = vsel %vm1659, %v1481, 0
        %v1690 = vsel %vm1659, %v1482, 0
        %v1693 = vsel %vm1659, %v1595, 0
        %v1696 = vsel %vm1659, %v1596, 0
        %v1699 = vsel %vm1659, %v1597, 0
        %v1702 = vsel %vm1659, %v1598, 0
        %v1705 = vsel %vm1659, %v1599, 0
        %v1708 = vsel %vm1659, %v1600, 0
        %v1711 = vsel %vm1659, %v1601, 0
        %v1714 = vsel %vm1659, %v1602, 0
        %v1717 = vsel %vm1659, %v1603, 0
        %v1720 = vsel %vm1659, %v1604, 0
        %v1723 = vsel %vm1659, %v1605, 0
        %v1726 = vsel %vm1659, %v1606, 0
        %v1729 = vsel %vm1659, %v1607, 0
        %v1732 = vsel %vm1659, %v1608, 0
        %v1735 = vsel %vm1659, %v1609, 0
        %v1738 = vsel %vm1659, %v1610, 0
        %1740 = vmatprep.subr.mxu0 0.0
        %1741 = vmatpush1.xpose.msra.mxu0 %v1693
        %1742 = vmatprep.subr.mxu0 0.0
        %1743 = vmatpush1.xpose.msra.mxu0 %v1696
        %1744 = vmatprep.subr.mxu0 0.0
        %1745 = vmatpush1.xpose.msra.mxu0 %v1699
        %1746 = vmatprep.subr.mxu0 0.0
        %1747 = vmatpush1.xpose.msra.mxu0 %v1702
        %1748 = vmatprep.subr.mxu0 0.0
        %1749 = vmatpush1.xpose.msra.mxu0 %v1705
        %1750 = vmatprep.subr.mxu0 0.0
        %1751 = vmatpush1.xpose.msra.mxu0 %v1708
        %1752 = vmatprep.subr.mxu0 0.0
        %1753 = vmatpush1.xpose.msra.mxu0 %v1711
        %1754 = vmatprep.subr.mxu0 0.0
        %1755 = vmatpush1.xpose.msra.mxu0 %v1714
        %1756 = vmatprep.subr.mxu0 0.0
        %1757 = vmatpush1.xpose.msra.mxu0 %v1717
        %1758 = vmatprep.subr.mxu0 0.0
        %1759 = vmatpush1.xpose.msra.mxu0 %v1720
        %1760 = vmatprep.subr.mxu0 0.0
        %1761 = vmatpush1.xpose.msra.mxu0 %v1723
        %1762 = vmatprep.subr.mxu0 0.0
        %1763 = vmatpush1.xpose.msra.mxu0 %v1726
        %1764 = vmatprep.subr.mxu0 0.0
        %1765 = vmatpush1.xpose.msra.mxu0 %v1729
        %1766 = vmatprep.subr.mxu0 0.0
        %1767 = vmatpush1.xpose.msra.mxu0 %v1732
        %1768 = vmatprep.subr.mxu0 0.0
        %1769 = vmatpush1.xpose.msra.mxu0 %v1735
        %1770 = vmatprep.subr.mxu0 0.0
        %1771 = vmatpush1.xpose.msra.mxu0 %v1738
        %1772 = vmatprep.subr.mxu0 0.0
        %1773 = vmatpush1.xpose.msra.mxu0 0.0
        %1774 = vmatprep.subr.mxu0 0.0
        %1775 = vmatpush1.xpose.msra.mxu0 0.0
        %1776 = vmatprep.subr.mxu0 0.0
        %1777 = vmatpush1.xpose.msra.mxu0 0.0
        %1778 = vmatprep.subr.mxu0 0.0
        %1779 = vmatpush1.xpose.msra.mxu0 0.0
        %1780 = vmatprep.subr.mxu0 0.0
        %1781 = vmatpush1.xpose.msra.mxu0 0.0
        %1782 = vmatprep.subr.mxu0 0.0
        %1783 = vmatpush1.xpose.msra.mxu0 0.0
        %1784 = vmatprep.subr.mxu0 0.0
        %1785 = vmatpush1.xpose.msra.mxu0 0.0
        %1786 = vmatprep.subr.mxu0 0.0
        %1787 = vmatpush1.xpose.msra.mxu0 0.0
        %1788 = vmatprep.subr.mxu0 0.0
        %1789 = vmatpush1.xpose.msra.mxu0 0.0
        %1790 = vmatprep.subr.mxu0 0.0
        %1791 = vmatpush1.xpose.msra.mxu0 0.0
        %1792 = vmatprep.subr.mxu0 0.0
        %1793 = vmatpush1.xpose.msra.mxu0 0.0
        %1794 = vmatprep.subr.mxu0 0.0
        %1795 = vmatpush1.xpose.msra.mxu0 0.0
        %1796 = vmatprep.subr.mxu0 0.0
        %1797 = vmatpush1.xpose.msra.mxu0 0.0
        %1798 = vmatprep.subr.mxu0 0.0
        %1799 = vmatpush1.xpose.msra.mxu0 0.0
        %1800 = vmatprep.subr.mxu0 0.0
        %1801 = vmatpush1.xpose.msra.mxu0 0.0
        %1802 = vmatprep.subr.mxu0 0.0
        %1803 = vmatpush1.xpose.msra.mxu0 0.0
        %1804 = vmatprep.mubr.f32.mxu0 0.0
        %1805 = vmatmul.mubr.f32.gmra.mrb[0].mxu0 %v1660
        %v1806 = vpop.f32.mrb[0].mxu0
        %v1807 = vadd.f32 0.0, %v1806
        %v1808 = vpop.f32.mrb[0].mxu0
        %1809 = vmatprep.mubr.f32.mxu0 0.0
        %1810 = vmatmul.mubr.f32.gmra.mrb[0].mxu0 %v1662
        %v1811 = vpop.f32.mrb[0].mxu0
        %v1812 = vadd.f32 0.0, %v1811
        %v1813 = vpop.f32.mrb[0].mxu0
        %1814 = vmatprep.mubr.f32.mxu0 0.0
        %1815 = vmatmul.mubr.f32.gmra.mrb[0].mxu0 %v1664
        %v1816 = vpop.f32.mrb[0].mxu0
        %v1817 = vadd.f32 0.0, %v1816
        %v1818 = vpop.f32.mrb[0].mxu0
        %1819 = vmatprep.mubr.f32.mxu0 0.0
        %1820 = vmatmul.mubr.f32.gmra.mrb[0].mxu0 %v1666
        %v1821 = vpop.f32.mrb[0].mxu0
        %v1822 = vadd.f32 0.0, %v1821
        %v1823 = vpop.f32.mrb[0].mxu0
        %1824 = vmatprep.mubr.f32.mxu0 0.0
        %1825 = vmatmul.mubr.f32.gmra.mrb[0].mxu0 %v1668
        %v1826 = vpop.f32.mrb[0].mxu0
        %v1827 = vadd.f32 0.0, %v1826
        %v1828 = vpop.f32.mrb[0].mxu0
        %1829 = vmatprep.mubr.f32.mxu0 0.0
        %1830 = vmatmul.mubr.f32.gmra.mrb[0].mxu0 %v1670
        %v1831 = vpop.f32.mrb[0].mxu0
        %v1832 = vadd.f32 0.0, %v1831
        %v1833 = vpop.f32.mrb[0].mxu0
        %1834 = vmatprep.mubr.f32.mxu0 0.0
        %1835 = vmatmul.mubr.f32.gmra.mrb[0].mxu0 %v1672
        %v1836 = vpop.f32.mrb[0].mxu0
        %v1837 = vadd.f32 0.0, %v1836
        %v1838 = vpop.f32.mrb[0].mxu0
        %1839 = vmatprep.mubr.f32.mxu0 0.0
        %1840 = vmatmul.mubr.f32.gmra.mrb[0].mxu0 %v1674
        %v1841 = vpop.f32.mrb[0].mxu0
        %v1842 = vadd.f32 0.0, %v1841
        %v1843 = vpop.f32.mrb[0].mxu0
        %1844 = vmatprep.mubr.f32.mxu0 0.0
        %1845 = vmatmul.mubr.f32.gmra.mrb[0].mxu0 %v1676
        %v1846 = vpop.f32.mrb[0].mxu0
        %v1847 = vadd.f32 0.0, %v1846
        %v1848 = vpop.f32.mrb[0].mxu0
        %1849 = vmatprep.mubr.f32.mxu0 0.0
        %1850 = vmatmul.mubr.f32.gmra.mrb[0].mxu0 %v1678
        %v1851 = vpop.f32.mrb[0].mxu0
        %v1852 = vadd.f32 0.0, %v1851
        %v1853 = vpop.f32.mrb[0].mxu0
        %1854 = vmatprep.mubr.f32.mxu0 0.0
        %1855 = vmatmul.mubr.f32.gmra.mrb[0].mxu0 %v1680
        %v1856 = vpop.f32.mrb[0].mxu0
        %v1857 = vadd.f32 0.0, %v1856
        %v1858 = vpop.f32.mrb[0].mxu0
        %1859 = vmatprep.mubr.f32.mxu0 0.0
        %1860 = vmatmul.mubr.f32.gmra.mrb[0].mxu0 %v1682
        %v1861 = vpop.f32.mrb[0].mxu0
        %v1862 = vadd.f32 0.0, %v1861
        %v1863 = vpop.f32.mrb[0].mxu0
        %1864 = vmatprep.mubr.f32.mxu0 0.0
        %1865 = vmatmul.mubr.f32.gmra.mrb[0].mxu0 %v1684
        %v1866 = vpop.f32.mrb[0].mxu0
        %v1867 = vadd.f32 0.0, %v1866
        %v1868 = vpop.f32.mrb[0].mxu0
        %1869 = vmatprep.mubr.f32.mxu0 0.0
        %1870 = vmatmul.mubr.f32.gmra.mrb[0].mxu0 %v1686
        %v1871 = vpop.f32.mrb[0].mxu0
        %v1872 = vadd.f32 0.0, %v1871
        %v1873 = vpop.f32.mrb[0].mxu0
        %1874 = vmatprep.mubr.f32.mxu0 0.0
        %1875 = vmatmul.mubr.f32.gmra.mrb[0].mxu0 %v1688
        %v1876 = vpop.f32.mrb[0].mxu0
        %v1877 = vadd.f32 0.0, %v1876
        %v1878 = vpop.f32.mrb[0].mxu0
        %1879 = vmatprep.mubr.f32.mxu0 0.0
        %1880 = vmatmul.mubr.f32.gmra.mrb[0].mxu0 %v1690
        %v1881 = vpop.f32.mrb[0].mxu0
        %v1882 = vadd.f32 0.0, %v1881
        %v1883 = vpop.f32.mrb[0].mxu0
        %1884 = vdwg.mxu0
        %v1885 = vsel %vm1659, %v1500, 0
        %v1887 = vsel %vm1659, %v1502, 0
        %v1889 = vsel %vm1659, %v1504, 0
        %v1891 = vsel %vm1659, %v1506, 0
        %v1893 = vsel %vm1659, %v1508, 0
        %v1895 = vsel %vm1659, %v1510, 0
        %v1897 = vsel %vm1659, %v1512, 0
        %v1899 = vsel %vm1659, %v1514, 0
        %v1901 = vsel %vm1659, %v1516, 0
        %v1903 = vsel %vm1659, %v1518, 0
        %v1905 = vsel %vm1659, %v1520, 0
        %v1907 = vsel %vm1659, %v1522, 0
        %v1909 = vsel %vm1659, %v1524, 0
        %v1911 = vsel %vm1659, %v1526, 0
        %v1913 = vsel %vm1659, %v1528, 0
        %v1915 = vsel %vm1659, %v1530, 0
        %v1918 = vsel %vm1659, %v1611, 0
        %v1921 = vsel %vm1659, %v1612, 0
        %v1924 = vsel %vm1659, %v1613, 0
        %v1927 = vsel %vm1659, %v1614, 0
        %v1930 = vsel %vm1659, %v1615, 0
        %v1933 = vsel %vm1659, %v1616, 0
        %v1936 = vsel %vm1659, %v1617, 0
        %v1939 = vsel %vm1659, %v1618, 0
        %v1942 = vsel %vm1659, %v1619, 0
        %v1945 = vsel %vm1659, %v1620, 0
        %v1948 = vsel %vm1659, %v1621, 0
        %v1951 = vsel %vm1659, %v1622, 0
        %v1954 = vsel %vm1659, %v1623, 0
        %v1957 = vsel %vm1659, %v1624, 0
        %v1960 = vsel %vm1659, %v1625, 0
        %v1963 = vsel %vm1659, %v1626, 0
        %1965 = vmatprep.subr.mxu0 0.0
        %1966 = vmatpush1.xpose.msra.mxu0 %v1918
        %1967 = vmatprep.subr.mxu0 0.0
        %1968 = vmatpush1.xpose.msra.mxu0 %v1921
        %1969 = vmatprep.subr.mxu0 0.0
        %1970 = vmatpush1.xpose.msra.mxu0 %v1924
        %1971 = vmatprep.subr.mxu0 0.0
        %1972 = vmatpush1.xpose.msra.mxu0 %v1927
        %1973 = vmatprep.subr.mxu0 0.0
        %1974 = vmatpush1.xpose.msra.mxu0 %v1930
        %1975 = vmatprep.subr.mxu0 0.0
        %1976 = vmatpush1.xpose.msra.mxu0 %v1933
        %1977 = vmatprep.subr.mxu0 0.0
        %1978 = vmatpush1.xpose.msra.mxu0 %v1936
        %1979 = vmatprep.subr.mxu0 0.0
        %1980 = vmatpush1.xpose.msra.mxu0 %v1939
        %1981 = vmatprep.subr.mxu0 0.0
        %1982 = vmatpush1.xpose.msra.mxu0 %v1942
        %1983 = vmatprep.subr.mxu0 0.0
        %1984 = vmatpush1.xpose.msra.mxu0 %v1945
        %1985 = vmatprep.subr.mxu0 0.0
        %1986 = vmatpush1.xpose.msra.mxu0 %v1948
        %1987 = vmatprep.subr.mxu0 0.0
        %1988 = vmatpush1.xpose.msra.mxu0 %v1951
        %1989 = vmatprep.subr.mxu0 0.0
        %1990 = vmatpush1.xpose.msra.mxu0 %v1954
        %1991 = vmatprep.subr.mxu0 0.0
        %1992 = vmatpush1.xpose.msra.mxu0 %v1957
        %1993 = vmatprep.subr.mxu0 0.0
        %1994 = vmatpush1.xpose.msra.mxu0 %v1960
        %1995 = vmatprep.subr.mxu0 0.0
        %1996 = vmatpush1.xpose.msra.mxu0 %v1963
        %1997 = vmatprep.subr.mxu0 0.0
        %1998 = vmatpush1.xpose.msra.mxu0 0.0
        %1999 = vmatprep.subr.mxu0 0.0
        %2000 = vmatpush1.xpose.msra.mxu0 0.0
        %2001 = vmatprep.subr.mxu0 0.0
        %2002 = vmatpush1.xpose.msra.mxu0 0.0
        %2003 = vmatprep.subr.mxu0 0.0
        %2004 = vmatpush1.xpose.msra.mxu0 0.0
        %2005 = vmatprep.subr.mxu0 0.0
        %2006 = vmatpush1.xpose.msra.mxu0 0.0
        %2007 = vmatprep.subr.mxu0 0.0
        %2008 = vmatpush1.xpose.msra.mxu0 0.0
        %2009 = vmatprep.subr.mxu0 0.0
        %2010 = vmatpush1.xpose.msra.mxu0 0.0
        %2011 = vmatprep.subr.mxu0 0.0
        %2012 = vmatpush1.xpose.msra.mxu0 0.0
        %2013 = vmatprep.subr.mxu0 0.0
        %2014 = vmatpush1.xpose.msra.mxu0 0.0
        %2015 = vmatprep.subr.mxu0 0.0
        %2016 = vmatpush1.xpose.msra.mxu0 0.0
        %2017 = vmatprep.subr.mxu0 0.0
        %2018 = vmatpush1.xpose.msra.mxu0 0.0
        %2019 = vmatprep.subr.mxu0 0.0
        %2020 = vmatpush1.xpose.msra.mxu0 0.0
        %2021 = vmatprep.subr.mxu0 0.0
        %2022 = vmatpush1.xpose.msra.mxu0 0.0
        %2023 = vmatprep.subr.mxu0 0.0
        %2024 = vmatpush1.xpose.msra.mxu0 0.0
        %2025 = vmatprep.subr.mxu0 0.0
        %2026 = vmatpush1.xpose.msra.mxu0 0.0
        %2027 = vmatprep.subr.mxu0 0.0
        %2028 = vmatpush1.xpose.msra.mxu0 0.0
        %2029 = vmatprep.mubr.f32.mxu0 0.0
        %2030 = vmatmul.mubr.f32.gmra.mrb[0].mxu0 %v1885
        %v2031 = vpop.f32.mrb[0].mxu0
        %v2032 = vadd.f32 0.0, %v2031
        %v2033 = vpop.f32.mrb[0].mxu0
        %2034 = vmatprep.mubr.f32.mxu0 0.0
        %2035 = vmatmul.mubr.f32.gmra.mrb[0].mxu0 %v1887
        %v2036 = vpop.f32.mrb[0].mxu0
        %v2037 = vadd.f32 0.0, %v2036
        %v2038 = vpop.f32.mrb[0].mxu0
        %2039 = vmatprep.mubr.f32.mxu0 0.0
        %2040 = vmatmul.mubr.f32.gmra.mrb[0].mxu0 %v1889
        %v2041 = vpop.f32.mrb[0].mxu0
        %v2042 = vadd.f32 0.0, %v2041
        %v2043 = vpop.f32.mrb[0].mxu0
        %2044 = vmatprep.mubr.f32.mxu0 0.0
        %2045 = vmatmul.mubr.f32.gmra.mrb[0].mxu0 %v1891
        %v2046 = vpop.f32.mrb[0].mxu0
        %v2047 = vadd.f32 0.0, %v2046
        %v2048 = vpop.f32.mrb[0].mxu0
        %2049 = vmatprep.mubr.f32.mxu0 0.0
        %2050 = vmatmul.mubr.f32.gmra.mrb[0].mxu0 %v1893
        %v2051 = vpop.f32.mrb[0].mxu0
        %v2052 = vadd.f32 0.0, %v2051
        %v2053 = vpop.f32.mrb[0].mxu0
        %2054 = vmatprep.mubr.f32.mxu0 0.0
        %2055 = vmatmul.mubr.f32.gmra.mrb[0].mxu0 %v1895
        %v2056 = vpop.f32.mrb[0].mxu0
        %v2057 = vadd.f32 0.0, %v2056
        %v2058 = vpop.f32.mrb[0].mxu0
        %2059 = vmatprep.mubr.f32.mxu0 0.0
        %2060 = vmatmul.mubr.f32.gmra.mrb[0].mxu0 %v1897
        %v2061 = vpop.f32.mrb[0].mxu0
        %v2062 = vadd.f32 0.0, %v2061
        %v2063 = vpop.f32.mrb[0].mxu0
        %2064 = vmatprep.mubr.f32.mxu0 0.0
        %2065 = vmatmul.mubr.f32.gmra.mrb[0].mxu0 %v1899
        %v2066 = vpop.f32.mrb[0].mxu0
        %v2067 = vadd.f32 0.0, %v2066
        %v2068 = vpop.f32.mrb[0].mxu0
        %2069 = vmatprep.mubr.f32.mxu0 0.0
        %2070 = vmatmul.mubr.f32.gmra.mrb[0].mxu0 %v1901
        %v2071 = vpop.f32.mrb[0].mxu0
        %v2072 = vadd.f32 0.0, %v2071
        %v2073 = vpop.f32.mrb[0].mxu0
        %2074 = vmatprep.mubr.f32.mxu0 0.0
        %2075 = vmatmul.mubr.f32.gmra.mrb[0].mxu0 %v1903
        %v2076 = vpop.f32.mrb[0].mxu0
        %v2077 = vadd.f32 0.0, %v2076
        %v2078 = vpop.f32.mrb[0].mxu0
        %2079 = vmatprep.mubr.f32.mxu0 0.0
        %2080 = vmatmul.mubr.f32.gmra.mrb[0].mxu0 %v1905
        %v2081 = vpop.f32.mrb[0].mxu0
        %v2082 = vadd.f32 0.0, %v2081
        %v2083 = vpop.f32.mrb[0].mxu0
        %2084 = vmatprep.mubr.f32.mxu0 0.0
        %2085 = vmatmul.mubr.f32.gmra.mrb[0].mxu0 %v1907
        %v2086 = vpop.f32.mrb[0].mxu0
        %v2087 = vadd.f32 0.0, %v2086
        %v2088 = vpop.f32.mrb[0].mxu0
        %2089 = vmatprep.mubr.f32.mxu0 0.0
        %2090 = vmatmul.mubr.f32.gmra.mrb[0].mxu0 %v1909
        %v2091 = vpop.f32.mrb[0].mxu0
        %v2092 = vadd.f32 0.0, %v2091
        %v2093 = vpop.f32.mrb[0].mxu0
        %2094 = vmatprep.mubr.f32.mxu0 0.0
        %2095 = vmatmul.mubr.f32.gmra.mrb[0].mxu0 %v1911
        %v2096 = vpop.f32.mrb[0].mxu0
        %v2097 = vadd.f32 0.0, %v2096
        %v2098 = vpop.f32.mrb[0].mxu0
        %2099 = vmatprep.mubr.f32.mxu0 0.0
        %2100 = vmatmul.mubr.f32.gmra.mrb[0].mxu0 %v1913
        %v2101 = vpop.f32.mrb[0].mxu0
        %v2102 = vadd.f32 0.0, %v2101
        %v2103 = vpop.f32.mrb[0].mxu0
        %2104 = vmatprep.mubr.f32.mxu0 0.0
        %2105 = vmatmul.mubr.f32.gmra.mrb[0].mxu0 %v1915
        %v2106 = vpop.f32.mrb[0].mxu0
        %v2107 = vadd.f32 0.0, %v2106
        %v2108 = vpop.f32.mrb[0].mxu0
        %2109 = vdwg.mxu0
        %v2110 = vsel %vm1659, %v1532, 0
        %v2112 = vsel %vm1659, %v1534, 0
        %v2114 = vsel %vm1659, %v1536, 0
        %v2116 = vsel %vm1659, %v1538, 0
        %v2118 = vsel %vm1659, %v1540, 0
        %v2120 = vsel %vm1659, %v1542, 0
        %v2122 = vsel %vm1659, %v1544, 0
        %v2124 = vsel %vm1659, %v1546, 0
        %v2126 = vsel %vm1659, %v1548, 0
        %v2128 = vsel %vm1659, %v1550, 0
        %v2130 = vsel %vm1659, %v1552, 0
        %v2132 = vsel %vm1659, %v1554, 0
        %v2134 = vsel %vm1659, %v1556, 0
        %v2136 = vsel %vm1659, %v1558, 0
        %v2138 = vsel %vm1659, %v1560, 0
        %v2140 = vsel %vm1659, %v1562, 0
        %v2143 = vsel %vm1659, %v1627, 0
        %v2146 = vsel %vm1659, %v1628, 0
        %v2149 = vsel %vm1659, %v1629, 0
        %v2152 = vsel %vm1659, %v1630, 0
        %v2155 = vsel %vm1659, %v1631, 0
        %v2158 = vsel %vm1659, %v1632, 0
        %v2161 = vsel %vm1659, %v1633, 0
        %v2164 = vsel %vm1659, %v1634, 0
        %v2167 = vsel %vm1659, %v1635, 0
        %v2170 = vsel %vm1659, %v1636, 0
        %v2173 = vsel %vm1659, %v1637, 0
        %v2176 = vsel %vm1659, %v1638, 0
        %v2179 = vsel %vm1659, %v1639, 0
        %v2182 = vsel %vm1659, %v1640, 0
        %v2185 = vsel %vm1659, %v1641, 0
        %v2188 = vsel %vm1659, %v1642, 0
        %2190 = vmatprep.subr.mxu0 0.0
        %2191 = vmatpush1.xpose.msra.mxu0 %v2143
        %2192 = vmatprep.subr.mxu0 0.0
        %2193 = vmatpush1.xpose.msra.mxu0 %v2146
        %2194 = vmatprep.subr.mxu0 0.0
        %2195 = vmatpush1.xpose.msra.mxu0 %v2149
        %2196 = vmatprep.subr.mxu0 0.0
        %2197 = vmatpush1.xpose.msra.mxu0 %v2152
        %2198 = vmatprep.subr.mxu0 0.0
        %2199 = vmatpush1.xpose.msra.mxu0 %v2155
        %2200 = vmatprep.subr.mxu0 0.0
        %2201 = vmatpush1.xpose.msra.mxu0 %v2158
        %2202 = vmatprep.subr.mxu0 0.0
        %2203 = vmatpush1.xpose.msra.mxu0 %v2161
        %2204 = vmatprep.subr.mxu0 0.0
        %2205 = vmatpush1.xpose.msra.mxu0 %v2164
        %2206 = vmatprep.subr.mxu0 0.0
        %2207 = vmatpush1.xpose.msra.mxu0 %v2167
        %2208 = vmatprep.subr.mxu0 0.0
        %2209 = vmatpush1.xpose.msra.mxu0 %v2170
        %2210 = vmatprep.subr.mxu0 0.0
        %2211 = vmatpush1.xpose.msra.mxu0 %v2173
        %2212 = vmatprep.subr.mxu0 0.0
        %2213 = vmatpush1.xpose.msra.mxu0 %v2176
        %2214 = vmatprep.subr.mxu0 0.0
        %2215 = vmatpush1.xpose.msra.mxu0 %v2179
        %2216 = vmatprep.subr.mxu0 0.0
        %2217 = vmatpush1.xpose.msra.mxu0 %v2182
        %2218 = vmatprep.subr.mxu0 0.0
        %2219 = vmatpush1.xpose.msra.mxu0 %v2185
        %2220 = vmatprep.subr.mxu0 0.0
        %2221 = vmatpush1.xpose.msra.mxu0 %v2188
        %2222 = vmatprep.subr.mxu0 0.0
        %2223 = vmatpush1.xpose.msra.mxu0 0.0
        %2224 = vmatprep.subr.mxu0 0.0
        %2225 = vmatpush1.xpose.msra.mxu0 0.0
        %2226 = vmatprep.subr.mxu0 0.0
        %2227 = vmatpush1.xpose.msra.mxu0 0.0
        %2228 = vmatprep.subr.mxu0 0.0
        %2229 = vmatpush1.xpose.msra.mxu0 0.0
        %2230 = vmatprep.subr.mxu0 0.0
        %2231 = vmatpush1.xpose.msra.mxu0 0.0
        %2232 = vmatprep.subr.mxu0 0.0
        %2233 = vmatpush1.xpose.msra.mxu0 0.0
        %2234 = vmatprep.subr.mxu0 0.0
        %2235 = vmatpush1.xpose.msra.mxu0 0.0
        %2236 = vmatprep.subr.mxu0 0.0
        %2237 = vmatpush1.xpose.msra.mxu0 0.0
        %2238 = vmatprep.subr.mxu0 0.0
        %2239 = vmatpush1.xpose.msra.mxu0 0.0
        %2240 = vmatprep.subr.mxu0 0.0
        %2241 = vmatpush1.xpose.msra.mxu0 0.0
        %2242 = vmatprep.subr.mxu0 0.0
        %2243 = vmatpush1.xpose.msra.mxu0 0.0
        %2244 = vmatprep.subr.mxu0 0.0
        %2245 = vmatpush1.xpose.msra.mxu0 0.0
        %2246 = vmatprep.subr.mxu0 0.0
        %2247 = vmatpush1.xpose.msra.mxu0 0.0
        %2248 = vmatprep.subr.mxu0 0.0
        %2249 = vmatpush1.xpose.msra.mxu0 0.0
        %2250 = vmatprep.subr.mxu0 0.0
        %2251 = vmatpush1.xpose.msra.mxu0 0.0
        %2252 = vmatprep.subr.mxu0 0.0
        %2253 = vmatpush1.xpose.msra.mxu0 0.0
        %2254 = vmatprep.mubr.f32.mxu0 0.0
        %2255 = vmatmul.mubr.f32.gmra.mrb[0].mxu0 %v2110
        %v2256 = vpop.f32.mrb[0].mxu0
        %v2257 = vadd.f32 0.0, %v2256
        %v2258 = vpop.f32.mrb[0].mxu0
        %2259 = vmatprep.mubr.f32.mxu0 0.0
        %2260 = vmatmul.mubr.f32.gmra.mrb[0].mxu0 %v2112
        %v2261 = vpop.f32.mrb[0].mxu0
        %v2262 = vadd.f32 0.0, %v2261
        %v2263 = vpop.f32.mrb[0].mxu0
        %2264 = vmatprep.mubr.f32.mxu0 0.0
        %2265 = vmatmul.mubr.f32.gmra.mrb[0].mxu0 %v2114
        %v2266 = vpop.f32.mrb[0].mxu0
        %v2267 = vadd.f32 0.0, %v2266
        %v2268 = vpop.f32.mrb[0].mxu0
        %2269 = vmatprep.mubr.f32.mxu0 0.0
        %2270 = vmatmul.mubr.f32.gmra.mrb[0].mxu0 %v2116
        %v2271 = vpop.f32.mrb[0].mxu0
        %v2272 = vadd.f32 0.0, %v2271
        %v2273 = vpop.f32.mrb[0].mxu0
        %2274 = vmatprep.mubr.f32.mxu0 0.0
        %2275 = vmatmul.mubr.f32.gmra.mrb[0].mxu0 %v2118
        %v2276 = vpop.f32.mrb[0].mxu0
        %v2277 = vadd.f32 0.0, %v2276
        %v2278 = vpop.f32.mrb[0].mxu0
        %2279 = vmatprep.mubr.f32.mxu0 0.0
        %2280 = vmatmul.mubr.f32.gmra.mrb[0].mxu0 %v2120
        %v2281 = vpop.f32.mrb[0].mxu0
        %v2282 = vadd.f32 0.0, %v2281
        %v2283 = vpop.f32.mrb[0].mxu0
        %2284 = vmatprep.mubr.f32.mxu0 0.0
        %2285 = vmatmul.mubr.f32.gmra.mrb[0].mxu0 %v2122
        %v2286 = vpop.f32.mrb[0].mxu0
        %v2287 = vadd.f32 0.0, %v2286
        %v2288 = vpop.f32.mrb[0].mxu0
        %2289 = vmatprep.mubr.f32.mxu0 0.0
        %2290 = vmatmul.mubr.f32.gmra.mrb[0].mxu0 %v2124
        %v2291 = vpop.f32.mrb[0].mxu0
        %v2292 = vadd.f32 0.0, %v2291
        %v2293 = vpop.f32.mrb[0].mxu0
        %2294 = vmatprep.mubr.f32.mxu0 0.0
        %2295 = vmatmul.mubr.f32.gmra.mrb[0].mxu0 %v2126
        %v2296 = vpop.f32.mrb[0].mxu0
        %v2297 = vadd.f32 0.0, %v2296
        %v2298 = vpop.f32.mrb[0].mxu0
        %2299 = vmatprep.mubr.f32.mxu0 0.0
        %2300 = vmatmul.mubr.f32.gmra.mrb[0].mxu0 %v2128
        %v2301 = vpop.f32.mrb[0].mxu0
        %v2302 = vadd.f32 0.0, %v2301
        %v2303 = vpop.f32.mrb[0].mxu0
        %2304 = vmatprep.mubr.f32.mxu0 0.0
        %2305 = vmatmul.mubr.f32.gmra.mrb[0].mxu0 %v2130
        %v2306 = vpop.f32.mrb[0].mxu0
        %v2307 = vadd.f32 0.0, %v2306
        %v2308 = vpop.f32.mrb[0].mxu0
        %2309 = vmatprep.mubr.f32.mxu0 0.0
        %2310 = vmatmul.mubr.f32.gmra.mrb[0].mxu0 %v2132
        %v2311 = vpop.f32.mrb[0].mxu0
        %v2312 = vadd.f32 0.0, %v2311
        %v2313 = vpop.f32.mrb[0].mxu0
        %2314 = vmatprep.mubr.f32.mxu0 0.0
        %2315 = vmatmul.mubr.f32.gmra.mrb[0].mxu0 %v2134
        %v2316 = vpop.f32.mrb[0].mxu0
        %v2317 = vadd.f32 0.0, %v2316
        %v2318 = vpop.f32.mrb[0].mxu0
        %2319 = vmatprep.mubr.f32.mxu0 0.0
        %2320 = vmatmul.mubr.f32.gmra.mrb[0].mxu0 %v2136
        %v2321 = vpop.f32.mrb[0].mxu0
        %v2322 = vadd.f32 0.0, %v2321
        %v2323 = vpop.f32.mrb[0].mxu0
        %2324 = vmatprep.mubr.f32.mxu0 0.0
        %2325 = vmatmul.mubr.f32.gmra.mrb[0].mxu0 %v2138
        %v2326 = vpop.f32.mrb[0].mxu0
        %v2327 = vadd.f32 0.0, %v2326
        %v2328 = vpop.f32.mrb[0].mxu0
        %2329 = vmatprep.mubr.f32.mxu0 0.0
        %2330 = vmatmul.mubr.f32.gmra.mrb[0].mxu0 %v2140
        %v2331 = vpop.f32.mrb[0].mxu0
        %v2332 = vadd.f32 0.0, %v2331
        %v2333 = vpop.f32.mrb[0].mxu0
        %2334 = vdwg.mxu0
        %v2335 = vsel %vm1659, %v1564, 0
        %v2337 = vsel %vm1659, %v1566, 0
        %v2339 = vsel %vm1659, %v1568, 0
        %v2341 = vsel %vm1659, %v1570, 0
        %v2343 = vsel %vm1659, %v1572, 0
        %v2345 = vsel %vm1659, %v1574, 0
        %v2347 = vsel %vm1659, %v1576, 0
        %v2349 = vsel %vm1659, %v1578, 0
        %v2351 = vsel %vm1659, %v1580, 0
        %v2353 = vsel %vm1659, %v1582, 0
        %v2355 = vsel %vm1659, %v1584, 0
        %v2357 = vsel %vm1659, %v1586, 0
        %v2359 = vsel %vm1659, %v1588, 0
        %v2361 = vsel %vm1659, %v1590, 0
        %v2363 = vsel %vm1659, %v1592, 0
        %v2365 = vsel %vm1659, %v1594, 0
        %v2368 = vsel %vm1659, %v1643, 0
        %v2371 = vsel %vm1659, %v1644, 0
        %v2374 = vsel %vm1659, %v1645, 0
        %v2377 = vsel %vm1659, %v1646, 0
        %v2380 = vsel %vm1659, %v1647, 0
        %v2383 = vsel %vm1659, %v1648, 0
        %v2386 = vsel %vm1659, %v1649, 0
        %v2389 = vsel %vm1659, %v1650, 0
        %v2392 = vsel %vm1659, %v1651, 0
        %v2395 = vsel %vm1659, %v1652, 0
        %v2398 = vsel %vm1659, %v1653, 0
        %v2401 = vsel %vm1659, %v1654, 0
        %v2404 = vsel %vm1659, %v1655, 0
        %v2407 = vsel %vm1659, %v1656, 0
        %v2410 = vsel %vm1659, %v1657, 0
        %v2413 = vsel %vm1659, %v1658, 0
        %2415 = vmatprep.subr.mxu0 0.0
        %2416 = vmatpush1.xpose.msra.mxu0 %v2368
        %2417 = vmatprep.subr.mxu0 0.0
        %2418 = vmatpush1.xpose.msra.mxu0 %v2371
        %2419 = vmatprep.subr.mxu0 0.0
        %2420 = vmatpush1.xpose.msra.mxu0 %v2374
        %2421 = vmatprep.subr.mxu0 0.0
        %2422 = vmatpush1.xpose.msra.mxu0 %v2377
        %2423 = vmatprep.subr.mxu0 0.0
        %2424 = vmatpush1.xpose.msra.mxu0 %v2380
        %2425 = vmatprep.subr.mxu0 0.0
        %2426 = vmatpush1.xpose.msra.mxu0 %v2383
        %2427 = vmatprep.subr.mxu0 0.0
        %2428 = vmatpush1.xpose.msra.mxu0 %v2386
        %2429 = vmatprep.subr.mxu0 0.0
        %2430 = vmatpush1.xpose.msra.mxu0 %v2389
        %2431 = vmatprep.subr.mxu0 0.0
        %2432 = vmatpush1.xpose.msra.mxu0 %v2392
        %2433 = vmatprep.subr.mxu0 0.0
        %2434 = vmatpush1.xpose.msra.mxu0 %v2395
        %2435 = vmatprep.subr.mxu0 0.0
        %2436 = vmatpush1.xpose.msra.mxu0 %v2398
        %2437 = vmatprep.subr.mxu0 0.0
        %2438 = vmatpush1.xpose.msra.mxu0 %v2401
        %2439 = vmatprep.subr.mxu0 0.0
        %2440 = vmatpush1.xpose.msra.mxu0 %v2404
        %2441 = vmatprep.subr.mxu0 0.0
        %2442 = vmatpush1.xpose.msra.mxu0 %v2407
        %2443 = vmatprep.subr.mxu0 0.0
        %2444 = vmatpush1.xpose.msra.mxu0 %v2410
        %2445 = vmatprep.subr.mxu0 0.0
        %2446 = vmatpush1.xpose.msra.mxu0 %v2413
        %2447 = vmatprep.subr.mxu0 0.0
        %2448 = vmatpush1.xpose.msra.mxu0 0.0
        %2449 = vmatprep.subr.mxu0 0.0
        %2450 = vmatpush1.xpose.msra.mxu0 0.0
        %2451 = vmatprep.subr.mxu0 0.0
        %2452 = vmatpush1.xpose.msra.mxu0 0.0
        %2453 = vmatprep.subr.mxu0 0.0
        %2454 = vmatpush1.xpose.msra.mxu0 0.0
        %2455 = vmatprep.subr.mxu0 0.0
        %2456 = vmatpush1.xpose.msra.mxu0 0.0
        %2457 = vmatprep.subr.mxu0 0.0
        %2458 = vmatpush1.xpose.msra.mxu0 0.0
        %2459 = vmatprep.subr.mxu0 0.0
        %2460 = vmatpush1.xpose.msra.mxu0 0.0
        %2461 = vmatprep.subr.mxu0 0.0
        %2462 = vmatpush1.xpose.msra.mxu0 0.0
        %2463 = vmatprep.subr.mxu0 0.0
        %2464 = vmatpush1.xpose.msra.mxu0 0.0
        %2465 = vmatprep.subr.mxu0 0.0
        %2466 = vmatpush1.xpose.msra.mxu0 0.0
        %2467 = vmatprep.subr.mxu0 0.0
        %2468 = vmatpush1.xpose.msra.mxu0 0.0
        %2469 = vmatprep.subr.mxu0 0.0
        %2470 = vmatpush1.xpose.msra.mxu0 0.0
        %2471 = vmatprep.subr.mxu0 0.0
        %2472 = vmatpush1.xpose.msra.mxu0 0.0
        %2473 = vmatprep.subr.mxu0 0.0
        %2474 = vmatpush1.xpose.msra.mxu0 0.0
        %2475 = vmatprep.subr.mxu0 0.0
        %2476 = vmatpush1.xpose.msra.mxu0 0.0
        %2477 = vmatprep.subr.mxu0 0.0
        %2478 = vmatpush1.xpose.msra.mxu0 0.0
        %2479 = vmatprep.mubr.f32.mxu0 0.0
        %2480 = vmatmul.mubr.f32.gmra.mrb[0].mxu0 %v2335
        %v2481 = vpop.f32.mrb[0].mxu0
        %v2482 = vadd.f32 0.0, %v2481
        %v2483 = vpop.f32.mrb[0].mxu0
        %2484 = vmatprep.mubr.f32.mxu0 0.0
        %2485 = vmatmul.mubr.f32.gmra.mrb[0].mxu0 %v2337
        %v2486 = vpop.f32.mrb[0].mxu0
        %v2487 = vadd.f32 0.0, %v2486
        %v2488 = vpop.f32.mrb[0].mxu0
        %2489 = vmatprep.mubr.f32.mxu0 0.0
        %2490 = vmatmul.mubr.f32.gmra.mrb[0].mxu0 %v2339
        %v2491 = vpop.f32.mrb[0].mxu0
        %v2492 = vadd.f32 0.0, %v2491
        %v2493 = vpop.f32.mrb[0].mxu0
        %2494 = vmatprep.mubr.f32.mxu0 0.0
        %2495 = vmatmul.mubr.f32.gmra.mrb[0].mxu0 %v2341
        %v2496 = vpop.f32.mrb[0].mxu0
        %v2497 = vadd.f32 0.0, %v2496
        %v2498 = vpop.f32.mrb[0].mxu0
        %2499 = vmatprep.mubr.f32.mxu0 0.0
        %2500 = vmatmul.mubr.f32.gmra.mrb[0].mxu0 %v2343
        %v2501 = vpop.f32.mrb[0].mxu0
        %v2502 = vadd.f32 0.0, %v2501
        %v2503 = vpop.f32.mrb[0].mxu0
        %2504 = vmatprep.mubr.f32.mxu0 0.0
        %2505 = vmatmul.mubr.f32.gmra.mrb[0].mxu0 %v2345
        %v2506 = vpop.f32.mrb[0].mxu0
        %v2507 = vadd.f32 0.0, %v2506
        %v2508 = vpop.f32.mrb[0].mxu0
        %2509 = vmatprep.mubr.f32.mxu0 0.0
        %2510 = vmatmul.mubr.f32.gmra.mrb[0].mxu0 %v2347
        %v2511 = vpop.f32.mrb[0].mxu0
        %v2512 = vadd.f32 0.0, %v2511
        %v2513 = vpop.f32.mrb[0].mxu0
        %2514 = vmatprep.mubr.f32.mxu0 0.0
        %2515 = vmatmul.mubr.f32.gmra.mrb[0].mxu0 %v2349
        %v2516 = vpop.f32.mrb[0].mxu0
        %v2517 = vadd.f32 0.0, %v2516
        %v2518 = vpop.f32.mrb[0].mxu0
        %2519 = vmatprep.mubr.f32.mxu0 0.0
        %2520 = vmatmul.mubr.f32.gmra.mrb[0].mxu0 %v2351
        %v2521 = vpop.f32.mrb[0].mxu0
        %v2522 = vadd.f32 0.0, %v2521
        %v2523 = vpop.f32.mrb[0].mxu0
        %2524 = vmatprep.mubr.f32.mxu0 0.0
        %2525 = vmatmul.mubr.f32.gmra.mrb[0].mxu0 %v2353
        %v2526 = vpop.f32.mrb[0].mxu0
        %v2527 = vadd.f32 0.0, %v2526
        %v2528 = vpop.f32.mrb[0].mxu0
        %2529 = vmatprep.mubr.f32.mxu0 0.0
        %2530 = vmatmul.mubr.f32.gmra.mrb[0].mxu0 %v2355
        %v2531 = vpop.f32.mrb[0].mxu0
        %v2532 = vadd.f32 0.0, %v2531
        %v2533 = vpop.f32.mrb[0].mxu0
        %2534 = vmatprep.mubr.f32.mxu0 0.0
        %2535 = vmatmul.mubr.f32.gmra.mrb[0].mxu0 %v2357
        %v2536 = vpop.f32.mrb[0].mxu0
        %v2537 = vadd.f32 0.0, %v2536
        %v2538 = vpop.f32.mrb[0].mxu0
        %2539 = vmatprep.mubr.f32.mxu0 0.0
        %2540 = vmatmul.mubr.f32.gmra.mrb[0].mxu0 %v2359
        %v2541 = vpop.f32.mrb[0].mxu0
        %v2542 = vadd.f32 0.0, %v2541
        %v2543 = vpop.f32.mrb[0].mxu0
        %2544 = vmatprep.mubr.f32.mxu0 0.0
        %2545 = vmatmul.mubr.f32.gmra.mrb[0].mxu0 %v2361
        %v2546 = vpop.f32.mrb[0].mxu0
        %v2547 = vadd.f32 0.0, %v2546
        %v2548 = vpop.f32.mrb[0].mxu0
        %2549 = vmatprep.mubr.f32.mxu0 0.0
        %2550 = vmatmul.mubr.f32.gmra.mrb[0].mxu0 %v2363
        %v2551 = vpop.f32.mrb[0].mxu0
        %v2552 = vadd.f32 0.0, %v2551
        %v2553 = vpop.f32.mrb[0].mxu0
        %2554 = vmatprep.mubr.f32.mxu0 0.0
        %2555 = vmatmul.mubr.f32.gmra.mrb[0].mxu0 %v2365
        %v2556 = vpop.f32.mrb[0].mxu0
        %v2557 = vadd.f32 0.0, %v2556
        %v2558 = vpop.f32.mrb[0].mxu0
        %2559 = vdwg.mxu0
        %2560 = vmax.xlane.f32.xlu0 %v1807
        %v2561 = vpop.xlane.xlu0 %2560
        %2562 = vmax.xlane.f32.xlu0 %v1812
        %v2563 = vpop.xlane.xlu0 %2562
        %2564 = vmax.xlane.f32.xlu0 %v1817
        %v2565 = vpop.xlane.xlu0 %2564
        %2566 = vmax.xlane.f32.xlu0 %v1822
        %v2567 = vpop.xlane.xlu0 %2566
        %2568 = vmax.xlane.f32.xlu0 %v1827
        %v2569 = vpop.xlane.xlu0 %2568
        %2570 = vmax.xlane.f32.xlu0 %v1832
        %v2571 = vpop.xlane.xlu0 %2570
        %2572 = vmax.xlane.f32.xlu0 %v1837
        %v2573 = vpop.xlane.xlu0 %2572
        %2574 = vmax.xlane.f32.xlu0 %v1842
        %v2575 = vpop.xlane.xlu0 %2574
        %2576 = vmax.xlane.f32.xlu0 %v1847
        %v2577 = vpop.xlane.xlu0 %2576
        %2578 = vmax.xlane.f32.xlu0 %v1852
        %v2579 = vpop.xlane.xlu0 %2578
        %2580 = vmax.xlane.f32.xlu0 %v1857
        %v2581 = vpop.xlane.xlu0 %2580
        %2582 = vmax.xlane.f32.xlu0 %v1862
        %v2583 = vpop.xlane.xlu0 %2582
        %2584 = vmax.xlane.f32.xlu0 %v1867
        %v2585 = vpop.xlane.xlu0 %2584
        %2586 = vmax.xlane.f32.xlu0 %v1872
        %v2587 = vpop.xlane.xlu0 %2586
        %2588 = vmax.xlane.f32.xlu0 %v1877
        %v2589 = vpop.xlane.xlu0 %2588
        %2590 = vmax.xlane.f32.xlu0 %v1882
        %v2591 = vpop.xlane.xlu0 %2590
        %2592 = vmax.xlane.f32.xlu0 %v2032
        %v2593 = vpop.xlane.xlu0 %2592
        %2594 = vmax.xlane.f32.xlu0 %v2037
        %v2595 = vpop.xlane.xlu0 %2594
        %2596 = vmax.xlane.f32.xlu0 %v2042
        %v2597 = vpop.xlane.xlu0 %2596
        %2598 = vmax.xlane.f32.xlu0 %v2047
        %v2599 = vpop.xlane.xlu0 %2598
        %2600 = vmax.xlane.f32.xlu0 %v2052
        %v2601 = vpop.xlane.xlu0 %2600
        %2602 = vmax.xlane.f32.xlu0 %v2057
        %v2603 = vpop.xlane.xlu0 %2602
        %2604 = vmax.xlane.f32.xlu0 %v2062
        %v2605 = vpop.xlane.xlu0 %2604
        %2606 = vmax.xlane.f32.xlu0 %v2067
        %v2607 = vpop.xlane.xlu0 %2606
        %2608 = vmax.xlane.f32.xlu0 %v2072
        %v2609 = vpop.xlane.xlu0 %2608
        %2610 = vmax.xlane.f32.xlu0 %v2077
        %v2611 = vpop.xlane.xlu0 %2610
        %2612 = vmax.xlane.f32.xlu0 %v2082
        %v2613 = vpop.xlane.xlu0 %2612
        %2614 = vmax.xlane.f32.xlu0 %v2087
        %v2615 = vpop.xlane.xlu0 %2614
        %2616 = vmax.xlane.f32.xlu0 %v2092
        %v2617 = vpop.xlane.xlu0 %2616
        %2618 = vmax.xlane.f32.xlu0 %v2097
        %v2619 = vpop.xlane.xlu0 %2618
        %2620 = vmax.xlane.f32.xlu0 %v2102
        %v2621 = vpop.xlane.xlu0 %2620
        %2622 = vmax.xlane.f32.xlu0 %v2107
        %v2623 = vpop.xlane.xlu0 %2622
        %2624 = vmax.xlane.f32.xlu0 %v2257
        %v2625 = vpop.xlane.xlu0 %2624
        %2626 = vmax.xlane.f32.xlu0 %v2262
        %v2627 = vpop.xlane.xlu0 %2626
        %2628 = vmax.xlane.f32.xlu0 %v2267
        %v2629 = vpop.xlane.xlu0 %2628
        %2630 = vmax.xlane.f32.xlu0 %v2272
        %v2631 = vpop.xlane.xlu0 %2630
        %2632 = vmax.xlane.f32.xlu0 %v2277
        %v2633 = vpop.xlane.xlu0 %2632
        %2634 = vmax.xlane.f32.xlu0 %v2282
        %v2635 = vpop.xlane.xlu0 %2634
        %2636 = vmax.xlane.f32.xlu0 %v2287
        %v2637 = vpop.xlane.xlu0 %2636
        %2638 = vmax.xlane.f32.xlu0 %v2292
        %v2639 = vpop.xlane.xlu0 %2638
        %2640 = vmax.xlane.f32.xlu0 %v2297
        %v2641 = vpop.xlane.xlu0 %2640
        %2642 = vmax.xlane.f32.xlu0 %v2302
        %v2643 = vpop.xlane.xlu0 %2642
        %2644 = vmax.xlane.f32.xlu0 %v2307
        %v2645 = vpop.xlane.xlu0 %2644
        %2646 = vmax.xlane.f32.xlu0 %v2312
        %v2647 = vpop.xlane.xlu0 %2646
        %2648 = vmax.xlane.f32.xlu0 %v2317
        %v2649 = vpop.xlane.xlu0 %2648
        %2650 = vmax.xlane.f32.xlu0 %v2322
        %v2651 = vpop.xlane.xlu0 %2650
        %2652 = vmax.xlane.f32.xlu0 %v2327
        %v2653 = vpop.xlane.xlu0 %2652
        %2654 = vmax.xlane.f32.xlu0 %v2332
        %v2655 = vpop.xlane.xlu0 %2654
        %2656 = vmax.xlane.f32.xlu0 %v2482
        %v2657 = vpop.xlane.xlu0 %2656
        %2658 = vmax.xlane.f32.xlu0 %v2487
        %v2659 = vpop.xlane.xlu0 %2658
        %2660 = vmax.xlane.f32.xlu0 %v2492
        %v2661 = vpop.xlane.xlu0 %2660
        %2662 = vmax.xlane.f32.xlu0 %v2497
        %v2663 = vpop.xlane.xlu0 %2662
        %2664 = vmax.xlane.f32.xlu0 %v2502
        %v2665 = vpop.xlane.xlu0 %2664
        %2666 = vmax.xlane.f32.xlu0 %v2507
        %v2667 = vpop.xlane.xlu0 %2666
        %2668 = vmax.xlane.f32.xlu0 %v2512
        %v2669 = vpop.xlane.xlu0 %2668
        %2670 = vmax.xlane.f32.xlu0 %v2517
        %v2671 = vpop.xlane.xlu0 %2670
        %2672 = vmax.xlane.f32.xlu0 %v2522
        %v2673 = vpop.xlane.xlu0 %2672
        %2674 = vmax.xlane.f32.xlu0 %v2527
        %v2675 = vpop.xlane.xlu0 %2674
        %2676 = vmax.xlane.f32.xlu0 %v2532
        %v2677 = vpop.xlane.xlu0 %2676
        %2678 = vmax.xlane.f32.xlu0 %v2537
        %v2679 = vpop.xlane.xlu0 %2678
        %2680 = vmax.xlane.f32.xlu0 %v2542
        %v2681 = vpop.xlane.xlu0 %2680
        %2682 = vmax.xlane.f32.xlu0 %v2547
        %v2683 = vpop.xlane.xlu0 %2682
        %2684 = vmax.xlane.f32.xlu0 %v2552
        %v2685 = vpop.xlane.xlu0 %2684
        %2686 = vmax.xlane.f32.xlu0 %v2557
        %v2687 = vpop.xlane.xlu0 %2686
        %v2688 = vsub.f32 %v1807, %v2561
        %v2689 = vsub.f32 %v1812, %v2563
        %v2690 = vsub.f32 %v1817, %v2565
        %v2691 = vsub.f32 %v1822, %v2567
        %v2692 = vsub.f32 %v1827, %v2569
        %v2693 = vsub.f32 %v1832, %v2571
        %v2694 = vsub.f32 %v1837, %v2573
        %v2695 = vsub.f32 %v1842, %v2575
        %v2696 = vsub.f32 %v1847, %v2577
        %v2697 = vsub.f32 %v1852, %v2579
        %v2698 = vsub.f32 %v1857, %v2581
        %v2699 = vsub.f32 %v1862, %v2583
        %v2700 = vsub.f32 %v1867, %v2585
        %v2701 = vsub.f32 %v1872, %v2587
        %v2702 = vsub.f32 %v1877, %v2589
        %v2703 = vsub.f32 %v1882, %v2591
        %v2704 = vsub.f32 %v2032, %v2593
        %v2705 = vsub.f32 %v2037, %v2595
        %v2706 = vsub.f32 %v2042, %v2597
        %v2707 = vsub.f32 %v2047, %v2599
        %v2708 = vsub.f32 %v2052, %v2601
        %v2709 = vsub.f32 %v2057, %v2603
        %v2710 = vsub.f32 %v2062, %v2605
        %v2711 = vsub.f32 %v2067, %v2607
        %v2712 = vsub.f32 %v2072, %v2609
        %v2713 = vsub.f32 %v2077, %v2611
        %v2714 = vsub.f32 %v2082, %v2613
        %v2715 = vsub.f32 %v2087, %v2615
        %v2716 = vsub.f32 %v2092, %v2617
        %v2717 = vsub.f32 %v2097, %v2619
        %v2718 = vsub.f32 %v2102, %v2621
        %v2719 = vsub.f32 %v2107, %v2623
        %v2720 = vsub.f32 %v2257, %v2625
        %v2721 = vsub.f32 %v2262, %v2627
        %v2722 = vsub.f32 %v2267, %v2629
        %v2723 = vsub.f32 %v2272, %v2631
        %v2724 = vsub.f32 %v2277, %v2633
        %v2725 = vsub.f32 %v2282, %v2635
        %v2726 = vsub.f32 %v2287, %v2637
        %v2727 = vsub.f32 %v2292, %v2639
        %v2728 = vsub.f32 %v2297, %v2641
        %v2729 = vsub.f32 %v2302, %v2643
        %v2730 = vsub.f32 %v2307, %v2645
        %v2731 = vsub.f32 %v2312, %v2647
        %v2732 = vsub.f32 %v2317, %v2649
        %v2733 = vsub.f32 %v2322, %v2651
        %v2734 = vsub.f32 %v2327, %v2653
        %v2735 = vsub.f32 %v2332, %v2655
        %v2736 = vsub.f32 %v2482, %v2657
        %v2737 = vsub.f32 %v2487, %v2659
        %v2738 = vsub.f32 %v2492, %v2661
        %v2739 = vsub.f32 %v2497, %v2663
        %v2740 = vsub.f32 %v2502, %v2665
        %v2741 = vsub.f32 %v2507, %v2667
        %v2742 = vsub.f32 %v2512, %v2669
        %v2743 = vsub.f32 %v2517, %v2671
        %v2744 = vsub.f32 %v2522, %v2673
        %v2745 = vsub.f32 %v2527, %v2675
        %v2746 = vsub.f32 %v2532, %v2677
        %v2747 = vsub.f32 %v2537, %v2679
        %v2748 = vsub.f32 %v2542, %v2681
        %v2749 = vsub.f32 %v2547, %v2683
        %v2750 = vsub.f32 %v2552, %v2685
        %v2751 = vsub.f32 %v2557, %v2687
        %v2752 = vmul.f32 %v2688, 1.442695
        %v2753 = vpow.pop %v2752
        %v2754 = vmul.f32 %v2689, 1.442695
        %v2755 = vpow.pop %v2754
        %v2756 = vmul.f32 %v2690, 1.442695
        %v2757 = vpow.pop %v2756
        %v2758 = vmul.f32 %v2691, 1.442695
        %v2759 = vpow.pop %v2758
        %v2760 = vmul.f32 %v2692, 1.442695
        %v2761 = vpow.pop %v2760
        %v2762 = vmul.f32 %v2693, 1.442695
        %v2763 = vpow.pop %v2762
        %v2764 = vmul.f32 %v2694, 1.442695
        %v2765 = vpow.pop %v2764
        %v2766 = vmul.f32 %v2695, 1.442695
        %v2767 = vpow.pop %v2766
        %v2768 = vmul.f32 %v2696, 1.442695
        %v2769 = vpow.pop %v2768
        %v2770 = vmul.f32 %v2697, 1.442695
        %v2771 = vpow.pop %v2770
        %v2772 = vmul.f32 %v2698, 1.442695
        %v2773 = vpow.pop %v2772
        %v2774 = vmul.f32 %v2699, 1.442695
        %v2775 = vpow.pop %v2774
        %v2776 = vmul.f32 %v2700, 1.442695
        %v2777 = vpow.pop %v2776
        %v2778 = vmul.f32 %v2701, 1.442695
        %v2779 = vpow.pop %v2778
        %v2780 = vmul.f32 %v2702, 1.442695
        %v2781 = vpow.pop %v2780
        %v2782 = vmul.f32 %v2703, 1.442695
        %v2783 = vpow.pop %v2782
        %v2784 = vmul.f32 %v2704, 1.442695
        %v2785 = vpow.pop %v2784
        %v2786 = vmul.f32 %v2705, 1.442695
        %v2787 = vpow.pop %v2786
        %v2788 = vmul.f32 %v2706, 1.442695
        %v2789 = vpow.pop %v2788
        %v2790 = vmul.f32 %v2707, 1.442695
        %v2791 = vpow.pop %v2790
        %v2792 = vmul.f32 %v2708, 1.442695
        %v2793 = vpow.pop %v2792
        %v2794 = vmul.f32 %v2709, 1.442695
        %v2795 = vpow.pop %v2794
        %v2796 = vmul.f32 %v2710, 1.442695
        %v2797 = vpow.pop %v2796
        %v2798 = vmul.f32 %v2711, 1.442695
        %v2799 = vpow.pop %v2798
        %v2800 = vmul.f32 %v2712, 1.442695
        %v2801 = vpow.pop %v2800
        %v2802 = vmul.f32 %v2713, 1.442695
        %v2803 = vpow.pop %v2802
        %v2804 = vmul.f32 %v2714, 1.442695
        %v2805 = vpow.pop %v2804
        %v2806 = vmul.f32 %v2715, 1.442695
        %v2807 = vpow.pop %v2806
        %v2808 = vmul.f32 %v2716, 1.442695
        %v2809 = vpow.pop %v2808
        %v2810 = vmul.f32 %v2717, 1.442695
        %v2811 = vpow.pop %v2810
        %v2812 = vmul.f32 %v2718, 1.442695
        %v2813 = vpow.pop %v2812
        %v2814 = vmul.f32 %v2719, 1.442695
        %v2815 = vpow.pop %v2814
        %v2816 = vmul.f32 %v2720, 1.442695
        %v2817 = vpow.pop %v2816
        %v2818 = vmul.f32 %v2721, 1.442695
        %v2819 = vpow.pop %v2818
        %v2820 = vmul.f32 %v2722, 1.442695
        %v2821 = vpow.pop %v2820
        %v2822 = vmul.f32 %v2723, 1.442695
        %v2823 = vpow.pop %v2822
        %v2824 = vmul.f32 %v2724, 1.442695
        %v2825 = vpow.pop %v2824
        %v2826 = vmul.f32 %v2725, 1.442695
        %v2827 = vpow.pop %v2826
        %v2828 = vmul.f32 %v2726, 1.442695
        %v2829 = vpow.pop %v2828
        %v2830 = vmul.f32 %v2727, 1.442695
        %v2831 = vpow.pop %v2830
        %v2832 = vmul.f32 %v2728, 1.442695
        %v2833 = vpow.pop %v2832
        %v2834 = vmul.f32 %v2729, 1.442695
        %v2835 = vpow.pop %v2834
        %v2836 = vmul.f32 %v2730, 1.442695
        %v2837 = vpow.pop %v2836
        %v2838 = vmul.f32 %v2731, 1.442695
        %v2839 = vpow.pop %v2838
        %v2840 = vmul.f32 %v2732, 1.442695
        %v2841 = vpow.pop %v2840
        %v2842 = vmul.f32 %v2733, 1.442695
        %v2843 = vpow.pop %v2842
        %v2844 = vmul.f32 %v2734, 1.442695
        %v2845 = vpow.pop %v2844
        %v2846 = vmul.f32 %v2735, 1.442695
        %v2847 = vpow.pop %v2846
        %v2848 = vmul.f32 %v2736, 1.442695
        %v2849 = vpow.pop %v2848
        %v2850 = vmul.f32 %v2737, 1.442695
        %v2851 = vpow.pop %v2850
        %v2852 = vmul.f32 %v2738, 1.442695
        %v2853 = vpow.pop %v2852
        %v2854 = vmul.f32 %v2739, 1.442695
        %v2855 = vpow.pop %v2854
        %v2856 = vmul.f32 %v2740, 1.442695
        %v2857 = vpow.pop %v2856
        %v2858 = vmul.f32 %v2741, 1.442695
        %v2859 = vpow.pop %v2858
        %v2860 = vmul.f32 %v2742, 1.442695
        %v2861 = vpow.pop %v2860
        %v2862 = vmul.f32 %v2743, 1.442695
        %v2863 = vpow.pop %v2862
        %v2864 = vmul.f32 %v2744, 1.442695
        %v2865 = vpow.pop %v2864
        %v2866 = vmul.f32 %v2745, 1.442695
        %v2867 = vpow.pop %v2866
        %v2868 = vmul.f32 %v2746, 1.442695
        %v2869 = vpow.pop %v2868
        %v2870 = vmul.f32 %v2747, 1.442695
        %v2871 = vpow.pop %v2870
        %v2872 = vmul.f32 %v2748, 1.442695
        %v2873 = vpow.pop %v2872
        %v2874 = vmul.f32 %v2749, 1.442695
        %v2875 = vpow.pop %v2874
        %v2876 = vmul.f32 %v2750, 1.442695
        %v2877 = vpow.pop %v2876
        %v2878 = vmul.f32 %v2751, 1.442695
        %v2879 = vpow.pop %v2878
        %2880 = vadd.xlane.f32.xlu0 %v2753
        %v2881 = vpop.xlane.xlu0 %2880
        %2882 = vadd.xlane.f32.xlu0 %v2755
        %v2883 = vpop.xlane.xlu0 %2882
        %2884 = vadd.xlane.f32.xlu0 %v2757
        %v2885 = vpop.xlane.xlu0 %2884
        %2886 = vadd.xlane.f32.xlu0 %v2759
        %v2887 = vpop.xlane.xlu0 %2886
        %2888 = vadd.xlane.f32.xlu0 %v2761
        %v2889 = vpop.xlane.xlu0 %2888
        %2890 = vadd.xlane.f32.xlu0 %v2763
        %v2891 = vpop.xlane.xlu0 %2890
        %2892 = vadd.xlane.f32.xlu0 %v2765
        %v2893 = vpop.xlane.xlu0 %2892
        %2894 = vadd.xlane.f32.xlu0 %v2767
        %v2895 = vpop.xlane.xlu0 %2894
        %2896 = vadd.xlane.f32.xlu0 %v2769
        %v2897 = vpop.xlane.xlu0 %2896
        %2898 = vadd.xlane.f32.xlu0 %v2771
        %v2899 = vpop.xlane.xlu0 %2898
        %2900 = vadd.xlane.f32.xlu0 %v2773
        %v2901 = vpop.xlane.xlu0 %2900
        %2902 = vadd.xlane.f32.xlu0 %v2775
        %v2903 = vpop.xlane.xlu0 %2902
        %2904 = vadd.xlane.f32.xlu0 %v2777
        %v2905 = vpop.xlane.xlu0 %2904
        %2906 = vadd.xlane.f32.xlu0 %v2779
        %v2907 = vpop.xlane.xlu0 %2906
        %2908 = vadd.xlane.f32.xlu0 %v2781
        %v2909 = vpop.xlane.xlu0 %2908
        %2910 = vadd.xlane.f32.xlu0 %v2783
        %v2911 = vpop.xlane.xlu0 %2910
        %2912 = vadd.xlane.f32.xlu0 %v2785
        %v2913 = vpop.xlane.xlu0 %2912
        %2914 = vadd.xlane.f32.xlu0 %v2787
        %v2915 = vpop.xlane.xlu0 %2914
        %2916 = vadd.xlane.f32.xlu0 %v2789
        %v2917 = vpop.xlane.xlu0 %2916
        %2918 = vadd.xlane.f32.xlu0 %v2791
        %v2919 = vpop.xlane.xlu0 %2918
        %2920 = vadd.xlane.f32.xlu0 %v2793
        %v2921 = vpop.xlane.xlu0 %2920
        %2922 = vadd.xlane.f32.xlu0 %v2795
        %v2923 = vpop.xlane.xlu0 %2922
        %2924 = vadd.xlane.f32.xlu0 %v2797
        %v2925 = vpop.xlane.xlu0 %2924
        %2926 = vadd.xlane.f32.xlu0 %v2799
        %v2927 = vpop.xlane.xlu0 %2926
        %2928 = vadd.xlane.f32.xlu0 %v2801
        %v2929 = vpop.xlane.xlu0 %2928
        %2930 = vadd.xlane.f32.xlu0 %v2803
        %v2931 = vpop.xlane.xlu0 %2930
        %2932 = vadd.xlane.f32.xlu0 %v2805
        %v2933 = vpop.xlane.xlu0 %2932
        %2934 = vadd.xlane.f32.xlu0 %v2807
        %v2935 = vpop.xlane.xlu0 %2934
        %2936 = vadd.xlane.f32.xlu0 %v2809
        %v2937 = vpop.xlane.xlu0 %2936
        %2938 = vadd.xlane.f32.xlu0 %v2811
        %v2939 = vpop.xlane.xlu0 %2938
        %2940 = vadd.xlane.f32.xlu0 %v2813
        %v2941 = vpop.xlane.xlu0 %2940
        %2942 = vadd.xlane.f32.xlu0 %v2815
        %v2943 = vpop.xlane.xlu0 %2942
        %2944 = vadd.xlane.f32.xlu0 %v2817
        %v2945 = vpop.xlane.xlu0 %2944
        %2946 = vadd.xlane.f32.xlu0 %v2819
        %v2947 = vpop.xlane.xlu0 %2946
        %2948 = vadd.xlane.f32.xlu0 %v2821
        %v2949 = vpop.xlane.xlu0 %2948
        %2950 = vadd.xlane.f32.xlu0 %v2823
        %v2951 = vpop.xlane.xlu0 %2950
        %2952 = vadd.xlane.f32.xlu0 %v2825
        %v2953 = vpop.xlane.xlu0 %2952
        %2954 = vadd.xlane.f32.xlu0 %v2827
        %v2955 = vpop.xlane.xlu0 %2954
        %2956 = vadd.xlane.f32.xlu0 %v2829
        %v2957 = vpop.xlane.xlu0 %2956
        %2958 = vadd.xlane.f32.xlu0 %v2831
        %v2959 = vpop.xlane.xlu0 %2958
        %2960 = vadd.xlane.f32.xlu0 %v2833
        %v2961 = vpop.xlane.xlu0 %2960
        %2962 = vadd.xlane.f32.xlu0 %v2835
        %v2963 = vpop.xlane.xlu0 %2962
        %2964 = vadd.xlane.f32.xlu0 %v2837
        %v2965 = vpop.xlane.xlu0 %2964
        %2966 = vadd.xlane.f32.xlu0 %v2839
        %v2967 = vpop.xlane.xlu0 %2966
        %2968 = vadd.xlane.f32.xlu0 %v2841
        %v2969 = vpop.xlane.xlu0 %2968
        %2970 = vadd.xlane.f32.xlu0 %v2843
        %v2971 = vpop.xlane.xlu0 %2970
        %2972 = vadd.xlane.f32.xlu0 %v2845
        %v2973 = vpop.xlane.xlu0 %2972
        %2974 = vadd.xlane.f32.xlu0 %v2847
        %v2975 = vpop.xlane.xlu0 %2974
        %2976 = vadd.xlane.f32.xlu0 %v2849
        %v2977 = vpop.xlane.xlu0 %2976
        %2978 = vadd.xlane.f32.xlu0 %v2851
        %v2979 = vpop.xlane.xlu0 %2978
        %2980 = vadd.xlane.f32.xlu0 %v2853
        %v2981 = vpop.xlane.xlu0 %2980
        %2982 = vadd.xlane.f32.xlu0 %v2855
        %v2983 = vpop.xlane.xlu0 %2982
        %2984 = vadd.xlane.f32.xlu0 %v2857
        %v2985 = vpop.xlane.xlu0 %2984
        %2986 = vadd.xlane.f32.xlu0 %v2859
        %v2987 = vpop.xlane.xlu0 %2986
        %2988 = vadd.xlane.f32.xlu0 %v2861
        %v2989 = vpop.xlane.xlu0 %2988
        %2990 = vadd.xlane.f32.xlu0 %v2863
        %v2991 = vpop.xlane.xlu0 %2990
        %2992 = vadd.xlane.f32.xlu0 %v2865
        %v2993 = vpop.xlane.xlu0 %2992
        %2994 = vadd.xlane.f32.xlu0 %v2867
        %v2995 = vpop.xlane.xlu0 %2994
        %2996 = vadd.xlane.f32.xlu0 %v2869
        %v2997 = vpop.xlane.xlu0 %2996
        %2998 = vadd.xlane.f32.xlu0 %v2871
        %v2999 = vpop.xlane.xlu0 %2998
        %3000 = vadd.xlane.f32.xlu0 %v2873
        %v3001 = vpop.xlane.xlu0 %3000
        %3002 = vadd.xlane.f32.xlu0 %v2875
        %v3003 = vpop.xlane.xlu0 %3002
        %3004 = vadd.xlane.f32.xlu0 %v2877
        %v3005 = vpop.xlane.xlu0 %3004
        %3006 = vadd.xlane.f32.xlu0 %v2879
        %v3007 = vpop.xlane.xlu0 %3006
        %v3008 = vrcp.pop %v2881
        %v3009 = vrcp.pop %v2883
        %v3010 = vrcp.pop %v2885
        %v3011 = vrcp.pop %v2887
        %v3012 = vrcp.pop %v2889
        %v3013 = vrcp.pop %v2891
        %v3014 = vrcp.pop %v2893
        %v3015 = vrcp.pop %v2895
        %v3016 = vrcp.pop %v2897
        %v3017 = vrcp.pop %v2899
        %v3018 = vrcp.pop %v2901
        %v3019 = vrcp.pop %v2903
        %v3020 = vrcp.pop %v2905
        %v3021 = vrcp.pop %v2907
        %v3022 = vrcp.pop %v2909
        %v3023 = vrcp.pop %v2911
        %v3024 = vrcp.pop %v2913
        %v3025 = vrcp.pop %v2915
        %v3026 = vrcp.pop %v2917
        %v3027 = vrcp.pop %v2919
        %v3028 = vrcp.pop %v2921
        %v3029 = vrcp.pop %v2923
        %v3030 = vrcp.pop %v2925
        %v3031 = vrcp.pop %v2927
        %v3032 = vrcp.pop %v2929
        %v3033 = vrcp.pop %v2931
        %v3034 = vrcp.pop %v2933
        %v3035 = vrcp.pop %v2935
        %v3036 = vrcp.pop %v2937
        %v3037 = vrcp.pop %v2939
        %v3038 = vrcp.pop %v2941
        %v3039 = vrcp.pop %v2943
        %v3040 = vrcp.pop %v2945
        %v3041 = vrcp.pop %v2947
        %v3042 = vrcp.pop %v2949
        %v3043 = vrcp.pop %v2951
        %v3044 = vrcp.pop %v2953
        %v3045 = vrcp.pop %v2955
        %v3046 = vrcp.pop %v2957
        %v3047 = vrcp.pop %v2959
        %v3048 = vrcp.pop %v2961
        %v3049 = vrcp.pop %v2963
        %v3050 = vrcp.pop %v2965
        %v3051 = vrcp.pop %v2967
        %v3052 = vrcp.pop %v2969
        %v3053 = vrcp.pop %v2971
        %v3054 = vrcp.pop %v2973
        %v3055 = vrcp.pop %v2975
        %v3056 = vrcp.pop %v2977
        %v3057 = vrcp.pop %v2979
        %v3058 = vrcp.pop %v2981
        %v3059 = vrcp.pop %v2983
        %v3060 = vrcp.pop %v2985
        %v3061 = vrcp.pop %v2987
        %v3062 = vrcp.pop %v2989
        %v3063 = vrcp.pop %v2991
        %v3064 = vrcp.pop %v2993
        %v3065 = vrcp.pop %v2995
        %v3066 = vrcp.pop %v2997
        %v3067 = vrcp.pop %v2999
        %v3068 = vrcp.pop %v3001
        %v3069 = vrcp.pop %v3003
        %v3070 = vrcp.pop %v3005
        %v3071 = vrcp.pop %v3007
        %v3072 = vmul.f32 %v2753, %v3008
        %v3073 = vmul.f32 %v2755, %v3009
        %v3074 = vmul.f32 %v2757, %v3010
        %v3075 = vmul.f32 %v2759, %v3011
        %v3076 = vmul.f32 %v2761, %v3012
        %v3077 = vmul.f32 %v2763, %v3013
        %v3078 = vmul.f32 %v2765, %v3014
        %v3079 = vmul.f32 %v2767, %v3015
        %v3080 = vmul.f32 %v2769, %v3016
        %v3081 = vmul.f32 %v2771, %v3017
        %v3082 = vmul.f32 %v2773, %v3018
        %v3083 = vmul.f32 %v2775, %v3019
        %v3084 = vmul.f32 %v2777, %v3020
        %v3085 = vmul.f32 %v2779, %v3021
        %v3086 = vmul.f32 %v2781, %v3022
        %v3087 = vmul.f32 %v2783, %v3023
        %v3088 = vmul.f32 %v2785, %v3024
        %v3089 = vmul.f32 %v2787, %v3025
        %v3090 = vmul.f32 %v2789, %v3026
        %v3091 = vmul.f32 %v2791, %v3027
        %v3092 = vmul.f32 %v2793, %v3028
        %v3093 = vmul.f32 %v2795, %v3029
        %v3094 = vmul.f32 %v2797, %v3030
        %v3095 = vmul.f32 %v2799, %v3031
        %v3096 = vmul.f32 %v2801, %v3032
        %v3097 = vmul.f32 %v2803, %v3033
        %v3098 = vmul.f32 %v2805, %v3034
        %v3099 = vmul.f32 %v2807, %v3035
        %v3100 = vmul.f32 %v2809, %v3036
        %v3101 = vmul.f32 %v2811, %v3037
        %v3102 = vmul.f32 %v2813, %v3038
        %v3103 = vmul.f32 %v2815, %v3039
        %v3104 = vmul.f32 %v2817, %v3040
        %v3105 = vmul.f32 %v2819, %v3041
        %v3106 = vmul.f32 %v2821, %v3042
        %v3107 = vmul.f32 %v2823, %v3043
        %v3108 = vmul.f32 %v2825, %v3044
        %v3109 = vmul.f32 %v2827, %v3045
        %v3110 = vmul.f32 %v2829, %v3046
        %v3111 = vmul.f32 %v2831, %v3047
        %v3112 = vmul.f32 %v2833, %v3048
        %v3113 = vmul.f32 %v2835, %v3049
        %v3114 = vmul.f32 %v2837, %v3050
        %v3115 = vmul.f32 %v2839, %v3051
        %v3116 = vmul.f32 %v2841, %v3052
        %v3117 = vmul.f32 %v2843, %v3053
        %v3118 = vmul.f32 %v2845, %v3054
        %v3119 = vmul.f32 %v2847, %v3055
        %v3120 = vmul.f32 %v2849, %v3056
        %v3121 = vmul.f32 %v2851, %v3057
        %v3122 = vmul.f32 %v2853, %v3058
        %v3123 = vmul.f32 %v2855, %v3059
        %v3124 = vmul.f32 %v2857, %v3060
        %v3125 = vmul.f32 %v2859, %v3061
        %v3126 = vmul.f32 %v2861, %v3062
        %v3127 = vmul.f32 %v2863, %v3063
        %v3128 = vmul.f32 %v2865, %v3064
        %v3129 = vmul.f32 %v2867, %v3065
        %v3130 = vmul.f32 %v2869, %v3066
        %v3131 = vmul.f32 %v2871, %v3067
        %v3132 = vmul.f32 %v2873, %v3068
        %v3133 = vmul.f32 %v2875, %v3069
        %v3134 = vmul.f32 %v2877, %v3070
        %v3135 = vmul.f32 %v2879, %v3071
        %v3136 = vld [vmem:[#allocation3] sm:$0xff]
        %v3137 = vld [vmem:[#allocation3 + $0x8] sm:$0xff]
        %v3138 = vld [vmem:[#allocation3 + $0x10] sm:$0xff]
        %v3139 = vld [vmem:[#allocation3 + $0x18] sm:$0xff]
        %v3140 = vld [vmem:[#allocation3 + $0x20] sm:$0xff]
        %v3141 = vld [vmem:[#allocation3 + $0x28] sm:$0xff]
        %v3142 = vld [vmem:[#allocation3 + $0x30] sm:$0xff]
        %v3143 = vld [vmem:[#allocation3 + $0x38] sm:$0xff]
        %v3144 = vld [vmem:[#allocation3 + $0x40] sm:$0xff]
        %v3145 = vld [vmem:[#allocation3 + $0x48] sm:$0xff]
        %v3146 = vld [vmem:[#allocation3 + $0x50] sm:$0xff]
        %v3147 = vld [vmem:[#allocation3 + $0x58] sm:$0xff]
        %v3148 = vld [vmem:[#allocation3 + $0x60] sm:$0xff]
        %v3149 = vld [vmem:[#allocation3 + $0x68] sm:$0xff]
        %v3150 = vld [vmem:[#allocation3 + $0x70] sm:$0xff]
        %v3151 = vld [vmem:[#allocation3 + $0x78] sm:$0xff]
        %v3152 = vld [vmem:[#allocation3 + $0x80] sm:$0xff]
        %v3153 = vld [vmem:[#allocation3 + $0x88] sm:$0xff]
        %v3154 = vld [vmem:[#allocation3 + $0x90] sm:$0xff]
        %v3155 = vld [vmem:[#allocation3 + $0x98] sm:$0xff]
        %v3156 = vld [vmem:[#allocation3 + $0xa0] sm:$0xff]
        %v3157 = vld [vmem:[#allocation3 + $0xa8] sm:$0xff]
        %v3158 = vld [vmem:[#allocation3 + $0xb0] sm:$0xff]
        %v3159 = vld [vmem:[#allocation3 + $0xb8] sm:$0xff]
        %v3160 = vld [vmem:[#allocation3 + $0xc0] sm:$0xff]
        %v3161 = vld [vmem:[#allocation3 + $0xc8] sm:$0xff]
        %v3162 = vld [vmem:[#allocation3 + $0xd0] sm:$0xff]
        %v3163 = vld [vmem:[#allocation3 + $0xd8] sm:$0xff]
        %v3164 = vld [vmem:[#allocation3 + $0xe0] sm:$0xff]
        %v3165 = vld [vmem:[#allocation3 + $0xe8] sm:$0xff]
        %v3166 = vld [vmem:[#allocation3 + $0xf0] sm:$0xff]
        %v3167 = vld [vmem:[#allocation3 + $0xf8] sm:$0xff]
        %v3168 = vld [vmem:[#allocation3 + $0x100] sm:$0xff]
        %v3169 = vld [vmem:[#allocation3 + $0x108] sm:$0xff]
        %v3170 = vld [vmem:[#allocation3 + $0x110] sm:$0xff]
        %v3171 = vld [vmem:[#allocation3 + $0x118] sm:$0xff]
        %v3172 = vld [vmem:[#allocation3 + $0x120] sm:$0xff]
        %v3173 = vld [vmem:[#allocation3 + $0x128] sm:$0xff]
        %v3174 = vld [vmem:[#allocation3 + $0x130] sm:$0xff]
        %v3175 = vld [vmem:[#allocation3 + $0x138] sm:$0xff]
        %v3176 = vld [vmem:[#allocation3 + $0x140] sm:$0xff]
        %v3177 = vld [vmem:[#allocation3 + $0x148] sm:$0xff]
        %v3178 = vld [vmem:[#allocation3 + $0x150] sm:$0xff]
        %v3179 = vld [vmem:[#allocation3 + $0x158] sm:$0xff]
        %v3180 = vld [vmem:[#allocation3 + $0x160] sm:$0xff]
        %v3181 = vld [vmem:[#allocation3 + $0x168] sm:$0xff]
        %v3182 = vld [vmem:[#allocation3 + $0x170] sm:$0xff]
        %v3183 = vld [vmem:[#allocation3 + $0x178] sm:$0xff]
        %v3184 = vld [vmem:[#allocation3 + $0x180] sm:$0xff]
        %v3185 = vld [vmem:[#allocation3 + $0x188] sm:$0xff]
        %v3186 = vld [vmem:[#allocation3 + $0x190] sm:$0xff]
        %v3187 = vld [vmem:[#allocation3 + $0x198] sm:$0xff]
        %v3188 = vld [vmem:[#allocation3 + $0x1a0] sm:$0xff]
        %v3189 = vld [vmem:[#allocation3 + $0x1a8] sm:$0xff]
        %v3190 = vld [vmem:[#allocation3 + $0x1b0] sm:$0xff]
        %v3191 = vld [vmem:[#allocation3 + $0x1b8] sm:$0xff]
        %v3192 = vld [vmem:[#allocation3 + $0x1c0] sm:$0xff]
        %v3193 = vld [vmem:[#allocation3 + $0x1c8] sm:$0xff]
        %v3194 = vld [vmem:[#allocation3 + $0x1d0] sm:$0xff]
        %v3195 = vld [vmem:[#allocation3 + $0x1d8] sm:$0xff]
        %v3196 = vld [vmem:[#allocation3 + $0x1e0] sm:$0xff]
        %v3197 = vld [vmem:[#allocation3 + $0x1e8] sm:$0xff]
        %v3198 = vld [vmem:[#allocation3 + $0x1f0] sm:$0xff]
        %v3199 = vld [vmem:[#allocation3 + $0x1f8] sm:$0xff]
        %3200 = vmatprep.subr.mxu0 0.0
        %3201 = vmatpush1.msra.mxu0 %v3136
        %3202 = vmatprep.subr.mxu0 0.0
        %3203 = vmatpush1.msra.mxu0 %v3137
        %3204 = vmatprep.subr.mxu0 0.0
        %3205 = vmatpush1.msra.mxu0 %v3138
        %3206 = vmatprep.subr.mxu0 0.0
        %3207 = vmatpush1.msra.mxu0 %v3139
        %3208 = vmatprep.subr.mxu0 0.0
        %3209 = vmatpush1.msra.mxu0 %v3140
        %3210 = vmatprep.subr.mxu0 0.0
        %3211 = vmatpush1.msra.mxu0 %v3141
        %3212 = vmatprep.subr.mxu0 0.0
        %3213 = vmatpush1.msra.mxu0 %v3142
        %3214 = vmatprep.subr.mxu0 0.0
        %3215 = vmatpush1.msra.mxu0 %v3143
        %3216 = vmatprep.subr.mxu0 0.0
        %3217 = vmatpush1.msra.mxu0 %v3144
        %3218 = vmatprep.subr.mxu0 0.0
        %3219 = vmatpush1.msra.mxu0 %v3145
        %3220 = vmatprep.subr.mxu0 0.0
        %3221 = vmatpush1.msra.mxu0 %v3146
        %3222 = vmatprep.subr.mxu0 0.0
        %3223 = vmatpush1.msra.mxu0 %v3147
        %3224 = vmatprep.subr.mxu0 0.0
        %3225 = vmatpush1.msra.mxu0 %v3148
        %3226 = vmatprep.subr.mxu0 0.0
        %3227 = vmatpush1.msra.mxu0 %v3149
        %3228 = vmatprep.subr.mxu0 0.0
        %3229 = vmatpush1.msra.mxu0 %v3150
        %3230 = vmatprep.subr.mxu0 0.0
        %3231 = vmatpush1.msra.mxu0 %v3151
        %3232 = vmatprep.subr.mxu0 0.0
        %3233 = vmatpush1.msra.mxu0 0.0
        %3234 = vmatprep.subr.mxu0 0.0
        %3235 = vmatpush1.msra.mxu0 0.0
        %3236 = vmatprep.subr.mxu0 0.0
        %3237 = vmatpush1.msra.mxu0 0.0
        %3238 = vmatprep.subr.mxu0 0.0
        %3239 = vmatpush1.msra.mxu0 0.0
        %3240 = vmatprep.subr.mxu0 0.0
        %3241 = vmatpush1.msra.mxu0 0.0
        %3242 = vmatprep.subr.mxu0 0.0
        %3243 = vmatpush1.msra.mxu0 0.0
        %3244 = vmatprep.subr.mxu0 0.0
        %3245 = vmatpush1.msra.mxu0 0.0
        %3246 = vmatprep.subr.mxu0 0.0
        %3247 = vmatpush1.msra.mxu0 0.0
        %3248 = vmatprep.subr.mxu0 0.0
        %3249 = vmatpush1.msra.mxu0 0.0
        %3250 = vmatprep.subr.mxu0 0.0
        %3251 = vmatpush1.msra.mxu0 0.0
        %3252 = vmatprep.subr.mxu0 0.0
        %3253 = vmatpush1.msra.mxu0 0.0
        %3254 = vmatprep.subr.mxu0 0.0
        %3255 = vmatpush1.msra.mxu0 0.0
        %3256 = vmatprep.subr.mxu0 0.0
        %3257 = vmatpush1.msra.mxu0 0.0
        %3258 = vmatprep.subr.mxu0 0.0
        %3259 = vmatpush1.msra.mxu0 0.0
        %3260 = vmatprep.subr.mxu0 0.0
        %3261 = vmatpush1.msra.mxu0 0.0
        %3262 = vmatprep.subr.mxu0 0.0
        %3263 = vmatpush1.msra.mxu0 0.0
        %3264 = vmatprep.mubr.f32.mxu0 0.0
        %3265 = vmatmul.mubr.f32.gmra.mrb[0].mxu0 %v3072
        %v3266 = vpop.f32.mrb[0].mxu0
        %v3267 = vadd.f32 0.0, %v3266
        %v3268 = vpop.f32.mrb[0].mxu0
        %3269 = vmatprep.mubr.f32.mxu0 0.0
        %3270 = vmatmul.mubr.f32.gmra.mrb[0].mxu0 %v3073
        %v3271 = vpop.f32.mrb[0].mxu0
        %v3272 = vadd.f32 0.0, %v3271
        %v3273 = vpop.f32.mrb[0].mxu0
        %3274 = vmatprep.mubr.f32.mxu0 0.0
        %3275 = vmatmul.mubr.f32.gmra.mrb[0].mxu0 %v3074
        %v3276 = vpop.f32.mrb[0].mxu0
        %v3277 = vadd.f32 0.0, %v3276
        %v3278 = vpop.f32.mrb[0].mxu0
        %3279 = vmatprep.mubr.f32.mxu0 0.0
        %3280 = vmatmul.mubr.f32.gmra.mrb[0].mxu0 %v3075
        %v3281 = vpop.f32.mrb[0].mxu0
        %v3282 = vadd.f32 0.0, %v3281
        %v3283 = vpop.f32.mrb[0].mxu0
        %3284 = vmatprep.mubr.f32.mxu0 0.0
        %3285 = vmatmul.mubr.f32.gmra.mrb[0].mxu0 %v3076
        %v3286 = vpop.f32.mrb[0].mxu0
        %v3287 = vadd.f32 0.0, %v3286
        %v3288 = vpop.f32.mrb[0].mxu0
        %3289 = vmatprep.mubr.f32.mxu0 0.0
        %3290 = vmatmul.mubr.f32.gmra.mrb[0].mxu0 %v3077
        %v3291 = vpop.f32.mrb[0].mxu0
        %v3292 = vadd.f32 0.0, %v3291
        %v3293 = vpop.f32.mrb[0].mxu0
        %3294 = vmatprep.mubr.f32.mxu0 0.0
        %3295 = vmatmul.mubr.f32.gmra.mrb[0].mxu0 %v3078
        %v3296 = vpop.f32.mrb[0].mxu0
        %v3297 = vadd.f32 0.0, %v3296
        %v3298 = vpop.f32.mrb[0].mxu0
        %3299 = vmatprep.mubr.f32.mxu0 0.0
        %3300 = vmatmul.mubr.f32.gmra.mrb[0].mxu0 %v3079
        %v3301 = vpop.f32.mrb[0].mxu0
        %v3302 = vadd.f32 0.0, %v3301
        %v3303 = vpop.f32.mrb[0].mxu0
        %3304 = vmatprep.mubr.f32.mxu0 0.0
        %3305 = vmatmul.mubr.f32.gmra.mrb[0].mxu0 %v3080
        %v3306 = vpop.f32.mrb[0].mxu0
        %v3307 = vadd.f32 0.0, %v3306
        %v3308 = vpop.f32.mrb[0].mxu0
        %3309 = vmatprep.mubr.f32.mxu0 0.0
        %3310 = vmatmul.mubr.f32.gmra.mrb[0].mxu0 %v3081
        %v3311 = vpop.f32.mrb[0].mxu0
        %v3312 = vadd.f32 0.0, %v3311
        %v3313 = vpop.f32.mrb[0].mxu0
        %3314 = vmatprep.mubr.f32.mxu0 0.0
        %3315 = vmatmul.mubr.f32.gmra.mrb[0].mxu0 %v3082
        %v3316 = vpop.f32.mrb[0].mxu0
        %v3317 = vadd.f32 0.0, %v3316
        %v3318 = vpop.f32.mrb[0].mxu0
        %3319 = vmatprep.mubr.f32.mxu0 0.0
        %3320 = vmatmul.mubr.f32.gmra.mrb[0].mxu0 %v3083
        %v3321 = vpop.f32.mrb[0].mxu0
        %v3322 = vadd.f32 0.0, %v3321
        %v3323 = vpop.f32.mrb[0].mxu0
        %3324 = vmatprep.mubr.f32.mxu0 0.0
        %3325 = vmatmul.mubr.f32.gmra.mrb[0].mxu0 %v3084
        %v3326 = vpop.f32.mrb[0].mxu0
        %v3327 = vadd.f32 0.0, %v3326
        %v3328 = vpop.f32.mrb[0].mxu0
        %3329 = vmatprep.mubr.f32.mxu0 0.0
        %3330 = vmatmul.mubr.f32.gmra.mrb[0].mxu0 %v3085
        %v3331 = vpop.f32.mrb[0].mxu0
        %v3332 = vadd.f32 0.0, %v3331
        %v3333 = vpop.f32.mrb[0].mxu0
        %3334 = vmatprep.mubr.f32.mxu0 0.0
        %3335 = vmatmul.mubr.f32.gmra.mrb[0].mxu0 %v3086
        %v3336 = vpop.f32.mrb[0].mxu0
        %v3337 = vadd.f32 0.0, %v3336
        %v3338 = vpop.f32.mrb[0].mxu0
        %3339 = vmatprep.mubr.f32.mxu0 0.0
        %3340 = vmatmul.mubr.f32.gmra.mrb[0].mxu0 %v3087
        %v3341 = vpop.f32.mrb[0].mxu0
        %v3342 = vadd.f32 0.0, %v3341
        %v3343 = vpop.f32.mrb[0].mxu0
        %3344 = vdwg.mxu0
        %3345 = vmatprep.subr.mxu0 0.0
        %3346 = vmatpush1.msra.mxu0 %v3152
        %3347 = vmatprep.subr.mxu0 0.0
        %3348 = vmatpush1.msra.mxu0 %v3153
        %3349 = vmatprep.subr.mxu0 0.0
        %3350 = vmatpush1.msra.mxu0 %v3154
        %3351 = vmatprep.subr.mxu0 0.0
        %3352 = vmatpush1.msra.mxu0 %v3155
        %3353 = vmatprep.subr.mxu0 0.0
        %3354 = vmatpush1.msra.mxu0 %v3156
        %3355 = vmatprep.subr.mxu0 0.0
        %3356 = vmatpush1.msra.mxu0 %v3157
        %3357 = vmatprep.subr.mxu0 0.0
        %3358 = vmatpush1.msra.mxu0 %v3158
        %3359 = vmatprep.subr.mxu0 0.0
        %3360 = vmatpush1.msra.mxu0 %v3159
        %3361 = vmatprep.subr.mxu0 0.0
        %3362 = vmatpush1.msra.mxu0 %v3160
        %3363 = vmatprep.subr.mxu0 0.0
        %3364 = vmatpush1.msra.mxu0 %v3161
        %3365 = vmatprep.subr.mxu0 0.0
        %3366 = vmatpush1.msra.mxu0 %v3162
        %3367 = vmatprep.subr.mxu0 0.0
        %3368 = vmatpush1.msra.mxu0 %v3163
        %3369 = vmatprep.subr.mxu0 0.0
        %3370 = vmatpush1.msra.mxu0 %v3164
        %3371 = vmatprep.subr.mxu0 0.0
        %3372 = vmatpush1.msra.mxu0 %v3165
        %3373 = vmatprep.subr.mxu0 0.0
        %3374 = vmatpush1.msra.mxu0 %v3166
        %3375 = vmatprep.subr.mxu0 0.0
        %3376 = vmatpush1.msra.mxu0 %v3167
        %3377 = vmatprep.subr.mxu0 0.0
        %3378 = vmatpush1.msra.mxu0 0.0
        %3379 = vmatprep.subr.mxu0 0.0
        %3380 = vmatpush1.msra.mxu0 0.0
        %3381 = vmatprep.subr.mxu0 0.0
        %3382 = vmatpush1.msra.mxu0 0.0
        %3383 = vmatprep.subr.mxu0 0.0
        %3384 = vmatpush1.msra.mxu0 0.0
        %3385 = vmatprep.subr.mxu0 0.0
        %3386 = vmatpush1.msra.mxu0 0.0
        %3387 = vmatprep.subr.mxu0 0.0
        %3388 = vmatpush1.msra.mxu0 0.0
        %3389 = vmatprep.subr.mxu0 0.0
        %3390 = vmatpush1.msra.mxu0 0.0
        %3391 = vmatprep.subr.mxu0 0.0
        %3392 = vmatpush1.msra.mxu0 0.0
        %3393 = vmatprep.subr.mxu0 0.0
        %3394 = vmatpush1.msra.mxu0 0.0
        %3395 = vmatprep.subr.mxu0 0.0
        %3396 = vmatpush1.msra.mxu0 0.0
        %3397 = vmatprep.subr.mxu0 0.0
        %3398 = vmatpush1.msra.mxu0 0.0
        %3399 = vmatprep.subr.mxu0 0.0
        %3400 = vmatpush1.msra.mxu0 0.0
        %3401 = vmatprep.subr.mxu0 0.0
        %3402 = vmatpush1.msra.mxu0 0.0
        %3403 = vmatprep.subr.mxu0 0.0
        %3404 = vmatpush1.msra.mxu0 0.0
        %3405 = vmatprep.subr.mxu0 0.0
        %3406 = vmatpush1.msra.mxu0 0.0
        %3407 = vmatprep.subr.mxu0 0.0
        %3408 = vmatpush1.msra.mxu0 0.0
        %3409 = vmatprep.mubr.f32.mxu0 0.0
        %3410 = vmatmul.mubr.f32.gmra.mrb[0].mxu0 %v3088
        %v3411 = vpop.f32.mrb[0].mxu0
        %v3412 = vadd.f32 0.0, %v3411
        %v3413 = vpop.f32.mrb[0].mxu0
        %3414 = vmatprep.mubr.f32.mxu0 0.0
        %3415 = vmatmul.mubr.f32.gmra.mrb[0].mxu0 %v3089
        %v3416 = vpop.f32.mrb[0].mxu0
        %v3417 = vadd.f32 0.0, %v3416
        %v3418 = vpop.f32.mrb[0].mxu0
        %3419 = vmatprep.mubr.f32.mxu0 0.0
        %3420 = vmatmul.mubr.f32.gmra.mrb[0].mxu0 %v3090
        %v3421 = vpop.f32.mrb[0].mxu0
        %v3422 = vadd.f32 0.0, %v3421
        %v3423 = vpop.f32.mrb[0].mxu0
        %3424 = vmatprep.mubr.f32.mxu0 0.0
        %3425 = vmatmul.mubr.f32.gmra.mrb[0].mxu0 %v3091
        %v3426 = vpop.f32.mrb[0].mxu0
        %v3427 = vadd.f32 0.0, %v3426
        %v3428 = vpop.f32.mrb[0].mxu0
        %3429 = vmatprep.mubr.f32.mxu0 0.0
        %3430 = vmatmul.mubr.f32.gmra.mrb[0].mxu0 %v3092
        %v3431 = vpop.f32.mrb[0].mxu0
        %v3432 = vadd.f32 0.0, %v3431
        %v3433 = vpop.f32.mrb[0].mxu0
        %3434 = vmatprep.mubr.f32.mxu0 0.0
        %3435 = vmatmul.mubr.f32.gmra.mrb[0].mxu0 %v3093
        %v3436 = vpop.f32.mrb[0].mxu0
        %v3437 = vadd.f32 0.0, %v3436
        %v3438 = vpop.f32.mrb[0].mxu0
        %3439 = vmatprep.mubr.f32.mxu0 0.0
        %3440 = vmatmul.mubr.f32.gmra.mrb[0].mxu0 %v3094
        %v3441 = vpop.f32.mrb[0].mxu0
        %v3442 = vadd.f32 0.0, %v3441
        %v3443 = vpop.f32.mrb[0].mxu0
        %3444 = vmatprep.mubr.f32.mxu0 0.0
        %3445 = vmatmul.mubr.f32.gmra.mrb[0].mxu0 %v3095
        %v3446 = vpop.f32.mrb[0].mxu0
        %v3447 = vadd.f32 0.0, %v3446
        %v3448 = vpop.f32.mrb[0].mxu0
        %3449 = vmatprep.mubr.f32.mxu0 0.0
        %3450 = vmatmul.mubr.f32.gmra.mrb[0].mxu0 %v3096
        %v3451 = vpop.f32.mrb[0].mxu0
        %v3452 = vadd.f32 0.0, %v3451
        %v3453 = vpop.f32.mrb[0].mxu0
        %3454 = vmatprep.mubr.f32.mxu0 0.0
        %3455 = vmatmul.mubr.f32.gmra.mrb[0].mxu0 %v3097
        %v3456 = vpop.f32.mrb[0].mxu0
        %v3457 = vadd.f32 0.0, %v3456
        %v3458 = vpop.f32.mrb[0].mxu0
        %3459 = vmatprep.mubr.f32.mxu0 0.0
        %3460 = vmatmul.mubr.f32.gmra.mrb[0].mxu0 %v3098
        %v3461 = vpop.f32.mrb[0].mxu0
        %v3462 = vadd.f32 0.0, %v3461
        %v3463 = vpop.f32.mrb[0].mxu0
        %3464 = vmatprep.mubr.f32.mxu0 0.0
        %3465 = vmatmul.mubr.f32.gmra.mrb[0].mxu0 %v3099
        %v3466 = vpop.f32.mrb[0].mxu0
        %v3467 = vadd.f32 0.0, %v3466
        %v3468 = vpop.f32.mrb[0].mxu0
        %3469 = vmatprep.mubr.f32.mxu0 0.0
        %3470 = vmatmul.mubr.f32.gmra.mrb[0].mxu0 %v3100
        %v3471 = vpop.f32.mrb[0].mxu0
        %v3472 = vadd.f32 0.0, %v3471
        %v3473 = vpop.f32.mrb[0].mxu0
        %3474 = vmatprep.mubr.f32.mxu0 0.0
        %3475 = vmatmul.mubr.f32.gmra.mrb[0].mxu0 %v3101
        %v3476 = vpop.f32.mrb[0].mxu0
        %v3477 = vadd.f32 0.0, %v3476
        %v3478 = vpop.f32.mrb[0].mxu0
        %3479 = vmatprep.mubr.f32.mxu0 0.0
        %3480 = vmatmul.mubr.f32.gmra.mrb[0].mxu0 %v3102
        %v3481 = vpop.f32.mrb[0].mxu0
        %v3482 = vadd.f32 0.0, %v3481
        %v3483 = vpop.f32.mrb[0].mxu0
        %3484 = vmatprep.mubr.f32.mxu0 0.0
        %3485 = vmatmul.mubr.f32.gmra.mrb[0].mxu0 %v3103
        %v3486 = vpop.f32.mrb[0].mxu0
        %v3487 = vadd.f32 0.0, %v3486
        %v3488 = vpop.f32.mrb[0].mxu0
        %3489 = vdwg.mxu0
        %3490 = vmatprep.subr.mxu0 0.0
        %3491 = vmatpush1.msra.mxu0 %v3168
        %3492 = vmatprep.subr.mxu0 0.0
        %3493 = vmatpush1.msra.mxu0 %v3169
        %3494 = vmatprep.subr.mxu0 0.0
        %3495 = vmatpush1.msra.mxu0 %v3170
        %3496 = vmatprep.subr.mxu0 0.0
        %3497 = vmatpush1.msra.mxu0 %v3171
        %3498 = vmatprep.subr.mxu0 0.0
        %3499 = vmatpush1.msra.mxu0 %v3172
        %3500 = vmatprep.subr.mxu0 0.0
        %3501 = vmatpush1.msra.mxu0 %v3173
        %3502 = vmatprep.subr.mxu0 0.0
        %3503 = vmatpush1.msra.mxu0 %v3174
        %3504 = vmatprep.subr.mxu0 0.0
        %3505 = vmatpush1.msra.mxu0 %v3175
        %3506 = vmatprep.subr.mxu0 0.0
        %3507 = vmatpush1.msra.mxu0 %v3176
        %3508 = vmatprep.subr.mxu0 0.0
        %3509 = vmatpush1.msra.mxu0 %v3177
        %3510 = vmatprep.subr.mxu0 0.0
        %3511 = vmatpush1.msra.mxu0 %v3178
        %3512 = vmatprep.subr.mxu0 0.0
        %3513 = vmatpush1.msra.mxu0 %v3179
        %3514 = vmatprep.subr.mxu0 0.0
        %3515 = vmatpush1.msra.mxu0 %v3180
        %3516 = vmatprep.subr.mxu0 0.0
        %3517 = vmatpush1.msra.mxu0 %v3181
        %3518 = vmatprep.subr.mxu0 0.0
        %3519 = vmatpush1.msra.mxu0 %v3182
        %3520 = vmatprep.subr.mxu0 0.0
        %3521 = vmatpush1.msra.mxu0 %v3183
        %3522 = vmatprep.subr.mxu0 0.0
        %3523 = vmatpush1.msra.mxu0 0.0
        %3524 = vmatprep.subr.mxu0 0.0
        %3525 = vmatpush1.msra.mxu0 0.0
        %3526 = vmatprep.subr.mxu0 0.0
        %3527 = vmatpush1.msra.mxu0 0.0
        %3528 = vmatprep.subr.mxu0 0.0
        %3529 = vmatpush1.msra.mxu0 0.0
        %3530 = vmatprep.subr.mxu0 0.0
        %3531 = vmatpush1.msra.mxu0 0.0
        %3532 = vmatprep.subr.mxu0 0.0
        %3533 = vmatpush1.msra.mxu0 0.0
        %3534 = vmatprep.subr.mxu0 0.0
        %3535 = vmatpush1.msra.mxu0 0.0
        %3536 = vmatprep.subr.mxu0 0.0
        %3537 = vmatpush1.msra.mxu0 0.0
        %3538 = vmatprep.subr.mxu0 0.0
        %3539 = vmatpush1.msra.mxu0 0.0
        %3540 = vmatprep.subr.mxu0 0.0
        %3541 = vmatpush1.msra.mxu0 0.0
        %3542 = vmatprep.subr.mxu0 0.0
        %3543 = vmatpush1.msra.mxu0 0.0
        %3544 = vmatprep.subr.mxu0 0.0
        %3545 = vmatpush1.msra.mxu0 0.0
        %3546 = vmatprep.subr.mxu0 0.0
        %3547 = vmatpush1.msra.mxu0 0.0
        %3548 = vmatprep.subr.mxu0 0.0
        %3549 = vmatpush1.msra.mxu0 0.0
        %3550 = vmatprep.subr.mxu0 0.0
        %3551 = vmatpush1.msra.mxu0 0.0
        %3552 = vmatprep.subr.mxu0 0.0
        %3553 = vmatpush1.msra.mxu0 0.0
        %3554 = vmatprep.mubr.f32.mxu0 0.0
        %3555 = vmatmul.mubr.f32.gmra.mrb[0].mxu0 %v3104
        %v3556 = vpop.f32.mrb[0].mxu0
        %v3557 = vadd.f32 0.0, %v3556
        %v3558 = vpop.f32.mrb[0].mxu0
        %3559 = vmatprep.mubr.f32.mxu0 0.0
        %3560 = vmatmul.mubr.f32.gmra.mrb[0].mxu0 %v3105
        %v3561 = vpop.f32.mrb[0].mxu0
        %v3562 = vadd.f32 0.0, %v3561
        %v3563 = vpop.f32.mrb[0].mxu0
        %3564 = vmatprep.mubr.f32.mxu0 0.0
        %3565 = vmatmul.mubr.f32.gmra.mrb[0].mxu0 %v3106
        %v3566 = vpop.f32.mrb[0].mxu0
        %v3567 = vadd.f32 0.0, %v3566
        %v3568 = vpop.f32.mrb[0].mxu0
        %3569 = vmatprep.mubr.f32.mxu0 0.0
        %3570 = vmatmul.mubr.f32.gmra.mrb[0].mxu0 %v3107
        %v3571 = vpop.f32.mrb[0].mxu0
        %v3572 = vadd.f32 0.0, %v3571
        %v3573 = vpop.f32.mrb[0].mxu0
        %3574 = vmatprep.mubr.f32.mxu0 0.0
        %3575 = vmatmul.mubr.f32.gmra.mrb[0].mxu0 %v3108
        %v3576 = vpop.f32.mrb[0].mxu0
        %v3577 = vadd.f32 0.0, %v3576
        %v3578 = vpop.f32.mrb[0].mxu0
        %3579 = vmatprep.mubr.f32.mxu0 0.0
        %3580 = vmatmul.mubr.f32.gmra.mrb[0].mxu0 %v3109
        %v3581 = vpop.f32.mrb[0].mxu0
        %v3582 = vadd.f32 0.0, %v3581
        %v3583 = vpop.f32.mrb[0].mxu0
        %3584 = vmatprep.mubr.f32.mxu0 0.0
        %3585 = vmatmul.mubr.f32.gmra.mrb[0].mxu0 %v3110
        %v3586 = vpop.f32.mrb[0].mxu0
        %v3587 = vadd.f32 0.0, %v3586
        %v3588 = vpop.f32.mrb[0].mxu0
        %3589 = vmatprep.mubr.f32.mxu0 0.0
        %3590 = vmatmul.mubr.f32.gmra.mrb[0].mxu0 %v3111
        %v3591 = vpop.f32.mrb[0].mxu0
        %v3592 = vadd.f32 0.0, %v3591
        %v3593 = vpop.f32.mrb[0].mxu0
        %3594 = vmatprep.mubr.f32.mxu0 0.0
        %3595 = vmatmul.mubr.f32.gmra.mrb[0].mxu0 %v3112
        %v3596 = vpop.f32.mrb[0].mxu0
        %v3597 = vadd.f32 0.0, %v3596
        %v3598 = vpop.f32.mrb[0].mxu0
        %3599 = vmatprep.mubr.f32.mxu0 0.0
        %3600 = vmatmul.mubr.f32.gmra.mrb[0].mxu0 %v3113
        %v3601 = vpop.f32.mrb[0].mxu0
        %v3602 = vadd.f32 0.0, %v3601
        %v3603 = vpop.f32.mrb[0].mxu0
        %3604 = vmatprep.mubr.f32.mxu0 0.0
        %3605 = vmatmul.mubr.f32.gmra.mrb[0].mxu0 %v3114
        %v3606 = vpop.f32.mrb[0].mxu0
        %v3607 = vadd.f32 0.0, %v3606
        %v3608 = vpop.f32.mrb[0].mxu0
        %3609 = vmatprep.mubr.f32.mxu0 0.0
        %3610 = vmatmul.mubr.f32.gmra.mrb[0].mxu0 %v3115
        %v3611 = vpop.f32.mrb[0].mxu0
        %v3612 = vadd.f32 0.0, %v3611
        %v3613 = vpop.f32.mrb[0].mxu0
        %3614 = vmatprep.mubr.f32.mxu0 0.0
        %3615 = vmatmul.mubr.f32.gmra.mrb[0].mxu0 %v3116
        %v3616 = vpop.f32.mrb[0].mxu0
        %v3617 = vadd.f32 0.0, %v3616
        %v3618 = vpop.f32.mrb[0].mxu0
        %3619 = vmatprep.mubr.f32.mxu0 0.0
        %3620 = vmatmul.mubr.f32.gmra.mrb[0].mxu0 %v3117
        %v3621 = vpop.f32.mrb[0].mxu0
        %v3622 = vadd.f32 0.0, %v3621
        %v3623 = vpop.f32.mrb[0].mxu0
        %3624 = vmatprep.mubr.f32.mxu0 0.0
        %3625 = vmatmul.mubr.f32.gmra.mrb[0].mxu0 %v3118
        %v3626 = vpop.f32.mrb[0].mxu0
        %v3627 = vadd.f32 0.0, %v3626
        %v3628 = vpop.f32.mrb[0].mxu0
        %3629 = vmatprep.mubr.f32.mxu0 0.0
        %3630 = vmatmul.mubr.f32.gmra.mrb[0].mxu0 %v3119
        %v3631 = vpop.f32.mrb[0].mxu0
        %v3632 = vadd.f32 0.0, %v3631
        %v3633 = vpop.f32.mrb[0].mxu0
        %3634 = vdwg.mxu0
        %3635 = vmatprep.subr.mxu0 0.0
        %3636 = vmatpush1.msra.mxu0 %v3184
        %3637 = vmatprep.subr.mxu0 0.0
        %3638 = vmatpush1.msra.mxu0 %v3185
        %3639 = vmatprep.subr.mxu0 0.0
        %3640 = vmatpush1.msra.mxu0 %v3186
        %3641 = vmatprep.subr.mxu0 0.0
        %3642 = vmatpush1.msra.mxu0 %v3187
        %3643 = vmatprep.subr.mxu0 0.0
        %3644 = vmatpush1.msra.mxu0 %v3188
        %3645 = vmatprep.subr.mxu0 0.0
        %3646 = vmatpush1.msra.mxu0 %v3189
        %3647 = vmatprep.subr.mxu0 0.0
        %3648 = vmatpush1.msra.mxu0 %v3190
        %3649 = vmatprep.subr.mxu0 0.0
        %3650 = vmatpush1.msra.mxu0 %v3191
        %3651 = vmatprep.subr.mxu0 0.0
        %3652 = vmatpush1.msra.mxu0 %v3192
        %3653 = vmatprep.subr.mxu0 0.0
        %3654 = vmatpush1.msra.mxu0 %v3193
        %3655 = vmatprep.subr.mxu0 0.0
        %3656 = vmatpush1.msra.mxu0 %v3194
        %3657 = vmatprep.subr.mxu0 0.0
        %3658 = vmatpush1.msra.mxu0 %v3195
        %3659 = vmatprep.subr.mxu0 0.0
        %3660 = vmatpush1.msra.mxu0 %v3196
        %3661 = vmatprep.subr.mxu0 0.0
        %3662 = vmatpush1.msra.mxu0 %v3197
        %3663 = vmatprep.subr.mxu0 0.0
        %3664 = vmatpush1.msra.mxu0 %v3198
        %3665 = vmatprep.subr.mxu0 0.0
        %3666 = vmatpush1.msra.mxu0 %v3199
        %3667 = vmatprep.subr.mxu0 0.0
        %3668 = vmatpush1.msra.mxu0 0.0
        %3669 = vmatprep.subr.mxu0 0.0
        %3670 = vmatpush1.msra.mxu0 0.0
        %3671 = vmatprep.subr.mxu0 0.0
        %3672 = vmatpush1.msra.mxu0 0.0
        %3673 = vmatprep.subr.mxu0 0.0
        %3674 = vmatpush1.msra.mxu0 0.0
        %3675 = vmatprep.subr.mxu0 0.0
        %3676 = vmatpush1.msra.mxu0 0.0
        %3677 = vmatprep.subr.mxu0 0.0
        %3678 = vmatpush1.msra.mxu0 0.0
        %3679 = vmatprep.subr.mxu0 0.0
        %3680 = vmatpush1.msra.mxu0 0.0
        %3681 = vmatprep.subr.mxu0 0.0
        %3682 = vmatpush1.msra.mxu0 0.0
        %3683 = vmatprep.subr.mxu0 0.0
        %3684 = vmatpush1.msra.mxu0 0.0
        %3685 = vmatprep.subr.mxu0 0.0
        %3686 = vmatpush1.msra.mxu0 0.0
        %3687 = vmatprep.subr.mxu0 0.0
        %3688 = vmatpush1.msra.mxu0 0.0
        %3689 = vmatprep.subr.mxu0 0.0
        %3690 = vmatpush1.msra.mxu0 0.0
        %3691 = vmatprep.subr.mxu0 0.0
        %3692 = vmatpush1.msra.mxu0 0.0
        %3693 = vmatprep.subr.mxu0 0.0
        %3694 = vmatpush1.msra.mxu0 0.0
        %3695 = vmatprep.subr.mxu0 0.0
        %3696 = vmatpush1.msra.mxu0 0.0
        %3697 = vmatprep.subr.mxu0 0.0
        %3698 = vmatpush1.msra.mxu0 0.0
        %3699 = vmatprep.mubr.f32.mxu0 0.0
        %3700 = vmatmul.mubr.f32.gmra.mrb[0].mxu0 %v3120
        %v3701 = vpop.f32.mrb[0].mxu0
        %v3702 = vadd.f32 0.0, %v3701
        %v3703 = vpop.f32.mrb[0].mxu0
        %3704 = vmatprep.mubr.f32.mxu0 0.0
        %3705 = vmatmul.mubr.f32.gmra.mrb[0].mxu0 %v3121
        %v3706 = vpop.f32.mrb[0].mxu0
        %v3707 = vadd.f32 0.0, %v3706
        %v3708 = vpop.f32.mrb[0].mxu0
        %3709 = vmatprep.mubr.f32.mxu0 0.0
        %3710 = vmatmul.mubr.f32.gmra.mrb[0].mxu0 %v3122
        %v3711 = vpop.f32.mrb[0].mxu0
        %v3712 = vadd.f32 0.0, %v3711
        %v3713 = vpop.f32.mrb[0].mxu0
        %3714 = vmatprep.mubr.f32.mxu0 0.0
        %3715 = vmatmul.mubr.f32.gmra.mrb[0].mxu0 %v3123
        %v3716 = vpop.f32.mrb[0].mxu0
        %v3717 = vadd.f32 0.0, %v3716
        %v3718 = vpop.f32.mrb[0].mxu0
        %3719 = vmatprep.mubr.f32.mxu0 0.0
        %3720 = vmatmul.mubr.f32.gmra.mrb[0].mxu0 %v3124
        %v3721 = vpop.f32.mrb[0].mxu0
        %v3722 = vadd.f32 0.0, %v3721
        %v3723 = vpop.f32.mrb[0].mxu0
        %3724 = vmatprep.mubr.f32.mxu0 0.0
        %3725 = vmatmul.mubr.f32.gmra.mrb[0].mxu0 %v3125
        %v3726 = vpop.f32.mrb[0].mxu0
        %v3727 = vadd.f32 0.0, %v3726
        %v3728 = vpop.f32.mrb[0].mxu0
        %3729 = vmatprep.mubr.f32.mxu0 0.0
        %3730 = vmatmul.mubr.f32.gmra.mrb[0].mxu0 %v3126
        %v3731 = vpop.f32.mrb[0].mxu0
        %v3732 = vadd.f32 0.0, %v3731
        %v3733 = vpop.f32.mrb[0].mxu0
        %3734 = vmatprep.mubr.f32.mxu0 0.0
        %3735 = vmatmul.mubr.f32.gmra.mrb[0].mxu0 %v3127
        %v3736 = vpop.f32.mrb[0].mxu0
        %v3737 = vadd.f32 0.0, %v3736
        %v3738 = vpop.f32.mrb[0].mxu0
        %3739 = vmatprep.mubr.f32.mxu0 0.0
        %3740 = vmatmul.mubr.f32.gmra.mrb[0].mxu0 %v3128
        %v3741 = vpop.f32.mrb[0].mxu0
        %v3742 = vadd.f32 0.0, %v3741
        %v3743 = vpop.f32.mrb[0].mxu0
        %3744 = vmatprep.mubr.f32.mxu0 0.0
        %3745 = vmatmul.mubr.f32.gmra.mrb[0].mxu0 %v3129
        %v3746 = vpop.f32.mrb[0].mxu0
        %v3747 = vadd.f32 0.0, %v3746
        %v3748 = vpop.f32.mrb[0].mxu0
        %3749 = vmatprep.mubr.f32.mxu0 0.0
        %3750 = vmatmul.mubr.f32.gmra.mrb[0].mxu0 %v3130
        %v3751 = vpop.f32.mrb[0].mxu0
        %v3752 = vadd.f32 0.0, %v3751
        %v3753 = vpop.f32.mrb[0].mxu0
        %3754 = vmatprep.mubr.f32.mxu0 0.0
        %3755 = vmatmul.mubr.f32.gmra.mrb[0].mxu0 %v3131
        %v3756 = vpop.f32.mrb[0].mxu0
        %v3757 = vadd.f32 0.0, %v3756
        %v3758 = vpop.f32.mrb[0].mxu0
        %3759 = vmatprep.mubr.f32.mxu0 0.0
        %3760 = vmatmul.mubr.f32.gmra.mrb[0].mxu0 %v3132
        %v3761 = vpop.f32.mrb[0].mxu0
        %v3762 = vadd.f32 0.0, %v3761
        %v3763 = vpop.f32.mrb[0].mxu0
        %3764 = vmatprep.mubr.f32.mxu0 0.0
        %3765 = vmatmul.mubr.f32.gmra.mrb[0].mxu0 %v3133
        %v3766 = vpop.f32.mrb[0].mxu0
        %v3767 = vadd.f32 0.0, %v3766
        %v3768 = vpop.f32.mrb[0].mxu0
        %3769 = vmatprep.mubr.f32.mxu0 0.0
        %3770 = vmatmul.mubr.f32.gmra.mrb[0].mxu0 %v3134
        %v3771 = vpop.f32.mrb[0].mxu0
        %v3772 = vadd.f32 0.0, %v3771
        %v3773 = vpop.f32.mrb[0].mxu0
        %3774 = vmatprep.mubr.f32.mxu0 0.0
        %3775 = vmatmul.mubr.f32.gmra.mrb[0].mxu0 %v3135
        %v3776 = vpop.f32.mrb[0].mxu0
        %v3777 = vadd.f32 0.0, %v3776
        %v3778 = vpop.f32.mrb[0].mxu0
        %3779 = vdwg.mxu0
        %3796 = vrot.lane.b32.xlu0 %v3412, 32
        %v3797 = vpop.permute.xlu0 %3796
        %3798 = vrot.lane.b32.xlu0 %v3417, 32
        %v3799 = vpop.permute.xlu0 %3798
        %3800 = vrot.lane.b32.xlu0 %v3422, 32
        %v3801 = vpop.permute.xlu0 %3800
        %3802 = vrot.lane.b32.xlu0 %v3427, 32
        %v3803 = vpop.permute.xlu0 %3802
        %3804 = vrot.lane.b32.xlu0 %v3432, 32
        %v3805 = vpop.permute.xlu0 %3804
        %3806 = vrot.lane.b32.xlu0 %v3437, 32
        %v3807 = vpop.permute.xlu0 %3806
        %3808 = vrot.lane.b32.xlu0 %v3442, 32
        %v3809 = vpop.permute.xlu0 %3808
        %3810 = vrot.lane.b32.xlu0 %v3447, 32
        %v3811 = vpop.permute.xlu0 %3810
        %3812 = vrot.lane.b32.xlu0 %v3452, 32
        %v3813 = vpop.permute.xlu0 %3812
        %3814 = vrot.lane.b32.xlu0 %v3457, 32
        %v3815 = vpop.permute.xlu0 %3814
        %3816 = vrot.lane.b32.xlu0 %v3462, 32
        %v3817 = vpop.permute.xlu0 %3816
        %3818 = vrot.lane.b32.xlu0 %v3467, 32
        %v3819 = vpop.permute.xlu0 %3818
        %3820 = vrot.lane.b32.xlu0 %v3472, 32
        %v3821 = vpop.permute.xlu0 %3820
        %3822 = vrot.lane.b32.xlu0 %v3477, 32
        %v3823 = vpop.permute.xlu0 %3822
        %3824 = vrot.lane.b32.xlu0 %v3482, 32
        %v3825 = vpop.permute.xlu0 %3824
        %3826 = vrot.lane.b32.xlu0 %v3487, 32
        %v3827 = vpop.permute.xlu0 %3826
        %3860 = vrot.lane.b32.xlu0 %v3557, 64
        %v3861 = vpop.permute.xlu0 %3860
        %3862 = vrot.lane.b32.xlu0 %v3562, 64
        %v3863 = vpop.permute.xlu0 %3862
        %3864 = vrot.lane.b32.xlu0 %v3567, 64
        %v3865 = vpop.permute.xlu0 %3864
        %3866 = vrot.lane.b32.xlu0 %v3572, 64
        %v3867 = vpop.permute.xlu0 %3866
        %3868 = vrot.lane.b32.xlu0 %v3577, 64
        %v3869 = vpop.permute.xlu0 %3868
        %3870 = vrot.lane.b32.xlu0 %v3582, 64
        %v3871 = vpop.permute.xlu0 %3870
        %3872 = vrot.lane.b32.xlu0 %v3587, 64
        %v3873 = vpop.permute.xlu0 %3872
        %3874 = vrot.lane.b32.xlu0 %v3592, 64
        %v3875 = vpop.permute.xlu0 %3874
        %3876 = vrot.lane.b32.xlu0 %v3597, 64
        %v3877 = vpop.permute.xlu0 %3876
        %3878 = vrot.lane.b32.xlu0 %v3602, 64
        %v3879 = vpop.permute.xlu0 %3878
        %3880 = vrot.lane.b32.xlu0 %v3607, 64
        %v3881 = vpop.permute.xlu0 %3880
        %3882 = vrot.lane.b32.xlu0 %v3612, 64
        %v3883 = vpop.permute.xlu0 %3882
        %3884 = vrot.lane.b32.xlu0 %v3617, 64
        %v3885 = vpop.permute.xlu0 %3884
        %3886 = vrot.lane.b32.xlu0 %v3622, 64
        %v3887 = vpop.permute.xlu0 %3886
        %3888 = vrot.lane.b32.xlu0 %v3627, 64
        %v3889 = vpop.permute.xlu0 %3888
        %3890 = vrot.lane.b32.xlu0 %v3632, 64
        %v3891 = vpop.permute.xlu0 %3890
        %3924 = vrot.lane.b32.xlu0 %v3702, 96
        %v3925 = vpop.permute.xlu0 %3924
        %3926 = vrot.lane.b32.xlu0 %v3707, 96
        %v3927 = vpop.permute.xlu0 %3926
        %3928 = vrot.lane.b32.xlu0 %v3712, 96
        %v3929 = vpop.permute.xlu0 %3928
        %3930 = vrot.lane.b32.xlu0 %v3717, 96
        %v3931 = vpop.permute.xlu0 %3930
        %3932 = vrot.lane.b32.xlu0 %v3722, 96
        %v3933 = vpop.permute.xlu0 %3932
        %3934 = vrot.lane.b32.xlu0 %v3727, 96
        %v3935 = vpop.permute.xlu0 %3934
        %3936 = vrot.lane.b32.xlu0 %v3732, 96
        %v3937 = vpop.permute.xlu0 %3936
        %3938 = vrot.lane.b32.xlu0 %v3737, 96
        %v3939 = vpop.permute.xlu0 %3938
        %3940 = vrot.lane.b32.xlu0 %v3742, 96
        %v3941 = vpop.permute.xlu0 %3940
        %3942 = vrot.lane.b32.xlu0 %v3747, 96
        %v3943 = vpop.permute.xlu0 %3942
        %3944 = vrot.lane.b32.xlu0 %v3752, 96
        %v3945 = vpop.permute.xlu0 %3944
        %3946 = vrot.lane.b32.xlu0 %v3757, 96
        %v3947 = vpop.permute.xlu0 %3946
        %3948 = vrot.lane.b32.xlu0 %v3762, 96
        %v3949 = vpop.permute.xlu0 %3948
        %3950 = vrot.lane.b32.xlu0 %v3767, 96
        %v3951 = vpop.permute.xlu0 %3950
        %3952 = vrot.lane.b32.xlu0 %v3772, 96
        %v3953 = vpop.permute.xlu0 %3952
        %3954 = vrot.lane.b32.xlu0 %v3777, 96
        %v3955 = vpop.permute.xlu0 %3954
        %v3972 = vsel %vm1659, %v3267, %v3797
        %v3973 = vsel %vm1659, %v3272, %v3799
        %v3974 = vsel %vm1659, %v3277, %v3801
        %v3975 = vsel %vm1659, %v3282, %v3803
        %v3976 = vsel %vm1659, %v3287, %v3805
        %v3977 = vsel %vm1659, %v3292, %v3807
        %v3978 = vsel %vm1659, %v3297, %v3809
        %v3979 = vsel %vm1659, %v3302, %v3811
        %v3980 = vsel %vm1659, %v3307, %v3813
        %v3981 = vsel %vm1659, %v3312, %v3815
        %v3982 = vsel %vm1659, %v3317, %v3817
        %v3983 = vsel %vm1659, %v3322, %v3819
        %v3984 = vsel %vm1659, %v3327, %v3821
        %v3985 = vsel %vm1659, %v3332, %v3823
        %v3986 = vsel %vm1659, %v3337, %v3825
        %v3987 = vsel %vm1659, %v3342, %v3827
        %vm3988 = vcmask 523264
        %v3989 = vsel %vm3988, %v3972, %v3861
        %v3990 = vsel %vm3988, %v3973, %v3863
        %v3991 = vsel %vm3988, %v3974, %v3865
        %v3992 = vsel %vm3988, %v3975, %v3867
        %v3993 = vsel %vm3988, %v3976, %v3869
        %v3994 = vsel %vm3988, %v3977, %v3871
        %v3995 = vsel %vm3988, %v3978, %v3873
        %v3996 = vsel %vm3988, %v3979, %v3875
        %v3997 = vsel %vm3988, %v3980, %v3877
        %v3998 = vsel %vm3988, %v3981, %v3879
        %v3999 = vsel %vm3988, %v3982, %v3881
        %v4000 = vsel %vm3988, %v3983, %v3883
        %v4001 = vsel %vm3988, %v3984, %v3885
        %v4002 = vsel %vm3988, %v3985, %v3887
        %v4003 = vsel %vm3988, %v3986, %v3889
        %v4004 = vsel %vm3988, %v3987, %v3891
        %vm4005 = vcmask 785408
        %v4006 = vsel %vm4005, %v3989, %v3925
        %v4007 = vsel %vm4005, %v3990, %v3927
        %v4008 = vsel %vm4005, %v3991, %v3929
        %v4009 = vsel %vm4005, %v3992, %v3931
        %v4010 = vsel %vm4005, %v3993, %v3933
        %v4011 = vsel %vm4005, %v3994, %v3935
        %v4012 = vsel %vm4005, %v3995, %v3937
        %v4013 = vsel %vm4005, %v3996, %v3939
        %v4014 = vsel %vm4005, %v3997, %v3941
        %v4015 = vsel %vm4005, %v3998, %v3943
        %v4016 = vsel %vm4005, %v3999, %v3945
        %v4017 = vsel %vm4005, %v4000, %v3947
        %v4018 = vsel %vm4005, %v4001, %v3949
        %v4019 = vsel %vm4005, %v4002, %v3951
        %v4020 = vsel %vm4005, %v4003, %v3953
        %v4021 = vsel %vm4005, %v4004, %v3955
        %v4022 = vld [vmem:[#allocation10] sm:$0xff]
        %v4023 = vld [vmem:[#allocation10 + $0x8] sm:$0xff]
        %v4024 = vld [vmem:[#allocation10 + $0x10] sm:$0xff]
        %v4025 = vld [vmem:[#allocation10 + $0x18] sm:$0xff]
        %v4026 = vld [vmem:[#allocation10 + $0x20] sm:$0xff]
        %v4027 = vld [vmem:[#allocation10 + $0x28] sm:$0xff]
        %v4028 = vld [vmem:[#allocation10 + $0x30] sm:$0xff]
        %v4029 = vld [vmem:[#allocation10 + $0x38] sm:$0xff]
        %v4030 = vld [vmem:[#allocation10 + $0x40] sm:$0xff]
        %v4031 = vld [vmem:[#allocation10 + $0x48] sm:$0xff]
        %v4032 = vld [vmem:[#allocation10 + $0x50] sm:$0xff]
        %v4033 = vld [vmem:[#allocation10 + $0x58] sm:$0xff]
        %v4034 = vld [vmem:[#allocation10 + $0x60] sm:$0xff]
        %v4035 = vld [vmem:[#allocation10 + $0x68] sm:$0xff]
        %v4036 = vld [vmem:[#allocation10 + $0x70] sm:$0xff]
        %v4037 = vld [vmem:[#allocation10 + $0x78] sm:$0xff]
        %v4038 = vld [vmem:[%s6] sm:$0x1]
        %v4040 = vlaneseq
        %v4041 = vshrl.u32 %v4040, 7
        %v4042 = vsub.s32 0, %v4041
        %v4043 = vrot.slane %v4038, %v4042
        %4045 = vmatprep.subr.mxu0 0.0
        %4046 = vmatpush1.msra.mxu0 %v4022
        %4047 = vmatprep.subr.mxu0 0.0
        %4048 = vmatpush1.msra.mxu0 %v4023
        %4049 = vmatprep.subr.mxu0 0.0
        %4050 = vmatpush1.msra.mxu0 %v4024
        %4051 = vmatprep.subr.mxu0 0.0
        %4052 = vmatpush1.msra.mxu0 %v4025
        %4053 = vmatprep.subr.mxu0 0.0
        %4054 = vmatpush1.msra.mxu0 %v4026
        %4055 = vmatprep.subr.mxu0 0.0
        %4056 = vmatpush1.msra.mxu0 %v4027
        %4057 = vmatprep.subr.mxu0 0.0
        %4058 = vmatpush1.msra.mxu0 %v4028
        %4059 = vmatprep.subr.mxu0 0.0
        %4060 = vmatpush1.msra.mxu0 %v4029
        %4061 = vmatprep.subr.mxu0 0.0
        %4062 = vmatpush1.msra.mxu0 %v4030
        %4063 = vmatprep.subr.mxu0 0.0
        %4064 = vmatpush1.msra.mxu0 %v4031
        %4065 = vmatprep.subr.mxu0 0.0
        %4066 = vmatpush1.msra.mxu0 %v4032
        %4067 = vmatprep.subr.mxu0 0.0
        %4068 = vmatpush1.msra.mxu0 %v4033
        %4069 = vmatprep.subr.mxu0 0.0
        %4070 = vmatpush1.msra.mxu0 %v4034
        %4071 = vmatprep.subr.mxu0 0.0
        %4072 = vmatpush1.msra.mxu0 %v4035
        %4073 = vmatprep.subr.mxu0 0.0
        %4074 = vmatpush1.msra.mxu0 %v4036
        %4075 = vmatprep.subr.mxu0 0.0
        %4076 = vmatpush1.msra.mxu0 %v4037
        %4077 = vmatprep.subr.mxu0 0.0
        %4078 = vmatpush1.msra.mxu0 0.0
        %4079 = vmatprep.subr.mxu0 0.0
        %4080 = vmatpush1.msra.mxu0 0.0
        %4081 = vmatprep.subr.mxu0 0.0
        %4082 = vmatpush1.msra.mxu0 0.0
        %4083 = vmatprep.subr.mxu0 0.0
        %4084 = vmatpush1.msra.mxu0 0.0
        %4085 = vmatprep.subr.mxu0 0.0
        %4086 = vmatpush1.msra.mxu0 0.0
        %4087 = vmatprep.subr.mxu0 0.0
        %4088 = vmatpush1.msra.mxu0 0.0
        %4089 = vmatprep.subr.mxu0 0.0
        %4090 = vmatpush1.msra.mxu0 0.0
        %4091 = vmatprep.subr.mxu0 0.0
        %4092 = vmatpush1.msra.mxu0 0.0
        %4093 = vmatprep.subr.mxu0 0.0
        %4094 = vmatpush1.msra.mxu0 0.0
        %4095 = vmatprep.subr.mxu0 0.0
        %4096 = vmatpush1.msra.mxu0 0.0
        %4097 = vmatprep.subr.mxu0 0.0
        %4098 = vmatpush1.msra.mxu0 0.0
        %4099 = vmatprep.subr.mxu0 0.0
        %4100 = vmatpush1.msra.mxu0 0.0
        %4101 = vmatprep.subr.mxu0 0.0
        %4102 = vmatpush1.msra.mxu0 0.0
        %4103 = vmatprep.subr.mxu0 0.0
        %4104 = vmatpush1.msra.mxu0 0.0
        %4105 = vmatprep.subr.mxu0 0.0
        %4106 = vmatpush1.msra.mxu0 0.0
        %4107 = vmatprep.subr.mxu0 0.0
        %4108 = vmatpush1.msra.mxu0 0.0
        %4109 = vmatprep.mubr.f32.mxu0 0.0
        %4110 = vmatmul.mubr.f32.gmra.mrb[0].mxu0 %v4006
        %v4111 = vpop.f32.mrb[0].mxu0
        %v4112 = vadd.f32 %v4043, %v4111
        %v4113 = vpop.f32.mrb[0].mxu0
        %4114 = vmatprep.mubr.f32.mxu0 0.0
        %4115 = vmatmul.mubr.f32.gmra.mrb[0].mxu0 %v4007
        %v4116 = vpop.f32.mrb[0].mxu0
        %v4117 = vadd.f32 %v4043, %v4116
        %v4118 = vpop.f32.mrb[0].mxu0
        %4119 = vmatprep.mubr.f32.mxu0 0.0
        %4120 = vmatmul.mubr.f32.gmra.mrb[0].mxu0 %v4008
        %v4121 = vpop.f32.mrb[0].mxu0
        %v4122 = vadd.f32 %v4043, %v4121
        %v4123 = vpop.f32.mrb[0].mxu0
        %4124 = vmatprep.mubr.f32.mxu0 0.0
        %4125 = vmatmul.mubr.f32.gmra.mrb[0].mxu0 %v4009
        %v4126 = vpop.f32.mrb[0].mxu0
        %v4127 = vadd.f32 %v4043, %v4126
        %v4128 = vpop.f32.mrb[0].mxu0
        %4129 = vmatprep.mubr.f32.mxu0 0.0
        %4130 = vmatmul.mubr.f32.gmra.mrb[0].mxu0 %v4010
        %v4131 = vpop.f32.mrb[0].mxu0
        %v4132 = vadd.f32 %v4043, %v4131
        %v4133 = vpop.f32.mrb[0].mxu0
        %4134 = vmatprep.mubr.f32.mxu0 0.0
        %4135 = vmatmul.mubr.f32.gmra.mrb[0].mxu0 %v4011
        %v4136 = vpop.f32.mrb[0].mxu0
        %v4137 = vadd.f32 %v4043, %v4136
        %v4138 = vpop.f32.mrb[0].mxu0
        %4139 = vmatprep.mubr.f32.mxu0 0.0
        %4140 = vmatmul.mubr.f32.gmra.mrb[0].mxu0 %v4012
        %v4141 = vpop.f32.mrb[0].mxu0
        %v4142 = vadd.f32 %v4043, %v4141
        %v4143 = vpop.f32.mrb[0].mxu0
        %4144 = vmatprep.mubr.f32.mxu0 0.0
        %4145 = vmatmul.mubr.f32.gmra.mrb[0].mxu0 %v4013
        %v4146 = vpop.f32.mrb[0].mxu0
        %v4147 = vadd.f32 %v4043, %v4146
        %v4148 = vpop.f32.mrb[0].mxu0
        %4149 = vmatprep.mubr.f32.mxu0 0.0
        %4150 = vmatmul.mubr.f32.gmra.mrb[0].mxu0 %v4014
        %v4151 = vpop.f32.mrb[0].mxu0
        %v4152 = vadd.f32 %v4043, %v4151
        %v4153 = vpop.f32.mrb[0].mxu0
        %4154 = vmatprep.mubr.f32.mxu0 0.0
        %4155 = vmatmul.mubr.f32.gmra.mrb[0].mxu0 %v4015
        %v4156 = vpop.f32.mrb[0].mxu0
        %v4157 = vadd.f32 %v4043, %v4156
        %v4158 = vpop.f32.mrb[0].mxu0
        %4159 = vmatprep.mubr.f32.mxu0 0.0
        %4160 = vmatmul.mubr.f32.gmra.mrb[0].mxu0 %v4016
        %v4161 = vpop.f32.mrb[0].mxu0
        %v4162 = vadd.f32 %v4043, %v4161
        %v4163 = vpop.f32.mrb[0].mxu0
        %4164 = vmatprep.mubr.f32.mxu0 0.0
        %4165 = vmatmul.mubr.f32.gmra.mrb[0].mxu0 %v4017
        %v4166 = vpop.f32.mrb[0].mxu0
        %v4167 = vadd.f32 %v4043, %v4166
        %v4168 = vpop.f32.mrb[0].mxu0
        %4169 = vmatprep.mubr.f32.mxu0 0.0
        %4170 = vmatmul.mubr.f32.gmra.mrb[0].mxu0 %v4018
        %v4171 = vpop.f32.mrb[0].mxu0
        %v4172 = vadd.f32 %v4043, %v4171
        %v4173 = vpop.f32.mrb[0].mxu0
        %4174 = vmatprep.mubr.f32.mxu0 0.0
        %4175 = vmatmul.mubr.f32.gmra.mrb[0].mxu0 %v4019
        %v4176 = vpop.f32.mrb[0].mxu0
        %v4177 = vadd.f32 %v4043, %v4176
        %v4178 = vpop.f32.mrb[0].mxu0
        %4179 = vmatprep.mubr.f32.mxu0 0.0
        %4180 = vmatmul.mubr.f32.gmra.mrb[0].mxu0 %v4020
        %v4181 = vpop.f32.mrb[0].mxu0
        %v4182 = vadd.f32 %v4043, %v4181
        %v4183 = vpop.f32.mrb[0].mxu0
        %4184 = vmatprep.mubr.f32.mxu0 0.0
        %4185 = vmatmul.mubr.f32.gmra.mrb[0].mxu0 %v4021
        %v4186 = vpop.f32.mrb[0].mxu0
        %v4187 = vadd.f32 %v4043, %v4186
        %v4188 = vpop.f32.mrb[0].mxu0
        %4189 = vdwg.mxu0
        %v4190 = vadd.f32 %v4112, %v1283
        %v4191 = vadd.f32 %v4117, %v1284
        %v4192 = vadd.f32 %v4122, %v1285
        %v4193 = vadd.f32 %v4127, %v1286
        %v4194 = vadd.f32 %v4132, %v1287
        %v4195 = vadd.f32 %v4137, %v1288
        %v4196 = vadd.f32 %v4142, %v1289
        %v4197 = vadd.f32 %v4147, %v1290
        %v4198 = vadd.f32 %v4152, %v1291
        %v4199 = vadd.f32 %v4157, %v1292
        %v4200 = vadd.f32 %v4162, %v1293
        %v4201 = vadd.f32 %v4167, %v1294
        %v4202 = vadd.f32 %v4172, %v1295
        %v4203 = vadd.f32 %v4177, %v1296
        %v4204 = vadd.f32 %v4182, %v1297
        %v4205 = vadd.f32 %v4187, %v1298
        %v4206 = vld [vmem:[%s7] sm:$0x1]
        %v4207 = vld [vmem:[%s8] sm:$0x1]
        %4208 = vadd.xlane.f32.xlu0 %v4190
        %v4209 = vpop.xlane.xlu0 %4208
        %4210 = vadd.xlane.f32.xlu0 %v4191
        %v4211 = vpop.xlane.xlu0 %4210
        %4212 = vadd.xlane.f32.xlu0 %v4192
        %v4213 = vpop.xlane.xlu0 %4212
        %4214 = vadd.xlane.f32.xlu0 %v4193
        %v4215 = vpop.xlane.xlu0 %4214
        %4216 = vadd.xlane.f32.xlu0 %v4194
        %v4217 = vpop.xlane.xlu0 %4216
        %4218 = vadd.xlane.f32.xlu0 %v4195
        %v4219 = vpop.xlane.xlu0 %4218
        %4220 = vadd.xlane.f32.xlu0 %v4196
        %v4221 = vpop.xlane.xlu0 %4220
        %4222 = vadd.xlane.f32.xlu0 %v4197
        %v4223 = vpop.xlane.xlu0 %4222
        %4224 = vadd.xlane.f32.xlu0 %v4198
        %v4225 = vpop.xlane.xlu0 %4224
        %4226 = vadd.xlane.f32.xlu0 %v4199
        %v4227 = vpop.xlane.xlu0 %4226
        %4228 = vadd.xlane.f32.xlu0 %v4200
        %v4229 = vpop.xlane.xlu0 %4228
        %4230 = vadd.xlane.f32.xlu0 %v4201
        %v4231 = vpop.xlane.xlu0 %4230
        %4232 = vadd.xlane.f32.xlu0 %v4202
        %v4233 = vpop.xlane.xlu0 %4232
        %4234 = vadd.xlane.f32.xlu0 %v4203
        %v4235 = vpop.xlane.xlu0 %4234
        %4236 = vadd.xlane.f32.xlu0 %v4204
        %v4237 = vpop.xlane.xlu0 %4236
        %4238 = vadd.xlane.f32.xlu0 %v4205
        %v4239 = vpop.xlane.xlu0 %4238
        %v4240 = vrcp.pop 128.0
        %v4241 = vmul.f32 %v4209, %v4240
        %v4242 = vmul.f32 %v4211, %v4240
        %v4243 = vmul.f32 %v4213, %v4240
        %v4244 = vmul.f32 %v4215, %v4240
        %v4245 = vmul.f32 %v4217, %v4240
        %v4246 = vmul.f32 %v4219, %v4240
        %v4247 = vmul.f32 %v4221, %v4240
        %v4248 = vmul.f32 %v4223, %v4240
        %v4249 = vmul.f32 %v4225, %v4240
        %v4250 = vmul.f32 %v4227, %v4240
        %v4251 = vmul.f32 %v4229, %v4240
        %v4252 = vmul.f32 %v4231, %v4240
        %v4253 = vmul.f32 %v4233, %v4240
        %v4254 = vmul.f32 %v4235, %v4240
        %v4255 = vmul.f32 %v4237, %v4240
        %v4256 = vmul.f32 %v4239, %v4240
        %v4257 = vsub.f32 %v4190, %v4241
        %v4258 = vsub.f32 %v4191, %v4242
        %v4259 = vsub.f32 %v4192, %v4243
        %v4260 = vsub.f32 %v4193, %v4244
        %v4261 = vsub.f32 %v4194, %v4245
        %v4262 = vsub.f32 %v4195, %v4246
        %v4263 = vsub.f32 %v4196, %v4247
        %v4264 = vsub.f32 %v4197, %v4248
        %v4265 = vsub.f32 %v4198, %v4249
        %v4266 = vsub.f32 %v4199, %v4250
        %v4267 = vsub.f32 %v4200, %v4251
        %v4268 = vsub.f32 %v4201, %v4252
        %v4269 = vsub.f32 %v4202, %v4253
        %v4270 = vsub.f32 %v4203, %v4254
        %v4271 = vsub.f32 %v4204, %v4255
        %v4272 = vsub.f32 %v4205, %v4256
        %v4273 = vmul.f32 %v4257, %v4257
        %v4274 = vmul.f32 %v4258, %v4258
        %v4275 = vmul.f32 %v4259, %v4259
        %v4276 = vmul.f32 %v4260, %v4260
        %v4277 = vmul.f32 %v4261, %v4261
        %v4278 = vmul.f32 %v4262, %v4262
        %v4279 = vmul.f32 %v4263, %v4263
        %v4280 = vmul.f32 %v4264, %v4264
        %v4281 = vmul.f32 %v4265, %v4265
        %v4282 = vmul.f32 %v4266, %v4266
        %v4283 = vmul.f32 %v4267, %v4267
        %v4284 = vmul.f32 %v4268, %v4268
        %v4285 = vmul.f32 %v4269, %v4269
        %v4286 = vmul.f32 %v4270, %v4270
        %v4287 = vmul.f32 %v4271, %v4271
        %v4288 = vmul.f32 %v4272, %v4272
        %4289 = vadd.xlane.f32.xlu0 %v4273
        %v4290 = vpop.xlane.xlu0 %4289
        %4291 = vadd.xlane.f32.xlu0 %v4274
        %v4292 = vpop.xlane.xlu0 %4291
        %4293 = vadd.xlane.f32.xlu0 %v4275
        %v4294 = vpop.xlane.xlu0 %4293
        %4295 = vadd.xlane.f32.xlu0 %v4276
        %v4296 = vpop.xlane.xlu0 %4295
        %4297 = vadd.xlane.f32.xlu0 %v4277
        %v4298 = vpop.xlane.xlu0 %4297
        %4299 = vadd.xlane.f32.xlu0 %v4278
        %v4300 = vpop.xlane.xlu0 %4299
        %4301 = vadd.xlane.f32.xlu0 %v4279
        %v4302 = vpop.xlane.xlu0 %4301
        %4303 = vadd.xlane.f32.xlu0 %v4280
        %v4304 = vpop.xlane.xlu0 %4303
        %4305 = vadd.xlane.f32.xlu0 %v4281
        %v4306 = vpop.xlane.xlu0 %4305
        %4307 = vadd.xlane.f32.xlu0 %v4282
        %v4308 = vpop.xlane.xlu0 %4307
        %4309 = vadd.xlane.f32.xlu0 %v4283
        %v4310 = vpop.xlane.xlu0 %4309
        %4311 = vadd.xlane.f32.xlu0 %v4284
        %v4312 = vpop.xlane.xlu0 %4311
        %4313 = vadd.xlane.f32.xlu0 %v4285
        %v4314 = vpop.xlane.xlu0 %4313
        %4315 = vadd.xlane.f32.xlu0 %v4286
        %v4316 = vpop.xlane.xlu0 %4315
        %4317 = vadd.xlane.f32.xlu0 %v4287
        %v4318 = vpop.xlane.xlu0 %4317
        %4319 = vadd.xlane.f32.xlu0 %v4288
        %v4320 = vpop.xlane.xlu0 %4319
        %v4321 = vmul.f32 %v4290, %v4240
        %v4322 = vmul.f32 %v4292, %v4240
        %v4323 = vmul.f32 %v4294, %v4240
        %v4324 = vmul.f32 %v4296, %v4240
        %v4325 = vmul.f32 %v4298, %v4240
        %v4326 = vmul.f32 %v4300, %v4240
        %v4327 = vmul.f32 %v4302, %v4240
        %v4328 = vmul.f32 %v4304, %v4240
        %v4329 = vmul.f32 %v4306, %v4240
        %v4330 = vmul.f32 %v4308, %v4240
        %v4331 = vmul.f32 %v4310, %v4240
        %v4332 = vmul.f32 %v4312, %v4240
        %v4333 = vmul.f32 %v4314, %v4240
        %v4334 = vmul.f32 %v4316, %v4240
        %v4335 = vmul.f32 %v4318, %v4240
        %v4336 = vmul.f32 %v4320, %v4240
        %v4337 = vadd.f32 %v4321, 1e-12
        %v4338 = vadd.f32 %v4322, 1e-12
        %v4339 = vadd.f32 %v4323, 1e-12
        %v4340 = vadd.f32 %v4324, 1e-12
        %v4341 = vadd.f32 %v4325, 1e-12
        %v4342 = vadd.f32 %v4326, 1e-12
        %v4343 = vadd.f32 %v4327, 1e-12
        %v4344 = vadd.f32 %v4328, 1e-12
        %v4345 = vadd.f32 %v4329, 1e-12
        %v4346 = vadd.f32 %v4330, 1e-12
        %v4347 = vadd.f32 %v4331, 1e-12
        %v4348 = vadd.f32 %v4332, 1e-12
        %v4349 = vadd.f32 %v4333, 1e-12
        %v4350 = vadd.f32 %v4334, 1e-12
        %v4351 = vadd.f32 %v4335, 1e-12
        %v4352 = vadd.f32 %v4336, 1e-12
        %v4353 = vrsqrt.pop %v4337
        %v4354 = vrsqrt.pop %v4338
        %v4355 = vrsqrt.pop %v4339
        %v4356 = vrsqrt.pop %v4340
        %v4357 = vrsqrt.pop %v4341
        %v4358 = vrsqrt.pop %v4342
        %v4359 = vrsqrt.pop %v4343
        %v4360 = vrsqrt.pop %v4344
        %v4361 = vrsqrt.pop %v4345
        %v4362 = vrsqrt.pop %v4346
        %v4363 = vrsqrt.pop %v4347
        %v4364 = vrsqrt.pop %v4348
        %v4365 = vrsqrt.pop %v4349
        %v4366 = vrsqrt.pop %v4350
        %v4367 = vrsqrt.pop %v4351
        %v4368 = vrsqrt.pop %v4352
        %v4369 = vmul.f32 %v4257, %v4353
        %v4370 = vmul.f32 %v4258, %v4354
        %v4371 = vmul.f32 %v4259, %v4355
        %v4372 = vmul.f32 %v4260, %v4356
        %v4373 = vmul.f32 %v4261, %v4357
        %v4374 = vmul.f32 %v4262, %v4358
        %v4375 = vmul.f32 %v4263, %v4359
        %v4376 = vmul.f32 %v4264, %v4360
        %v4377 = vmul.f32 %v4265, %v4361
        %v4378 = vmul.f32 %v4266, %v4362
        %v4379 = vmul.f32 %v4267, %v4363
        %v4380 = vmul.f32 %v4268, %v4364
        %v4381 = vmul.f32 %v4269, %v4365
        %v4382 = vmul.f32 %v4270, %v4366
        %v4383 = vmul.f32 %v4271, %v4367
        %v4384 = vmul.f32 %v4272, %v4368
        %v4386 = vlaneseq
        %v4387 = vshrl.u32 %v4386, 7
        %v4388 = vsub.s32 0, %v4387
        %v4389 = vrot.slane %v4206, %v4388
        %v4391 = vmul.f32 %v4389, %v4369
        %v4392 = vmul.f32 %v4389, %v4370
        %v4393 = vmul.f32 %v4389, %v4371
        %v4394 = vmul.f32 %v4389, %v4372
        %v4395 = vmul.f32 %v4389, %v4373
        %v4396 = vmul.f32 %v4389, %v4374
        %v4397 = vmul.f32 %v4389, %v4375
        %v4398 = vmul.f32 %v4389, %v4376
        %v4399 = vmul.f32 %v4389, %v4377
        %v4400 = vmul.f32 %v4389, %v4378
        %v4401 = vmul.f32 %v4389, %v4379
        %v4402 = vmul.f32 %v4389, %v4380
        %v4403 = vmul.f32 %v4389, %v4381
        %v4404 = vmul.f32 %v4389, %v4382
        %v4405 = vmul.f32 %v4389, %v4383
        %v4406 = vmul.f32 %v4389, %v4384
        %v4408 = vlaneseq
        %v4409 = vshrl.u32 %v4408, 7
        %v4410 = vsub.s32 0, %v4409
        %v4411 = vrot.slane %v4207, %v4410
        %v4413 = vadd.f32 %v4391, %v4411
        %v4414 = vadd.f32 %v4392, %v4411
        %v4415 = vadd.f32 %v4393, %v4411
        %v4416 = vadd.f32 %v4394, %v4411
        %v4417 = vadd.f32 %v4395, %v4411
        %v4418 = vadd.f32 %v4396, %v4411
        %v4419 = vadd.f32 %v4397, %v4411
        %v4420 = vadd.f32 %v4398, %v4411
        %v4421 = vadd.f32 %v4399, %v4411
        %v4422 = vadd.f32 %v4400, %v4411
        %v4423 = vadd.f32 %v4401, %v4411
        %v4424 = vadd.f32 %v4402, %v4411
        %v4425 = vadd.f32 %v4403, %v4411
        %v4426 = vadd.f32 %v4404, %v4411
        %v4427 = vadd.f32 %v4405, %v4411
        %v4428 = vadd.f32 %v4406, %v4411
        %v4429 = vld [vmem:[#allocation12] sm:$0xff]
        %v4430 = vld [vmem:[#allocation12 + $0x8] sm:$0xff]
        %v4431 = vld [vmem:[#allocation12 + $0x10] sm:$0xff]
        %v4432 = vld [vmem:[#allocation12 + $0x18] sm:$0xff]
        %v4433 = vld [vmem:[#allocation12 + $0x20] sm:$0xff]
        %v4434 = vld [vmem:[#allocation12 + $0x28] sm:$0xff]
        %v4435 = vld [vmem:[#allocation12 + $0x30] sm:$0xff]
        %v4436 = vld [vmem:[#allocation12 + $0x38] sm:$0xff]
        %v4437 = vld [vmem:[#allocation12 + $0x40] sm:$0xff]
        %v4438 = vld [vmem:[#allocation12 + $0x48] sm:$0xff]
        %v4439 = vld [vmem:[#allocation12 + $0x50] sm:$0xff]
        %v4440 = vld [vmem:[#allocation12 + $0x58] sm:$0xff]
        %v4441 = vld [vmem:[#allocation12 + $0x60] sm:$0xff]
        %v4442 = vld [vmem:[#allocation12 + $0x68] sm:$0xff]
        %v4443 = vld [vmem:[#allocation12 + $0x70] sm:$0xff]
        %v4444 = vld [vmem:[#allocation12 + $0x78] sm:$0xff]
        %v4445 = vld [vmem:[#allocation12 + $0x80] sm:$0xff]
        %v4446 = vld [vmem:[#allocation12 + $0x88] sm:$0xff]
        %v4447 = vld [vmem:[#allocation12 + $0x90] sm:$0xff]
        %v4448 = vld [vmem:[#allocation12 + $0x98] sm:$0xff]
        %v4449 = vld [vmem:[#allocation12 + $0xa0] sm:$0xff]
        %v4450 = vld [vmem:[#allocation12 + $0xa8] sm:$0xff]
        %v4451 = vld [vmem:[#allocation12 + $0xb0] sm:$0xff]
        %v4452 = vld [vmem:[#allocation12 + $0xb8] sm:$0xff]
        %v4453 = vld [vmem:[#allocation12 + $0xc0] sm:$0xff]
        %v4454 = vld [vmem:[#allocation12 + $0xc8] sm:$0xff]
        %v4455 = vld [vmem:[#allocation12 + $0xd0] sm:$0xff]
        %v4456 = vld [vmem:[#allocation12 + $0xd8] sm:$0xff]
        %v4457 = vld [vmem:[#allocation12 + $0xe0] sm:$0xff]
        %v4458 = vld [vmem:[#allocation12 + $0xe8] sm:$0xff]
        %v4459 = vld [vmem:[#allocation12 + $0xf0] sm:$0xff]
        %v4460 = vld [vmem:[#allocation12 + $0xf8] sm:$0xff]
        %v4461 = vld [vmem:[%s10] sm:$0x3]
        %v4463 = vlaneseq
        %v4464 = vshrl.u32 %v4463, 7
        %v4465 = vsub.s32 0, %v4464
        %v4466 = vrot.slane %v4461, %v4465
        %v4467 = vlaneseq
        %v4468 = vshrl.u32 %v4467, 7
        %v4469 = vsub.s32 1, %v4468
        %v4470 = vrot.slane %v4461, %v4469
        %4473 = vmatprep.subr.mxu0 %v4430
        %4474 = vmatpush1.msra.mxu0 %v4429
        %4475 = vmatprep.subr.mxu0 %v4432
        %4476 = vmatpush1.msra.mxu0 %v4431
        %4477 = vmatprep.subr.mxu0 %v4434
        %4478 = vmatpush1.msra.mxu0 %v4433
        %4479 = vmatprep.subr.mxu0 %v4436
        %4480 = vmatpush1.msra.mxu0 %v4435
        %4481 = vmatprep.subr.mxu0 %v4438
        %4482 = vmatpush1.msra.mxu0 %v4437
        %4483 = vmatprep.subr.mxu0 %v4440
        %4484 = vmatpush1.msra.mxu0 %v4439
        %4485 = vmatprep.subr.mxu0 %v4442
        %4486 = vmatpush1.msra.mxu0 %v4441
        %4487 = vmatprep.subr.mxu0 %v4444
        %4488 = vmatpush1.msra.mxu0 %v4443
        %4489 = vmatprep.subr.mxu0 %v4446
        %4490 = vmatpush1.msra.mxu0 %v4445
        %4491 = vmatprep.subr.mxu0 %v4448
        %4492 = vmatpush1.msra.mxu0 %v4447
        %4493 = vmatprep.subr.mxu0 %v4450
        %4494 = vmatpush1.msra.mxu0 %v4449
        %4495 = vmatprep.subr.mxu0 %v4452
        %4496 = vmatpush1.msra.mxu0 %v4451
        %4497 = vmatprep.subr.mxu0 %v4454
        %4498 = vmatpush1.msra.mxu0 %v4453
        %4499 = vmatprep.subr.mxu0 %v4456
        %4500 = vmatpush1.msra.mxu0 %v4455
        %4501 = vmatprep.subr.mxu0 %v4458
        %4502 = vmatpush1.msra.mxu0 %v4457
        %4503 = vmatprep.subr.mxu0 %v4460
        %4504 = vmatpush1.msra.mxu0 %v4459
        %4505 = vmatprep.subr.mxu0 0.0
        %4506 = vmatpush1.msra.mxu0 0.0
        %4507 = vmatprep.subr.mxu0 0.0
        %4508 = vmatpush1.msra.mxu0 0.0
        %4509 = vmatprep.subr.mxu0 0.0
        %4510 = vmatpush1.msra.mxu0 0.0
        %4511 = vmatprep.subr.mxu0 0.0
        %4512 = vmatpush1.msra.mxu0 0.0
        %4513 = vmatprep.subr.mxu0 0.0
        %4514 = vmatpush1.msra.mxu0 0.0
        %4515 = vmatprep.subr.mxu0 0.0
        %4516 = vmatpush1.msra.mxu0 0.0
        %4517 = vmatprep.subr.mxu0 0.0
        %4518 = vmatpush1.msra.mxu0 0.0
        %4519 = vmatprep.subr.mxu0 0.0
        %4520 = vmatpush1.msra.mxu0 0.0
        %4521 = vmatprep.subr.mxu0 0.0
        %4522 = vmatpush1.msra.mxu0 0.0
        %4523 = vmatprep.subr.mxu0 0.0
        %4524 = vmatpush1.msra.mxu0 0.0
        %4525 = vmatprep.subr.mxu0 0.0
        %4526 = vmatpush1.msra.mxu0 0.0
        %4527 = vmatprep.subr.mxu0 0.0
        %4528 = vmatpush1.msra.mxu0 0.0
        %4529 = vmatprep.subr.mxu0 0.0
        %4530 = vmatpush1.msra.mxu0 0.0
        %4531 = vmatprep.subr.mxu0 0.0
        %4532 = vmatpush1.msra.mxu0 0.0
        %4533 = vmatprep.subr.mxu0 0.0
        %4534 = vmatpush1.msra.mxu0 0.0
        %4535 = vmatprep.subr.mxu0 0.0
        %4536 = vmatpush1.msra.mxu0 0.0
        %4537 = vmatprep.mubr.f32.mxu0 0.0
        %4538 = vmatmul.mubr.f32.gmra.mrb[0].mxu0 %v4413
        %v4539 = vpop.f32.mrb[0].mxu0
        %v4540 = vadd.f32 %v4466, %v4539
        %v4541 = vpop.f32.mrb[0].mxu0
        %v4542 = vadd.f32 %v4470, %v4541
        %4543 = vmatprep.mubr.f32.mxu0 0.0
        %4544 = vmatmul.mubr.f32.gmra.mrb[0].mxu0 %v4414
        %v4545 = vpop.f32.mrb[0].mxu0
        %v4546 = vadd.f32 %v4466, %v4545
        %v4547 = vpop.f32.mrb[0].mxu0
        %v4548 = vadd.f32 %v4470, %v4547
        %4549 = vmatprep.mubr.f32.mxu0 0.0
        %4550 = vmatmul.mubr.f32.gmra.mrb[0].mxu0 %v4415
        %v4551 = vpop.f32.mrb[0].mxu0
        %v4552 = vadd.f32 %v4466, %v4551
        %v4553 = vpop.f32.mrb[0].mxu0
        %v4554 = vadd.f32 %v4470, %v4553
        %4555 = vmatprep.mubr.f32.mxu0 0.0
        %4556 = vmatmul.mubr.f32.gmra.mrb[0].mxu0 %v4416
        %v4557 = vpop.f32.mrb[0].mxu0
        %v4558 = vadd.f32 %v4466, %v4557
        %v4559 = vpop.f32.mrb[0].mxu0
        %v4560 = vadd.f32 %v4470, %v4559
        %4561 = vmatprep.mubr.f32.mxu0 0.0
        %4562 = vmatmul.mubr.f32.gmra.mrb[0].mxu0 %v4417
        %v4563 = vpop.f32.mrb[0].mxu0
        %v4564 = vadd.f32 %v4466, %v4563
        %v4565 = vpop.f32.mrb[0].mxu0
        %v4566 = vadd.f32 %v4470, %v4565
        %4567 = vmatprep.mubr.f32.mxu0 0.0
        %4568 = vmatmul.mubr.f32.gmra.mrb[0].mxu0 %v4418
        %v4569 = vpop.f32.mrb[0].mxu0
        %v4570 = vadd.f32 %v4466, %v4569
        %v4571 = vpop.f32.mrb[0].mxu0
        %v4572 = vadd.f32 %v4470, %v4571
        %4573 = vmatprep.mubr.f32.mxu0 0.0
        %4574 = vmatmul.mubr.f32.gmra.mrb[0].mxu0 %v4419
        %v4575 = vpop.f32.mrb[0].mxu0
        %v4576 = vadd.f32 %v4466, %v4575
        %v4577 = vpop.f32.mrb[0].mxu0
        %v4578 = vadd.f32 %v4470, %v4577
        %4579 = vmatprep.mubr.f32.mxu0 0.0
        %4580 = vmatmul.mubr.f32.gmra.mrb[0].mxu0 %v4420
        %v4581 = vpop.f32.mrb[0].mxu0
        %v4582 = vadd.f32 %v4466, %v4581
        %v4583 = vpop.f32.mrb[0].mxu0
        %v4584 = vadd.f32 %v4470, %v4583
        %4585 = vmatprep.mubr.f32.mxu0 0.0
        %4586 = vmatmul.mubr.f32.gmra.mrb[0].mxu0 %v4421
        %v4587 = vpop.f32.mrb[0].mxu0
        %v4588 = vadd.f32 %v4466, %v4587
        %v4589 = vpop.f32.mrb[0].mxu0
        %v4590 = vadd.f32 %v4470, %v4589
        %4591 = vmatprep.mubr.f32.mxu0 0.0
        %4592 = vmatmul.mubr.f32.gmra.mrb[0].mxu0 %v4422
        %v4593 = vpop.f32.mrb[0].mxu0
        %v4594 = vadd.f32 %v4466, %v4593
        %v4595 = vpop.f32.mrb[0].mxu0
        %v4596 = vadd.f32 %v4470, %v4595
        %4597 = vmatprep.mubr.f32.mxu0 0.0
        %4598 = vmatmul.mubr.f32.gmra.mrb[0].mxu0 %v4423
        %v4599 = vpop.f32.mrb[0].mxu0
        %v4600 = vadd.f32 %v4466, %v4599
        %v4601 = vpop.f32.mrb[0].mxu0
        %v4602 = vadd.f32 %v4470, %v4601
        %4603 = vmatprep.mubr.f32.mxu0 0.0
        %4604 = vmatmul.mubr.f32.gmra.mrb[0].mxu0 %v4424
        %v4605 = vpop.f32.mrb[0].mxu0
        %v4606 = vadd.f32 %v4466, %v4605
        %v4607 = vpop.f32.mrb[0].mxu0
        %v4608 = vadd.f32 %v4470, %v4607
        %4609 = vmatprep.mubr.f32.mxu0 0.0
        %4610 = vmatmul.mubr.f32.gmra.mrb[0].mxu0 %v4425
        %v4611 = vpop.f32.mrb[0].mxu0
        %v4612 = vadd.f32 %v4466, %v4611
        %v4613 = vpop.f32.mrb[0].mxu0
        %v4614 = vadd.f32 %v4470, %v4613
        %4615 = vmatprep.mubr.f32.mxu0 0.0
        %4616 = vmatmul.mubr.f32.gmra.mrb[0].mxu0 %v4426
        %v4617 = vpop.f32.mrb[0].mxu0
        %v4618 = vadd.f32 %v4466, %v4617
        %v4619 = vpop.f32.mrb[0].mxu0
        %v4620 = vadd.f32 %v4470, %v4619
        %4621 = vmatprep.mubr.f32.mxu0 0.0
        %4622 = vmatmul.mubr.f32.gmra.mrb[0].mxu0 %v4427
        %v4623 = vpop.f32.mrb[0].mxu0
        %v4624 = vadd.f32 %v4466, %v4623
        %v4625 = vpop.f32.mrb[0].mxu0
        %v4626 = vadd.f32 %v4470, %v4625
        %4627 = vmatprep.mubr.f32.mxu0 0.0
        %4628 = vmatmul.mubr.f32.gmra.mrb[0].mxu0 %v4428
        %v4629 = vpop.f32.mrb[0].mxu0
        %v4630 = vadd.f32 %v4466, %v4629
        %v4631 = vpop.f32.mrb[0].mxu0
        %v4632 = vadd.f32 %v4470, %v4631
        %4633 = vdwg.mxu0
        %v4634 = vmax.f32 %v4540, 0.0
        %v4635 = vmax.f32 %v4542, 0.0
        %v4636 = vmax.f32 %v4546, 0.0
        %v4637 = vmax.f32 %v4548, 0.0
        %v4638 = vmax.f32 %v4552, 0.0
        %v4639 = vmax.f32 %v4554, 0.0
        %v4640 = vmax.f32 %v4558, 0.0
        %v4641 = vmax.f32 %v4560, 0.0
        %v4642 = vmax.f32 %v4564, 0.0
        %v4643 = vmax.f32 %v4566, 0.0
        %v4644 = vmax.f32 %v4570, 0.0
        %v4645 = vmax.f32 %v4572, 0.0
        %v4646 = vmax.f32 %v4576, 0.0
        %v4647 = vmax.f32 %v4578, 0.0
        %v4648 = vmax.f32 %v4582, 0.0
        %v4649 = vmax.f32 %v4584, 0.0
        %v4650 = vmax.f32 %v4588, 0.0
        %v4651 = vmax.f32 %v4590, 0.0
        %v4652 = vmax.f32 %v4594, 0.0
        %v4653 = vmax.f32 %v4596, 0.0
        %v4654 = vmax.f32 %v4600, 0.0
        %v4655 = vmax.f32 %v4602, 0.0
        %v4656 = vmax.f32 %v4606, 0.0
        %v4657 = vmax.f32 %v4608, 0.0
        %v4658 = vmax.f32 %v4612, 0.0
        %v4659 = vmax.f32 %v4614, 0.0
        %v4660 = vmax.f32 %v4618, 0.0
        %v4661 = vmax.f32 %v4620, 0.0
        %v4662 = vmax.f32 %v4624, 0.0
        %v4663 = vmax.f32 %v4626, 0.0
        %v4664 = vmax.f32 %v4630, 0.0
        %v4665 = vmax.f32 %v4632, 0.0
        %v4666 = vld [vmem:[#allocation13] sm:$0xff]
        %v4667 = vld [vmem:[#allocation13 + $0x8] sm:$0xff]
        %v4668 = vld [vmem:[#allocation13 + $0x10] sm:$0xff]
        %v4669 = vld [vmem:[#allocation13 + $0x18] sm:$0xff]
        %v4670 = vld [vmem:[#allocation13 + $0x20] sm:$0xff]
        %v4671 = vld [vmem:[#allocation13 + $0x28] sm:$0xff]
        %v4672 = vld [vmem:[#allocation13 + $0x30] sm:$0xff]
        %v4673 = vld [vmem:[#allocation13 + $0x38] sm:$0xff]
        %v4674 = vld [vmem:[#allocation13 + $0x40] sm:$0xff]
        %v4675 = vld [vmem:[#allocation13 + $0x48] sm:$0xff]
        %v4676 = vld [vmem:[#allocation13 + $0x50] sm:$0xff]
        %v4677 = vld [vmem:[#allocation13 + $0x58] sm:$0xff]
        %v4678 = vld [vmem:[#allocation13 + $0x60] sm:$0xff]
        %v4679 = vld [vmem:[#allocation13 + $0x68] sm:$0xff]
        %v4680 = vld [vmem:[#allocation13 + $0x70] sm:$0xff]
        %v4681 = vld [vmem:[#allocation13 + $0x78] sm:$0xff]
        %v4682 = vld [vmem:[#allocation13 + $0x80] sm:$0xff]
        %v4683 = vld [vmem:[#allocation13 + $0x88] sm:$0xff]
        %v4684 = vld [vmem:[#allocation13 + $0x90] sm:$0xff]
        %v4685 = vld [vmem:[#allocation13 + $0x98] sm:$0xff]
        %v4686 = vld [vmem:[#allocation13 + $0xa0] sm:$0xff]
        %v4687 = vld [vmem:[#allocation13 + $0xa8] sm:$0xff]
        %v4688 = vld [vmem:[#allocation13 + $0xb0] sm:$0xff]
        %v4689 = vld [vmem:[#allocation13 + $0xb8] sm:$0xff]
        %v4690 = vld [vmem:[#allocation13 + $0xc0] sm:$0xff]
        %v4691 = vld [vmem:[#allocation13 + $0xc8] sm:$0xff]
        %v4692 = vld [vmem:[#allocation13 + $0xd0] sm:$0xff]
        %v4693 = vld [vmem:[#allocation13 + $0xd8] sm:$0xff]
        %v4694 = vld [vmem:[#allocation13 + $0xe0] sm:$0xff]
        %v4695 = vld [vmem:[#allocation13 + $0xe8] sm:$0xff]
        %v4696 = vld [vmem:[#allocation13 + $0xf0] sm:$0xff]
        %v4697 = vld [vmem:[#allocation13 + $0xf8] sm:$0xff]
        %v4698 = vld [vmem:[%s12] sm:$0x1]
        %v4700 = vlaneseq
        %v4701 = vshrl.u32 %v4700, 7
        %v4702 = vsub.s32 0, %v4701
        %v4703 = vrot.slane %v4698, %v4702
        %4705 = vmatprep.subr.mxu0 0.0
        %4706 = vmatpush1.msra.mxu0 %v4666
        %4707 = vmatprep.subr.mxu0 0.0
        %4708 = vmatpush1.msra.mxu0 %v4667
        %4709 = vmatprep.subr.mxu0 0.0
        %4710 = vmatpush1.msra.mxu0 %v4668
        %4711 = vmatprep.subr.mxu0 0.0
        %4712 = vmatpush1.msra.mxu0 %v4669
        %4713 = vmatprep.subr.mxu0 0.0
        %4714 = vmatpush1.msra.mxu0 %v4670
        %4715 = vmatprep.subr.mxu0 0.0
        %4716 = vmatpush1.msra.mxu0 %v4671
        %4717 = vmatprep.subr.mxu0 0.0
        %4718 = vmatpush1.msra.mxu0 %v4672
        %4719 = vmatprep.subr.mxu0 0.0
        %4720 = vmatpush1.msra.mxu0 %v4673
        %4721 = vmatprep.subr.mxu0 0.0
        %4722 = vmatpush1.msra.mxu0 %v4674
        %4723 = vmatprep.subr.mxu0 0.0
        %4724 = vmatpush1.msra.mxu0 %v4675
        %4725 = vmatprep.subr.mxu0 0.0
        %4726 = vmatpush1.msra.mxu0 %v4676
        %4727 = vmatprep.subr.mxu0 0.0
        %4728 = vmatpush1.msra.mxu0 %v4677
        %4729 = vmatprep.subr.mxu0 0.0
        %4730 = vmatpush1.msra.mxu0 %v4678
        %4731 = vmatprep.subr.mxu0 0.0
        %4732 = vmatpush1.msra.mxu0 %v4679
        %4733 = vmatprep.subr.mxu0 0.0
        %4734 = vmatpush1.msra.mxu0 %v4680
        %4735 = vmatprep.subr.mxu0 0.0
        %4736 = vmatpush1.msra.mxu0 %v4681
        %4737 = vmatprep.subr.mxu0 0.0
        %4738 = vmatpush1.msra.mxu0 %v4682
        %4739 = vmatprep.subr.mxu0 0.0
        %4740 = vmatpush1.msra.mxu0 %v4683
        %4741 = vmatprep.subr.mxu0 0.0
        %4742 = vmatpush1.msra.mxu0 %v4684
        %4743 = vmatprep.subr.mxu0 0.0
        %4744 = vmatpush1.msra.mxu0 %v4685
        %4745 = vmatprep.subr.mxu0 0.0
        %4746 = vmatpush1.msra.mxu0 %v4686
        %4747 = vmatprep.subr.mxu0 0.0
        %4748 = vmatpush1.msra.mxu0 %v4687
        %4749 = vmatprep.subr.mxu0 0.0
        %4750 = vmatpush1.msra.mxu0 %v4688
        %4751 = vmatprep.subr.mxu0 0.0
        %4752 = vmatpush1.msra.mxu0 %v4689
        %4753 = vmatprep.subr.mxu0 0.0
        %4754 = vmatpush1.msra.mxu0 %v4690
        %4755 = vmatprep.subr.mxu0 0.0
        %4756 = vmatpush1.msra.mxu0 %v4691
        %4757 = vmatprep.subr.mxu0 0.0
        %4758 = vmatpush1.msra.mxu0 %v4692
        %4759 = vmatprep.subr.mxu0 0.0
        %4760 = vmatpush1.msra.mxu0 %v4693
        %4761 = vmatprep.subr.mxu0 0.0
        %4762 = vmatpush1.msra.mxu0 %v4694
        %4763 = vmatprep.subr.mxu0 0.0
        %4764 = vmatpush1.msra.mxu0 %v4695
        %4765 = vmatprep.subr.mxu0 0.0
        %4766 = vmatpush1.msra.mxu0 %v4696
        %4767 = vmatprep.subr.mxu0 0.0
        %4768 = vmatpush1.msra.mxu0 %v4697
        %4769 = vmatprep.mubr.f32.mxu0 %v4635
        %4770 = vmatmul.mubr.f32.gmra.mrb[0].mxu0 %v4634
        %v4771 = vpop.f32.mrb[0].mxu0
        %v4772 = vadd.f32 %v4703, %v4771
        %v4773 = vpop.f32.mrb[0].mxu0
        %4774 = vmatprep.mubr.f32.mxu0 %v4637
        %4775 = vmatmul.mubr.f32.gmra.mrb[0].mxu0 %v4636
        %v4776 = vpop.f32.mrb[0].mxu0
        %v4777 = vadd.f32 %v4703, %v4776
        %v4778 = vpop.f32.mrb[0].mxu0
        %4779 = vmatprep.mubr.f32.mxu0 %v4639
        %4780 = vmatmul.mubr.f32.gmra.mrb[0].mxu0 %v4638
        %v4781 = vpop.f32.mrb[0].mxu0
        %v4782 = vadd.f32 %v4703, %v4781
        %v4783 = vpop.f32.mrb[0].mxu0
        %4784 = vmatprep.mubr.f32.mxu0 %v4641
        %4785 = vmatmul.mubr.f32.gmra.mrb[0].mxu0 %v4640
        %v4786 = vpop.f32.mrb[0].mxu0
        %v4787 = vadd.f32 %v4703, %v4786
        %v4788 = vpop.f32.mrb[0].mxu0
        %4789 = vmatprep.mubr.f32.mxu0 %v4643
        %4790 = vmatmul.mubr.f32.gmra.mrb[0].mxu0 %v4642
        %v4791 = vpop.f32.mrb[0].mxu0
        %v4792 = vadd.f32 %v4703, %v4791
        %v4793 = vpop.f32.mrb[0].mxu0
        %4794 = vmatprep.mubr.f32.mxu0 %v4645
        %4795 = vmatmul.mubr.f32.gmra.mrb[0].mxu0 %v4644
        %v4796 = vpop.f32.mrb[0].mxu0
        %v4797 = vadd.f32 %v4703, %v4796
        %v4798 = vpop.f32.mrb[0].mxu0
        %4799 = vmatprep.mubr.f32.mxu0 %v4647
        %4800 = vmatmul.mubr.f32.gmra.mrb[0].mxu0 %v4646
        %v4801 = vpop.f32.mrb[0].mxu0
        %v4802 = vadd.f32 %v4703, %v4801
        %v4803 = vpop.f32.mrb[0].mxu0
        %4804 = vmatprep.mubr.f32.mxu0 %v4649
        %4805 = vmatmul.mubr.f32.gmra.mrb[0].mxu0 %v4648
        %v4806 = vpop.f32.mrb[0].mxu0
        %v4807 = vadd.f32 %v4703, %v4806
        %v4808 = vpop.f32.mrb[0].mxu0
        %4809 = vmatprep.mubr.f32.mxu0 %v4651
        %4810 = vmatmul.mubr.f32.gmra.mrb[0].mxu0 %v4650
        %v4811 = vpop.f32.mrb[0].mxu0
        %v4812 = vadd.f32 %v4703, %v4811
        %v4813 = vpop.f32.mrb[0].mxu0
        %4814 = vmatprep.mubr.f32.mxu0 %v4653
        %4815 = vmatmul.mubr.f32.gmra.mrb[0].mxu0 %v4652
        %v4816 = vpop.f32.mrb[0].mxu0
        %v4817 = vadd.f32 %v4703, %v4816
        %v4818 = vpop.f32.mrb[0].mxu0
        %4819 = vmatprep.mubr.f32.mxu0 %v4655
        %4820 = vmatmul.mubr.f32.gmra.mrb[0].mxu0 %v4654
        %v4821 = vpop.f32.mrb[0].mxu0
        %v4822 = vadd.f32 %v4703, %v4821
        %v4823 = vpop.f32.mrb[0].mxu0
        %4824 = vmatprep.mubr.f32.mxu0 %v4657
        %4825 = vmatmul.mubr.f32.gmra.mrb[0].mxu0 %v4656
        %v4826 = vpop.f32.mrb[0].mxu0
        %v4827 = vadd.f32 %v4703, %v4826
        %v4828 = vpop.f32.mrb[0].mxu0
        %4829 = vmatprep.mubr.f32.mxu0 %v4659
        %4830 = vmatmul.mubr.f32.gmra.mrb[0].mxu0 %v4658
        %v4831 = vpop.f32.mrb[0].mxu0
        %v4832 = vadd.f32 %v4703, %v4831
        %v4833 = vpop.f32.mrb[0].mxu0
        %4834 = vmatprep.mubr.f32.mxu0 %v4661
        %4835 = vmatmul.mubr.f32.gmra.mrb[0].mxu0 %v4660
        %v4836 = vpop.f32.mrb[0].mxu0
        %v4837 = vadd.f32 %v4703, %v4836
        %v4838 = vpop.f32.mrb[0].mxu0
        %4839 = vmatprep.mubr.f32.mxu0 %v4663
        %4840 = vmatmul.mubr.f32.gmra.mrb[0].mxu0 %v4662
        %v4841 = vpop.f32.mrb[0].mxu0
        %v4842 = vadd.f32 %v4703, %v4841
        %v4843 = vpop.f32.mrb[0].mxu0
        %4844 = vmatprep.mubr.f32.mxu0 %v4665
        %4845 = vmatmul.mubr.f32.gmra.mrb[0].mxu0 %v4664
        %v4846 = vpop.f32.mrb[0].mxu0
        %v4847 = vadd.f32 %v4703, %v4846
        %v4848 = vpop.f32.mrb[0].mxu0
        %4849 = vdwg.mxu0
        %v4850 = vadd.f32 %v4772, %v4413
        %v4851 = vadd.f32 %v4777, %v4414
        %v4852 = vadd.f32 %v4782, %v4415
        %v4853 = vadd.f32 %v4787, %v4416
        %v4854 = vadd.f32 %v4792, %v4417
        %v4855 = vadd.f32 %v4797, %v4418
        %v4856 = vadd.f32 %v4802, %v4419
        %v4857 = vadd.f32 %v4807, %v4420
        %v4858 = vadd.f32 %v4812, %v4421
        %v4859 = vadd.f32 %v4817, %v4422
        %v4860 = vadd.f32 %v4822, %v4423
        %v4861 = vadd.f32 %v4827, %v4424
        %v4862 = vadd.f32 %v4832, %v4425
        %v4863 = vadd.f32 %v4837, %v4426
        %v4864 = vadd.f32 %v4842, %v4427
        %v4865 = vadd.f32 %v4847, %v4428
        %v4866 = vld [vmem:[%s13] sm:$0x1]
        %v4867 = vld [vmem:[%s14] sm:$0x1]
        %4868 = vadd.xlane.f32.xlu0 %v4850
        %v4869 = vpop.xlane.xlu0 %4868
        %4870 = vadd.xlane.f32.xlu0 %v4851
        %v4871 = vpop.xlane.xlu0 %4870
        %4872 = vadd.xlane.f32.xlu0 %v4852
        %v4873 = vpop.xlane.xlu0 %4872
        %4874 = vadd.xlane.f32.xlu0 %v4853
        %v4875 = vpop.xlane.xlu0 %4874
        %4876 = vadd.xlane.f32.xlu0 %v4854
        %v4877 = vpop.xlane.xlu0 %4876
        %4878 = vadd.xlane.f32.xlu0 %v4855
        %v4879 = vpop.xlane.xlu0 %4878
        %4880 = vadd.xlane.f32.xlu0 %v4856
        %v4881 = vpop.xlane.xlu0 %4880
        %4882 = vadd.xlane.f32.xlu0 %v4857
        %v4883 = vpop.xlane.xlu0 %4882
        %4884 = vadd.xlane.f32.xlu0 %v4858
        %v4885 = vpop.xlane.xlu0 %4884
        %4886 = vadd.xlane.f32.xlu0 %v4859
        %v4887 = vpop.xlane.xlu0 %4886
        %4888 = vadd.xlane.f32.xlu0 %v4860
        %v4889 = vpop.xlane.xlu0 %4888
        %4890 = vadd.xlane.f32.xlu0 %v4861
        %v4891 = vpop.xlane.xlu0 %4890
        %4892 = vadd.xlane.f32.xlu0 %v4862
        %v4893 = vpop.xlane.xlu0 %4892
        %4894 = vadd.xlane.f32.xlu0 %v4863
        %v4895 = vpop.xlane.xlu0 %4894
        %4896 = vadd.xlane.f32.xlu0 %v4864
        %v4897 = vpop.xlane.xlu0 %4896
        %4898 = vadd.xlane.f32.xlu0 %v4865
        %v4899 = vpop.xlane.xlu0 %4898
        %v4900 = vmul.f32 %v4869, %v4240
        %v4901 = vmul.f32 %v4871, %v4240
        %v4902 = vmul.f32 %v4873, %v4240
        %v4903 = vmul.f32 %v4875, %v4240
        %v4904 = vmul.f32 %v4877, %v4240
        %v4905 = vmul.f32 %v4879, %v4240
        %v4906 = vmul.f32 %v4881, %v4240
        %v4907 = vmul.f32 %v4883, %v4240
        %v4908 = vmul.f32 %v4885, %v4240
        %v4909 = vmul.f32 %v4887, %v4240
        %v4910 = vmul.f32 %v4889, %v4240
        %v4911 = vmul.f32 %v4891, %v4240
        %v4912 = vmul.f32 %v4893, %v4240
        %v4913 = vmul.f32 %v4895, %v4240
        %v4914 = vmul.f32 %v4897, %v4240
        %v4915 = vmul.f32 %v4899, %v4240
        %v4916 = vsub.f32 %v4850, %v4900
        %v4917 = vsub.f32 %v4851, %v4901
        %v4918 = vsub.f32 %v4852, %v4902
        %v4919 = vsub.f32 %v4853, %v4903
        %v4920 = vsub.f32 %v4854, %v4904
        %v4921 = vsub.f32 %v4855, %v4905
        %v4922 = vsub.f32 %v4856, %v4906
        %v4923 = vsub.f32 %v4857, %v4907
        %v4924 = vsub.f32 %v4858, %v4908
        %v4925 = vsub.f32 %v4859, %v4909
        %v4926 = vsub.f32 %v4860, %v4910
        %v4927 = vsub.f32 %v4861, %v4911
        %v4928 = vsub.f32 %v4862, %v4912
        %v4929 = vsub.f32 %v4863, %v4913
        %v4930 = vsub.f32 %v4864, %v4914
        %v4931 = vsub.f32 %v4865, %v4915
        %v4932 = vmul.f32 %v4916, %v4916
        %v4933 = vmul.f32 %v4917, %v4917
        %v4934 = vmul.f32 %v4918, %v4918
        %v4935 = vmul.f32 %v4919, %v4919
        %v4936 = vmul.f32 %v4920, %v4920
        %v4937 = vmul.f32 %v4921, %v4921
        %v4938 = vmul.f32 %v4922, %v4922
        %v4939 = vmul.f32 %v4923, %v4923
        %v4940 = vmul.f32 %v4924, %v4924
        %v4941 = vmul.f32 %v4925, %v4925
        %v4942 = vmul.f32 %v4926, %v4926
        %v4943 = vmul.f32 %v4927, %v4927
        %v4944 = vmul.f32 %v4928, %v4928
        %v4945 = vmul.f32 %v4929, %v4929
        %v4946 = vmul.f32 %v4930, %v4930
        %v4947 = vmul.f32 %v4931, %v4931
        %4948 = vadd.xlane.f32.xlu0 %v4932
        %v4949 = vpop.xlane.xlu0 %4948
        %4950 = vadd.xlane.f32.xlu0 %v4933
        %v4951 = vpop.xlane.xlu0 %4950
        %4952 = vadd.xlane.f32.xlu0 %v4934
        %v4953 = vpop.xlane.xlu0 %4952
        %4954 = vadd.xlane.f32.xlu0 %v4935
        %v4955 = vpop.xlane.xlu0 %4954
        %4956 = vadd.xlane.f32.xlu0 %v4936
        %v4957 = vpop.xlane.xlu0 %4956
        %4958 = vadd.xlane.f32.xlu0 %v4937
        %v4959 = vpop.xlane.xlu0 %4958
        %4960 = vadd.xlane.f32.xlu0 %v4938
        %v4961 = vpop.xlane.xlu0 %4960
        %4962 = vadd.xlane.f32.xlu0 %v4939
        %v4963 = vpop.xlane.xlu0 %4962
        %4964 = vadd.xlane.f32.xlu0 %v4940
        %v4965 = vpop.xlane.xlu0 %4964
        %4966 = vadd.xlane.f32.xlu0 %v4941
        %v4967 = vpop.xlane.xlu0 %4966
        %4968 = vadd.xlane.f32.xlu0 %v4942
        %v4969 = vpop.xlane.xlu0 %4968
        %4970 = vadd.xlane.f32.xlu0 %v4943
        %v4971 = vpop.xlane.xlu0 %4970
        %4972 = vadd.xlane.f32.xlu0 %v4944
        %v4973 = vpop.xlane.xlu0 %4972
        %4974 = vadd.xlane.f32.xlu0 %v4945
        %v4975 = vpop.xlane.xlu0 %4974
        %4976 = vadd.xlane.f32.xlu0 %v4946
        %v4977 = vpop.xlane.xlu0 %4976
        %4978 = vadd.xlane.f32.xlu0 %v4947
        %v4979 = vpop.xlane.xlu0 %4978
        %v4980 = vmul.f32 %v4949, %v4240
        %v4981 = vmul.f32 %v4951, %v4240
        %v4982 = vmul.f32 %v4953, %v4240
        %v4983 = vmul.f32 %v4955, %v4240
        %v4984 = vmul.f32 %v4957, %v4240
        %v4985 = vmul.f32 %v4959, %v4240
        %v4986 = vmul.f32 %v4961, %v4240
        %v4987 = vmul.f32 %v4963, %v4240
        %v4988 = vmul.f32 %v4965, %v4240
        %v4989 = vmul.f32 %v4967, %v4240
        %v4990 = vmul.f32 %v4969, %v4240
        %v4991 = vmul.f32 %v4971, %v4240
        %v4992 = vmul.f32 %v4973, %v4240
        %v4993 = vmul.f32 %v4975, %v4240
        %v4994 = vmul.f32 %v4977, %v4240
        %v4995 = vmul.f32 %v4979, %v4240
        %v4996 = vadd.f32 %v4980, 1e-12
        %v4997 = vadd.f32 %v4981, 1e-12
        %v4998 = vadd.f32 %v4982, 1e-12
        %v4999 = vadd.f32 %v4983, 1e-12
        %v5000 = vadd.f32 %v4984, 1e-12
        %v5001 = vadd.f32 %v4985, 1e-12
        %v5002 = vadd.f32 %v4986, 1e-12
        %v5003 = vadd.f32 %v4987, 1e-12
        %v5004 = vadd.f32 %v4988, 1e-12
        %v5005 = vadd.f32 %v4989, 1e-12
        %v5006 = vadd.f32 %v4990, 1e-12
        %v5007 = vadd.f32 %v4991, 1e-12
        %v5008 = vadd.f32 %v4992, 1e-12
        %v5009 = vadd.f32 %v4993, 1e-12
        %v5010 = vadd.f32 %v4994, 1e-12
        %v5011 = vadd.f32 %v4995, 1e-12
        %v5012 = vrsqrt.pop %v4996
        %v5013 = vrsqrt.pop %v4997
        %v5014 = vrsqrt.pop %v4998
        %v5015 = vrsqrt.pop %v4999
        %v5016 = vrsqrt.pop %v5000
        %v5017 = vrsqrt.pop %v5001
        %v5018 = vrsqrt.pop %v5002
        %v5019 = vrsqrt.pop %v5003
        %v5020 = vrsqrt.pop %v5004
        %v5021 = vrsqrt.pop %v5005
        %v5022 = vrsqrt.pop %v5006
        %v5023 = vrsqrt.pop %v5007
        %v5024 = vrsqrt.pop %v5008
        %v5025 = vrsqrt.pop %v5009
        %v5026 = vrsqrt.pop %v5010
        %v5027 = vrsqrt.pop %v5011
        %v5028 = vmul.f32 %v4916, %v5012
        %v5029 = vmul.f32 %v4917, %v5013
        %v5030 = vmul.f32 %v4918, %v5014
        %v5031 = vmul.f32 %v4919, %v5015
        %v5032 = vmul.f32 %v4920, %v5016
        %v5033 = vmul.f32 %v4921, %v5017
        %v5034 = vmul.f32 %v4922, %v5018
        %v5035 = vmul.f32 %v4923, %v5019
        %v5036 = vmul.f32 %v4924, %v5020
        %v5037 = vmul.f32 %v4925, %v5021
        %v5038 = vmul.f32 %v4926, %v5022
        %v5039 = vmul.f32 %v4927, %v5023
        %v5040 = vmul.f32 %v4928, %v5024
        %v5041 = vmul.f32 %v4929, %v5025
        %v5042 = vmul.f32 %v4930, %v5026
        %v5043 = vmul.f32 %v4931, %v5027
        %v5045 = vlaneseq
        %v5046 = vshrl.u32 %v5045, 7
        %v5047 = vsub.s32 0, %v5046
        %v5048 = vrot.slane %v4866, %v5047
        %v5050 = vmul.f32 %v5048, %v5028
        %v5051 = vmul.f32 %v5048, %v5029
        %v5052 = vmul.f32 %v5048, %v5030
        %v5053 = vmul.f32 %v5048, %v5031
        %v5054 = vmul.f32 %v5048, %v5032
        %v5055 = vmul.f32 %v5048, %v5033
        %v5056 = vmul.f32 %v5048, %v5034
        %v5057 = vmul.f32 %v5048, %v5035
        %v5058 = vmul.f32 %v5048, %v5036
        %v5059 = vmul.f32 %v5048, %v5037
        %v5060 = vmul.f32 %v5048, %v5038
        %v5061 = vmul.f32 %v5048, %v5039
        %v5062 = vmul.f32 %v5048, %v5040
        %v5063 = vmul.f32 %v5048, %v5041
        %v5064 = vmul.f32 %v5048, %v5042
        %v5065 = vmul.f32 %v5048, %v5043
        %v5067 = vlaneseq
        %v5068 = vshrl.u32 %v5067, 7
        %v5069 = vsub.s32 0, %v5068
        %v5070 = vrot.slane %v4867, %v5069
        %v5072 = vadd.f32 %v5050, %v5070
        %v5073 = vadd.f32 %v5051, %v5070
        %v5074 = vadd.f32 %v5052, %v5070
        %v5075 = vadd.f32 %v5053, %v5070
        %v5076 = vadd.f32 %v5054, %v5070
        %v5077 = vadd.f32 %v5055, %v5070
        %v5078 = vadd.f32 %v5056, %v5070
        %v5079 = vadd.f32 %v5057, %v5070
        %v5080 = vadd.f32 %v5058, %v5070
        %v5081 = vadd.f32 %v5059, %v5070
        %v5082 = vadd.f32 %v5060, %v5070
        %v5083 = vadd.f32 %v5061, %v5070
        %v5084 = vadd.f32 %v5062, %v5070
        %v5085 = vadd.f32 %v5063, %v5070
        %v5086 = vadd.f32 %v5064, %v5070
        %v5087 = vadd.f32 %v5065, %v5070
        %5088 = vst [vmem:[%s599] sm:$0xff] %v5072
        %5089 = vst [vmem:[%s599 + $0x8] sm:$0xff] %v5073
        %5090 = vst [vmem:[%s599 + $0x10] sm:$0xff] %v5074
        %5091 = vst [vmem:[%s599 + $0x18] sm:$0xff] %v5075
        %5092 = vst [vmem:[%s599 + $0x20] sm:$0xff] %v5076
        %5093 = vst [vmem:[%s599 + $0x28] sm:$0xff] %v5077
        %5094 = vst [vmem:[%s599 + $0x30] sm:$0xff] %v5078
        %5095 = vst [vmem:[%s599 + $0x38] sm:$0xff] %v5079
        %5096 = vst [vmem:[%s599 + $0x40] sm:$0xff] %v5080
        %5097 = vst [vmem:[%s599 + $0x48] sm:$0xff] %v5081
        %5098 = vst [vmem:[%s599 + $0x50] sm:$0xff] %v5082
        %5099 = vst [vmem:[%s599 + $0x58] sm:$0xff] %v5083
        %5100 = vst [vmem:[%s599 + $0x60] sm:$0xff] %v5084
        %5101 = vst [vmem:[%s599 + $0x68] sm:$0xff] %v5085
        %5102 = vst [vmem:[%s599 + $0x70] sm:$0xff] %v5086
        %5103 = vst [vmem:[%s599 + $0x78] sm:$0xff] %v5087
        %s5104 = sand.u32 %s377, 1
        %s5105 = scalar_lea.sflag [#allocation6], %s5104
        %s5106 = sand.u32 %s377, 1
        %s5107 = smul.addr %s5106, 128
        %s5108 = scalar_lea.vmem [#allocation15], %s5107
        // Predicated region
        $region109: #{tpu_custom_call.1} parent=79 // pred_check
          %p5109 = pneg %p387
        $region110: #{tpu_custom_call.1} parent=79 // pred_check_branch
          %5111 = sbr.rel (%p5109) target = $region112
        $region111: #{tpu_custom_call.1} parent=79 // pred_region
          %s5112 = smul.u32 16, %s40
          %s5114 = ssub.s32 2048, 2048
          %5115 = vsyncadd %s5105, %s5114
          %s5116 = smul.addr %s39, 16
          %s5117 = sadd.s32 %s5112, %s5116
          %s5118 = smul.addr %s5117, 128
          %s5119 = scalar_lea.hbm %s15, %s5118
          %s5120 = sshll.u32 %s5108, 4
          %s5121 = int_to_ptr.vmem [resolvable:$true] %s5120
          %5126 = dma.vmem_to_hbm [thread:$0]  %s5121, 2048, %s5119, %s5105, 128, 128, 8
        $region112: #{tpu_custom_call.1} parent=79 // pred_fallthru
          _
      $region80: #{tpu_custom_call.1} parent=5 // pred_fallthru
        _
      %p5127 = scmp.le.s32.totalorder 2, %s30
      // Predicated region
      $region113: #{tpu_custom_call.1} parent=5 // pred_check
        %p5128 = pneg %p5127
      $region114: #{tpu_custom_call.1} parent=5 // pred_check_branch
        %5130 = sbr.rel (%p5128) target = $region116
      $region115: #{tpu_custom_call.1} parent=5 // pred_region
        %s5131 = ssub.s32 %s30, 2
        // Predicated region
        $region117: #{tpu_custom_call.1} parent=115 // pred_check
          %p5132 = pneg %p393
        $region118: #{tpu_custom_call.1} parent=115 // pred_check_branch
          %5134 = sbr.rel (%p5132) target = $region120
        $region119: #{tpu_custom_call.1} parent=115 // pred_region
          %s5135 = sand.u32 %s378, 1
          %s5136 = scalar_lea.sflag [#allocation6], %s5135
          %s5137 = sand.u32 %s378, 1
          %s5138 = smul.addr %s5137, 128
          %s5139 = scalar_lea.vmem [#allocation15], %s5138
          %5140 = dma.done %s5136, 2048
        $region120: #{tpu_custom_call.1} parent=115 // pred_fallthru
          _
      $region116: #{tpu_custom_call.1} parent=5 // pred_fallthru
        _
    $region6: #{tpu_custom_call.1} parent=1 // loop_footer
      %s34 = sadd.s32 1, %s30
    $region7: #{tpu_custom_call.1} parent=1 // loop_footer_branch
      %29 = sbr.rel target = $region3
    $region8: #{tpu_custom_call.1} parent=1 // loop_exit
      _
    %5141 = vsyncpa [#allocation5], 1
    %s5142 = scalar_lea.sflag [#allocation5], 1
    %5143 = vsyncpa %s5142, 1
    %5144 = vsyncpa [#allocation8], 1
    %5145 = vsyncpa [#allocation11], 1
    %5146 = vsyncpa [#allocation14], 1
    %5147 = vsyncpa [#allocation6], 1
    %s5148 = scalar_lea.sflag [#allocation6], 1
    %5149 = vsyncpa %s5148, 1

// kernel: tpu_custom_call.1
$region0: #{tpu_custom_call.1}
  #allocation0 [shape = 'u32[]', space=smem, size = 0x4, offset = 0x4, fixed_abs, tag = 'smem constant byte address 0x4 - core index']
  #allocation1 [shape = 'u32[144,128]{1,0:T(1,128)}', space=vmem, size = 0x12000, scoped, tag = 'internal scratch']
  #allocation2 [shape = 'f32[4,128,32]{2,1,0:T(8,128)}', space=vmem, size = 0x40000, scoped, tag = 'scratch operand']
  #allocation3 [shape = 'f32[4,128,32]{2,1,0:T(8,128)}', space=vmem, size = 0x40000, scoped, tag = 'scratch operand']
  %s0 = inlined_call_operand.hbm [shape: f32[2,128,128], index: 0, kind: input, shape index: {}]
  %s1 = inlined_call_operand.hbm [shape: f32[128,128], index: 1, kind: input, shape index: {}]
  %s2 = inlined_call_operand.vmem [shape: f32[1,128], index: 2, kind: input, shape index: {}]
  %s3 = inlined_call_operand.hbm [shape: f32[128,256], index: 3, kind: input, shape index: {}]
  %s4 = inlined_call_operand.vmem [shape: f32[1,256], index: 4, kind: input, shape index: {}]
  %s5 = inlined_call_operand.hbm [shape: f32[128,128], index: 5, kind: input, shape index: {}]
  %s6 = inlined_call_operand.vmem [shape: f32[1,128], index: 6, kind: input, shape index: {}]
  %s7 = inlined_call_operand.vmem [shape: f32[1,128], index: 7, kind: input, shape index: {}]
  %s8 = inlined_call_operand.vmem [shape: f32[1,128], index: 8, kind: input, shape index: {}]
  %s9 = inlined_call_operand.hbm [shape: f32[128,256], index: 9, kind: input, shape index: {}]
  %s10 = inlined_call_operand.vmem [shape: f32[1,256], index: 10, kind: input, shape index: {}]
  %s11 = inlined_call_operand.hbm [shape: f32[256,128], index: 11, kind: input, shape index: {}]
  %s12 = inlined_call_operand.vmem [shape: f32[1,128], index: 12, kind: input, shape index: {}]
  %s13 = inlined_call_operand.vmem [shape: f32[1,128], index: 13, kind: input, shape index: {}]
  %s14 = inlined_call_operand.vmem [shape: f32[1,128], index: 14, kind: input, shape index: {}]
  %s15 = inlined_call_operand.hbm [shape: f32[2,128,128], index: 15, kind: output, shape index: {}]
  %s16 = sld [smem:[#allocation0]]
  $region121: #{tpu_custom_call.1} parent=0
    _
  %s18 = ssub.s32 1, %s16
  %s19 = scalar_select 0, %s18, %s16
  $region1: #{tpu_custom_call.1} parent=0
    #allocation4 [shape = 'u8[131072]{0}', space=vmem, size = 0x20000, scoped, tag = 'input window, operand 0']
    #allocation5 [shape = 's32[2]{0}', space=sflag, size = 0x8, scoped, tag = 'scoped memory for tpu_custom_call.1']
    #allocation6 [shape = 's32[2]{0}', space=sflag, size = 0x8, scoped, tag = 'scoped memory for tpu_custom_call.1']
    #allocation7 [shape = 'u8[65536]{0}', space=vmem, size = 0x10000, scoped, tag = 'input window, operand 1, single buffered']
    #allocation8 [shape = 's32[1]{0}', space=sflag, size = 0x4, scoped, tag = 'scoped memory for tpu_custom_call.1']
    #allocation9 [shape = 'u8[131072]{0}', space=vmem, size = 0x20000, scoped, tag = 'input window, operand 3, single buffered']
    #allocation10 [shape = 'u8[65536]{0}', space=vmem, size = 0x10000, scoped, tag = 'input window, operand 5, single buffered']
    #allocation11 [shape = 's32[1]{0}', space=sflag, size = 0x4, scoped, tag = 'scoped memory for tpu_custom_call.1']
    #allocation12 [shape = 'u8[131072]{0}', space=vmem, size = 0x20000, scoped, tag = 'input window, operand 9, single buffered']
    #allocation13 [shape = 'u8[131072]{0}', space=vmem, size = 0x20000, scoped, tag = 'input window, operand 11, single buffered']
    #allocation14 [shape = 's32[1]{0}', space=sflag, size = 0x4, scoped, tag = 'scoped memory for tpu_custom_call.1']
    #allocation15 [shape = 'u8[131072]{0}', space=vmem, size = 0x20000, scoped, tag = 'output window, operand 0']
    %20 = vsyncpa [#allocation5], 0
    %s21 = scalar_lea.sflag [#allocation5], 1
    %22 = vsyncpa %s21, 0
    %23 = vsyncpa [#allocation8], 0
    %24 = vsyncpa [#allocation11], 0
    %25 = vsyncpa [#allocation14], 0
    %26 = vsyncpa [#allocation6], 0
    %s27 = scalar_lea.sflag [#allocation6], 1
    %28 = vsyncpa %s27, 0
    loop: start=0, step=1, limit=4
    $region2: #{tpu_custom_call.1} parent=1 // loop_pre_header
      _
    $region3: #{tpu_custom_call.1} parent=1 // loop_header
      %s30 = sphi 0, %s34
      %p31 = scmp.ge.s32.totalorder %s30, 4
      %s37 = sphi 0, %s49
      %s38 = sphi 0, %s45
      %s39 = sphi 0, %s37
      %s40 = sphi 0, %s38
      %s41 = sphi 0, %s39
      %s42 = sphi 0, %s40
      %s52 = sphi 0, %s54
      %s55 = sphi 0, %s52
      %s56 = sphi 0, %s55
      %s72 = sphi 0, %s56
      %s76 = sphi 0, %s76
      %s78 = sphi 0, %s76
      %s79 = sphi 0, %s78
      %s93 = sphi 0, %s79
      %s97 = sphi 0, %s97
      %s99 = sphi 0, %s97
      %s100 = sphi 0, %s99
      %s114 = sphi 0, %s100
      %s118 = sphi 0, %s118
      %s120 = sphi 0, %s118
      %s121 = sphi 0, %s120
      %s135 = sphi 0, %s121
      %s139 = sphi 0, %s139
      %s141 = sphi 0, %s139
      %s142 = sphi 0, %s141
      %s156 = sphi 0, %s142
      %s160 = sphi 0, %s160
      %s162 = sphi 0, %s160
      %s163 = sphi 0, %s162
      %s177 = sphi 0, %s163
      %s181 = sphi 0, %s181
      %s183 = sphi 0, %s181
      %s184 = sphi 0, %s183
      %s198 = sphi 0, %s184
      %s202 = sphi 0, %s202
      %s204 = sphi 0, %s202
      %s205 = sphi 0, %s204
      %s219 = sphi 0, %s205
      %s223 = sphi 0, %s223
      %s225 = sphi 0, %s223
      %s226 = sphi 0, %s225
      %s240 = sphi 0, %s226
      %s244 = sphi 0, %s244
      %s246 = sphi 0, %s244
      %s247 = sphi 0, %s246
      %s261 = sphi 0, %s247
      %s265 = sphi 0, %s265
      %s267 = sphi 0, %s265
      %s268 = sphi 0, %s267
      %s282 = sphi 0, %s268
      %s286 = sphi 0, %s286
      %s288 = sphi 0, %s286
      %s289 = sphi 0, %s288
      %s303 = sphi 0, %s289
      %s307 = sphi 0, %s307
      %s309 = sphi 0, %s307
      %s310 = sphi 0, %s309
      %s324 = sphi 0, %s310
      %s328 = sphi 0, %s328
      %s330 = sphi 0, %s328
      %s331 = sphi 0, %s330
      %s345 = sphi 0, %s331
      %s349 = sphi 0, %s349
      %s351 = sphi 0, %s349
      %s352 = sphi 0, %s351
      %s366 = sphi 0, %s352
      %s374 = sphi 0, %s376
      %s377 = sphi 0, %s374
      %s378 = sphi 0, %s377
      %s394 = sphi 0, %s378
    $region4: #{tpu_custom_call.1} parent=1 // loop_header_branch
      %33 = sbr.rel (%p31) target = $region8
    $region5: #{tpu_custom_call.1} parent=1 // loop_body
      %s35 = ssub.s32 %s30, 1
      %s36 = ssub.s32 %s30, 2
      %s43 = sadd.s32 1, %s38
      %p44 = scmp.ge.s32.totalorder %s43, 1
      %s45 = scalar_select %p44, 0, %s43
      %s46 = sadd.s32 1, %s37
      %s47 = scalar_select %p44, %s46, %s37
      %p48 = scmp.ge.s32.totalorder %s47, 2
      %s49 = scalar_select %p48, 0, %s47
      %s50 = ssub.s32 %s37, %s49
      %p51 = scmp.eq.s32.totalorder %s50, 0
      %s53 = sadd.s32 %s52, 1
      %s54 = scalar_select %p51, %s52, %s53
      %p57 = pneg %p51
      %p58 = scmp.eq.s32.totalorder %s30, 1
      %p59 = por %p57, %p58
      %p60 = scmp.ne.s32.totalorder %s52, %s55
      %p61 = scmp.eq.s32.totalorder %s30, 0
      %p62 = por %p60, %p61
      %p63 = scmp.ne.s32.totalorder %s52, %s55
      %p64 = scmp.eq.s32.totalorder %s35, 1
      %p65 = por %p63, %p64
      %p66 = scmp.ne.s32.totalorder %s55, %s56
      %p67 = scmp.eq.s32.totalorder %s35, 0
      %p68 = por %p66, %p67
      %p69 = scmp.ne.s32.totalorder %s55, %s56
      %p70 = scmp.eq.s32.totalorder %s36, 1
      %p71 = por %p69, %p70
      %p73 = scmp.ne.s32.totalorder %s56, %s72
      %p74 = scmp.eq.s32.totalorder %s36, 0
      %p75 = por %p73, %p74
      %s77 = sadd.s32 %s76, 1
      %p80 = scmp.eq.s32.totalorder %s30, 1
      %p81 = scmp.ne.s32.totalorder %s76, %s78
      %p82 = scmp.eq.s32.totalorder %s30, 0
      %p83 = por %p81, %p82
      %p84 = scmp.ne.s32.totalorder %s76, %s78
      %p85 = scmp.eq.s32.totalorder %s35, 1
      %p86 = por %p84, %p85
      %p87 = scmp.ne.s32.totalorder %s78, %s79
      %p88 = scmp.eq.s32.totalorder %s35, 0
      %p89 = por %p87, %p88
      %p90 = scmp.ne.s32.totalorder %s78, %s79
      %p91 = scmp.eq.s32.totalorder %s36, 1
      %p92 = por %p90, %p91
      %p94 = scmp.ne.s32.totalorder %s79, %s93
      %p95 = scmp.eq.s32.totalorder %s36, 0
      %p96 = por %p94, %p95
      %s98 = sadd.s32 %s97, 1
      %p101 = scmp.eq.s32.totalorder %s30, 1
      %p102 = scmp.ne.s32.totalorder %s97, %s99
      %p103 = scmp.eq.s32.totalorder %s30, 0
      %p104 = por %p102, %p103
      %p105 = scmp.ne.s32.totalorder %s97, %s99
      %p106 = scmp.eq.s32.totalorder %s35, 1
      %p107 = por %p105, %p106
      %p108 = scmp.ne.s32.totalorder %s99, %s100
      %p109 = scmp.eq.s32.totalorder %s35, 0
      %p110 = por %p108, %p109
      %p111 = scmp.ne.s32.totalorder %s99, %s100
      %p112 = scmp.eq.s32.totalorder %s36, 1
      %p113 = por %p111, %p112
      %p115 = scmp.ne.s32.totalorder %s100, %s114
      %p116 = scmp.eq.s32.totalorder %s36, 0
      %p117 = por %p115, %p116
      %s119 = sadd.s32 %s118, 1
      %p122 = scmp.eq.s32.totalorder %s30, 1
      %p123 = scmp.ne.s32.totalorder %s118, %s120
      %p124 = scmp.eq.s32.totalorder %s30, 0
      %p125 = por %p123, %p124
      %p126 = scmp.ne.s32.totalorder %s118, %s120
      %p127 = scmp.eq.s32.totalorder %s35, 1
      %p128 = por %p126, %p127
      %p129 = scmp.ne.s32.totalorder %s120, %s121
      %p130 = scmp.eq.s32.totalorder %s35, 0
      %p131 = por %p129, %p130
      %p132 = scmp.ne.s32.totalorder %s120, %s121
      %p133 = scmp.eq.s32.totalorder %s36, 1
      %p134 = por %p132, %p133
      %p136 = scmp.ne.s32.totalorder %s121, %s135
      %p137 = scmp.eq.s32.totalorder %s36, 0
      %p138 = por %p136, %p137
      %s140 = sadd.s32 %s139, 1
      %p143 = scmp.eq.s32.totalorder %s30, 1
      %p144 = scmp.ne.s32.totalorder %s139, %s141
      %p145 = scmp.eq.s32.totalorder %s30, 0
      %p146 = por %p144, %p145
      %p147 = scmp.ne.s32.totalorder %s139, %s141
      %p148 = scmp.eq.s32.totalorder %s35, 1
      %p149 = por %p147, %p148
      %p150 = scmp.ne.s32.totalorder %s141, %s142
      %p151 = scmp.eq.s32.totalorder %s35, 0
      %p152 = por %p150, %p151
      %p153 = scmp.ne.s32.totalorder %s141, %s142
      %p154 = scmp.eq.s32.totalorder %s36, 1
      %p155 = por %p153, %p154
      %p157 = scmp.ne.s32.totalorder %s142, %s156
      %p158 = scmp.eq.s32.totalorder %s36, 0
      %p159 = por %p157, %p158
      %s161 = sadd.s32 %s160, 1
      %p164 = scmp.eq.s32.totalorder %s30, 1
      %p165 = scmp.ne.s32.totalorder %s160, %s162
      %p166 = scmp.eq.s32.totalorder %s30, 0
      %p167 = por %p165, %p166
      %p168 = scmp.ne.s32.totalorder %s160, %s162
      %p169 = scmp.eq.s32.totalorder %s35, 1
      %p170 = por %p168, %p169
      %p171 = scmp.ne.s32.totalorder %s162, %s163
      %p172 = scmp.eq.s32.totalorder %s35, 0
      %p173 = por %p171, %p172
      %p174 = scmp.ne.s32.totalorder %s162, %s163
      %p175 = scmp.eq.s32.totalorder %s36, 1
      %p176 = por %p174, %p175
      %p178 = scmp.ne.s32.totalorder %s163, %s177
      %p179 = scmp.eq.s32.totalorder %s36, 0
      %p180 = por %p178, %p179
      %s182 = sadd.s32 %s181, 1
      %p185 = scmp.eq.s32.totalorder %s30, 1
      %p186 = scmp.ne.s32.totalorder %s181, %s183
      %p187 = scmp.eq.s32.totalorder %s30, 0
      %p188 = por %p186, %p187
      %p189 = scmp.ne.s32.totalorder %s181, %s183
      %p190 = scmp.eq.s32.totalorder %s35, 1
      %p191 = por %p189, %p190
      %p192 = scmp.ne.s32.totalorder %s183, %s184
      %p193 = scmp.eq.s32.totalorder %s35, 0
      %p194 = por %p192, %p193
      %p195 = scmp.ne.s32.totalorder %s183, %s184
      %p196 = scmp.eq.s32.totalorder %s36, 1
      %p197 = por %p195, %p196
      %p199 = scmp.ne.s32.totalorder %s184, %s198
      %p200 = scmp.eq.s32.totalorder %s36, 0
      %p201 = por %p199, %p200
      %s203 = sadd.s32 %s202, 1
      %p206 = scmp.eq.s32.totalorder %s30, 1
      %p207 = scmp.ne.s32.totalorder %s202, %s204
      %p208 = scmp.eq.s32.totalorder %s30, 0
      %p209 = por %p207, %p208
      %p210 = scmp.ne.s32.totalorder %s202, %s204
      %p211 = scmp.eq.s32.totalorder %s35, 1
      %p212 = por %p210, %p211
      %p213 = scmp.ne.s32.totalorder %s204, %s205
      %p214 = scmp.eq.s32.totalorder %s35, 0
      %p215 = por %p213, %p214
      %p216 = scmp.ne.s32.totalorder %s204, %s205
      %p217 = scmp.eq.s32.totalorder %s36, 1
      %p218 = por %p216, %p217
      %p220 = scmp.ne.s32.totalorder %s205, %s219
      %p221 = scmp.eq.s32.totalorder %s36, 0
      %p222 = por %p220, %p221
      %s224 = sadd.s32 %s223, 1
      %p227 = scmp.eq.s32.totalorder %s30, 1
      %p228 = scmp.ne.s32.totalorder %s223, %s225
      %p229 = scmp.eq.s32.totalorder %s30, 0
      %p230 = por %p228, %p229
      %p231 = scmp.ne.s32.totalorder %s223, %s225
      %p232 = scmp.eq.s32.totalorder %s35, 1
      %p233 = por %p231, %p232
      %p234 = scmp.ne.s32.totalorder %s225, %s226
      %p235 = scmp.eq.s32.totalorder %s35, 0
      %p236 = por %p234, %p235
      %p237 = scmp.ne.s32.totalorder %s225, %s226
      %p238 = scmp.eq.s32.totalorder %s36, 1
      %p239 = por %p237, %p238
      %p241 = scmp.ne.s32.totalorder %s226, %s240
      %p242 = scmp.eq.s32.totalorder %s36, 0
      %p243 = por %p241, %p242
      %s245 = sadd.s32 %s244, 1
      %p248 = scmp.eq.s32.totalorder %s30, 1
      %p249 = scmp.ne.s32.totalorder %s244, %s246
      %p250 = scmp.eq.s32.totalorder %s30, 0
      %p251 = por %p249, %p250
      %p252 = scmp.ne.s32.totalorder %s244, %s246
      %p253 = scmp.eq.s32.totalorder %s35, 1
      %p254 = por %p252, %p253
      %p255 = scmp.ne.s32.totalorder %s246, %s247
      %p256 = scmp.eq.s32.totalorder %s35, 0
      %p257 = por %p255, %p256
      %p258 = scmp.ne.s32.totalorder %s246, %s247
      %p259 = scmp.eq.s32.totalorder %s36, 1
      %p260 = por %p258, %p259
      %p262 = scmp.ne.s32.totalorder %s247, %s261
      %p263 = scmp.eq.s32.totalorder %s36, 0
      %p264 = por %p262, %p263
      %s266 = sadd.s32 %s265, 1
      %p269 = scmp.eq.s32.totalorder %s30, 1
      %p270 = scmp.ne.s32.totalorder %s265, %s267
      %p271 = scmp.eq.s32.totalorder %s30, 0
      %p272 = por %p270, %p271
      %p273 = scmp.ne.s32.totalorder %s265, %s267
      %p274 = scmp.eq.s32.totalorder %s35, 1
      %p275 = por %p273, %p274
      %p276 = scmp.ne.s32.totalorder %s267, %s268
      %p277 = scmp.eq.s32.totalorder %s35, 0
      %p278 = por %p276, %p277
      %p279 = scmp.ne.s32.totalorder %s267, %s268
      %p280 = scmp.eq.s32.totalorder %s36, 1
      %p281 = por %p279, %p280
      %p283 = scmp.ne.s32.totalorder %s268, %s282
      %p284 = scmp.eq.s32.totalorder %s36, 0
      %p285 = por %p283, %p284
      %s287 = sadd.s32 %s286, 1
      %p290 = scmp.eq.s32.totalorder %s30, 1
      %p291 = scmp.ne.s32.totalorder %s286, %s288
      %p292 = scmp.eq.s32.totalorder %s30, 0
      %p293 = por %p291, %p292
      %p294 = scmp.ne.s32.totalorder %s286, %s288
      %p295 = scmp.eq.s32.totalorder %s35, 1
      %p296 = por %p294, %p295
      %p297 = scmp.ne.s32.totalorder %s288, %s289
      %p298 = scmp.eq.s32.totalorder %s35, 0
      %p299 = por %p297, %p298
      %p300 = scmp.ne.s32.totalorder %s288, %s289
      %p301 = scmp.eq.s32.totalorder %s36, 1
      %p302 = por %p300, %p301
      %p304 = scmp.ne.s32.totalorder %s289, %s303
      %p305 = scmp.eq.s32.totalorder %s36, 0
      %p306 = por %p304, %p305
      %s308 = sadd.s32 %s307, 1
      %p311 = scmp.eq.s32.totalorder %s30, 1
      %p312 = scmp.ne.s32.totalorder %s307, %s309
      %p313 = scmp.eq.s32.totalorder %s30, 0
      %p314 = por %p312, %p313
      %p315 = scmp.ne.s32.totalorder %s307, %s309
      %p316 = scmp.eq.s32.totalorder %s35, 1
      %p317 = por %p315, %p316
      %p318 = scmp.ne.s32.totalorder %s309, %s310
      %p319 = scmp.eq.s32.totalorder %s35, 0
      %p320 = por %p318, %p319
      %p321 = scmp.ne.s32.totalorder %s309, %s310
      %p322 = scmp.eq.s32.totalorder %s36, 1
      %p323 = por %p321, %p322
      %p325 = scmp.ne.s32.totalorder %s310, %s324
      %p326 = scmp.eq.s32.totalorder %s36, 0
      %p327 = por %p325, %p326
      %s329 = sadd.s32 %s328, 1
      %p332 = scmp.eq.s32.totalorder %s30, 1
      %p333 = scmp.ne.s32.totalorder %s328, %s330
      %p334 = scmp.eq.s32.totalorder %s30, 0
      %p335 = por %p333, %p334
      %p336 = scmp.ne.s32.totalorder %s328, %s330
      %p337 = scmp.eq.s32.totalorder %s35, 1
      %p338 = por %p336, %p337
      %p339 = scmp.ne.s32.totalorder %s330, %s331
      %p340 = scmp.eq.s32.totalorder %s35, 0
      %p341 = por %p339, %p340
      %p342 = scmp.ne.s32.totalorder %s330, %s331
      %p343 = scmp.eq.s32.totalorder %s36, 1
      %p344 = por %p342, %p343
      %p346 = scmp.ne.s32.totalorder %s331, %s345
      %p347 = scmp.eq.s32.totalorder %s36, 0
      %p348 = por %p346, %p347
      %s350 = sadd.s32 %s349, 1
      %p353 = scmp.eq.s32.totalorder %s30, 1
      %p354 = scmp.ne.s32.totalorder %s349, %s351
      %p355 = scmp.eq.s32.totalorder %s30, 0
      %p356 = por %p354, %p355
      %p357 = scmp.ne.s32.totalorder %s349, %s351
      %p358 = scmp.eq.s32.totalorder %s35, 1
      %p359 = por %p357, %p358
      %p360 = scmp.ne.s32.totalorder %s351, %s352
      %p361 = scmp.eq.s32.totalorder %s35, 0
      %p362 = por %p360, %p361
      %p363 = scmp.ne.s32.totalorder %s351, %s352
      %p364 = scmp.eq.s32.totalorder %s36, 1
      %p365 = por %p363, %p364
      %p367 = scmp.ne.s32.totalorder %s352, %s366
      %p368 = scmp.eq.s32.totalorder %s36, 0
      %p369 = por %p367, %p368
      %s370 = ssub.s32 %s37, %s49
      %s371 = ssub.s32 %s38, %s45
      %s372 = sor.u32 %s370, %s371
      %p373 = scmp.eq.s32.totalorder %s372, 0
      %s375 = sadd.s32 %s374, 1
      %s376 = scalar_select %p373, %s374, %s375
      %p379 = pneg %p373
      %p380 = scmp.eq.s32.totalorder %s30, 1
      %p381 = por %p379, %p380
      %p382 = scmp.ne.s32.totalorder %s374, %s377
      %p383 = scmp.eq.s32.totalorder %s30, 0
      %p384 = por %p382, %p383
      %p385 = scmp.ne.s32.totalorder %s374, %s377
      %p386 = scmp.eq.s32.totalorder %s35, 1
      %p387 = por %p385, %p386
      %p388 = scmp.ne.s32.totalorder %s377, %s378
      %p389 = scmp.eq.s32.totalorder %s35, 0
      %p390 = por %p388, %p389
      %p391 = scmp.ne.s32.totalorder %s377, %s378
      %p392 = scmp.eq.s32.totalorder %s36, 1
      %p393 = por %p391, %p392
      %p395 = scmp.ne.s32.totalorder %s378, %s394
      %p396 = scmp.eq.s32.totalorder %s36, 0
      %p397 = por %p395, %p396
      %p398 = scmp.le.s32.totalorder 1, %s30
      %p399 = scmp.lt.s32.totalorder %s30, 3
      %p400 = pnand %p398, %p399
      %p401 = pneg %p400
      // Predicated region
      $region9: #{tpu_custom_call.1} parent=5 // pred_check
        _
      $region10: #{tpu_custom_call.1} parent=5 // pred_check_branch
        %403 = sbr.rel (%p400) target = $region12
      $region11: #{tpu_custom_call.1} parent=5 // pred_region
        %s404 = ssub.s32 %s30, 1
        // Predicated region
        $region13: #{tpu_custom_call.1} parent=11 // pred_check
          %p405 = pneg %p89
        $region14: #{tpu_custom_call.1} parent=11 // pred_check_branch
          %407 = sbr.rel (%p405) target = $region16
        $region15: #{tpu_custom_call.1} parent=11 // pred_region
          %s409 = ssub.s32 2048, 2048
          %410 = vsyncadd [#allocation8], %s409
          %s411 = sshll.u32 [#allocation7], 4
          %s412 = int_to_ptr.vmem [resolvable:$true] %s411
          %417 = dma.hbm_to_vmem [thread:$0]  %s1, 2048, %s412, [#allocation8], 128, 128, 8
        $region16: #{tpu_custom_call.1} parent=11 // pred_fallthru
          _
        // Predicated region
        $region17: #{tpu_custom_call.1} parent=11 // pred_check
          %p418 = pneg %p110
        $region18: #{tpu_custom_call.1} parent=11 // pred_check_branch
          %420 = sbr.rel (%p418) target = $region20
        $region19: #{tpu_custom_call.1} parent=11 // pred_region
          _
        $region20: #{tpu_custom_call.1} parent=11 // pred_fallthru
          _
        // Predicated region
        $region21: #{tpu_custom_call.1} parent=11 // pred_check
          %p421 = pneg %p131
        $region22: #{tpu_custom_call.1} parent=11 // pred_check_branch
          %423 = sbr.rel (%p421) target = $region24
        $region23: #{tpu_custom_call.1} parent=11 // pred_region
          %s425 = ssub.s32 4096, 4096
          %426 = vsyncadd [#allocation8], %s425
          %s427 = sshll.u32 [#allocation9], 4
          %s428 = int_to_ptr.vmem [resolvable:$true] %s427
          %433 = dma.hbm_to_vmem [thread:$0]  %s3, 4096, %s428, [#allocation8], 256, 256, 16
        $region24: #{tpu_custom_call.1} parent=11 // pred_fallthru
          _
        // Predicated region
        $region25: #{tpu_custom_call.1} parent=11 // pred_check
          %p434 = pneg %p152
        $region26: #{tpu_custom_call.1} parent=11 // pred_check_branch
          %436 = sbr.rel (%p434) target = $region28
        $region27: #{tpu_custom_call.1} parent=11 // pred_region
          _
        $region28: #{tpu_custom_call.1} parent=11 // pred_fallthru
          _
        // Predicated region
        $region29: #{tpu_custom_call.1} parent=11 // pred_check
          %p437 = pneg %p173
        $region30: #{tpu_custom_call.1} parent=11 // pred_check_branch
          %439 = sbr.rel (%p437) target = $region32
        $region31: #{tpu_custom_call.1} parent=11 // pred_region
          %s441 = ssub.s32 2048, 2048
          %442 = vsyncadd [#allocation11], %s441
          %s443 = sshll.u32 [#allocation10], 4
          %s444 = int_to_ptr.vmem [resolvable:$true] %s443
          %449 = dma.hbm_to_vmem [thread:$0]  %s5, 2048, %s444, [#allocation11], 128, 128, 8
        $region32: #{tpu_custom_call.1} parent=11 // pred_fallthru
          _
        // Predicated region
        $region33: #{tpu_custom_call.1} parent=11 // pred_check
          %p450 = pneg %p194
        $region34: #{tpu_custom_call.1} parent=11 // pred_check_branch
          %452 = sbr.rel (%p450) target = $region36
        $region35: #{tpu_custom_call.1} parent=11 // pred_region
          _
        $region36: #{tpu_custom_call.1} parent=11 // pred_fallthru
          _
        // Predicated region
        $region37: #{tpu_custom_call.1} parent=11 // pred_check
          %p453 = pneg %p215
        $region38: #{tpu_custom_call.1} parent=11 // pred_check_branch
          %455 = sbr.rel (%p453) target = $region40
        $region39: #{tpu_custom_call.1} parent=11 // pred_region
          _
        $region40: #{tpu_custom_call.1} parent=11 // pred_fallthru
          _
        // Predicated region
        $region41: #{tpu_custom_call.1} parent=11 // pred_check
          %p456 = pneg %p236
        $region42: #{tpu_custom_call.1} parent=11 // pred_check_branch
          %458 = sbr.rel (%p456) target = $region44
        $region43: #{tpu_custom_call.1} parent=11 // pred_region
          _
        $region44: #{tpu_custom_call.1} parent=11 // pred_fallthru
          _
        // Predicated region
        $region45: #{tpu_custom_call.1} parent=11 // pred_check
          %p459 = pneg %p257
        $region46: #{tpu_custom_call.1} parent=11 // pred_check_branch
          %461 = sbr.rel (%p459) target = $region48
        $region47: #{tpu_custom_call.1} parent=11 // pred_region
          %s463 = ssub.s32 4096, 4096
          %464 = vsyncadd [#allocation11], %s463
          %s465 = sshll.u32 [#allocation12], 4
          %s466 = int_to_ptr.vmem [resolvable:$true] %s465
          %471 = dma.hbm_to_vmem [thread:$0]  %s9, 4096, %s466, [#allocation11], 256, 256, 16
        $region48: #{tpu_custom_call.1} parent=11 // pred_fallthru
          _
        // Predicated region
        $region49: #{tpu_custom_call.1} parent=11 // pred_check
          %p472 = pneg %p278
        $region50: #{tpu_custom_call.1} parent=11 // pred_check_branch
          %474 = sbr.rel (%p472) target = $region52
        $region51: #{tpu_custom_call.1} parent=11 // pred_region
          _
        $region52: #{tpu_custom_call.1} parent=11 // pred_fallthru
          _
        // Predicated region
        $region53: #{tpu_custom_call.1} parent=11 // pred_check
          %p475 = pneg %p299
        $region54: #{tpu_custom_call.1} parent=11 // pred_check_branch
          %477 = sbr.rel (%p475) target = $region56
        $region55: #{tpu_custom_call.1} parent=11 // pred_region
          %s479 = ssub.s32 4096, 4096
          %480 = vsyncadd [#allocation14], %s479
          %s481 = sshll.u32 [#allocation13], 4
          %s482 = int_to_ptr.vmem [resolvable:$true] %s481
          %487 = dma.hbm_to_vmem [thread:$0]  %s11, 4096, %s482, [#allocation14], 128, 128, 8
        $region56: #{tpu_custom_call.1} parent=11 // pred_fallthru
          _
        // Predicated region
        $region57: #{tpu_custom_call.1} parent=11 // pred_check
          %p488 = pneg %p320
        $region58: #{tpu_custom_call.1} parent=11 // pred_check_branch
          %490 = sbr.rel (%p488) target = $region60
        $region59: #{tpu_custom_call.1} parent=11 // pred_region
          _
        $region60: #{tpu_custom_call.1} parent=11 // pred_fallthru
          _
        // Predicated region
        $region61: #{tpu_custom_call.1} parent=11 // pred_check
          %p491 = pneg %p341
        $region62: #{tpu_custom_call.1} parent=11 // pred_check_branch
          %493 = sbr.rel (%p491) target = $region64
        $region63: #{tpu_custom_call.1} parent=11 // pred_region
          _
        $region64: #{tpu_custom_call.1} parent=11 // pred_fallthru
          _
        // Predicated region
        $region65: #{tpu_custom_call.1} parent=11 // pred_check
          %p494 = pneg %p362
        $region66: #{tpu_custom_call.1} parent=11 // pred_check_branch
          %496 = sbr.rel (%p494) target = $region68
        $region67: #{tpu_custom_call.1} parent=11 // pred_region
          _
        $region68: #{tpu_custom_call.1} parent=11 // pred_fallthru
          _
      $region12: #{tpu_custom_call.1} parent=5 // pred_fallthru
        _
      %p497 = scmp.lt.s32.totalorder %s30, 2
      // Predicated region
      $region69: #{tpu_custom_call.1} parent=5 // pred_check
        %p498 = pneg %p497
      $region70: #{tpu_custom_call.1} parent=5 // pred_check_branch
        %500 = sbr.rel (%p498) target = $region72
      $region71: #{tpu_custom_call.1} parent=5 // pred_region
        // Predicated region
        $region73: #{tpu_custom_call.1} parent=71 // pred_check
          %p501 = pneg %p62
        $region74: #{tpu_custom_call.1} parent=71 // pred_check_branch
          %503 = sbr.rel (%p501) target = $region76
        $region75: #{tpu_custom_call.1} parent=71 // pred_region
          %s504 = sand.u32 %s52, 1
          %s505 = scalar_lea.sflag [#allocation5], %s504
          %s506 = sand.u32 %s52, 1
          %s507 = smul.addr %s506, 128
          %s508 = scalar_lea.vmem [#allocation4], %s507
          %s510 = ssub.s32 2048, 2048
          %511 = vsyncadd %s505, %s510
          %s512 = smul.addr %s37, 16
          %s513 = smul.addr %s512, 128
          %s514 = scalar_lea.hbm %s0, %s513
          %s515 = sshll.u32 %s508, 4
          %s516 = int_to_ptr.vmem [resolvable:$true] %s515
          %521 = dma.hbm_to_vmem [thread:$0]  %s514, 2048, %s516, %s505, 128, 128, 8
        $region76: #{tpu_custom_call.1} parent=71 // pred_fallthru
          _
      $region72: #{tpu_custom_call.1} parent=5 // pred_fallthru
        _
      %p522 = scmp.le.s32.totalorder 1, %s30
      %p523 = scmp.lt.s32.totalorder %s30, 3
      %p524 = pnand %p522, %p523
      %p525 = pneg %p524
      // Predicated region
      $region77: #{tpu_custom_call.1} parent=5 // pred_check
        _
      $region78: #{tpu_custom_call.1} parent=5 // pred_check_branch
        %527 = sbr.rel (%p524) target = $region80
      $region79: #{tpu_custom_call.1} parent=5 // pred_region
        %s528 = ssub.s32 %s30, 1
        %s529 = sand.u32 %s55, 1
        %s530 = scalar_lea.sflag [#allocation5], %s529
        %s531 = sand.u32 %s55, 1
        %s532 = smul.addr %s531, 128
        %s533 = scalar_lea.vmem [#allocation4], %s532
        // Predicated region
        $region81: #{tpu_custom_call.1} parent=79 // pred_check
          %p534 = pneg %p68
        $region82: #{tpu_custom_call.1} parent=79 // pred_check_branch
          %536 = sbr.rel (%p534) target = $region84
        $region83: #{tpu_custom_call.1} parent=79 // pred_region
          %537 = dma.done %s530, 2048
        $region84: #{tpu_custom_call.1} parent=79 // pred_fallthru
          _
        // Predicated region
        $region85: #{tpu_custom_call.1} parent=79 // pred_check
          %p538 = pneg %p89
        $region86: #{tpu_custom_call.1} parent=79 // pred_check_branch
          %540 = sbr.rel (%p538) target = $region88
        $region87: #{tpu_custom_call.1} parent=79 // pred_region
          %541 = dma.done [#allocation8], 2048
        $region88: #{tpu_custom_call.1} parent=79 // pred_fallthru
          _
        // Predicated region
        $region89: #{tpu_custom_call.1} parent=79 // pred_check
          %p542 = pneg %p131
        $region90: #{tpu_custom_call.1} parent=79 // pred_check_branch
          %544 = sbr.rel (%p542) target = $region92
        $region91: #{tpu_custom_call.1} parent=79 // pred_region
          %545 = dma.done [#allocation8], 4096
        $region92: #{tpu_custom_call.1} parent=79 // pred_fallthru
          _
        // Predicated region
        $region93: #{tpu_custom_call.1} parent=79 // pred_check
          %p546 = pneg %p173
        $region94: #{tpu_custom_call.1} parent=79 // pred_check_branch
          %548 = sbr.rel (%p546) target = $region96
        $region95: #{tpu_custom_call.1} parent=79 // pred_region
          %549 = dma.done [#allocation11], 2048
        $region96: #{tpu_custom_call.1} parent=79 // pred_fallthru
          _
        // Predicated region
        $region97: #{tpu_custom_call.1} parent=79 // pred_check
          %p550 = pneg %p257
        $region98: #{tpu_custom_call.1} parent=79 // pred_check_branch
          %552 = sbr.rel (%p550) target = $region100
        $region99: #{tpu_custom_call.1} parent=79 // pred_region
          %553 = dma.done [#allocation11], 4096
        $region100: #{tpu_custom_call.1} parent=79 // pred_fallthru
          _
        // Predicated region
        $region101: #{tpu_custom_call.1} parent=79 // pred_check
          %p554 = pneg %p299
        $region102: #{tpu_custom_call.1} parent=79 // pred_check_branch
          %556 = sbr.rel (%p554) target = $region104
        $region103: #{tpu_custom_call.1} parent=79 // pred_region
          %557 = dma.done [#allocation14], 4096
        $region104: #{tpu_custom_call.1} parent=79 // pred_fallthru
          _
        %s558 = sand.u32 %s55, 1
        %s559 = scalar_lea.sflag [#allocation5], %s558
        %s560 = sand.u32 %s55, 1
        %s561 = smul.addr %s560, 128
        %s562 = scalar_lea.vmem [#allocation4], %s561
        %p563 = pneg %p68
        %p564 = pneg %p65
        %p565 = pneg %p89
        %p566 = pneg %p86
        %p567 = pneg %p110
        %p568 = pneg %p107
        %p569 = pneg %p131
        %p570 = pneg %p128
        %p571 = pneg %p152
        %p572 = pneg %p149
        %p573 = pneg %p173
        %p574 = pneg %p170
        %p575 = pneg %p194
        %p576 = pneg %p191
        %p577 = pneg %p215
        %p578 = pneg %p212
        %p579 = pneg %p236
        %p580 = pneg %p233
        %p581 = pneg %p257
        %p582 = pneg %p254
        %p583 = pneg %p278
        %p584 = pneg %p275
        %p585 = pneg %p299
        %p586 = pneg %p296
        %p587 = pneg %p320
        %p588 = pneg %p317
        %p589 = pneg %p341
        %p590 = pneg %p338
        %p591 = pneg %p362
        %p592 = pneg %p359
        %p593 = pneg %p390
        %p594 = pneg %p387
        %s595 = sand.u32 %s377, 1
        %s596 = scalar_lea.sflag [#allocation6], %s595
        %s597 = sand.u32 %s377, 1
        %s598 = smul.addr %s597, 128
        %s599 = scalar_lea.vmem [#allocation15], %s598
        %s600 = smul.u32 16, %s40
        %p601 = scmp.eq.s32.totalorder %s40, 0
        // Predicated region
        $region105: #{tpu_custom_call.1} parent=79 // pred_check
          %p602 = pneg %p601
        $region106: #{tpu_custom_call.1} parent=79 // pred_check_branch
          %604 = sbr.rel (%p602) target = $region108
        $region107: #{tpu_custom_call.1} parent=79 // pred_region
          %v605 = vld [vmem:[%s533] sm:$0xff]
          %v606 = vld [vmem:[%s533 + $0x8] sm:$0xff]
          %v607 = vld [vmem:[%s533 + $0x10] sm:$0xff]
          %v608 = vld [vmem:[%s533 + $0x18] sm:$0xff]
          %v609 = vld [vmem:[%s533 + $0x20] sm:$0xff]
          %v610 = vld [vmem:[%s533 + $0x28] sm:$0xff]
          %v611 = vld [vmem:[%s533 + $0x30] sm:$0xff]
          %v612 = vld [vmem:[%s533 + $0x38] sm:$0xff]
          %v613 = vld [vmem:[%s533 + $0x40] sm:$0xff]
          %v614 = vld [vmem:[%s533 + $0x48] sm:$0xff]
          %v615 = vld [vmem:[%s533 + $0x50] sm:$0xff]
          %v616 = vld [vmem:[%s533 + $0x58] sm:$0xff]
          %v617 = vld [vmem:[%s533 + $0x60] sm:$0xff]
          %v618 = vld [vmem:[%s533 + $0x68] sm:$0xff]
          %v619 = vld [vmem:[%s533 + $0x70] sm:$0xff]
          %v620 = vld [vmem:[%s533 + $0x78] sm:$0xff]
          %v621 = vld [vmem:[#allocation9] sm:$0xff]
          %v622 = vld [vmem:[#allocation9 + $0x8] sm:$0xff]
          %v623 = vld [vmem:[#allocation9 + $0x10] sm:$0xff]
          %v624 = vld [vmem:[#allocation9 + $0x18] sm:$0xff]
          %v625 = vld [vmem:[#allocation9 + $0x20] sm:$0xff]
          %v626 = vld [vmem:[#allocation9 + $0x28] sm:$0xff]
          %v627 = vld [vmem:[#allocation9 + $0x30] sm:$0xff]
          %v628 = vld [vmem:[#allocation9 + $0x38] sm:$0xff]
          %v629 = vld [vmem:[#allocation9 + $0x40] sm:$0xff]
          %v630 = vld [vmem:[#allocation9 + $0x48] sm:$0xff]
          %v631 = vld [vmem:[#allocation9 + $0x50] sm:$0xff]
          %v632 = vld [vmem:[#allocation9 + $0x58] sm:$0xff]
          %v633 = vld [vmem:[#allocation9 + $0x60] sm:$0xff]
          %v634 = vld [vmem:[#allocation9 + $0x68] sm:$0xff]
          %v635 = vld [vmem:[#allocation9 + $0x70] sm:$0xff]
          %v636 = vld [vmem:[#allocation9 + $0x78] sm:$0xff]
          %v637 = vld [vmem:[#allocation9 + $0x80] sm:$0xff]
          %v638 = vld [vmem:[#allocation9 + $0x88] sm:$0xff]
          %v639 = vld [vmem:[#allocation9 + $0x90] sm:$0xff]
          %v640 = vld [vmem:[#allocation9 + $0x98] sm:$0xff]
          %v641 = vld [vmem:[#allocation9 + $0xa0] sm:$0xff]
          %v642 = vld [vmem:[#allocation9 + $0xa8] sm:$0xff]
          %v643 = vld [vmem:[#allocation9 + $0xb0] sm:$0xff]
          %v644 = vld [vmem:[#allocation9 + $0xb8] sm:$0xff]
          %v645 = vld [vmem:[#allocation9 + $0xc0] sm:$0xff]
          %v646 = vld [vmem:[#allocation9 + $0xc8] sm:$0xff]
          %v647 = vld [vmem:[#allocation9 + $0xd0] sm:$0xff]
          %v648 = vld [vmem:[#allocation9 + $0xd8] sm:$0xff]
          %v649 = vld [vmem:[#allocation9 + $0xe0] sm:$0xff]
          %v650 = vld [vmem:[#allocation9 + $0xe8] sm:$0xff]
          %v651 = vld [vmem:[#allocation9 + $0xf0] sm:$0xff]
          %v652 = vld [vmem:[#allocation9 + $0xf8] sm:$0xff]
          %v653 = vld [vmem:[%s4] sm:$0x3]
          %v655 = vlaneseq
          %v656 = vshrl.u32 %v655, 7
          %v657 = vsub.s32 0, %v656
          %v658 = vrot.slane %v653, %v657
          %v659 = vlaneseq
          %v660 = vshrl.u32 %v659, 7
          %v661 = vsub.s32 1, %v660
          %v662 = vrot.slane %v653, %v661
          %665 = vmatprep.subr.mxu0 %v622
          %666 = vmatpush1.msra.mxu0 %v621
          %667 = vmatprep.subr.mxu0 %v624
          %668 = vmatpush1.msra.mxu0 %v623
          %669 = vmatprep.subr.mxu0 %v626
          %670 = vmatpush1.msra.mxu0 %v625
          %671 = vmatprep.subr.mxu0 %v628
          %672 = vmatpush1.msra.mxu0 %v627
          %673 = vmatprep.subr.mxu0 %v630
          %674 = vmatpush1.msra.mxu0 %v629
          %675 = vmatprep.subr.mxu0 %v632
          %676 = vmatpush1.msra.mxu0 %v631
          %677 = vmatprep.subr.mxu0 %v634
          %678 = vmatpush1.msra.mxu0 %v633
          %679 = vmatprep.subr.mxu0 %v636
          %680 = vmatpush1.msra.mxu0 %v635
          %681 = vmatprep.subr.mxu0 %v638
          %682 = vmatpush1.msra.mxu0 %v637
          %683 = vmatprep.subr.mxu0 %v640
          %684 = vmatpush1.msra.mxu0 %v639
          %685 = vmatprep.subr.mxu0 %v642
          %686 = vmatpush1.msra.mxu0 %v641
          %687 = vmatprep.subr.mxu0 %v644
          %688 = vmatpush1.msra.mxu0 %v643
          %689 = vmatprep.subr.mxu0 %v646
          %690 = vmatpush1.msra.mxu0 %v645
          %691 = vmatprep.subr.mxu0 %v648
          %692 = vmatpush1.msra.mxu0 %v647
          %693 = vmatprep.subr.mxu0 %v650
          %694 = vmatpush1.msra.mxu0 %v649
          %695 = vmatprep.subr.mxu0 %v652
          %696 = vmatpush1.msra.mxu0 %v651
          %697 = vmatprep.subr.mxu0 0.0
          %698 = vmatpush1.msra.mxu0 0.0
          %699 = vmatprep.subr.mxu0 0.0
          %700 = vmatpush1.msra.mxu0 0.0
          %701 = vmatprep.subr.mxu0 0.0
          %702 = vmatpush1.msra.mxu0 0.0
          %703 = vmatprep.subr.mxu0 0.0
          %704 = vmatpush1.msra.mxu0 0.0
          %705 = vmatprep.subr.mxu0 0.0
          %706 = vmatpush1.msra.mxu0 0.0
          %707 = vmatprep.subr.mxu0 0.0
          %708 = vmatpush1.msra.mxu0 0.0
          %709 = vmatprep.subr.mxu0 0.0
          %710 = vmatpush1.msra.mxu0 0.0
          %711 = vmatprep.subr.mxu0 0.0
          %712 = vmatpush1.msra.mxu0 0.0
          %713 = vmatprep.subr.mxu0 0.0
          %714 = vmatpush1.msra.mxu0 0.0
          %715 = vmatprep.subr.mxu0 0.0
          %716 = vmatpush1.msra.mxu0 0.0
          %717 = vmatprep.subr.mxu0 0.0
          %718 = vmatpush1.msra.mxu0 0.0
          %719 = vmatprep.subr.mxu0 0.0
          %720 = vmatpush1.msra.mxu0 0.0
          %721 = vmatprep.subr.mxu0 0.0
          %722 = vmatpush1.msra.mxu0 0.0
          %723 = vmatprep.subr.mxu0 0.0
          %724 = vmatpush1.msra.mxu0 0.0
          %725 = vmatprep.subr.mxu0 0.0
          %726 = vmatpush1.msra.mxu0 0.0
          %727 = vmatprep.subr.mxu0 0.0
          %728 = vmatpush1.msra.mxu0 0.0
          %729 = vmatprep.mubr.f32.mxu0 0.0
          %730 = vmatmul.mubr.f32.gmra.mrb[0].mxu0 %v605
          %v731 = vpop.f32.mrb[0].mxu0
          %v732 = vadd.f32 %v658, %v731
          %v733 = vpop.f32.mrb[0].mxu0
          %v734 = vadd.f32 %v662, %v733
          %735 = vmatprep.mubr.f32.mxu0 0.0
          %736 = vmatmul.mubr.f32.gmra.mrb[0].mxu0 %v606
          %v737 = vpop.f32.mrb[0].mxu0
          %v738 = vadd.f32 %v658, %v737
          %v739 = vpop.f32.mrb[0].mxu0
          %v740 = vadd.f32 %v662, %v739
          %741 = vmatprep.mubr.f32.mxu0 0.0
          %742 = vmatmul.mubr.f32.gmra.mrb[0].mxu0 %v607
          %v743 = vpop.f32.mrb[0].mxu0
          %v744 = vadd.f32 %v658, %v743
          %v745 = vpop.f32.mrb[0].mxu0
          %v746 = vadd.f32 %v662, %v745
          %747 = vmatprep.mubr.f32.mxu0 0.0
          %748 = vmatmul.mubr.f32.gmra.mrb[0].mxu0 %v608
          %v749 = vpop.f32.mrb[0].mxu0
          %v750 = vadd.f32 %v658, %v749
          %v751 = vpop.f32.mrb[0].mxu0
          %v752 = vadd.f32 %v662, %v751
          %753 = vmatprep.mubr.f32.mxu0 0.0
          %754 = vmatmul.mubr.f32.gmra.mrb[0].mxu0 %v609
          %v755 = vpop.f32.mrb[0].mxu0
          %v756 = vadd.f32 %v658, %v755
          %v757 = vpop.f32.mrb[0].mxu0
          %v758 = vadd.f32 %v662, %v757
          %759 = vmatprep.mubr.f32.mxu0 0.0
          %760 = vmatmul.mubr.f32.gmra.mrb[0].mxu0 %v610
          %v761 = vpop.f32.mrb[0].mxu0
          %v762 = vadd.f32 %v658, %v761
          %v763 = vpop.f32.mrb[0].mxu0
          %v764 = vadd.f32 %v662, %v763
          %765 = vmatprep.mubr.f32.mxu0 0.0
          %766 = vmatmul.mubr.f32.gmra.mrb[0].mxu0 %v611
          %v767 = vpop.f32.mrb[0].mxu0
          %v768 = vadd.f32 %v658, %v767
          %v769 = vpop.f32.mrb[0].mxu0
          %v770 = vadd.f32 %v662, %v769
          %771 = vmatprep.mubr.f32.mxu0 0.0
          %772 = vmatmul.mubr.f32.gmra.mrb[0].mxu0 %v612
          %v773 = vpop.f32.mrb[0].mxu0
          %v774 = vadd.f32 %v658, %v773
          %v775 = vpop.f32.mrb[0].mxu0
          %v776 = vadd.f32 %v662, %v775
          %777 = vmatprep.mubr.f32.mxu0 0.0
          %778 = vmatmul.mubr.f32.gmra.mrb[0].mxu0 %v613
          %v779 = vpop.f32.mrb[0].mxu0
          %v780 = vadd.f32 %v658, %v779
          %v781 = vpop.f32.mrb[0].mxu0
          %v782 = vadd.f32 %v662, %v781
          %783 = vmatprep.mubr.f32.mxu0 0.0
          %784 = vmatmul.mubr.f32.gmra.mrb[0].mxu0 %v614
          %v785 = vpop.f32.mrb[0].mxu0
          %v786 = vadd.f32 %v658, %v785
          %v787 = vpop.f32.mrb[0].mxu0
          %v788 = vadd.f32 %v662, %v787
          %789 = vmatprep.mubr.f32.mxu0 0.0
          %790 = vmatmul.mubr.f32.gmra.mrb[0].mxu0 %v615
          %v791 = vpop.f32.mrb[0].mxu0
          %v792 = vadd.f32 %v658, %v791
          %v793 = vpop.f32.mrb[0].mxu0
          %v794 = vadd.f32 %v662, %v793
          %795 = vmatprep.mubr.f32.mxu0 0.0
          %796 = vmatmul.mubr.f32.gmra.mrb[0].mxu0 %v616
          %v797 = vpop.f32.mrb[0].mxu0
          %v798 = vadd.f32 %v658, %v797
          %v799 = vpop.f32.mrb[0].mxu0
          %v800 = vadd.f32 %v662, %v799
          %801 = vmatprep.mubr.f32.mxu0 0.0
          %802 = vmatmul.mubr.f32.gmra.mrb[0].mxu0 %v617
          %v803 = vpop.f32.mrb[0].mxu0
          %v804 = vadd.f32 %v658, %v803
          %v805 = vpop.f32.mrb[0].mxu0
          %v806 = vadd.f32 %v662, %v805
          %807 = vmatprep.mubr.f32.mxu0 0.0
          %808 = vmatmul.mubr.f32.gmra.mrb[0].mxu0 %v618
          %v809 = vpop.f32.mrb[0].mxu0
          %v810 = vadd.f32 %v658, %v809
          %v811 = vpop.f32.mrb[0].mxu0
          %v812 = vadd.f32 %v662, %v811
          %813 = vmatprep.mubr.f32.mxu0 0.0
          %814 = vmatmul.mubr.f32.gmra.mrb[0].mxu0 %v619
          %v815 = vpop.f32.mrb[0].mxu0
          %v816 = vadd.f32 %v658, %v815
          %v817 = vpop.f32.mrb[0].mxu0
          %v818 = vadd.f32 %v662, %v817
          %819 = vmatprep.mubr.f32.mxu0 0.0
          %820 = vmatmul.mubr.f32.gmra.mrb[0].mxu0 %v620
          %v821 = vpop.f32.mrb[0].mxu0
          %v822 = vadd.f32 %v658, %v821
          %v823 = vpop.f32.mrb[0].mxu0
          %v824 = vadd.f32 %v662, %v823
          %825 = vdwg.mxu0
          %vm826 = vcmask 261120
          %827 = vst.msk [vmem:[#allocation2] sm:$0xff] %vm826, %v732
          %828 = vst.msk [vmem:[#allocation2 + $0x8] sm:$0xff] %vm826, %v738
          %829 = vst.msk [vmem:[#allocation2 + $0x10] sm:$0xff] %vm826, %v744
          %830 = vst.msk [vmem:[#allocation2 + $0x18] sm:$0xff] %vm826, %v750
          %831 = vst.msk [vmem:[#allocation2 + $0x20] sm:$0xff] %vm826, %v756
          %832 = vst.msk [vmem:[#allocation2 + $0x28] sm:$0xff] %vm826, %v762
          %833 = vst.msk [vmem:[#allocation2 + $0x30] sm:$0xff] %vm826, %v768
          %834 = vst.msk [vmem:[#allocation2 + $0x38] sm:$0xff] %vm826, %v774
          %835 = vst.msk [vmem:[#allocation2 + $0x40] sm:$0xff] %vm826, %v780
          %836 = vst.msk [vmem:[#allocation2 + $0x48] sm:$0xff] %vm826, %v786
          %837 = vst.msk [vmem:[#allocation2 + $0x50] sm:$0xff] %vm826, %v792
          %838 = vst.msk [vmem:[#allocation2 + $0x58] sm:$0xff] %vm826, %v798
          %839 = vst.msk [vmem:[#allocation2 + $0x60] sm:$0xff] %vm826, %v804
          %840 = vst.msk [vmem:[#allocation2 + $0x68] sm:$0xff] %vm826, %v810
          %841 = vst.msk [vmem:[#allocation2 + $0x70] sm:$0xff] %vm826, %v816
          %842 = vst.msk [vmem:[#allocation2 + $0x78] sm:$0xff] %vm826, %v822
          %843 = vst.msk [vmem:[#allocation3] sm:$0xff] %vm826, %v734
          %844 = vst.msk [vmem:[#allocation3 + $0x8] sm:$0xff] %vm826, %v740
          %845 = vst.msk [vmem:[#allocation3 + $0x10] sm:$0xff] %vm826, %v746
          %846 = vst.msk [vmem:[#allocation3 + $0x18] sm:$0xff] %vm826, %v752
          %847 = vst.msk [vmem:[#allocation3 + $0x20] sm:$0xff] %vm826, %v758
          %848 = vst.msk [vmem:[#allocation3 + $0x28] sm:$0xff] %vm826, %v764
          %849 = vst.msk [vmem:[#allocation3 + $0x30] sm:$0xff] %vm826, %v770
          %850 = vst.msk [vmem:[#allocation3 + $0x38] sm:$0xff] %vm826, %v776
          %851 = vst.msk [vmem:[#allocation3 + $0x40] sm:$0xff] %vm826, %v782
          %852 = vst.msk [vmem:[#allocation3 + $0x48] sm:$0xff] %vm826, %v788
          %853 = vst.msk [vmem:[#allocation3 + $0x50] sm:$0xff] %vm826, %v794
          %854 = vst.msk [vmem:[#allocation3 + $0x58] sm:$0xff] %vm826, %v800
          %855 = vst.msk [vmem:[#allocation3 + $0x60] sm:$0xff] %vm826, %v806
          %856 = vst.msk [vmem:[#allocation3 + $0x68] sm:$0xff] %vm826, %v812
          %857 = vst.msk [vmem:[#allocation3 + $0x70] sm:$0xff] %vm826, %v818
          %858 = vst.msk [vmem:[#allocation3 + $0x78] sm:$0xff] %vm826, %v824
          %875 = vrot.lane.b32.xlu0 %v732, 96
          %v876 = vpop.permute.xlu0 %875
          %877 = vrot.lane.b32.xlu0 %v738, 96
          %v878 = vpop.permute.xlu0 %877
          %879 = vrot.lane.b32.xlu0 %v744, 96
          %v880 = vpop.permute.xlu0 %879
          %881 = vrot.lane.b32.xlu0 %v750, 96
          %v882 = vpop.permute.xlu0 %881
          %883 = vrot.lane.b32.xlu0 %v756, 96
          %v884 = vpop.permute.xlu0 %883
          %885 = vrot.lane.b32.xlu0 %v762, 96
          %v886 = vpop.permute.xlu0 %885
          %887 = vrot.lane.b32.xlu0 %v768, 96
          %v888 = vpop.permute.xlu0 %887
          %889 = vrot.lane.b32.xlu0 %v774, 96
          %v890 = vpop.permute.xlu0 %889
          %891 = vrot.lane.b32.xlu0 %v780, 96
          %v892 = vpop.permute.xlu0 %891
          %893 = vrot.lane.b32.xlu0 %v786, 96
          %v894 = vpop.permute.xlu0 %893
          %895 = vrot.lane.b32.xlu0 %v792, 96
          %v896 = vpop.permute.xlu0 %895
          %897 = vrot.lane.b32.xlu0 %v798, 96
          %v898 = vpop.permute.xlu0 %897
          %899 = vrot.lane.b32.xlu0 %v804, 96
          %v900 = vpop.permute.xlu0 %899
          %901 = vrot.lane.b32.xlu0 %v810, 96
          %v902 = vpop.permute.xlu0 %901
          %903 = vrot.lane.b32.xlu0 %v816, 96
          %v904 = vpop.permute.xlu0 %903
          %905 = vrot.lane.b32.xlu0 %v822, 96
          %v906 = vpop.permute.xlu0 %905
          %s923 = scalar_lea.vmem [#allocation2], 128
          %924 = vst.msk [vmem:[%s923] sm:$0xff] %vm826, %v876
          %925 = vst.msk [vmem:[%s923 + $0x8] sm:$0xff] %vm826, %v878
          %926 = vst.msk [vmem:[%s923 + $0x10] sm:$0xff] %vm826, %v880
          %927 = vst.msk [vmem:[%s923 + $0x18] sm:$0xff] %vm826, %v882
          %928 = vst.msk [vmem:[%s923 + $0x20] sm:$0xff] %vm826, %v884
          %929 = vst.msk [vmem:[%s923 + $0x28] sm:$0xff] %vm826, %v886
          %930 = vst.msk [vmem:[%s923 + $0x30] sm:$0xff] %vm826, %v888
          %931 = vst.msk [vmem:[%s923 + $0x38] sm:$0xff] %vm826, %v890
          %932 = vst.msk [vmem:[%s923 + $0x40] sm:$0xff] %vm826, %v892
          %933 = vst.msk [vmem:[%s923 + $0x48] sm:$0xff] %vm826, %v894
          %934 = vst.msk [vmem:[%s923 + $0x50] sm:$0xff] %vm826, %v896
          %935 = vst.msk [vmem:[%s923 + $0x58] sm:$0xff] %vm826, %v898
          %936 = vst.msk [vmem:[%s923 + $0x60] sm:$0xff] %vm826, %v900
          %937 = vst.msk [vmem:[%s923 + $0x68] sm:$0xff] %vm826, %v902
          %938 = vst.msk [vmem:[%s923 + $0x70] sm:$0xff] %vm826, %v904
          %939 = vst.msk [vmem:[%s923 + $0x78] sm:$0xff] %vm826, %v906
          %956 = vrot.lane.b32.xlu0 %v734, 96
          %v957 = vpop.permute.xlu0 %956
          %958 = vrot.lane.b32.xlu0 %v740, 96
          %v959 = vpop.permute.xlu0 %958
          %960 = vrot.lane.b32.xlu0 %v746, 96
          %v961 = vpop.permute.xlu0 %960
          %962 = vrot.lane.b32.xlu0 %v752, 96
          %v963 = vpop.permute.xlu0 %962
          %964 = vrot.lane.b32.xlu0 %v758, 96
          %v965 = vpop.permute.xlu0 %964
          %966 = vrot.lane.b32.xlu0 %v764, 96
          %v967 = vpop.permute.xlu0 %966
          %968 = vrot.lane.b32.xlu0 %v770, 96
          %v969 = vpop.permute.xlu0 %968
          %970 = vrot.lane.b32.xlu0 %v776, 96
          %v971 = vpop.permute.xlu0 %970
          %972 = vrot.lane.b32.xlu0 %v782, 96
          %v973 = vpop.permute.xlu0 %972
          %974 = vrot.lane.b32.xlu0 %v788, 96
          %v975 = vpop.permute.xlu0 %974
          %976 = vrot.lane.b32.xlu0 %v794, 96
          %v977 = vpop.permute.xlu0 %976
          %978 = vrot.lane.b32.xlu0 %v800, 96
          %v979 = vpop.permute.xlu0 %978
          %980 = vrot.lane.b32.xlu0 %v806, 96
          %v981 = vpop.permute.xlu0 %980
          %982 = vrot.lane.b32.xlu0 %v812, 96
          %v983 = vpop.permute.xlu0 %982
          %984 = vrot.lane.b32.xlu0 %v818, 96
          %v985 = vpop.permute.xlu0 %984
          %986 = vrot.lane.b32.xlu0 %v824, 96
          %v987 = vpop.permute.xlu0 %986
          %s1004 = scalar_lea.vmem [#allocation3], 128
          %1005 = vst.msk [vmem:[%s1004] sm:$0xff] %vm826, %v957
          %1006 = vst.msk [vmem:[%s1004 + $0x8] sm:$0xff] %vm826, %v959
          %1007 = vst.msk [vmem:[%s1004 + $0x10] sm:$0xff] %vm826, %v961
          %1008 = vst.msk [vmem:[%s1004 + $0x18] sm:$0xff] %vm826, %v963
          %1009 = vst.msk [vmem:[%s1004 + $0x20] sm:$0xff] %vm826, %v965
          %1010 = vst.msk [vmem:[%s1004 + $0x28] sm:$0xff] %vm826, %v967
          %1011 = vst.msk [vmem:[%s1004 + $0x30] sm:$0xff] %vm826, %v969
          %1012 = vst.msk [vmem:[%s1004 + $0x38] sm:$0xff] %vm826, %v971
          %1013 = vst.msk [vmem:[%s1004 + $0x40] sm:$0xff] %vm826, %v973
          %1014 = vst.msk [vmem:[%s1004 + $0x48] sm:$0xff] %vm826, %v975
          %1015 = vst.msk [vmem:[%s1004 + $0x50] sm:$0xff] %vm826, %v977
          %1016 = vst.msk [vmem:[%s1004 + $0x58] sm:$0xff] %vm826, %v979
          %1017 = vst.msk [vmem:[%s1004 + $0x60] sm:$0xff] %vm826, %v981
          %1018 = vst.msk [vmem:[%s1004 + $0x68] sm:$0xff] %vm826, %v983
          %1019 = vst.msk [vmem:[%s1004 + $0x70] sm:$0xff] %vm826, %v985
          %1020 = vst.msk [vmem:[%s1004 + $0x78] sm:$0xff] %vm826, %v987
          %1021 = vrot.lane.b32.xlu0 %v732, 64
          %v1022 = vpop.permute.xlu0 %1021
          %1023 = vrot.lane.b32.xlu0 %v738, 64
          %v1024 = vpop.permute.xlu0 %1023
          %1025 = vrot.lane.b32.xlu0 %v744, 64
          %v1026 = vpop.permute.xlu0 %1025
          %1027 = vrot.lane.b32.xlu0 %v750, 64
          %v1028 = vpop.permute.xlu0 %1027
          %1029 = vrot.lane.b32.xlu0 %v756, 64
          %v1030 = vpop.permute.xlu0 %1029
          %1031 = vrot.lane.b32.xlu0 %v762, 64
          %v1032 = vpop.permute.xlu0 %1031
          %1033 = vrot.lane.b32.xlu0 %v768, 64
          %v1034 = vpop.permute.xlu0 %1033
          %1035 = vrot.lane.b32.xlu0 %v774, 64
          %v1036 = vpop.permute.xlu0 %1035
          %1037 = vrot.lane.b32.xlu0 %v780, 64
          %v1038 = vpop.permute.xlu0 %1037
          %1039 = vrot.lane.b32.xlu0 %v786, 64
          %v1040 = vpop.permute.xlu0 %1039
          %1041 = vrot.lane.b32.xlu0 %v792, 64
          %v1042 = vpop.permute.xlu0 %1041
          %1043 = vrot.lane.b32.xlu0 %v798, 64
          %v1044 = vpop.permute.xlu0 %1043
          %1045 = vrot.lane.b32.xlu0 %v804, 64
          %v1046 = vpop.permute.xlu0 %1045
          %1047 = vrot.lane.b32.xlu0 %v810, 64
          %v1048 = vpop.permute.xlu0 %1047
          %1049 = vrot.lane.b32.xlu0 %v816, 64
          %v1050 = vpop.permute.xlu0 %1049
          %1051 = vrot.lane.b32.xlu0 %v822, 64
          %v1052 = vpop.permute.xlu0 %1051
          %s1069 = scalar_lea.vmem [#allocation2], 256
          %1070 = vst.msk [vmem:[%s1069] sm:$0xff] %vm826, %v1022
          %1071 = vst.msk [vmem:[%s1069 + $0x8] sm:$0xff] %vm826, %v1024
          %1072 = vst.msk [vmem:[%s1069 + $0x10] sm:$0xff] %vm826, %v1026
          %1073 = vst.msk [vmem:[%s1069 + $0x18] sm:$0xff] %vm826, %v1028
          %1074 = vst.msk [vmem:[%s1069 + $0x20] sm:$0xff] %vm826, %v1030
          %1075 = vst.msk [vmem:[%s1069 + $0x28] sm:$0xff] %vm826, %v1032
          %1076 = vst.msk [vmem:[%s1069 + $0x30] sm:$0xff] %vm826, %v1034
          %1077 = vst.msk [vmem:[%s1069 + $0x38] sm:$0xff] %vm826, %v1036
          %1078 = vst.msk [vmem:[%s1069 + $0x40] sm:$0xff] %vm826, %v1038
          %1079 = vst.msk [vmem:[%s1069 + $0x48] sm:$0xff] %vm826, %v1040
          %1080 = vst.msk [vmem:[%s1069 + $0x50] sm:$0xff] %vm826, %v1042
          %1081 = vst.msk [vmem:[%s1069 + $0x58] sm:$0xff] %vm826, %v1044
          %1082 = vst.msk [vmem:[%s1069 + $0x60] sm:$0xff] %vm826, %v1046
          %1083 = vst.msk [vmem:[%s1069 + $0x68] sm:$0xff] %vm826, %v1048
          %1084 = vst.msk [vmem:[%s1069 + $0x70] sm:$0xff] %vm826, %v1050
          %1085 = vst.msk [vmem:[%s1069 + $0x78] sm:$0xff] %vm826, %v1052
          %1086 = vrot.lane.b32.xlu0 %v734, 64
          %v1087 = vpop.permute.xlu0 %1086
          %1088 = vrot.lane.b32.xlu0 %v740, 64
          %v1089 = vpop.permute.xlu0 %1088
          %1090 = vrot.lane.b32.xlu0 %v746, 64
          %v1091 = vpop.permute.xlu0 %1090
          %1092 = vrot.lane.b32.xlu0 %v752, 64
          %v1093 = vpop.permute.xlu0 %1092
          %1094 = vrot.lane.b32.xlu0 %v758, 64
          %v1095 = vpop.permute.xlu0 %1094
          %1096 = vrot.lane.b32.xlu0 %v764, 64
          %v1097 = vpop.permute.xlu0 %1096
          %1098 = vrot.lane.b32.xlu0 %v770, 64
          %v1099 = vpop.permute.xlu0 %1098
          %1100 = vrot.lane.b32.xlu0 %v776, 64
          %v1101 = vpop.permute.xlu0 %1100
          %1102 = vrot.lane.b32.xlu0 %v782, 64
          %v1103 = vpop.permute.xlu0 %1102
          %1104 = vrot.lane.b32.xlu0 %v788, 64
          %v1105 = vpop.permute.xlu0 %1104
          %1106 = vrot.lane.b32.xlu0 %v794, 64
          %v1107 = vpop.permute.xlu0 %1106
          %1108 = vrot.lane.b32.xlu0 %v800, 64
          %v1109 = vpop.permute.xlu0 %1108
          %1110 = vrot.lane.b32.xlu0 %v806, 64
          %v1111 = vpop.permute.xlu0 %1110
          %1112 = vrot.lane.b32.xlu0 %v812, 64
          %v1113 = vpop.permute.xlu0 %1112
          %1114 = vrot.lane.b32.xlu0 %v818, 64
          %v1115 = vpop.permute.xlu0 %1114
          %1116 = vrot.lane.b32.xlu0 %v824, 64
          %v1117 = vpop.permute.xlu0 %1116
          %s1134 = scalar_lea.vmem [#allocation3], 256
          %1135 = vst.msk [vmem:[%s1134] sm:$0xff] %vm826, %v1087
          %1136 = vst.msk [vmem:[%s1134 + $0x8] sm:$0xff] %vm826, %v1089
          %1137 = vst.msk [vmem:[%s1134 + $0x10] sm:$0xff] %vm826, %v1091
          %1138 = vst.msk [vmem:[%s1134 + $0x18] sm:$0xff] %vm826, %v1093
          %1139 = vst.msk [vmem:[%s1134 + $0x20] sm:$0xff] %vm826, %v1095
          %1140 = vst.msk [vmem:[%s1134 + $0x28] sm:$0xff] %vm826, %v1097
          %1141 = vst.msk [vmem:[%s1134 + $0x30] sm:$0xff] %vm826, %v1099
          %1142 = vst.msk [vmem:[%s1134 + $0x38] sm:$0xff] %vm826, %v1101
          %1143 = vst.msk [vmem:[%s1134 + $0x40] sm:$0xff] %vm826, %v1103
          %1144 = vst.msk [vmem:[%s1134 + $0x48] sm:$0xff] %vm826, %v1105
          %1145 = vst.msk [vmem:[%s1134 + $0x50] sm:$0xff] %vm826, %v1107
          %1146 = vst.msk [vmem:[%s1134 + $0x58] sm:$0xff] %vm826, %v1109
          %1147 = vst.msk [vmem:[%s1134 + $0x60] sm:$0xff] %vm826, %v1111
          %1148 = vst.msk [vmem:[%s1134 + $0x68] sm:$0xff] %vm826, %v1113
          %1149 = vst.msk [vmem:[%s1134 + $0x70] sm:$0xff] %vm826, %v1115
          %1150 = vst.msk [vmem:[%s1134 + $0x78] sm:$0xff] %vm826, %v1117
          %1151 = vrot.lane.b32.xlu0 %v732, 32
          %v1152 = vpop.permute.xlu0 %1151
          %1153 = vrot.lane.b32.xlu0 %v738, 32
          %v1154 = vpop.permute.xlu0 %1153
          %1155 = vrot.lane.b32.xlu0 %v744, 32
          %v1156 = vpop.permute.xlu0 %1155
          %1157 = vrot.lane.b32.xlu0 %v750, 32
          %v1158 = vpop.permute.xlu0 %1157
          %1159 = vrot.lane.b32.xlu0 %v756, 32
          %v1160 = vpop.permute.xlu0 %1159
          %1161 = vrot.lane.b32.xlu0 %v762, 32
          %v1162 = vpop.permute.xlu0 %1161
          %1163 = vrot.lane.b32.xlu0 %v768, 32
          %v1164 = vpop.permute.xlu0 %1163
          %1165 = vrot.lane.b32.xlu0 %v774, 32
          %v1166 = vpop.permute.xlu0 %1165
          %1167 = vrot.lane.b32.xlu0 %v780, 32
          %v1168 = vpop.permute.xlu0 %1167
          %1169 = vrot.lane.b32.xlu0 %v786, 32
          %v1170 = vpop.permute.xlu0 %1169
          %1171 = vrot.lane.b32.xlu0 %v792, 32
          %v1172 = vpop.permute.xlu0 %1171
          %1173 = vrot.lane.b32.xlu0 %v798, 32
          %v1174 = vpop.permute.xlu0 %1173
          %1175 = vrot.lane.b32.xlu0 %v804, 32
          %v1176 = vpop.permute.xlu0 %1175
          %1177 = vrot.lane.b32.xlu0 %v810, 32
          %v1178 = vpop.permute.xlu0 %1177
          %1179 = vrot.lane.b32.xlu0 %v816, 32
          %v1180 = vpop.permute.xlu0 %1179
          %1181 = vrot.lane.b32.xlu0 %v822, 32
          %v1182 = vpop.permute.xlu0 %1181
          %s1199 = scalar_lea.vmem [#allocation2], 384
          %1200 = vst.msk [vmem:[%s1199] sm:$0xff] %vm826, %v1152
          %1201 = vst.msk [vmem:[%s1199 + $0x8] sm:$0xff] %vm826, %v1154
          %1202 = vst.msk [vmem:[%s1199 + $0x10] sm:$0xff] %vm826, %v1156
          %1203 = vst.msk [vmem:[%s1199 + $0x18] sm:$0xff] %vm826, %v1158
          %1204 = vst.msk [vmem:[%s1199 + $0x20] sm:$0xff] %vm826, %v1160
          %1205 = vst.msk [vmem:[%s1199 + $0x28] sm:$0xff] %vm826, %v1162
          %1206 = vst.msk [vmem:[%s1199 + $0x30] sm:$0xff] %vm826, %v1164
          %1207 = vst.msk [vmem:[%s1199 + $0x38] sm:$0xff] %vm826, %v1166
          %1208 = vst.msk [vmem:[%s1199 + $0x40] sm:$0xff] %vm826, %v1168
          %1209 = vst.msk [vmem:[%s1199 + $0x48] sm:$0xff] %vm826, %v1170
          %1210 = vst.msk [vmem:[%s1199 + $0x50] sm:$0xff] %vm826, %v1172
          %1211 = vst.msk [vmem:[%s1199 + $0x58] sm:$0xff] %vm826, %v1174
          %1212 = vst.msk [vmem:[%s1199 + $0x60] sm:$0xff] %vm826, %v1176
          %1213 = vst.msk [vmem:[%s1199 + $0x68] sm:$0xff] %vm826, %v1178
          %1214 = vst.msk [vmem:[%s1199 + $0x70] sm:$0xff] %vm826, %v1180
          %1215 = vst.msk [vmem:[%s1199 + $0x78] sm:$0xff] %vm826, %v1182
          %1216 = vrot.lane.b32.xlu0 %v734, 32
          %v1217 = vpop.permute.xlu0 %1216
          %1218 = vrot.lane.b32.xlu0 %v740, 32
          %v1219 = vpop.permute.xlu0 %1218
          %1220 = vrot.lane.b32.xlu0 %v746, 32
          %v1221 = vpop.permute.xlu0 %1220
          %1222 = vrot.lane.b32.xlu0 %v752, 32
          %v1223 = vpop.permute.xlu0 %1222
          %1224 = vrot.lane.b32.xlu0 %v758, 32
          %v1225 = vpop.permute.xlu0 %1224
          %1226 = vrot.lane.b32.xlu0 %v764, 32
          %v1227 = vpop.permute.xlu0 %1226
          %1228 = vrot.lane.b32.xlu0 %v770, 32
          %v1229 = vpop.permute.xlu0 %1228
          %1230 = vrot.lane.b32.xlu0 %v776, 32
          %v1231 = vpop.permute.xlu0 %1230
          %1232 = vrot.lane.b32.xlu0 %v782, 32
          %v1233 = vpop.permute.xlu0 %1232
          %1234 = vrot.lane.b32.xlu0 %v788, 32
          %v1235 = vpop.permute.xlu0 %1234
          %1236 = vrot.lane.b32.xlu0 %v794, 32
          %v1237 = vpop.permute.xlu0 %1236
          %1238 = vrot.lane.b32.xlu0 %v800, 32
          %v1239 = vpop.permute.xlu0 %1238
          %1240 = vrot.lane.b32.xlu0 %v806, 32
          %v1241 = vpop.permute.xlu0 %1240
          %1242 = vrot.lane.b32.xlu0 %v812, 32
          %v1243 = vpop.permute.xlu0 %1242
          %1244 = vrot.lane.b32.xlu0 %v818, 32
          %v1245 = vpop.permute.xlu0 %1244
          %1246 = vrot.lane.b32.xlu0 %v824, 32
          %v1247 = vpop.permute.xlu0 %1246
          %s1264 = scalar_lea.vmem [#allocation3], 384
          %1265 = vst.msk [vmem:[%s1264] sm:$0xff] %vm826, %v1217
          %1266 = vst.msk [vmem:[%s1264 + $0x8] sm:$0xff] %vm826, %v1219
          %1267 = vst.msk [vmem:[%s1264 + $0x10] sm:$0xff] %vm826, %v1221
          %1268 = vst.msk [vmem:[%s1264 + $0x18] sm:$0xff] %vm826, %v1223
          %1269 = vst.msk [vmem:[%s1264 + $0x20] sm:$0xff] %vm826, %v1225
          %1270 = vst.msk [vmem:[%s1264 + $0x28] sm:$0xff] %vm826, %v1227
          %1271 = vst.msk [vmem:[%s1264 + $0x30] sm:$0xff] %vm826, %v1229
          %1272 = vst.msk [vmem:[%s1264 + $0x38] sm:$0xff] %vm826, %v1231
          %1273 = vst.msk [vmem:[%s1264 + $0x40] sm:$0xff] %vm826, %v1233
          %1274 = vst.msk [vmem:[%s1264 + $0x48] sm:$0xff] %vm826, %v1235
          %1275 = vst.msk [vmem:[%s1264 + $0x50] sm:$0xff] %vm826, %v1237
          %1276 = vst.msk [vmem:[%s1264 + $0x58] sm:$0xff] %vm826, %v1239
          %1277 = vst.msk [vmem:[%s1264 + $0x60] sm:$0xff] %vm826, %v1241
          %1278 = vst.msk [vmem:[%s1264 + $0x68] sm:$0xff] %vm826, %v1243
          %1279 = vst.msk [vmem:[%s1264 + $0x70] sm:$0xff] %vm826, %v1245
          %1280 = vst.msk [vmem:[%s1264 + $0x78] sm:$0xff] %vm826, %v1247
        $region108: #{tpu_custom_call.1} parent=79 // pred_fallthru
          _
        %s1281 = smul.u32 %s40, 128
        %s1282 = scalar_lea.vmem %s533, %s1281 [#allocation4]
        %v1283 = vld [vmem:[%s1282] sm:$0xff]
        %v1284 = vld [vmem:[%s1282 + $0x8] sm:$0xff]
        %v1285 = vld [vmem:[%s1282 + $0x10] sm:$0xff]
        %v1286 = vld [vmem:[%s1282 + $0x18] sm:$0xff]
        %v1287 = vld [vmem:[%s1282 + $0x20] sm:$0xff]
        %v1288 = vld [vmem:[%s1282 + $0x28] sm:$0xff]
        %v1289 = vld [vmem:[%s1282 + $0x30] sm:$0xff]
        %v1290 = vld [vmem:[%s1282 + $0x38] sm:$0xff]
        %v1291 = vld [vmem:[%s1282 + $0x40] sm:$0xff]
        %v1292 = vld [vmem:[%s1282 + $0x48] sm:$0xff]
        %v1293 = vld [vmem:[%s1282 + $0x50] sm:$0xff]
        %v1294 = vld [vmem:[%s1282 + $0x58] sm:$0xff]
        %v1295 = vld [vmem:[%s1282 + $0x60] sm:$0xff]
        %v1296 = vld [vmem:[%s1282 + $0x68] sm:$0xff]
        %v1297 = vld [vmem:[%s1282 + $0x70] sm:$0xff]
        %v1298 = vld [vmem:[%s1282 + $0x78] sm:$0xff]
        %v1299 = vld [vmem:[#allocation7] sm:$0xff]
        %v1300 = vld [vmem:[#allocation7 + $0x8] sm:$0xff]
        %v1301 = vld [vmem:[#allocation7 + $0x10] sm:$0xff]
        %v1302 = vld [vmem:[#allocation7 + $0x18] sm:$0xff]
        %v1303 = vld [vmem:[#allocation7 + $0x20] sm:$0xff]
        %v1304 = vld [vmem:[#allocation7 + $0x28] sm:$0xff]
        %v1305 = vld [vmem:[#allocation7 + $0x30] sm:$0xff]
        %v1306 = vld [vmem:[#allocation7 + $0x38] sm:$0xff]
        %v1307 = vld [vmem:[#allocation7 + $0x40] sm:$0xff]
        %v1308 = vld [vmem:[#allocation7 + $0x48] sm:$0xff]
        %v1309 = vld [vmem:[#allocation7 + $0x50] sm:$0xff]
        %v1310 = vld [vmem:[#allocation7 + $0x58] sm:$0xff]
        %v1311 = vld [vmem:[#allocation7 + $0x60] sm:$0xff]
        %v1312 = vld [vmem:[#allocation7 + $0x68] sm:$0xff]
        %v1313 = vld [vmem:[#allocation7 + $0x70] sm:$0xff]
        %v1314 = vld [vmem:[#allocation7 + $0x78] sm:$0xff]
        %v1315 = vld [vmem:[%s2] sm:$0x1]
        %v1317 = vlaneseq
        %v1318 = vshrl.u32 %v1317, 7
        %v1319 = vsub.s32 0, %v1318
        %v1320 = vrot.slane %v1315, %v1319
        %1322 = vmatprep.subr.mxu0 0.0
        %1323 = vmatpush1.msra.mxu0 %v1299
        %1324 = vmatprep.subr.mxu0 0.0
        %1325 = vmatpush1.msra.mxu0 %v1300
        %1326 = vmatprep.subr.mxu0 0.0
        %1327 = vmatpush1.msra.mxu0 %v1301
        %1328 = vmatprep.subr.mxu0 0.0
        %1329 = vmatpush1.msra.mxu0 %v1302
        %1330 = vmatprep.subr.mxu0 0.0
        %1331 = vmatpush1.msra.mxu0 %v1303
        %1332 = vmatprep.subr.mxu0 0.0
        %1333 = vmatpush1.msra.mxu0 %v1304
        %1334 = vmatprep.subr.mxu0 0.0
        %1335 = vmatpush1.msra.mxu0 %v1305
        %1336 = vmatprep.subr.mxu0 0.0
        %1337 = vmatpush1.msra.mxu0 %v1306
        %1338 = vmatprep.subr.mxu0 0.0
        %1339 = vmatpush1.msra.mxu0 %v1307
        %1340 = vmatprep.subr.mxu0 0.0
        %1341 = vmatpush1.msra.mxu0 %v1308
        %1342 = vmatprep.subr.mxu0 0.0
        %1343 = vmatpush1.msra.mxu0 %v1309
        %1344 = vmatprep.subr.mxu0 0.0
        %1345 = vmatpush1.msra.mxu0 %v1310
        %1346 = vmatprep.subr.mxu0 0.0
        %1347 = vmatpush1.msra.mxu0 %v1311
        %1348 = vmatprep.subr.mxu0 0.0
        %1349 = vmatpush1.msra.mxu0 %v1312
        %1350 = vmatprep.subr.mxu0 0.0
        %1351 = vmatpush1.msra.mxu0 %v1313
        %1352 = vmatprep.subr.mxu0 0.0
        %1353 = vmatpush1.msra.mxu0 %v1314
        %1354 = vmatprep.subr.mxu0 0.0
        %1355 = vmatpush1.msra.mxu0 0.0
        %1356 = vmatprep.subr.mxu0 0.0
        %1357 = vmatpush1.msra.mxu0 0.0
        %1358 = vmatprep.subr.mxu0 0.0
        %1359 = vmatpush1.msra.mxu0 0.0
        %1360 = vmatprep.subr.mxu0 0.0
        %1361 = vmatpush1.msra.mxu0 0.0
        %1362 = vmatprep.subr.mxu0 0.0
        %1363 = vmatpush1.msra.mxu0 0.0
        %1364 = vmatprep.subr.mxu0 0.0
        %1365 = vmatpush1.msra.mxu0 0.0
        %1366 = vmatprep.subr.mxu0 0.0
        %1367 = vmatpush1.msra.mxu0 0.0
        %1368 = vmatprep.subr.mxu0 0.0
        %1369 = vmatpush1.msra.mxu0 0.0
        %1370 = vmatprep.subr.mxu0 0.0
        %1371 = vmatpush1.msra.mxu0 0.0
        %1372 = vmatprep.subr.mxu0 0.0
        %1373 = vmatpush1.msra.mxu0 0.0
        %1374 = vmatprep.subr.mxu0 0.0
        %1375 = vmatpush1.msra.mxu0 0.0
        %1376 = vmatprep.subr.mxu0 0.0
        %1377 = vmatpush1.msra.mxu0 0.0
        %1378 = vmatprep.subr.mxu0 0.0
        %1379 = vmatpush1.msra.mxu0 0.0
        %1380 = vmatprep.subr.mxu0 0.0
        %1381 = vmatpush1.msra.mxu0 0.0
        %1382 = vmatprep.subr.mxu0 0.0
        %1383 = vmatpush1.msra.mxu0 0.0
        %1384 = vmatprep.subr.mxu0 0.0
        %1385 = vmatpush1.msra.mxu0 0.0
        %1386 = vmatprep.mubr.f32.mxu0 0.0
        %1387 = vmatmul.mubr.f32.gmra.mrb[0].mxu0 %v1283
        %v1388 = vpop.f32.mrb[0].mxu0
        %v1389 = vadd.f32 %v1320, %v1388
        %v1390 = vpop.f32.mrb[0].mxu0
        %1391 = vmatprep.mubr.f32.mxu0 0.0
        %1392 = vmatmul.mubr.f32.gmra.mrb[0].mxu0 %v1284
        %v1393 = vpop.f32.mrb[0].mxu0
        %v1394 = vadd.f32 %v1320, %v1393
        %v1395 = vpop.f32.mrb[0].mxu0
        %1396 = vmatprep.mubr.f32.mxu0 0.0
        %1397 = vmatmul.mubr.f32.gmra.mrb[0].mxu0 %v1285
        %v1398 = vpop.f32.mrb[0].mxu0
        %v1399 = vadd.f32 %v1320, %v1398
        %v1400 = vpop.f32.mrb[0].mxu0
        %1401 = vmatprep.mubr.f32.mxu0 0.0
        %1402 = vmatmul.mubr.f32.gmra.mrb[0].mxu0 %v1286
        %v1403 = vpop.f32.mrb[0].mxu0
        %v1404 = vadd.f32 %v1320, %v1403
        %v1405 = vpop.f32.mrb[0].mxu0
        %1406 = vmatprep.mubr.f32.mxu0 0.0
        %1407 = vmatmul.mubr.f32.gmra.mrb[0].mxu0 %v1287
        %v1408 = vpop.f32.mrb[0].mxu0
        %v1409 = vadd.f32 %v1320, %v1408
        %v1410 = vpop.f32.mrb[0].mxu0
        %1411 = vmatprep.mubr.f32.mxu0 0.0
        %1412 = vmatmul.mubr.f32.gmra.mrb[0].mxu0 %v1288
        %v1413 = vpop.f32.mrb[0].mxu0
        %v1414 = vadd.f32 %v1320, %v1413
        %v1415 = vpop.f32.mrb[0].mxu0
        %1416 = vmatprep.mubr.f32.mxu0 0.0
        %1417 = vmatmul.mubr.f32.gmra.mrb[0].mxu0 %v1289
        %v1418 = vpop.f32.mrb[0].mxu0
        %v1419 = vadd.f32 %v1320, %v1418
        %v1420 = vpop.f32.mrb[0].mxu0
        %1421 = vmatprep.mubr.f32.mxu0 0.0
        %1422 = vmatmul.mubr.f32.gmra.mrb[0].mxu0 %v1290
        %v1423 = vpop.f32.mrb[0].mxu0
        %v1424 = vadd.f32 %v1320, %v1423
        %v1425 = vpop.f32.mrb[0].mxu0
        %1426 = vmatprep.mubr.f32.mxu0 0.0
        %1427 = vmatmul.mubr.f32.gmra.mrb[0].mxu0 %v1291
        %v1428 = vpop.f32.mrb[0].mxu0
        %v1429 = vadd.f32 %v1320, %v1428
        %v1430 = vpop.f32.mrb[0].mxu0
        %1431 = vmatprep.mubr.f32.mxu0 0.0
        %1432 = vmatmul.mubr.f32.gmra.mrb[0].mxu0 %v1292
        %v1433 = vpop.f32.mrb[0].mxu0
        %v1434 = vadd.f32 %v1320, %v1433
        %v1435 = vpop.f32.mrb[0].mxu0
        %1436 = vmatprep.mubr.f32.mxu0 0.0
        %1437 = vmatmul.mubr.f32.gmra.mrb[0].mxu0 %v1293
        %v1438 = vpop.f32.mrb[0].mxu0
        %v1439 = vadd.f32 %v1320, %v1438
        %v1440 = vpop.f32.mrb[0].mxu0
        %1441 = vmatprep.mubr.f32.mxu0 0.0
        %1442 = vmatmul.mubr.f32.gmra.mrb[0].mxu0 %v1294
        %v1443 = vpop.f32.mrb[0].mxu0
        %v1444 = vadd.f32 %v1320, %v1443
        %v1445 = vpop.f32.mrb[0].mxu0
        %1446 = vmatprep.mubr.f32.mxu0 0.0
        %1447 = vmatmul.mubr.f32.gmra.mrb[0].mxu0 %v1295
        %v1448 = vpop.f32.mrb[0].mxu0
        %v1449 = vadd.f32 %v1320, %v1448
        %v1450 = vpop.f32.mrb[0].mxu0
        %1451 = vmatprep.mubr.f32.mxu0 0.0
        %1452 = vmatmul.mubr.f32.gmra.mrb[0].mxu0 %v1296
        %v1453 = vpop.f32.mrb[0].mxu0
        %v1454 = vadd.f32 %v1320, %v1453
        %v1455 = vpop.f32.mrb[0].mxu0
        %1456 = vmatprep.mubr.f32.mxu0 0.0
        %1457 = vmatmul.mubr.f32.gmra.mrb[0].mxu0 %v1297
        %v1458 = vpop.f32.mrb[0].mxu0
        %v1459 = vadd.f32 %v1320, %v1458
        %v1460 = vpop.f32.mrb[0].mxu0
        %1461 = vmatprep.mubr.f32.mxu0 0.0
        %1462 = vmatmul.mubr.f32.gmra.mrb[0].mxu0 %v1298
        %v1463 = vpop.f32.mrb[0].mxu0
        %v1464 = vadd.f32 %v1320, %v1463
        %v1465 = vpop.f32.mrb[0].mxu0
        %1466 = vdwg.mxu0
        %v1467 = vmul.f32 %v1389, 0.17677669
        %v1468 = vmul.f32 %v1394, 0.17677669
        %v1469 = vmul.f32 %v1399, 0.17677669
        %v1470 = vmul.f32 %v1404, 0.17677669
        %v1471 = vmul.f32 %v1409, 0.17677669
        %v1472 = vmul.f32 %v1414, 0.17677669
        %v1473 = vmul.f32 %v1419, 0.17677669
        %v1474 = vmul.f32 %v1424, 0.17677669
        %v1475 = vmul.f32 %v1429, 0.17677669
        %v1476 = vmul.f32 %v1434, 0.17677669
        %v1477 = vmul.f32 %v1439, 0.17677669
        %v1478 = vmul.f32 %v1444, 0.17677669
        %v1479 = vmul.f32 %v1449, 0.17677669
        %v1480 = vmul.f32 %v1454, 0.17677669
        %v1481 = vmul.f32 %v1459, 0.17677669
        %v1482 = vmul.f32 %v1464, 0.17677669
        %1499 = vrot.lane.b32.xlu0 %v1467, 96
        %v1500 = vpop.permute.xlu0 %1499
        %1501 = vrot.lane.b32.xlu0 %v1468, 96
        %v1502 = vpop.permute.xlu0 %1501
        %1503 = vrot.lane.b32.xlu0 %v1469, 96
        %v1504 = vpop.permute.xlu0 %1503
        %1505 = vrot.lane.b32.xlu0 %v1470, 96
        %v1506 = vpop.permute.xlu0 %1505
        %1507 = vrot.lane.b32.xlu0 %v1471, 96
        %v1508 = vpop.permute.xlu0 %1507
        %1509 = vrot.lane.b32.xlu0 %v1472, 96
        %v1510 = vpop.permute.xlu0 %1509
        %1511 = vrot.lane.b32.xlu0 %v1473, 96
        %v1512 = vpop.permute.xlu0 %1511
        %1513 = vrot.lane.b32.xlu0 %v1474, 96
        %v1514 = vpop.permute.xlu0 %1513
        %1515 = vrot.lane.b32.xlu0 %v1475, 96
        %v1516 = vpop.permute.xlu0 %1515
        %1517 = vrot.lane.b32.xlu0 %v1476, 96
        %v1518 = vpop.permute.xlu0 %1517
        %1519 = vrot.lane.b32.xlu0 %v1477, 96
        %v1520 = vpop.permute.xlu0 %1519
        %1521 = vrot.lane.b32.xlu0 %v1478, 96
        %v1522 = vpop.permute.xlu0 %1521
        %1523 = vrot.lane.b32.xlu0 %v1479, 96
        %v1524 = vpop.permute.xlu0 %1523
        %1525 = vrot.lane.b32.xlu0 %v1480, 96
        %v1526 = vpop.permute.xlu0 %1525
        %1527 = vrot.lane.b32.xlu0 %v1481, 96
        %v1528 = vpop.permute.xlu0 %1527
        %1529 = vrot.lane.b32.xlu0 %v1482, 96
        %v1530 = vpop.permute.xlu0 %1529
        %1531 = vrot.lane.b32.xlu0 %v1467, 64
        %v1532 = vpop.permute.xlu0 %1531
        %1533 = vrot.lane.b32.xlu0 %v1468, 64
        %v1534 = vpop.permute.xlu0 %1533
        %1535 = vrot.lane.b32.xlu0 %v1469, 64
        %v1536 = vpop.permute.xlu0 %1535
        %1537 = vrot.lane.b32.xlu0 %v1470, 64
        %v1538 = vpop.permute.xlu0 %1537
        %1539 = vrot.lane.b32.xlu0 %v1471, 64
        %v1540 = vpop.permute.xlu0 %1539
        %1541 = vrot.lane.b32.xlu0 %v1472, 64
        %v1542 = vpop.permute.xlu0 %1541
        %1543 = vrot.lane.b32.xlu0 %v1473, 64
        %v1544 = vpop.permute.xlu0 %1543
        %1545 = vrot.lane.b32.xlu0 %v1474, 64
        %v1546 = vpop.permute.xlu0 %1545
        %1547 = vrot.lane.b32.xlu0 %v1475, 64
        %v1548 = vpop.permute.xlu0 %1547
        %1549 = vrot.lane.b32.xlu0 %v1476, 64
        %v1550 = vpop.permute.xlu0 %1549
        %1551 = vrot.lane.b32.xlu0 %v1477, 64
        %v1552 = vpop.permute.xlu0 %1551
        %1553 = vrot.lane.b32.xlu0 %v1478, 64
        %v1554 = vpop.permute.xlu0 %1553
        %1555 = vrot.lane.b32.xlu0 %v1479, 64
        %v1556 = vpop.permute.xlu0 %1555
        %1557 = vrot.lane.b32.xlu0 %v1480, 64
        %v1558 = vpop.permute.xlu0 %1557
        %1559 = vrot.lane.b32.xlu0 %v1481, 64
        %v1560 = vpop.permute.xlu0 %1559
        %1561 = vrot.lane.b32.xlu0 %v1482, 64
        %v1562 = vpop.permute.xlu0 %1561
        %1563 = vrot.lane.b32.xlu0 %v1467, 32
        %v1564 = vpop.permute.xlu0 %1563
        %1565 = vrot.lane.b32.xlu0 %v1468, 32
        %v1566 = vpop.permute.xlu0 %1565
        %1567 = vrot.lane.b32.xlu0 %v1469, 32
        %v1568 = vpop.permute.xlu0 %1567
        %1569 = vrot.lane.b32.xlu0 %v1470, 32
        %v1570 = vpop.permute.xlu0 %1569
        %1571 = vrot.lane.b32.xlu0 %v1471, 32
        %v1572 = vpop.permute.xlu0 %1571
        %1573 = vrot.lane.b32.xlu0 %v1472, 32
        %v1574 = vpop.permute.xlu0 %1573
        %1575 = vrot.lane.b32.xlu0 %v1473, 32
        %v1576 = vpop.permute.xlu0 %1575
        %1577 = vrot.lane.b32.xlu0 %v1474, 32
        %v1578 = vpop.permute.xlu0 %1577
        %1579 = vrot.lane.b32.xlu0 %v1475, 32
        %v1580 = vpop.permute.xlu0 %1579
        %1581 = vrot.lane.b32.xlu0 %v1476, 32
        %v1582 = vpop.permute.xlu0 %1581
        %1583 = vrot.lane.b32.xlu0 %v1477, 32
        %v1584 = vpop.permute.xlu0 %1583
        %1585 = vrot.lane.b32.xlu0 %v1478, 32
        %v1586 = vpop.permute.xlu0 %1585
        %1587 = vrot.lane.b32.xlu0 %v1479, 32
        %v1588 = vpop.permute.xlu0 %1587
        %1589 = vrot.lane.b32.xlu0 %v1480, 32
        %v1590 = vpop.permute.xlu0 %1589
        %1591 = vrot.lane.b32.xlu0 %v1481, 32
        %v1592 = vpop.permute.xlu0 %1591
        %1593 = vrot.lane.b32.xlu0 %v1482, 32
        %v1594 = vpop.permute.xlu0 %1593
        %v1595 = vld [vmem:[#allocation2] sm:$0xff]
        %v1596 = vld [vmem:[#allocation2 + $0x8] sm:$0xff]
        %v1597 = vld [vmem:[#allocation2 + $0x10] sm:$0xff]
        %v1598 = vld [vmem:[#allocation2 + $0x18] sm:$0xff]
        %v1599 = vld [vmem:[#allocation2 + $0x20] sm:$0xff]
        %v1600 = vld [vmem:[#allocation2 + $0x28] sm:$0xff]
        %v1601 = vld [vmem:[#allocation2 + $0x30] sm:$0xff]
        %v1602 = vld [vmem:[#allocation2 + $0x38] sm:$0xff]
        %v1603 = vld [vmem:[#allocation2 + $0x40] sm:$0xff]
        %v1604 = vld [vmem:[#allocation2 + $0x48] sm:$0xff]
        %v1605 = vld [vmem:[#allocation2 + $0x50] sm:$0xff]
        %v1606 = vld [vmem:[#allocation2 + $0x58] sm:$0xff]
        %v1607 = vld [vmem:[#allocation2 + $0x60] sm:$0xff]
        %v1608 = vld [vmem:[#allocation2 + $0x68] sm:$0xff]
        %v1609 = vld [vmem:[#allocation2 + $0x70] sm:$0xff]
        %v1610 = vld [vmem:[#allocation2 + $0x78] sm:$0xff]
        %v1611 = vld [vmem:[#allocation2 + $0x80] sm:$0xff]
        %v1612 = vld [vmem:[#allocation2 + $0x88] sm:$0xff]
        %v1613 = vld [vmem:[#allocation2 + $0x90] sm:$0xff]
        %v1614 = vld [vmem:[#allocation2 + $0x98] sm:$0xff]
        %v1615 = vld [vmem:[#allocation2 + $0xa0] sm:$0xff]
        %v1616 = vld [vmem:[#allocation2 + $0xa8] sm:$0xff]
        %v1617 = vld [vmem:[#allocation2 + $0xb0] sm:$0xff]
        %v1618 = vld [vmem:[#allocation2 + $0xb8] sm:$0xff]
        %v1619 = vld [vmem:[#allocation2 + $0xc0] sm:$0xff]
        %v1620 = vld [vmem:[#allocation2 + $0xc8] sm:$0xff]
        %v1621 = vld [vmem:[#allocation2 + $0xd0] sm:$0xff]
        %v1622 = vld [vmem:[#allocation2 + $0xd8] sm:$0xff]
        %v1623 = vld [vmem:[#allocation2 + $0xe0] sm:$0xff]
        %v1624 = vld [vmem:[#allocation2 + $0xe8] sm:$0xff]
        %v1625 = vld [vmem:[#allocation2 + $0xf0] sm:$0xff]
        %v1626 = vld [vmem:[#allocation2 + $0xf8] sm:$0xff]
        %v1627 = vld [vmem:[#allocation2 + $0x100] sm:$0xff]
        %v1628 = vld [vmem:[#allocation2 + $0x108] sm:$0xff]
        %v1629 = vld [vmem:[#allocation2 + $0x110] sm:$0xff]
        %v1630 = vld [vmem:[#allocation2 + $0x118] sm:$0xff]
        %v1631 = vld [vmem:[#allocation2 + $0x120] sm:$0xff]
        %v1632 = vld [vmem:[#allocation2 + $0x128] sm:$0xff]
        %v1633 = vld [vmem:[#allocation2 + $0x130] sm:$0xff]
        %v1634 = vld [vmem:[#allocation2 + $0x138] sm:$0xff]
        %v1635 = vld [vmem:[#allocation2 + $0x140] sm:$0xff]
        %v1636 = vld [vmem:[#allocation2 + $0x148] sm:$0xff]
        %v1637 = vld [vmem:[#allocation2 + $0x150] sm:$0xff]
        %v1638 = vld [vmem:[#allocation2 + $0x158] sm:$0xff]
        %v1639 = vld [vmem:[#allocation2 + $0x160] sm:$0xff]
        %v1640 = vld [vmem:[#allocation2 + $0x168] sm:$0xff]
        %v1641 = vld [vmem:[#allocation2 + $0x170] sm:$0xff]
        %v1642 = vld [vmem:[#allocation2 + $0x178] sm:$0xff]
        %v1643 = vld [vmem:[#allocation2 + $0x180] sm:$0xff]
        %v1644 = vld [vmem:[#allocation2 + $0x188] sm:$0xff]
        %v1645 = vld [vmem:[#allocation2 + $0x190] sm:$0xff]
        %v1646 = vld [vmem:[#allocation2 + $0x198] sm:$0xff]
        %v1647 = vld [vmem:[#allocation2 + $0x1a0] sm:$0xff]
        %v1648 = vld [vmem:[#allocation2 + $0x1a8] sm:$0xff]
        %v1649 = vld [vmem:[#allocation2 + $0x1b0] sm:$0xff]
        %v1650 = vld [vmem:[#allocation2 + $0x1b8] sm:$0xff]
        %v1651 = vld [vmem:[#allocation2 + $0x1c0] sm:$0xff]
        %v1652 = vld [vmem:[#allocation2 + $0x1c8] sm:$0xff]
        %v1653 = vld [vmem:[#allocation2 + $0x1d0] sm:$0xff]
        %v1654 = vld [vmem:[#allocation2 + $0x1d8] sm:$0xff]
        %v1655 = vld [vmem:[#allocation2 + $0x1e0] sm:$0xff]
        %v1656 = vld [vmem:[#allocation2 + $0x1e8] sm:$0xff]
        %v1657 = vld [vmem:[#allocation2 + $0x1f0] sm:$0xff]
        %v1658 = vld [vmem:[#allocation2 + $0x1f8] sm:$0xff]
        %vm1659 = vcmask 261120
        %v1660 = vsel %vm1659, %v1467, 0
        %v1662 = vsel %vm1659, %v1468, 0
        %v1664 = vsel %vm1659, %v1469, 0
        %v1666 = vsel %vm1659, %v1470, 0
        %v1668 = vsel %vm1659, %v1471, 0
        %v1670 = vsel %vm1659, %v1472, 0
        %v1672 = vsel %vm1659, %v1473, 0
        %v1674 = vsel %vm1659, %v1474, 0
        %v1676 = vsel %vm1659, %v1475, 0
        %v1678 = vsel %vm1659, %v1476, 0
        %v1680 = vsel %vm1659, %v1477, 0
        %v1682 = vsel %vm1659, %v1478, 0
        %v1684 = vsel %vm1659, %v1479, 0
        %v1686 = vsel %vm1659, %v1480, 0
        %v1688 = vsel %vm1659, %v1481, 0
        %v1690 = vsel %vm1659, %v1482, 0
        %v1693 = vsel %vm1659, %v1595, 0
        %v1696 = vsel %vm1659, %v1596, 0
        %v1699 = vsel %vm1659, %v1597, 0
        %v1702 = vsel %vm1659, %v1598, 0
        %v1705 = vsel %vm1659, %v1599, 0
        %v1708 = vsel %vm1659, %v1600, 0
        %v1711 = vsel %vm1659, %v1601, 0
        %v1714 = vsel %vm1659, %v1602, 0
        %v1717 = vsel %vm1659, %v1603, 0
        %v1720 = vsel %vm1659, %v1604, 0
        %v1723 = vsel %vm1659, %v1605, 0
        %v1726 = vsel %vm1659, %v1606, 0
        %v1729 = vsel %vm1659, %v1607, 0
        %v1732 = vsel %vm1659, %v1608, 0
        %v1735 = vsel %vm1659, %v1609, 0
        %v1738 = vsel %vm1659, %v1610, 0
        %1740 = vmatprep.subr.mxu0 0.0
        %1741 = vmatpush1.xpose.msra.mxu0 %v1693
        %1742 = vmatprep.subr.mxu0 0.0
        %1743 = vmatpush1.xpose.msra.mxu0 %v1696
        %1744 = vmatprep.subr.mxu0 0.0
        %1745 = vmatpush1.xpose.msra.mxu0 %v1699
        %1746 = vmatprep.subr.mxu0 0.0
        %1747 = vmatpush1.xpose.msra.mxu0 %v1702
        %1748 = vmatprep.subr.mxu0 0.0
        %1749 = vmatpush1.xpose.msra.mxu0 %v1705
        %1750 = vmatprep.subr.mxu0 0.0
        %1751 = vmatpush1.xpose.msra.mxu0 %v1708
        %1752 = vmatprep.subr.mxu0 0.0
        %1753 = vmatpush1.xpose.msra.mxu0 %v1711
        %1754 = vmatprep.subr.mxu0 0.0
        %1755 = vmatpush1.xpose.msra.mxu0 %v1714
        %1756 = vmatprep.subr.mxu0 0.0
        %1757 = vmatpush1.xpose.msra.mxu0 %v1717
        %1758 = vmatprep.subr.mxu0 0.0
        %1759 = vmatpush1.xpose.msra.mxu0 %v1720
        %1760 = vmatprep.subr.mxu0 0.0
        %1761 = vmatpush1.xpose.msra.mxu0 %v1723
        %1762 = vmatprep.subr.mxu0 0.0
        %1763 = vmatpush1.xpose.msra.mxu0 %v1726
        %1764 = vmatprep.subr.mxu0 0.0
        %1765 = vmatpush1.xpose.msra.mxu0 %v1729
        %1766 = vmatprep.subr.mxu0 0.0
        %1767 = vmatpush1.xpose.msra.mxu0 %v1732
        %1768 = vmatprep.subr.mxu0 0.0
        %1769 = vmatpush1.xpose.msra.mxu0 %v1735
        %1770 = vmatprep.subr.mxu0 0.0
        %1771 = vmatpush1.xpose.msra.mxu0 %v1738
        %1772 = vmatprep.subr.mxu0 0.0
        %1773 = vmatpush1.xpose.msra.mxu0 0.0
        %1774 = vmatprep.subr.mxu0 0.0
        %1775 = vmatpush1.xpose.msra.mxu0 0.0
        %1776 = vmatprep.subr.mxu0 0.0
        %1777 = vmatpush1.xpose.msra.mxu0 0.0
        %1778 = vmatprep.subr.mxu0 0.0
        %1779 = vmatpush1.xpose.msra.mxu0 0.0
        %1780 = vmatprep.subr.mxu0 0.0
        %1781 = vmatpush1.xpose.msra.mxu0 0.0
        %1782 = vmatprep.subr.mxu0 0.0
        %1783 = vmatpush1.xpose.msra.mxu0 0.0
        %1784 = vmatprep.subr.mxu0 0.0
        %1785 = vmatpush1.xpose.msra.mxu0 0.0
        %1786 = vmatprep.subr.mxu0 0.0
        %1787 = vmatpush1.xpose.msra.mxu0 0.0
        %1788 = vmatprep.subr.mxu0 0.0
        %1789 = vmatpush1.xpose.msra.mxu0 0.0
        %1790 = vmatprep.subr.mxu0 0.0
        %1791 = vmatpush1.xpose.msra.mxu0 0.0
        %1792 = vmatprep.subr.mxu0 0.0
        %1793 = vmatpush1.xpose.msra.mxu0 0.0
        %1794 = vmatprep.subr.mxu0 0.0
        %1795 = vmatpush1.xpose.msra.mxu0 0.0
        %1796 = vmatprep.subr.mxu0 0.0
        %1797 = vmatpush1.xpose.msra.mxu0 0.0
        %1798 = vmatprep.subr.mxu0 0.0
        %1799 = vmatpush1.xpose.msra.mxu0 0.0
        %1800 = vmatprep.subr.mxu0 0.0
        %1801 = vmatpush1.xpose.msra.mxu0 0.0
        %1802 = vmatprep.subr.mxu0 0.0
        %1803 = vmatpush1.xpose.msra.mxu0 0.0
        %1804 = vmatprep.mubr.f32.mxu0 0.0
        %1805 = vmatmul.mubr.f32.gmra.mrb[0].mxu0 %v1660
        %v1806 = vpop.f32.mrb[0].mxu0
        %v1807 = vadd.f32 0.0, %v1806
        %v1808 = vpop.f32.mrb[0].mxu0
        %1809 = vmatprep.mubr.f32.mxu0 0.0
        %1810 = vmatmul.mubr.f32.gmra.mrb[0].mxu0 %v1662
        %v1811 = vpop.f32.mrb[0].mxu0
        %v1812 = vadd.f32 0.0, %v1811
        %v1813 = vpop.f32.mrb[0].mxu0
        %1814 = vmatprep.mubr.f32.mxu0 0.0
        %1815 = vmatmul.mubr.f32.gmra.mrb[0].mxu0 %v1664
        %v1816 = vpop.f32.mrb[0].mxu0
        %v1817 = vadd.f32 0.0, %v1816
        %v1818 = vpop.f32.mrb[0].mxu0
        %1819 = vmatprep.mubr.f32.mxu0 0.0
        %1820 = vmatmul.mubr.f32.gmra.mrb[0].mxu0 %v1666
        %v1821 = vpop.f32.mrb[0].mxu0
        %v1822 = vadd.f32 0.0, %v1821
        %v1823 = vpop.f32.mrb[0].mxu0
        %1824 = vmatprep.mubr.f32.mxu0 0.0
        %1825 = vmatmul.mubr.f32.gmra.mrb[0].mxu0 %v1668
        %v1826 = vpop.f32.mrb[0].mxu0
        %v1827 = vadd.f32 0.0, %v1826
        %v1828 = vpop.f32.mrb[0].mxu0
        %1829 = vmatprep.mubr.f32.mxu0 0.0
        %1830 = vmatmul.mubr.f32.gmra.mrb[0].mxu0 %v1670
        %v1831 = vpop.f32.mrb[0].mxu0
        %v1832 = vadd.f32 0.0, %v1831
        %v1833 = vpop.f32.mrb[0].mxu0
        %1834 = vmatprep.mubr.f32.mxu0 0.0
        %1835 = vmatmul.mubr.f32.gmra.mrb[0].mxu0 %v1672
        %v1836 = vpop.f32.mrb[0].mxu0
        %v1837 = vadd.f32 0.0, %v1836
        %v1838 = vpop.f32.mrb[0].mxu0
        %1839 = vmatprep.mubr.f32.mxu0 0.0
        %1840 = vmatmul.mubr.f32.gmra.mrb[0].mxu0 %v1674
        %v1841 = vpop.f32.mrb[0].mxu0
        %v1842 = vadd.f32 0.0, %v1841
        %v1843 = vpop.f32.mrb[0].mxu0
        %1844 = vmatprep.mubr.f32.mxu0 0.0
        %1845 = vmatmul.mubr.f32.gmra.mrb[0].mxu0 %v1676
        %v1846 = vpop.f32.mrb[0].mxu0
        %v1847 = vadd.f32 0.0, %v1846
        %v1848 = vpop.f32.mrb[0].mxu0
        %1849 = vmatprep.mubr.f32.mxu0 0.0
        %1850 = vmatmul.mubr.f32.gmra.mrb[0].mxu0 %v1678
        %v1851 = vpop.f32.mrb[0].mxu0
        %v1852 = vadd.f32 0.0, %v1851
        %v1853 = vpop.f32.mrb[0].mxu0
        %1854 = vmatprep.mubr.f32.mxu0 0.0
        %1855 = vmatmul.mubr.f32.gmra.mrb[0].mxu0 %v1680
        %v1856 = vpop.f32.mrb[0].mxu0
        %v1857 = vadd.f32 0.0, %v1856
        %v1858 = vpop.f32.mrb[0].mxu0
        %1859 = vmatprep.mubr.f32.mxu0 0.0
        %1860 = vmatmul.mubr.f32.gmra.mrb[0].mxu0 %v1682
        %v1861 = vpop.f32.mrb[0].mxu0
        %v1862 = vadd.f32 0.0, %v1861
        %v1863 = vpop.f32.mrb[0].mxu0
        %1864 = vmatprep.mubr.f32.mxu0 0.0
        %1865 = vmatmul.mubr.f32.gmra.mrb[0].mxu0 %v1684
        %v1866 = vpop.f32.mrb[0].mxu0
        %v1867 = vadd.f32 0.0, %v1866
        %v1868 = vpop.f32.mrb[0].mxu0
        %1869 = vmatprep.mubr.f32.mxu0 0.0
        %1870 = vmatmul.mubr.f32.gmra.mrb[0].mxu0 %v1686
        %v1871 = vpop.f32.mrb[0].mxu0
        %v1872 = vadd.f32 0.0, %v1871
        %v1873 = vpop.f32.mrb[0].mxu0
        %1874 = vmatprep.mubr.f32.mxu0 0.0
        %1875 = vmatmul.mubr.f32.gmra.mrb[0].mxu0 %v1688
        %v1876 = vpop.f32.mrb[0].mxu0
        %v1877 = vadd.f32 0.0, %v1876
        %v1878 = vpop.f32.mrb[0].mxu0
        %1879 = vmatprep.mubr.f32.mxu0 0.0
        %1880 = vmatmul.mubr.f32.gmra.mrb[0].mxu0 %v1690
        %v1881 = vpop.f32.mrb[0].mxu0
        %v1882 = vadd.f32 0.0, %v1881
        %v1883 = vpop.f32.mrb[0].mxu0
        %1884 = vdwg.mxu0
        %v1885 = vsel %vm1659, %v1500, 0
        %v1887 = vsel %vm1659, %v1502, 0
        %v1889 = vsel %vm1659, %v1504, 0
        %v1891 = vsel %vm1659, %v1506, 0
        %v1893 = vsel %vm1659, %v1508, 0
        %v1895 = vsel %vm1659, %v1510, 0
        %v1897 = vsel %vm1659, %v1512, 0
        %v1899 = vsel %vm1659, %v1514, 0
        %v1901 = vsel %vm1659, %v1516, 0
        %v1903 = vsel %vm1659, %v1518, 0
        %v1905 = vsel %vm1659, %v1520, 0
        %v1907 = vsel %vm1659, %v1522, 0
        %v1909 = vsel %vm1659, %v1524, 0
        %v1911 = vsel %vm1659, %v1526, 0
        %v1913 = vsel %vm1659, %v1528, 0
        %v1915 = vsel %vm1659, %v1530, 0
        %v1918 = vsel %vm1659, %v1611, 0
        %v1921 = vsel %vm1659, %v1612, 0
        %v1924 = vsel %vm1659, %v1613, 0
        %v1927 = vsel %vm1659, %v1614, 0
        %v1930 = vsel %vm1659, %v1615, 0
        %v1933 = vsel %vm1659, %v1616, 0
        %v1936 = vsel %vm1659, %v1617, 0
        %v1939 = vsel %vm1659, %v1618, 0
        %v1942 = vsel %vm1659, %v1619, 0
        %v1945 = vsel %vm1659, %v1620, 0
        %v1948 = vsel %vm1659, %v1621, 0
        %v1951 = vsel %vm1659, %v1622, 0
        %v1954 = vsel %vm1659, %v1623, 0
        %v1957 = vsel %vm1659, %v1624, 0
        %v1960 = vsel %vm1659, %v1625, 0
        %v1963 = vsel %vm1659, %v1626, 0
        %1965 = vmatprep.subr.mxu0 0.0
        %1966 = vmatpush1.xpose.msra.mxu0 %v1918
        %1967 = vmatprep.subr.mxu0 0.0
        %1968 = vmatpush1.xpose.msra.mxu0 %v1921
        %1969 = vmatprep.subr.mxu0 0.0
        %1970 = vmatpush1.xpose.msra.mxu0 %v1924
        %1971 = vmatprep.subr.mxu0 0.0
        %1972 = vmatpush1.xpose.msra.mxu0 %v1927
        %1973 = vmatprep.subr.mxu0 0.0
        %1974 = vmatpush1.xpose.msra.mxu0 %v1930
        %1975 = vmatprep.subr.mxu0 0.0
        %1976 = vmatpush1.xpose.msra.mxu0 %v1933
        %1977 = vmatprep.subr.mxu0 0.0
        %1978 = vmatpush1.xpose.msra.mxu0 %v1936
        %1979 = vmatprep.subr.mxu0 0.0
        %1980 = vmatpush1.xpose.msra.mxu0 %v1939
        %1981 = vmatprep.subr.mxu0 0.0
        %1982 = vmatpush1.xpose.msra.mxu0 %v1942
        %1983 = vmatprep.subr.mxu0 0.0
        %1984 = vmatpush1.xpose.msra.mxu0 %v1945
        %1985 = vmatprep.subr.mxu0 0.0
        %1986 = vmatpush1.xpose.msra.mxu0 %v1948
        %1987 = vmatprep.subr.mxu0 0.0
        %1988 = vmatpush1.xpose.msra.mxu0 %v1951
        %1989 = vmatprep.subr.mxu0 0.0
        %1990 = vmatpush1.xpose.msra.mxu0 %v1954
        %1991 = vmatprep.subr.mxu0 0.0
        %1992 = vmatpush1.xpose.msra.mxu0 %v1957
        %1993 = vmatprep.subr.mxu0 0.0
        %1994 = vmatpush1.xpose.msra.mxu0 %v1960
        %1995 = vmatprep.subr.mxu0 0.0
        %1996 = vmatpush1.xpose.msra.mxu0 %v1963
        %1997 = vmatprep.subr.mxu0 0.0
        %1998 = vmatpush1.xpose.msra.mxu0 0.0
        %1999 = vmatprep.subr.mxu0 0.0
        %2000 = vmatpush1.xpose.msra.mxu0 0.0
        %2001 = vmatprep.subr.mxu0 0.0
        %2002 = vmatpush1.xpose.msra.mxu0 0.0
        %2003 = vmatprep.subr.mxu0 0.0
        %2004 = vmatpush1.xpose.msra.mxu0 0.0
        %2005 = vmatprep.subr.mxu0 0.0
        %2006 = vmatpush1.xpose.msra.mxu0 0.0
        %2007 = vmatprep.subr.mxu0 0.0
        %2008 = vmatpush1.xpose.msra.mxu0 0.0
        %2009 = vmatprep.subr.mxu0 0.0
        %2010 = vmatpush1.xpose.msra.mxu0 0.0
        %2011 = vmatprep.subr.mxu0 0.0
        %2012 = vmatpush1.xpose.msra.mxu0 0.0
        %2013 = vmatprep.subr.mxu0 0.0
        %2014 = vmatpush1.xpose.msra.mxu0 0.0
        %2015 = vmatprep.subr.mxu0 0.0
        %2016 = vmatpush1.xpose.msra.mxu0 0.0
        %2017 = vmatprep.subr.mxu0 0.0
        %2018 = vmatpush1.xpose.msra.mxu0 0.0
        %2019 = vmatprep.subr.mxu0 0.0
        %2020 = vmatpush1.xpose.msra.mxu0 0.0
        %2021 = vmatprep.subr.mxu0 0.0
        %2022 = vmatpush1.xpose.msra.mxu0 0.0
        %2023 = vmatprep.subr.mxu0 0.0
        %2024 = vmatpush1.xpose.msra.mxu0 0.0
        %2025 = vmatprep.subr.mxu0 0.0
        %2026 = vmatpush1.xpose.msra.mxu0 0.0
        %2027 = vmatprep.subr.mxu0 0.0
        %2028 = vmatpush1.xpose.msra.mxu0 0.0
        %2029 = vmatprep.mubr.f32.mxu0 0.0
        %2030 = vmatmul.mubr.f32.gmra.mrb[0].mxu0 %v1885
        %v2031 = vpop.f32.mrb[0].mxu0
        %v2032 = vadd.f32 0.0, %v2031
        %v2033 = vpop.f32.mrb[0].mxu0
        %2034 = vmatprep.mubr.f32.mxu0 0.0
        %2035 = vmatmul.mubr.f32.gmra.mrb[0].mxu0 %v1887
        %v2036 = vpop.f32.mrb[0].mxu0
        %v2037 = vadd.f32 0.0, %v2036
        %v2038 = vpop.f32.mrb[0].mxu0
        %2039 = vmatprep.mubr.f32.mxu0 0.0
        %2040 = vmatmul.mubr.f32.gmra.mrb[0].mxu0 %v1889
        %v2041 = vpop.f32.mrb[0].mxu0
        %v2042 = vadd.f32 0.0, %v2041
        %v2043 = vpop.f32.mrb[0].mxu0
        %2044 = vmatprep.mubr.f32.mxu0 0.0
        %2045 = vmatmul.mubr.f32.gmra.mrb[0].mxu0 %v1891
        %v2046 = vpop.f32.mrb[0].mxu0
        %v2047 = vadd.f32 0.0, %v2046
        %v2048 = vpop.f32.mrb[0].mxu0
        %2049 = vmatprep.mubr.f32.mxu0 0.0
        %2050 = vmatmul.mubr.f32.gmra.mrb[0].mxu0 %v1893
        %v2051 = vpop.f32.mrb[0].mxu0
        %v2052 = vadd.f32 0.0, %v2051
        %v2053 = vpop.f32.mrb[0].mxu0
        %2054 = vmatprep.mubr.f32.mxu0 0.0
        %2055 = vmatmul.mubr.f32.gmra.mrb[0].mxu0 %v1895
        %v2056 = vpop.f32.mrb[0].mxu0
        %v2057 = vadd.f32 0.0, %v2056
        %v2058 = vpop.f32.mrb[0].mxu0
        %2059 = vmatprep.mubr.f32.mxu0 0.0
        %2060 = vmatmul.mubr.f32.gmra.mrb[0].mxu0 %v1897
        %v2061 = vpop.f32.mrb[0].mxu0
        %v2062 = vadd.f32 0.0, %v2061
        %v2063 = vpop.f32.mrb[0].mxu0
        %2064 = vmatprep.mubr.f32.mxu0 0.0
        %2065 = vmatmul.mubr.f32.gmra.mrb[0].mxu0 %v1899
        %v2066 = vpop.f32.mrb[0].mxu0
        %v2067 = vadd.f32 0.0, %v2066
        %v2068 = vpop.f32.mrb[0].mxu0
        %2069 = vmatprep.mubr.f32.mxu0 0.0
        %2070 = vmatmul.mubr.f32.gmra.mrb[0].mxu0 %v1901
        %v2071 = vpop.f32.mrb[0].mxu0
        %v2072 = vadd.f32 0.0, %v2071
        %v2073 = vpop.f32.mrb[0].mxu0
        %2074 = vmatprep.mubr.f32.mxu0 0.0
        %2075 = vmatmul.mubr.f32.gmra.mrb[0].mxu0 %v1903
        %v2076 = vpop.f32.mrb[0].mxu0
        %v2077 = vadd.f32 0.0, %v2076
        %v2078 = vpop.f32.mrb[0].mxu0
        %2079 = vmatprep.mubr.f32.mxu0 0.0
        %2080 = vmatmul.mubr.f32.gmra.mrb[0].mxu0 %v1905
        %v2081 = vpop.f32.mrb[0].mxu0
        %v2082 = vadd.f32 0.0, %v2081
        %v2083 = vpop.f32.mrb[0].mxu0
        %2084 = vmatprep.mubr.f32.mxu0 0.0
        %2085 = vmatmul.mubr.f32.gmra.mrb[0].mxu0 %v1907
        %v2086 = vpop.f32.mrb[0].mxu0
        %v2087 = vadd.f32 0.0, %v2086
        %v2088 = vpop.f32.mrb[0].mxu0
        %2089 = vmatprep.mubr.f32.mxu0 0.0
        %2090 = vmatmul.mubr.f32.gmra.mrb[0].mxu0 %v1909
        %v2091 = vpop.f32.mrb[0].mxu0
        %v2092 = vadd.f32 0.0, %v2091
        %v2093 = vpop.f32.mrb[0].mxu0
        %2094 = vmatprep.mubr.f32.mxu0 0.0
        %2095 = vmatmul.mubr.f32.gmra.mrb[0].mxu0 %v1911
        %v2096 = vpop.f32.mrb[0].mxu0
        %v2097 = vadd.f32 0.0, %v2096
        %v2098 = vpop.f32.mrb[0].mxu0
        %2099 = vmatprep.mubr.f32.mxu0 0.0
        %2100 = vmatmul.mubr.f32.gmra.mrb[0].mxu0 %v1913
        %v2101 = vpop.f32.mrb[0].mxu0
        %v2102 = vadd.f32 0.0, %v2101
        %v2103 = vpop.f32.mrb[0].mxu0
        %2104 = vmatprep.mubr.f32.mxu0 0.0
        %2105 = vmatmul.mubr.f32.gmra.mrb[0].mxu0 %v1915
        %v2106 = vpop.f32.mrb[0].mxu0
        %v2107 = vadd.f32 0.0, %v2106
        %v2108 = vpop.f32.mrb[0].mxu0
        %2109 = vdwg.mxu0
        %v2110 = vsel %vm1659, %v1532, 0
        %v2112 = vsel %vm1659, %v1534, 0
        %v2114 = vsel %vm1659, %v1536, 0
        %v2116 = vsel %vm1659, %v1538, 0
        %v2118 = vsel %vm1659, %v1540, 0
        %v2120 = vsel %vm1659, %v1542, 0
        %v2122 = vsel %vm1659, %v1544, 0
        %v2124 = vsel %vm1659, %v1546, 0
        %v2126 = vsel %vm1659, %v1548, 0
        %v2128 = vsel %vm1659, %v1550, 0
        %v2130 = vsel %vm1659, %v1552, 0
        %v2132 = vsel %vm1659, %v1554, 0
        %v2134 = vsel %vm1659, %v1556, 0
        %v2136 = vsel %vm1659, %v1558, 0
        %v2138 = vsel %vm1659, %v1560, 0
        %v2140 = vsel %vm1659, %v1562, 0
        %v2143 = vsel %vm1659, %v1627, 0
        %v2146 = vsel %vm1659, %v1628, 0
        %v2149 = vsel %vm1659, %v1629, 0
        %v2152 = vsel %vm1659, %v1630, 0
        %v2155 = vsel %vm1659, %v1631, 0
        %v2158 = vsel %vm1659, %v1632, 0
        %v2161 = vsel %vm1659, %v1633, 0
        %v2164 = vsel %vm1659, %v1634, 0
        %v2167 = vsel %vm1659, %v1635, 0
        %v2170 = vsel %vm1659, %v1636, 0
        %v2173 = vsel %vm1659, %v1637, 0
        %v2176 = vsel %vm1659, %v1638, 0
        %v2179 = vsel %vm1659, %v1639, 0
        %v2182 = vsel %vm1659, %v1640, 0
        %v2185 = vsel %vm1659, %v1641, 0
        %v2188 = vsel %vm1659, %v1642, 0
        %2190 = vmatprep.subr.mxu0 0.0
        %2191 = vmatpush1.xpose.msra.mxu0 %v2143
        %2192 = vmatprep.subr.mxu0 0.0
        %2193 = vmatpush1.xpose.msra.mxu0 %v2146
        %2194 = vmatprep.subr.mxu0 0.0
        %2195 = vmatpush1.xpose.msra.mxu0 %v2149
        %2196 = vmatprep.subr.mxu0 0.0
        %2197 = vmatpush1.xpose.msra.mxu0 %v2152
        %2198 = vmatprep.subr.mxu0 0.0
        %2199 = vmatpush1.xpose.msra.mxu0 %v2155
        %2200 = vmatprep.subr.mxu0 0.0
        %2201 = vmatpush1.xpose.msra.mxu0 %v2158
        %2202 = vmatprep.subr.mxu0 0.0
        %2203 = vmatpush1.xpose.msra.mxu0 %v2161
        %2204 = vmatprep.subr.mxu0 0.0
        %2205 = vmatpush1.xpose.msra.mxu0 %v2164
        %2206 = vmatprep.subr.mxu0 0.0
        %2207 = vmatpush1.xpose.msra.mxu0 %v2167
        %2208 = vmatprep.subr.mxu0 0.0
        %2209 = vmatpush1.xpose.msra.mxu0 %v2170
        %2210 = vmatprep.subr.mxu0 0.0
        %2211 = vmatpush1.xpose.msra.mxu0 %v2173
        %2212 = vmatprep.subr.mxu0 0.0
        %2213 = vmatpush1.xpose.msra.mxu0 %v2176
        %2214 = vmatprep.subr.mxu0 0.0
        %2215 = vmatpush1.xpose.msra.mxu0 %v2179
        %2216 = vmatprep.subr.mxu0 0.0
        %2217 = vmatpush1.xpose.msra.mxu0 %v2182
        %2218 = vmatprep.subr.mxu0 0.0
        %2219 = vmatpush1.xpose.msra.mxu0 %v2185
        %2220 = vmatprep.subr.mxu0 0.0
        %2221 = vmatpush1.xpose.msra.mxu0 %v2188
        %2222 = vmatprep.subr.mxu0 0.0
        %2223 = vmatpush1.xpose.msra.mxu0 0.0
        %2224 = vmatprep.subr.mxu0 0.0
        %2225 = vmatpush1.xpose.msra.mxu0 0.0
        %2226 = vmatprep.subr.mxu0 0.0
        %2227 = vmatpush1.xpose.msra.mxu0 0.0
        %2228 = vmatprep.subr.mxu0 0.0
        %2229 = vmatpush1.xpose.msra.mxu0 0.0
        %2230 = vmatprep.subr.mxu0 0.0
        %2231 = vmatpush1.xpose.msra.mxu0 0.0
        %2232 = vmatprep.subr.mxu0 0.0
        %2233 = vmatpush1.xpose.msra.mxu0 0.0
        %2234 = vmatprep.subr.mxu0 0.0
        %2235 = vmatpush1.xpose.msra.mxu0 0.0
        %2236 = vmatprep.subr.mxu0 0.0
        %2237 = vmatpush1.xpose.msra.mxu0 0.0
        %2238 = vmatprep.subr.mxu0 0.0
        %2239 = vmatpush1.xpose.msra.mxu0 0.0
        %2240 = vmatprep.subr.mxu0 0.0
        %2241 = vmatpush1.xpose.msra.mxu0 0.0
        %2242 = vmatprep.subr.mxu0 0.0
        %2243 = vmatpush1.xpose.msra.mxu0 0.0
        %2244 = vmatprep.subr.mxu0 0.0
        %2245 = vmatpush1.xpose.msra.mxu0 0.0
        %2246 = vmatprep.subr.mxu0 0.0
        %2247 = vmatpush1.xpose.msra.mxu0 0.0
        %2248 = vmatprep.subr.mxu0 0.0
        %2249 = vmatpush1.xpose.msra.mxu0 0.0
        %2250 = vmatprep.subr.mxu0 0.0
        %2251 = vmatpush1.xpose.msra.mxu0 0.0
        %2252 = vmatprep.subr.mxu0 0.0
        %2253 = vmatpush1.xpose.msra.mxu0 0.0
        %2254 = vmatprep.mubr.f32.mxu0 0.0
        %2255 = vmatmul.mubr.f32.gmra.mrb[0].mxu0 %v2110
        %v2256 = vpop.f32.mrb[0].mxu0
        %v2257 = vadd.f32 0.0, %v2256
        %v2258 = vpop.f32.mrb[0].mxu0
        %2259 = vmatprep.mubr.f32.mxu0 0.0
        %2260 = vmatmul.mubr.f32.gmra.mrb[0].mxu0 %v2112
        %v2261 = vpop.f32.mrb[0].mxu0
        %v2262 = vadd.f32 0.0, %v2261
        %v2263 = vpop.f32.mrb[0].mxu0
        %2264 = vmatprep.mubr.f32.mxu0 0.0
        %2265 = vmatmul.mubr.f32.gmra.mrb[0].mxu0 %v2114
        %v2266 = vpop.f32.mrb[0].mxu0
        %v2267 = vadd.f32 0.0, %v2266
        %v2268 = vpop.f32.mrb[0].mxu0
        %2269 = vmatprep.mubr.f32.mxu0 0.0
        %2270 = vmatmul.mubr.f32.gmra.mrb[0].mxu0 %v2116
        %v2271 = vpop.f32.mrb[0].mxu0
        %v2272 = vadd.f32 0.0, %v2271
        %v2273 = vpop.f32.mrb[0].mxu0
        %2274 = vmatprep.mubr.f32.mxu0 0.0
        %2275 = vmatmul.mubr.f32.gmra.mrb[0].mxu0 %v2118
        %v2276 = vpop.f32.mrb[0].mxu0
        %v2277 = vadd.f32 0.0, %v2276
        %v2278 = vpop.f32.mrb[0].mxu0
        %2279 = vmatprep.mubr.f32.mxu0 0.0
        %2280 = vmatmul.mubr.f32.gmra.mrb[0].mxu0 %v2120
        %v2281 = vpop.f32.mrb[0].mxu0
        %v2282 = vadd.f32 0.0, %v2281
        %v2283 = vpop.f32.mrb[0].mxu0
        %2284 = vmatprep.mubr.f32.mxu0 0.0
        %2285 = vmatmul.mubr.f32.gmra.mrb[0].mxu0 %v2122
        %v2286 = vpop.f32.mrb[0].mxu0
        %v2287 = vadd.f32 0.0, %v2286
        %v2288 = vpop.f32.mrb[0].mxu0
        %2289 = vmatprep.mubr.f32.mxu0 0.0
        %2290 = vmatmul.mubr.f32.gmra.mrb[0].mxu0 %v2124
        %v2291 = vpop.f32.mrb[0].mxu0
        %v2292 = vadd.f32 0.0, %v2291
        %v2293 = vpop.f32.mrb[0].mxu0
        %2294 = vmatprep.mubr.f32.mxu0 0.0
        %2295 = vmatmul.mubr.f32.gmra.mrb[0].mxu0 %v2126
        %v2296 = vpop.f32.mrb[0].mxu0
        %v2297 = vadd.f32 0.0, %v2296
        %v2298 = vpop.f32.mrb[0].mxu0
        %2299 = vmatprep.mubr.f32.mxu0 0.0
        %2300 = vmatmul.mubr.f32.gmra.mrb[0].mxu0 %v2128
        %v2301 = vpop.f32.mrb[0].mxu0
        %v2302 = vadd.f32 0.0, %v2301
        %v2303 = vpop.f32.mrb[0].mxu0
        %2304 = vmatprep.mubr.f32.mxu0 0.0
        %2305 = vmatmul.mubr.f32.gmra.mrb[0].mxu0 %v2130
        %v2306 = vpop.f32.mrb[0].mxu0
        %v2307 = vadd.f32 0.0, %v2306
        %v2308 = vpop.f32.mrb[0].mxu0
        %2309 = vmatprep.mubr.f32.mxu0 0.0
        %2310 = vmatmul.mubr.f32.gmra.mrb[0].mxu0 %v2132
        %v2311 = vpop.f32.mrb[0].mxu0
        %v2312 = vadd.f32 0.0, %v2311
        %v2313 = vpop.f32.mrb[0].mxu0
        %2314 = vmatprep.mubr.f32.mxu0 0.0
        %2315 = vmatmul.mubr.f32.gmra.mrb[0].mxu0 %v2134
        %v2316 = vpop.f32.mrb[0].mxu0
        %v2317 = vadd.f32 0.0, %v2316
        %v2318 = vpop.f32.mrb[0].mxu0
        %2319 = vmatprep.mubr.f32.mxu0 0.0
        %2320 = vmatmul.mubr.f32.gmra.mrb[0].mxu0 %v2136
        %v2321 = vpop.f32.mrb[0].mxu0
        %v2322 = vadd.f32 0.0, %v2321
        %v2323 = vpop.f32.mrb[0].mxu0
        %2324 = vmatprep.mubr.f32.mxu0 0.0
        %2325 = vmatmul.mubr.f32.gmra.mrb[0].mxu0 %v2138
        %v2326 = vpop.f32.mrb[0].mxu0
        %v2327 = vadd.f32 0.0, %v2326
        %v2328 = vpop.f32.mrb[0].mxu0
        %2329 = vmatprep.mubr.f32.mxu0 0.0
        %2330 = vmatmul.mubr.f32.gmra.mrb[0].mxu0 %v2140
        %v2331 = vpop.f32.mrb[0].mxu0
        %v2332 = vadd.f32 0.0, %v2331
        %v2333 = vpop.f32.mrb[0].mxu0
        %2334 = vdwg.mxu0
        %v2335 = vsel %vm1659, %v1564, 0
        %v2337 = vsel %vm1659, %v1566, 0
        %v2339 = vsel %vm1659, %v1568, 0
        %v2341 = vsel %vm1659, %v1570, 0
        %v2343 = vsel %vm1659, %v1572, 0
        %v2345 = vsel %vm1659, %v1574, 0
        %v2347 = vsel %vm1659, %v1576, 0
        %v2349 = vsel %vm1659, %v1578, 0
        %v2351 = vsel %vm1659, %v1580, 0
        %v2353 = vsel %vm1659, %v1582, 0
        %v2355 = vsel %vm1659, %v1584, 0
        %v2357 = vsel %vm1659, %v1586, 0
        %v2359 = vsel %vm1659, %v1588, 0
        %v2361 = vsel %vm1659, %v1590, 0
        %v2363 = vsel %vm1659, %v1592, 0
        %v2365 = vsel %vm1659, %v1594, 0
        %v2368 = vsel %vm1659, %v1643, 0
        %v2371 = vsel %vm1659, %v1644, 0
        %v2374 = vsel %vm1659, %v1645, 0
        %v2377 = vsel %vm1659, %v1646, 0
        %v2380 = vsel %vm1659, %v1647, 0
        %v2383 = vsel %vm1659, %v1648, 0
        %v2386 = vsel %vm1659, %v1649, 0
        %v2389 = vsel %vm1659, %v1650, 0
        %v2392 = vsel %vm1659, %v1651, 0
        %v2395 = vsel %vm1659, %v1652, 0
        %v2398 = vsel %vm1659, %v1653, 0
        %v2401 = vsel %vm1659, %v1654, 0
        %v2404 = vsel %vm1659, %v1655, 0
        %v2407 = vsel %vm1659, %v1656, 0
        %v2410 = vsel %vm1659, %v1657, 0
        %v2413 = vsel %vm1659, %v1658, 0
        %2415 = vmatprep.subr.mxu0 0.0
        %2416 = vmatpush1.xpose.msra.mxu0 %v2368
        %2417 = vmatprep.subr.mxu0 0.0
        %2418 = vmatpush1.xpose.msra.mxu0 %v2371
        %2419 = vmatprep.subr.mxu0 0.0
        %2420 = vmatpush1.xpose.msra.mxu0 %v2374
        %2421 = vmatprep.subr.mxu0 0.0
        %2422 = vmatpush1.xpose.msra.mxu0 %v2377
        %2423 = vmatprep.subr.mxu0 0.0
        %2424 = vmatpush1.xpose.msra.mxu0 %v2380
        %2425 = vmatprep.subr.mxu0 0.0
        %2426 = vmatpush1.xpose.msra.mxu0 %v2383
        %2427 = vmatprep.subr.mxu0 0.0
        %2428 = vmatpush1.xpose.msra.mxu0 %v2386
        %2429 = vmatprep.subr.mxu0 0.0
        %2430 = vmatpush1.xpose.msra.mxu0 %v2389
        %2431 = vmatprep.subr.mxu0 0.0
        %2432 = vmatpush1.xpose.msra.mxu0 %v2392
        %2433 = vmatprep.subr.mxu0 0.0
        %2434 = vmatpush1.xpose.msra.mxu0 %v2395
        %2435 = vmatprep.subr.mxu0 0.0
        %2436 = vmatpush1.xpose.msra.mxu0 %v2398
        %2437 = vmatprep.subr.mxu0 0.0
        %2438 = vmatpush1.xpose.msra.mxu0 %v2401
        %2439 = vmatprep.subr.mxu0 0.0
        %2440 = vmatpush1.xpose.msra.mxu0 %v2404
        %2441 = vmatprep.subr.mxu0 0.0
        %2442 = vmatpush1.xpose.msra.mxu0 %v2407
        %2443 = vmatprep.subr.mxu0 0.0
        %2444 = vmatpush1.xpose.msra.mxu0 %v2410
        %2445 = vmatprep.subr.mxu0 0.0
        %2446 = vmatpush1.xpose.msra.mxu0 %v2413
        %2447 = vmatprep.subr.mxu0 0.0
        %2448 = vmatpush1.xpose.msra.mxu0 0.0
        %2449 = vmatprep.subr.mxu0 0.0
        %2450 = vmatpush1.xpose.msra.mxu0 0.0
        %2451 = vmatprep.subr.mxu0 0.0
        %2452 = vmatpush1.xpose.msra.mxu0 0.0
        %2453 = vmatprep.subr.mxu0 0.0
        %2454 = vmatpush1.xpose.msra.mxu0 0.0
        %2455 = vmatprep.subr.mxu0 0.0
        %2456 = vmatpush1.xpose.msra.mxu0 0.0
        %2457 = vmatprep.subr.mxu0 0.0
        %2458 = vmatpush1.xpose.msra.mxu0 0.0
        %2459 = vmatprep.subr.mxu0 0.0
        %2460 = vmatpush1.xpose.msra.mxu0 0.0
        %2461 = vmatprep.subr.mxu0 0.0
        %2462 = vmatpush1.xpose.msra.mxu0 0.0
        %2463 = vmatprep.subr.mxu0 0.0
        %2464 = vmatpush1.xpose.msra.mxu0 0.0
        %2465 = vmatprep.subr.mxu0 0.0
        %2466 = vmatpush1.xpose.msra.mxu0 0.0
        %2467 = vmatprep.subr.mxu0 0.0
        %2468 = vmatpush1.xpose.msra.mxu0 0.0
        %2469 = vmatprep.subr.mxu0 0.0
        %2470 = vmatpush1.xpose.msra.mxu0 0.0
        %2471 = vmatprep.subr.mxu0 0.0
        %2472 = vmatpush1.xpose.msra.mxu0 0.0
        %2473 = vmatprep.subr.mxu0 0.0
        %2474 = vmatpush1.xpose.msra.mxu0 0.0
        %2475 = vmatprep.subr.mxu0 0.0
        %2476 = vmatpush1.xpose.msra.mxu0 0.0
        %2477 = vmatprep.subr.mxu0 0.0
        %2478 = vmatpush1.xpose.msra.mxu0 0.0
        %2479 = vmatprep.mubr.f32.mxu0 0.0
        %2480 = vmatmul.mubr.f32.gmra.mrb[0].mxu0 %v2335
        %v2481 = vpop.f32.mrb[0].mxu0
        %v2482 = vadd.f32 0.0, %v2481
        %v2483 = vpop.f32.mrb[0].mxu0
        %2484 = vmatprep.mubr.f32.mxu0 0.0
        %2485 = vmatmul.mubr.f32.gmra.mrb[0].mxu0 %v2337
        %v2486 = vpop.f32.mrb[0].mxu0
        %v2487 = vadd.f32 0.0, %v2486
        %v2488 = vpop.f32.mrb[0].mxu0
        %2489 = vmatprep.mubr.f32.mxu0 0.0
        %2490 = vmatmul.mubr.f32.gmra.mrb[0].mxu0 %v2339
        %v2491 = vpop.f32.mrb[0].mxu0
        %v2492 = vadd.f32 0.0, %v2491
        %v2493 = vpop.f32.mrb[0].mxu0
        %2494 = vmatprep.mubr.f32.mxu0 0.0
        %2495 = vmatmul.mubr.f32.gmra.mrb[0].mxu0 %v2341
        %v2496 = vpop.f32.mrb[0].mxu0
        %v2497 = vadd.f32 0.0, %v2496
        %v2498 = vpop.f32.mrb[0].mxu0
        %2499 = vmatprep.mubr.f32.mxu0 0.0
        %2500 = vmatmul.mubr.f32.gmra.mrb[0].mxu0 %v2343
        %v2501 = vpop.f32.mrb[0].mxu0
        %v2502 = vadd.f32 0.0, %v2501
        %v2503 = vpop.f32.mrb[0].mxu0
        %2504 = vmatprep.mubr.f32.mxu0 0.0
        %2505 = vmatmul.mubr.f32.gmra.mrb[0].mxu0 %v2345
        %v2506 = vpop.f32.mrb[0].mxu0
        %v2507 = vadd.f32 0.0, %v2506
        %v2508 = vpop.f32.mrb[0].mxu0
        %2509 = vmatprep.mubr.f32.mxu0 0.0
        %2510 = vmatmul.mubr.f32.gmra.mrb[0].mxu0 %v2347
        %v2511 = vpop.f32.mrb[0].mxu0
        %v2512 = vadd.f32 0.0, %v2511
        %v2513 = vpop.f32.mrb[0].mxu0
        %2514 = vmatprep.mubr.f32.mxu0 0.0
        %2515 = vmatmul.mubr.f32.gmra.mrb[0].mxu0 %v2349
        %v2516 = vpop.f32.mrb[0].mxu0
        %v2517 = vadd.f32 0.0, %v2516
        %v2518 = vpop.f32.mrb[0].mxu0
        %2519 = vmatprep.mubr.f32.mxu0 0.0
        %2520 = vmatmul.mubr.f32.gmra.mrb[0].mxu0 %v2351
        %v2521 = vpop.f32.mrb[0].mxu0
        %v2522 = vadd.f32 0.0, %v2521
        %v2523 = vpop.f32.mrb[0].mxu0
        %2524 = vmatprep.mubr.f32.mxu0 0.0
        %2525 = vmatmul.mubr.f32.gmra.mrb[0].mxu0 %v2353
        %v2526 = vpop.f32.mrb[0].mxu0
        %v2527 = vadd.f32 0.0, %v2526
        %v2528 = vpop.f32.mrb[0].mxu0
        %2529 = vmatprep.mubr.f32.mxu0 0.0
        %2530 = vmatmul.mubr.f32.gmra.mrb[0].mxu0 %v2355
        %v2531 = vpop.f32.mrb[0].mxu0
        %v2532 = vadd.f32 0.0, %v2531
        %v2533 = vpop.f32.mrb[0].mxu0
        %2534 = vmatprep.mubr.f32.mxu0 0.0
        %2535 = vmatmul.mubr.f32.gmra.mrb[0].mxu0 %v2357
        %v2536 = vpop.f32.mrb[0].mxu0
        %v2537 = vadd.f32 0.0, %v2536
        %v2538 = vpop.f32.mrb[0].mxu0
        %2539 = vmatprep.mubr.f32.mxu0 0.0
        %2540 = vmatmul.mubr.f32.gmra.mrb[0].mxu0 %v2359
        %v2541 = vpop.f32.mrb[0].mxu0
        %v2542 = vadd.f32 0.0, %v2541
        %v2543 = vpop.f32.mrb[0].mxu0
        %2544 = vmatprep.mubr.f32.mxu0 0.0
        %2545 = vmatmul.mubr.f32.gmra.mrb[0].mxu0 %v2361
        %v2546 = vpop.f32.mrb[0].mxu0
        %v2547 = vadd.f32 0.0, %v2546
        %v2548 = vpop.f32.mrb[0].mxu0
        %2549 = vmatprep.mubr.f32.mxu0 0.0
        %2550 = vmatmul.mubr.f32.gmra.mrb[0].mxu0 %v2363
        %v2551 = vpop.f32.mrb[0].mxu0
        %v2552 = vadd.f32 0.0, %v2551
        %v2553 = vpop.f32.mrb[0].mxu0
        %2554 = vmatprep.mubr.f32.mxu0 0.0
        %2555 = vmatmul.mubr.f32.gmra.mrb[0].mxu0 %v2365
        %v2556 = vpop.f32.mrb[0].mxu0
        %v2557 = vadd.f32 0.0, %v2556
        %v2558 = vpop.f32.mrb[0].mxu0
        %2559 = vdwg.mxu0
        %2560 = vmax.xlane.f32.xlu0 %v1807
        %v2561 = vpop.xlane.xlu0 %2560
        %2562 = vmax.xlane.f32.xlu0 %v1812
        %v2563 = vpop.xlane.xlu0 %2562
        %2564 = vmax.xlane.f32.xlu0 %v1817
        %v2565 = vpop.xlane.xlu0 %2564
        %2566 = vmax.xlane.f32.xlu0 %v1822
        %v2567 = vpop.xlane.xlu0 %2566
        %2568 = vmax.xlane.f32.xlu0 %v1827
        %v2569 = vpop.xlane.xlu0 %2568
        %2570 = vmax.xlane.f32.xlu0 %v1832
        %v2571 = vpop.xlane.xlu0 %2570
        %2572 = vmax.xlane.f32.xlu0 %v1837
        %v2573 = vpop.xlane.xlu0 %2572
        %2574 = vmax.xlane.f32.xlu0 %v1842
        %v2575 = vpop.xlane.xlu0 %2574
        %2576 = vmax.xlane.f32.xlu0 %v1847
        %v2577 = vpop.xlane.xlu0 %2576
        %2578 = vmax.xlane.f32.xlu0 %v1852
        %v2579 = vpop.xlane.xlu0 %2578
        %2580 = vmax.xlane.f32.xlu0 %v1857
        %v2581 = vpop.xlane.xlu0 %2580
        %2582 = vmax.xlane.f32.xlu0 %v1862
        %v2583 = vpop.xlane.xlu0 %2582
        %2584 = vmax.xlane.f32.xlu0 %v1867
        %v2585 = vpop.xlane.xlu0 %2584
        %2586 = vmax.xlane.f32.xlu0 %v1872
        %v2587 = vpop.xlane.xlu0 %2586
        %2588 = vmax.xlane.f32.xlu0 %v1877
        %v2589 = vpop.xlane.xlu0 %2588
        %2590 = vmax.xlane.f32.xlu0 %v1882
        %v2591 = vpop.xlane.xlu0 %2590
        %2592 = vmax.xlane.f32.xlu0 %v2032
        %v2593 = vpop.xlane.xlu0 %2592
        %2594 = vmax.xlane.f32.xlu0 %v2037
        %v2595 = vpop.xlane.xlu0 %2594
        %2596 = vmax.xlane.f32.xlu0 %v2042
        %v2597 = vpop.xlane.xlu0 %2596
        %2598 = vmax.xlane.f32.xlu0 %v2047
        %v2599 = vpop.xlane.xlu0 %2598
        %2600 = vmax.xlane.f32.xlu0 %v2052
        %v2601 = vpop.xlane.xlu0 %2600
        %2602 = vmax.xlane.f32.xlu0 %v2057
        %v2603 = vpop.xlane.xlu0 %2602
        %2604 = vmax.xlane.f32.xlu0 %v2062
        %v2605 = vpop.xlane.xlu0 %2604
        %2606 = vmax.xlane.f32.xlu0 %v2067
        %v2607 = vpop.xlane.xlu0 %2606
        %2608 = vmax.xlane.f32.xlu0 %v2072
        %v2609 = vpop.xlane.xlu0 %2608
        %2610 = vmax.xlane.f32.xlu0 %v2077
        %v2611 = vpop.xlane.xlu0 %2610
        %2612 = vmax.xlane.f32.xlu0 %v2082
        %v2613 = vpop.xlane.xlu0 %2612
        %2614 = vmax.xlane.f32.xlu0 %v2087
        %v2615 = vpop.xlane.xlu0 %2614
        %2616 = vmax.xlane.f32.xlu0 %v2092
        %v2617 = vpop.xlane.xlu0 %2616
        %2618 = vmax.xlane.f32.xlu0 %v2097
        %v2619 = vpop.xlane.xlu0 %2618
        %2620 = vmax.xlane.f32.xlu0 %v2102
        %v2621 = vpop.xlane.xlu0 %2620
        %2622 = vmax.xlane.f32.xlu0 %v2107
        %v2623 = vpop.xlane.xlu0 %2622
        %2624 = vmax.xlane.f32.xlu0 %v2257
        %v2625 = vpop.xlane.xlu0 %2624
        %2626 = vmax.xlane.f32.xlu0 %v2262
        %v2627 = vpop.xlane.xlu0 %2626
        %2628 = vmax.xlane.f32.xlu0 %v2267
        %v2629 = vpop.xlane.xlu0 %2628
        %2630 = vmax.xlane.f32.xlu0 %v2272
        %v2631 = vpop.xlane.xlu0 %2630
        %2632 = vmax.xlane.f32.xlu0 %v2277
        %v2633 = vpop.xlane.xlu0 %2632
        %2634 = vmax.xlane.f32.xlu0 %v2282
        %v2635 = vpop.xlane.xlu0 %2634
        %2636 = vmax.xlane.f32.xlu0 %v2287
        %v2637 = vpop.xlane.xlu0 %2636
        %2638 = vmax.xlane.f32.xlu0 %v2292
        %v2639 = vpop.xlane.xlu0 %2638
        %2640 = vmax.xlane.f32.xlu0 %v2297
        %v2641 = vpop.xlane.xlu0 %2640
        %2642 = vmax.xlane.f32.xlu0 %v2302
        %v2643 = vpop.xlane.xlu0 %2642
        %2644 = vmax.xlane.f32.xlu0 %v2307
        %v2645 = vpop.xlane.xlu0 %2644
        %2646 = vmax.xlane.f32.xlu0 %v2312
        %v2647 = vpop.xlane.xlu0 %2646
        %2648 = vmax.xlane.f32.xlu0 %v2317
        %v2649 = vpop.xlane.xlu0 %2648
        %2650 = vmax.xlane.f32.xlu0 %v2322
        %v2651 = vpop.xlane.xlu0 %2650
        %2652 = vmax.xlane.f32.xlu0 %v2327
        %v2653 = vpop.xlane.xlu0 %2652
        %2654 = vmax.xlane.f32.xlu0 %v2332
        %v2655 = vpop.xlane.xlu0 %2654
        %2656 = vmax.xlane.f32.xlu0 %v2482
        %v2657 = vpop.xlane.xlu0 %2656
        %2658 = vmax.xlane.f32.xlu0 %v2487
        %v2659 = vpop.xlane.xlu0 %2658
        %2660 = vmax.xlane.f32.xlu0 %v2492
        %v2661 = vpop.xlane.xlu0 %2660
        %2662 = vmax.xlane.f32.xlu0 %v2497
        %v2663 = vpop.xlane.xlu0 %2662
        %2664 = vmax.xlane.f32.xlu0 %v2502
        %v2665 = vpop.xlane.xlu0 %2664
        %2666 = vmax.xlane.f32.xlu0 %v2507
        %v2667 = vpop.xlane.xlu0 %2666
        %2668 = vmax.xlane.f32.xlu0 %v2512
        %v2669 = vpop.xlane.xlu0 %2668
        %2670 = vmax.xlane.f32.xlu0 %v2517
        %v2671 = vpop.xlane.xlu0 %2670
        %2672 = vmax.xlane.f32.xlu0 %v2522
        %v2673 = vpop.xlane.xlu0 %2672
        %2674 = vmax.xlane.f32.xlu0 %v2527
        %v2675 = vpop.xlane.xlu0 %2674
        %2676 = vmax.xlane.f32.xlu0 %v2532
        %v2677 = vpop.xlane.xlu0 %2676
        %2678 = vmax.xlane.f32.xlu0 %v2537
        %v2679 = vpop.xlane.xlu0 %2678
        %2680 = vmax.xlane.f32.xlu0 %v2542
        %v2681 = vpop.xlane.xlu0 %2680
        %2682 = vmax.xlane.f32.xlu0 %v2547
        %v2683 = vpop.xlane.xlu0 %2682
        %2684 = vmax.xlane.f32.xlu0 %v2552
        %v2685 = vpop.xlane.xlu0 %2684
        %2686 = vmax.xlane.f32.xlu0 %v2557
        %v2687 = vpop.xlane.xlu0 %2686
        %v2688 = vsub.f32 %v1807, %v2561
        %v2689 = vsub.f32 %v1812, %v2563
        %v2690 = vsub.f32 %v1817, %v2565
        %v2691 = vsub.f32 %v1822, %v2567
        %v2692 = vsub.f32 %v1827, %v2569
        %v2693 = vsub.f32 %v1832, %v2571
        %v2694 = vsub.f32 %v1837, %v2573
        %v2695 = vsub.f32 %v1842, %v2575
        %v2696 = vsub.f32 %v1847, %v2577
        %v2697 = vsub.f32 %v1852, %v2579
        %v2698 = vsub.f32 %v1857, %v2581
        %v2699 = vsub.f32 %v1862, %v2583
        %v2700 = vsub.f32 %v1867, %v2585
        %v2701 = vsub.f32 %v1872, %v2587
        %v2702 = vsub.f32 %v1877, %v2589
        %v2703 = vsub.f32 %v1882, %v2591
        %v2704 = vsub.f32 %v2032, %v2593
        %v2705 = vsub.f32 %v2037, %v2595
        %v2706 = vsub.f32 %v2042, %v2597
        %v2707 = vsub.f32 %v2047, %v2599
        %v2708 = vsub.f32 %v2052, %v2601
        %v2709 = vsub.f32 %v2057, %v2603
        %v2710 = vsub.f32 %v2062, %v2605
        %v2711 = vsub.f32 %v2067, %v2607
        %v2712 = vsub.f32 %v2072, %v2609
        %v2713 = vsub.f32 %v2077, %v2611
        %v2714 = vsub.f32 %v2082, %v2613
        %v2715 = vsub.f32 %v2087, %v2615
        %v2716 = vsub.f32 %v2092, %v2617
        %v2717 = vsub.f32 %v2097, %v2619
        %v2718 = vsub.f32 %v2102, %v2621
        %v2719 = vsub.f32 %v2107, %v2623
        %v2720 = vsub.f32 %v2257, %v2625
        %v2721 = vsub.f32 %v2262, %v2627
        %v2722 = vsub.f32 %v2267, %v2629
        %v2723 = vsub.f32 %v2272, %v2631
        %v2724 = vsub.f32 %v2277, %v2633
        %v2725 = vsub.f32 %v2282, %v2635
        %v2726 = vsub.f32 %v2287, %v2637
        %v2727 = vsub.f32 %v2292, %v2639
        %v2728 = vsub.f32 %v2297, %v2641
        %v2729 = vsub.f32 %v2302, %v2643
        %v2730 = vsub.f32 %v2307, %v2645
        %v2731 = vsub.f32 %v2312, %v2647
        %v2732 = vsub.f32 %v2317, %v2649
        %v2733 = vsub.f32 %v2322, %v2651
        %v2734 = vsub.f32 %v2327, %v2653
        %v2735 = vsub.f32 %v2332, %v2655
        %v2736 = vsub.f32 %v2482, %v2657
        %v2737 = vsub.f32 %v2487, %v2659
        %v2738 = vsub.f32 %v2492, %v2661
        %v2739 = vsub.f32 %v2497, %v2663
        %v2740 = vsub.f32 %v2502, %v2665
        %v2741 = vsub.f32 %v2507, %v2667
        %v2742 = vsub.f32 %v2512, %v2669
        %v2743 = vsub.f32 %v2517, %v2671
        %v2744 = vsub.f32 %v2522, %v2673
        %v2745 = vsub.f32 %v2527, %v2675
        %v2746 = vsub.f32 %v2532, %v2677
        %v2747 = vsub.f32 %v2537, %v2679
        %v2748 = vsub.f32 %v2542, %v2681
        %v2749 = vsub.f32 %v2547, %v2683
        %v2750 = vsub.f32 %v2552, %v2685
        %v2751 = vsub.f32 %v2557, %v2687
        %v2752 = vmul.f32 %v2688, 1.442695
        %v2753 = vpow.pop %v2752
        %v2754 = vmul.f32 %v2689, 1.442695
        %v2755 = vpow.pop %v2754
        %v2756 = vmul.f32 %v2690, 1.442695
        %v2757 = vpow.pop %v2756
        %v2758 = vmul.f32 %v2691, 1.442695
        %v2759 = vpow.pop %v2758
        %v2760 = vmul.f32 %v2692, 1.442695
        %v2761 = vpow.pop %v2760
        %v2762 = vmul.f32 %v2693, 1.442695
        %v2763 = vpow.pop %v2762
        %v2764 = vmul.f32 %v2694, 1.442695
        %v2765 = vpow.pop %v2764
        %v2766 = vmul.f32 %v2695, 1.442695
        %v2767 = vpow.pop %v2766
        %v2768 = vmul.f32 %v2696, 1.442695
        %v2769 = vpow.pop %v2768
        %v2770 = vmul.f32 %v2697, 1.442695
        %v2771 = vpow.pop %v2770
        %v2772 = vmul.f32 %v2698, 1.442695
        %v2773 = vpow.pop %v2772
        %v2774 = vmul.f32 %v2699, 1.442695
        %v2775 = vpow.pop %v2774
        %v2776 = vmul.f32 %v2700, 1.442695
        %v2777 = vpow.pop %v2776
        %v2778 = vmul.f32 %v2701, 1.442695
        %v2779 = vpow.pop %v2778
        %v2780 = vmul.f32 %v2702, 1.442695
        %v2781 = vpow.pop %v2780
        %v2782 = vmul.f32 %v2703, 1.442695
        %v2783 = vpow.pop %v2782
        %v2784 = vmul.f32 %v2704, 1.442695
        %v2785 = vpow.pop %v2784
        %v2786 = vmul.f32 %v2705, 1.442695
        %v2787 = vpow.pop %v2786
        %v2788 = vmul.f32 %v2706, 1.442695
        %v2789 = vpow.pop %v2788
        %v2790 = vmul.f32 %v2707, 1.442695
        %v2791 = vpow.pop %v2790
        %v2792 = vmul.f32 %v2708, 1.442695
        %v2793 = vpow.pop %v2792
        %v2794 = vmul.f32 %v2709, 1.442695
        %v2795 = vpow.pop %v2794
        %v2796 = vmul.f32 %v2710, 1.442695
        %v2797 = vpow.pop %v2796
        %v2798 = vmul.f32 %v2711, 1.442695
        %v2799 = vpow.pop %v2798
        %v2800 = vmul.f32 %v2712, 1.442695
        %v2801 = vpow.pop %v2800
        %v2802 = vmul.f32 %v2713, 1.442695
        %v2803 = vpow.pop %v2802
        %v2804 = vmul.f32 %v2714, 1.442695
        %v2805 = vpow.pop %v2804
        %v2806 = vmul.f32 %v2715, 1.442695
        %v2807 = vpow.pop %v2806
        %v2808 = vmul.f32 %v2716, 1.442695
        %v2809 = vpow.pop %v2808
        %v2810 = vmul.f32 %v2717, 1.442695
        %v2811 = vpow.pop %v2810
        %v2812 = vmul.f32 %v2718, 1.442695
        %v2813 = vpow.pop %v2812
        %v2814 = vmul.f32 %v2719, 1.442695
        %v2815 = vpow.pop %v2814
        %v2816 = vmul.f32 %v2720, 1.442695
        %v2817 = vpow.pop %v2816
        %v2818 = vmul.f32 %v2721, 1.442695
        %v2819 = vpow.pop %v2818
        %v2820 = vmul.f32 %v2722, 1.442695
        %v2821 = vpow.pop %v2820
        %v2822 = vmul.f32 %v2723, 1.442695
        %v2823 = vpow.pop %v2822
        %v2824 = vmul.f32 %v2724, 1.442695
        %v2825 = vpow.pop %v2824
        %v2826 = vmul.f32 %v2725, 1.442695
        %v2827 = vpow.pop %v2826
        %v2828 = vmul.f32 %v2726, 1.442695
        %v2829 = vpow.pop %v2828
        %v2830 = vmul.f32 %v2727, 1.442695
        %v2831 = vpow.pop %v2830
        %v2832 = vmul.f32 %v2728, 1.442695
        %v2833 = vpow.pop %v2832
        %v2834 = vmul.f32 %v2729, 1.442695
        %v2835 = vpow.pop %v2834
        %v2836 = vmul.f32 %v2730, 1.442695
        %v2837 = vpow.pop %v2836
        %v2838 = vmul.f32 %v2731, 1.442695
        %v2839 = vpow.pop %v2838
        %v2840 = vmul.f32 %v2732, 1.442695
        %v2841 = vpow.pop %v2840
        %v2842 = vmul.f32 %v2733, 1.442695
        %v2843 = vpow.pop %v2842
        %v2844 = vmul.f32 %v2734, 1.442695
        %v2845 = vpow.pop %v2844
        %v2846 = vmul.f32 %v2735, 1.442695
        %v2847 = vpow.pop %v2846
        %v2848 = vmul.f32 %v2736, 1.442695
        %v2849 = vpow.pop %v2848
        %v2850 = vmul.f32 %v2737, 1.442695
        %v2851 = vpow.pop %v2850
        %v2852 = vmul.f32 %v2738, 1.442695
        %v2853 = vpow.pop %v2852
        %v2854 = vmul.f32 %v2739, 1.442695
        %v2855 = vpow.pop %v2854
        %v2856 = vmul.f32 %v2740, 1.442695
        %v2857 = vpow.pop %v2856
        %v2858 = vmul.f32 %v2741, 1.442695
        %v2859 = vpow.pop %v2858
        %v2860 = vmul.f32 %v2742, 1.442695
        %v2861 = vpow.pop %v2860
        %v2862 = vmul.f32 %v2743, 1.442695
        %v2863 = vpow.pop %v2862
        %v2864 = vmul.f32 %v2744, 1.442695
        %v2865 = vpow.pop %v2864
        %v2866 = vmul.f32 %v2745, 1.442695
        %v2867 = vpow.pop %v2866
        %v2868 = vmul.f32 %v2746, 1.442695
        %v2869 = vpow.pop %v2868
        %v2870 = vmul.f32 %v2747, 1.442695
        %v2871 = vpow.pop %v2870
        %v2872 = vmul.f32 %v2748, 1.442695
        %v2873 = vpow.pop %v2872
        %v2874 = vmul.f32 %v2749, 1.442695
        %v2875 = vpow.pop %v2874
        %v2876 = vmul.f32 %v2750, 1.442695
        %v2877 = vpow.pop %v2876
        %v2878 = vmul.f32 %v2751, 1.442695
        %v2879 = vpow.pop %v2878
        %2880 = vadd.xlane.f32.xlu0 %v2753
        %v2881 = vpop.xlane.xlu0 %2880
        %2882 = vadd.xlane.f32.xlu0 %v2755
        %v2883 = vpop.xlane.xlu0 %2882
        %2884 = vadd.xlane.f32.xlu0 %v2757
        %v2885 = vpop.xlane.xlu0 %2884
        %2886 = vadd.xlane.f32.xlu0 %v2759
        %v2887 = vpop.xlane.xlu0 %2886
        %2888 = vadd.xlane.f32.xlu0 %v2761
        %v2889 = vpop.xlane.xlu0 %2888
        %2890 = vadd.xlane.f32.xlu0 %v2763
        %v2891 = vpop.xlane.xlu0 %2890
        %2892 = vadd.xlane.f32.xlu0 %v2765
        %v2893 = vpop.xlane.xlu0 %2892
        %2894 = vadd.xlane.f32.xlu0 %v2767
        %v2895 = vpop.xlane.xlu0 %2894
        %2896 = vadd.xlane.f32.xlu0 %v2769
        %v2897 = vpop.xlane.xlu0 %2896
        %2898 = vadd.xlane.f32.xlu0 %v2771
        %v2899 = vpop.xlane.xlu0 %2898
        %2900 = vadd.xlane.f32.xlu0 %v2773
        %v2901 = vpop.xlane.xlu0 %2900
        %2902 = vadd.xlane.f32.xlu0 %v2775
        %v2903 = vpop.xlane.xlu0 %2902
        %2904 = vadd.xlane.f32.xlu0 %v2777
        %v2905 = vpop.xlane.xlu0 %2904
        %2906 = vadd.xlane.f32.xlu0 %v2779
        %v2907 = vpop.xlane.xlu0 %2906
        %2908 = vadd.xlane.f32.xlu0 %v2781
        %v2909 = vpop.xlane.xlu0 %2908
        %2910 = vadd.xlane.f32.xlu0 %v2783
        %v2911 = vpop.xlane.xlu0 %2910
        %2912 = vadd.xlane.f32.xlu0 %v2785
        %v2913 = vpop.xlane.xlu0 %2912
        %2914 = vadd.xlane.f32.xlu0 %v2787
        %v2915 = vpop.xlane.xlu0 %2914
        %2916 = vadd.xlane.f32.xlu0 %v2789
        %v2917 = vpop.xlane.xlu0 %2916
        %2918 = vadd.xlane.f32.xlu0 %v2791
        %v2919 = vpop.xlane.xlu0 %2918
        %2920 = vadd.xlane.f32.xlu0 %v2793
        %v2921 = vpop.xlane.xlu0 %2920
        %2922 = vadd.xlane.f32.xlu0 %v2795
        %v2923 = vpop.xlane.xlu0 %2922
        %2924 = vadd.xlane.f32.xlu0 %v2797
        %v2925 = vpop.xlane.xlu0 %2924
        %2926 = vadd.xlane.f32.xlu0 %v2799
        %v2927 = vpop.xlane.xlu0 %2926
        %2928 = vadd.xlane.f32.xlu0 %v2801
        %v2929 = vpop.xlane.xlu0 %2928
        %2930 = vadd.xlane.f32.xlu0 %v2803
        %v2931 = vpop.xlane.xlu0 %2930
        %2932 = vadd.xlane.f32.xlu0 %v2805
        %v2933 = vpop.xlane.xlu0 %2932
        %2934 = vadd.xlane.f32.xlu0 %v2807
        %v2935 = vpop.xlane.xlu0 %2934
        %2936 = vadd.xlane.f32.xlu0 %v2809
        %v2937 = vpop.xlane.xlu0 %2936
        %2938 = vadd.xlane.f32.xlu0 %v2811
        %v2939 = vpop.xlane.xlu0 %2938
        %2940 = vadd.xlane.f32.xlu0 %v2813
        %v2941 = vpop.xlane.xlu0 %2940
        %2942 = vadd.xlane.f32.xlu0 %v2815
        %v2943 = vpop.xlane.xlu0 %2942
        %2944 = vadd.xlane.f32.xlu0 %v2817
        %v2945 = vpop.xlane.xlu0 %2944
        %2946 = vadd.xlane.f32.xlu0 %v2819
        %v2947 = vpop.xlane.xlu0 %2946
        %2948 = vadd.xlane.f32.xlu0 %v2821
        %v2949 = vpop.xlane.xlu0 %2948
        %2950 = vadd.xlane.f32.xlu0 %v2823
        %v2951 = vpop.xlane.xlu0 %2950
        %2952 = vadd.xlane.f32.xlu0 %v2825
        %v2953 = vpop.xlane.xlu0 %2952
        %2954 = vadd.xlane.f32.xlu0 %v2827
        %v2955 = vpop.xlane.xlu0 %2954
        %2956 = vadd.xlane.f32.xlu0 %v2829
        %v2957 = vpop.xlane.xlu0 %2956
        %2958 = vadd.xlane.f32.xlu0 %v2831
        %v2959 = vpop.xlane.xlu0 %2958
        %2960 = vadd.xlane.f32.xlu0 %v2833
        %v2961 = vpop.xlane.xlu0 %2960
        %2962 = vadd.xlane.f32.xlu0 %v2835
        %v2963 = vpop.xlane.xlu0 %2962
        %2964 = vadd.xlane.f32.xlu0 %v2837
        %v2965 = vpop.xlane.xlu0 %2964
        %2966 = vadd.xlane.f32.xlu0 %v2839
        %v2967 = vpop.xlane.xlu0 %2966
        %2968 = vadd.xlane.f32.xlu0 %v2841
        %v2969 = vpop.xlane.xlu0 %2968
        %2970 = vadd.xlane.f32.xlu0 %v2843
        %v2971 = vpop.xlane.xlu0 %2970
        %2972 = vadd.xlane.f32.xlu0 %v2845
        %v2973 = vpop.xlane.xlu0 %2972
        %2974 = vadd.xlane.f32.xlu0 %v2847
        %v2975 = vpop.xlane.xlu0 %2974
        %2976 = vadd.xlane.f32.xlu0 %v2849
        %v2977 = vpop.xlane.xlu0 %2976
        %2978 = vadd.xlane.f32.xlu0 %v2851
        %v2979 = vpop.xlane.xlu0 %2978
        %2980 = vadd.xlane.f32.xlu0 %v2853
        %v2981 = vpop.xlane.xlu0 %2980
        %2982 = vadd.xlane.f32.xlu0 %v2855
        %v2983 = vpop.xlane.xlu0 %2982
        %2984 = vadd.xlane.f32.xlu0 %v2857
        %v2985 = vpop.xlane.xlu0 %2984
        %2986 = vadd.xlane.f32.xlu0 %v2859
        %v2987 = vpop.xlane.xlu0 %2986
        %2988 = vadd.xlane.f32.xlu0 %v2861
        %v2989 = vpop.xlane.xlu0 %2988
        %2990 = vadd.xlane.f32.xlu0 %v2863
        %v2991 = vpop.xlane.xlu0 %2990
        %2992 = vadd.xlane.f32.xlu0 %v2865
        %v2993 = vpop.xlane.xlu0 %2992
        %2994 = vadd.xlane.f32.xlu0 %v2867
        %v2995 = vpop.xlane.xlu0 %2994
        %2996 = vadd.xlane.f32.xlu0 %v2869
        %v2997 = vpop.xlane.xlu0 %2996
        %2998 = vadd.xlane.f32.xlu0 %v2871
        %v2999 = vpop.xlane.xlu0 %2998
        %3000 = vadd.xlane.f32.xlu0 %v2873
        %v3001 = vpop.xlane.xlu0 %3000
        %3002 = vadd.xlane.f32.xlu0 %v2875
        %v3003 = vpop.xlane.xlu0 %3002
        %3004 = vadd.xlane.f32.xlu0 %v2877
        %v3005 = vpop.xlane.xlu0 %3004
        %3006 = vadd.xlane.f32.xlu0 %v2879
        %v3007 = vpop.xlane.xlu0 %3006
        %v3008 = vrcp.pop %v2881
        %v3009 = vrcp.pop %v2883
        %v3010 = vrcp.pop %v2885
        %v3011 = vrcp.pop %v2887
        %v3012 = vrcp.pop %v2889
        %v3013 = vrcp.pop %v2891
        %v3014 = vrcp.pop %v2893
        %v3015 = vrcp.pop %v2895
        %v3016 = vrcp.pop %v2897
        %v3017 = vrcp.pop %v2899
        %v3018 = vrcp.pop %v2901
        %v3019 = vrcp.pop %v2903
        %v3020 = vrcp.pop %v2905
        %v3021 = vrcp.pop %v2907
        %v3022 = vrcp.pop %v2909
        %v3023 = vrcp.pop %v2911
        %v3024 = vrcp.pop %v2913
        %v3025 = vrcp.pop %v2915
        %v3026 = vrcp.pop %v2917
        %v3027 = vrcp.pop %v2919
        %v3028 = vrcp.pop %v2921
        %v3029 = vrcp.pop %v2923
        %v3030 = vrcp.pop %v2925
        %v3031 = vrcp.pop %v2927
        %v3032 = vrcp.pop %v2929
        %v3033 = vrcp.pop %v2931
        %v3034 = vrcp.pop %v2933
        %v3035 = vrcp.pop %v2935
        %v3036 = vrcp.pop %v2937
        %v3037 = vrcp.pop %v2939
        %v3038 = vrcp.pop %v2941
        %v3039 = vrcp.pop %v2943
        %v3040 = vrcp.pop %v2945
        %v3041 = vrcp.pop %v2947
        %v3042 = vrcp.pop %v2949
        %v3043 = vrcp.pop %v2951
        %v3044 = vrcp.pop %v2953
        %v3045 = vrcp.pop %v2955
        %v3046 = vrcp.pop %v2957
        %v3047 = vrcp.pop %v2959
        %v3048 = vrcp.pop %v2961
        %v3049 = vrcp.pop %v2963
        %v3050 = vrcp.pop %v2965
        %v3051 = vrcp.pop %v2967
        %v3052 = vrcp.pop %v2969
        %v3053 = vrcp.pop %v2971
        %v3054 = vrcp.pop %v2973
        %v3055 = vrcp.pop %v2975
        %v3056 = vrcp.pop %v2977
        %v3057 = vrcp.pop %v2979
        %v3058 = vrcp.pop %v2981
        %v3059 = vrcp.pop %v2983
        %v3060 = vrcp.pop %v2985
        %v3061 = vrcp.pop %v2987
        %v3062 = vrcp.pop %v2989
        %v3063 = vrcp.pop %v2991
        %v3064 = vrcp.pop %v2993
        %v3065 = vrcp.pop %v2995
        %v3066 = vrcp.pop %v2997
        %v3067 = vrcp.pop %v2999
        %v3068 = vrcp.pop %v3001
        %v3069 = vrcp.pop %v3003
        %v3070 = vrcp.pop %v3005
        %v3071 = vrcp.pop %v3007
        %v3072 = vmul.f32 %v2753, %v3008
        %v3073 = vmul.f32 %v2755, %v3009
        %v3074 = vmul.f32 %v2757, %v3010
        %v3075 = vmul.f32 %v2759, %v3011
        %v3076 = vmul.f32 %v2761, %v3012
        %v3077 = vmul.f32 %v2763, %v3013
        %v3078 = vmul.f32 %v2765, %v3014
        %v3079 = vmul.f32 %v2767, %v3015
        %v3080 = vmul.f32 %v2769, %v3016
        %v3081 = vmul.f32 %v2771, %v3017
        %v3082 = vmul.f32 %v2773, %v3018
        %v3083 = vmul.f32 %v2775, %v3019
        %v3084 = vmul.f32 %v2777, %v3020
        %v3085 = vmul.f32 %v2779, %v3021
        %v3086 = vmul.f32 %v2781, %v3022
        %v3087 = vmul.f32 %v2783, %v3023
        %v3088 = vmul.f32 %v2785, %v3024
        %v3089 = vmul.f32 %v2787, %v3025
        %v3090 = vmul.f32 %v2789, %v3026
        %v3091 = vmul.f32 %v2791, %v3027
        %v3092 = vmul.f32 %v2793, %v3028
        %v3093 = vmul.f32 %v2795, %v3029
        %v3094 = vmul.f32 %v2797, %v3030
        %v3095 = vmul.f32 %v2799, %v3031
        %v3096 = vmul.f32 %v2801, %v3032
        %v3097 = vmul.f32 %v2803, %v3033
        %v3098 = vmul.f32 %v2805, %v3034
        %v3099 = vmul.f32 %v2807, %v3035
        %v3100 = vmul.f32 %v2809, %v3036
        %v3101 = vmul.f32 %v2811, %v3037
        %v3102 = vmul.f32 %v2813, %v3038
        %v3103 = vmul.f32 %v2815, %v3039
        %v3104 = vmul.f32 %v2817, %v3040
        %v3105 = vmul.f32 %v2819, %v3041
        %v3106 = vmul.f32 %v2821, %v3042
        %v3107 = vmul.f32 %v2823, %v3043
        %v3108 = vmul.f32 %v2825, %v3044
        %v3109 = vmul.f32 %v2827, %v3045
        %v3110 = vmul.f32 %v2829, %v3046
        %v3111 = vmul.f32 %v2831, %v3047
        %v3112 = vmul.f32 %v2833, %v3048
        %v3113 = vmul.f32 %v2835, %v3049
        %v3114 = vmul.f32 %v2837, %v3050
        %v3115 = vmul.f32 %v2839, %v3051
        %v3116 = vmul.f32 %v2841, %v3052
        %v3117 = vmul.f32 %v2843, %v3053
        %v3118 = vmul.f32 %v2845, %v3054
        %v3119 = vmul.f32 %v2847, %v3055
        %v3120 = vmul.f32 %v2849, %v3056
        %v3121 = vmul.f32 %v2851, %v3057
        %v3122 = vmul.f32 %v2853, %v3058
        %v3123 = vmul.f32 %v2855, %v3059
        %v3124 = vmul.f32 %v2857, %v3060
        %v3125 = vmul.f32 %v2859, %v3061
        %v3126 = vmul.f32 %v2861, %v3062
        %v3127 = vmul.f32 %v2863, %v3063
        %v3128 = vmul.f32 %v2865, %v3064
        %v3129 = vmul.f32 %v2867, %v3065
        %v3130 = vmul.f32 %v2869, %v3066
        %v3131 = vmul.f32 %v2871, %v3067
        %v3132 = vmul.f32 %v2873, %v3068
        %v3133 = vmul.f32 %v2875, %v3069
        %v3134 = vmul.f32 %v2877, %v3070
        %v3135 = vmul.f32 %v2879, %v3071
        %v3136 = vld [vmem:[#allocation3] sm:$0xff]
        %v3137 = vld [vmem:[#allocation3 + $0x8] sm:$0xff]
        %v3138 = vld [vmem:[#allocation3 + $0x10] sm:$0xff]
        %v3139 = vld [vmem:[#allocation3 + $0x18] sm:$0xff]
        %v3140 = vld [vmem:[#allocation3 + $0x20] sm:$0xff]
        %v3141 = vld [vmem:[#allocation3 + $0x28] sm:$0xff]
        %v3142 = vld [vmem:[#allocation3 + $0x30] sm:$0xff]
        %v3143 = vld [vmem:[#allocation3 + $0x38] sm:$0xff]
        %v3144 = vld [vmem:[#allocation3 + $0x40] sm:$0xff]
        %v3145 = vld [vmem:[#allocation3 + $0x48] sm:$0xff]
        %v3146 = vld [vmem:[#allocation3 + $0x50] sm:$0xff]
        %v3147 = vld [vmem:[#allocation3 + $0x58] sm:$0xff]
        %v3148 = vld [vmem:[#allocation3 + $0x60] sm:$0xff]
        %v3149 = vld [vmem:[#allocation3 + $0x68] sm:$0xff]
        %v3150 = vld [vmem:[#allocation3 + $0x70] sm:$0xff]
        %v3151 = vld [vmem:[#allocation3 + $0x78] sm:$0xff]
        %v3152 = vld [vmem:[#allocation3 + $0x80] sm:$0xff]
        %v3153 = vld [vmem:[#allocation3 + $0x88] sm:$0xff]
        %v3154 = vld [vmem:[#allocation3 + $0x90] sm:$0xff]
        %v3155 = vld [vmem:[#allocation3 + $0x98] sm:$0xff]
        %v3156 = vld [vmem:[#allocation3 + $0xa0] sm:$0xff]
        %v3157 = vld [vmem:[#allocation3 + $0xa8] sm:$0xff]
        %v3158 = vld [vmem:[#allocation3 + $0xb0] sm:$0xff]
        %v3159 = vld [vmem:[#allocation3 + $0xb8] sm:$0xff]
        %v3160 = vld [vmem:[#allocation3 + $0xc0] sm:$0xff]
        %v3161 = vld [vmem:[#allocation3 + $0xc8] sm:$0xff]
        %v3162 = vld [vmem:[#allocation3 + $0xd0] sm:$0xff]
        %v3163 = vld [vmem:[#allocation3 + $0xd8] sm:$0xff]
        %v3164 = vld [vmem:[#allocation3 + $0xe0] sm:$0xff]
        %v3165 = vld [vmem:[#allocation3 + $0xe8] sm:$0xff]
        %v3166 = vld [vmem:[#allocation3 + $0xf0] sm:$0xff]
        %v3167 = vld [vmem:[#allocation3 + $0xf8] sm:$0xff]
        %v3168 = vld [vmem:[#allocation3 + $0x100] sm:$0xff]
        %v3169 = vld [vmem:[#allocation3 + $0x108] sm:$0xff]
        %v3170 = vld [vmem:[#allocation3 + $0x110] sm:$0xff]
        %v3171 = vld [vmem:[#allocation3 + $0x118] sm:$0xff]
        %v3172 = vld [vmem:[#allocation3 + $0x120] sm:$0xff]
        %v3173 = vld [vmem:[#allocation3 + $0x128] sm:$0xff]
        %v3174 = vld [vmem:[#allocation3 + $0x130] sm:$0xff]
        %v3175 = vld [vmem:[#allocation3 + $0x138] sm:$0xff]
        %v3176 = vld [vmem:[#allocation3 + $0x140] sm:$0xff]
        %v3177 = vld [vmem:[#allocation3 + $0x148] sm:$0xff]
        %v3178 = vld [vmem:[#allocation3 + $0x150] sm:$0xff]
        %v3179 = vld [vmem:[#allocation3 + $0x158] sm:$0xff]
        %v3180 = vld [vmem:[#allocation3 + $0x160] sm:$0xff]
        %v3181 = vld [vmem:[#allocation3 + $0x168] sm:$0xff]
        %v3182 = vld [vmem:[#allocation3 + $0x170] sm:$0xff]
        %v3183 = vld [vmem:[#allocation3 + $0x178] sm:$0xff]
        %v3184 = vld [vmem:[#allocation3 + $0x180] sm:$0xff]
        %v3185 = vld [vmem:[#allocation3 + $0x188] sm:$0xff]
        %v3186 = vld [vmem:[#allocation3 + $0x190] sm:$0xff]
        %v3187 = vld [vmem:[#allocation3 + $0x198] sm:$0xff]
        %v3188 = vld [vmem:[#allocation3 + $0x1a0] sm:$0xff]
        %v3189 = vld [vmem:[#allocation3 + $0x1a8] sm:$0xff]
        %v3190 = vld [vmem:[#allocation3 + $0x1b0] sm:$0xff]
        %v3191 = vld [vmem:[#allocation3 + $0x1b8] sm:$0xff]
        %v3192 = vld [vmem:[#allocation3 + $0x1c0] sm:$0xff]
        %v3193 = vld [vmem:[#allocation3 + $0x1c8] sm:$0xff]
        %v3194 = vld [vmem:[#allocation3 + $0x1d0] sm:$0xff]
        %v3195 = vld [vmem:[#allocation3 + $0x1d8] sm:$0xff]
        %v3196 = vld [vmem:[#allocation3 + $0x1e0] sm:$0xff]
        %v3197 = vld [vmem:[#allocation3 + $0x1e8] sm:$0xff]
        %v3198 = vld [vmem:[#allocation3 + $0x1f0] sm:$0xff]
        %v3199 = vld [vmem:[#allocation3 + $0x1f8] sm:$0xff]
        %3200 = vmatprep.subr.mxu0 0.0
        %3201 = vmatpush1.msra.mxu0 %v3136
        %3202 = vmatprep.subr.mxu0 0.0
        %3203 = vmatpush1.msra.mxu0 %v3137
        %3204 = vmatprep.subr.mxu0 0.0
        %3205 = vmatpush1.msra.mxu0 %v3138
        %3206 = vmatprep.subr.mxu0 0.0
        %3207 = vmatpush1.msra.mxu0 %v3139
        %3208 = vmatprep.subr.mxu0 0.0
        %3209 = vmatpush1.msra.mxu0 %v3140
        %3210 = vmatprep.subr.mxu0 0.0
        %3211 = vmatpush1.msra.mxu0 %v3141
        %3212 = vmatprep.subr.mxu0 0.0
        %3213 = vmatpush1.msra.mxu0 %v3142
        %3214 = vmatprep.subr.mxu0 0.0
        %3215 = vmatpush1.msra.mxu0 %v3143
        %3216 = vmatprep.subr.mxu0 0.0
        %3217 = vmatpush1.msra.mxu0 %v3144
        %3218 = vmatprep.subr.mxu0 0.0
        %3219 = vmatpush1.msra.mxu0 %v3145
        %3220 = vmatprep.subr.mxu0 0.0
        %3221 = vmatpush1.msra.mxu0 %v3146
        %3222 = vmatprep.subr.mxu0 0.0
        %3223 = vmatpush1.msra.mxu0 %v3147
        %3224 = vmatprep.subr.mxu0 0.0
        %3225 = vmatpush1.msra.mxu0 %v3148
        %3226 = vmatprep.subr.mxu0 0.0
        %3227 = vmatpush1.msra.mxu0 %v3149
        %3228 = vmatprep.subr.mxu0 0.0
        %3229 = vmatpush1.msra.mxu0 %v3150
        %3230 = vmatprep.subr.mxu0 0.0
        %3231 = vmatpush1.msra.mxu0 %v3151
        %3232 = vmatprep.subr.mxu0 0.0
        %3233 = vmatpush1.msra.mxu0 0.0
        %3234 = vmatprep.subr.mxu0 0.0
        %3235 = vmatpush1.msra.mxu0 0.0
        %3236 = vmatprep.subr.mxu0 0.0
        %3237 = vmatpush1.msra.mxu0 0.0
        %3238 = vmatprep.subr.mxu0 0.0
        %3239 = vmatpush1.msra.mxu0 0.0
        %3240 = vmatprep.subr.mxu0 0.0
        %3241 = vmatpush1.msra.mxu0 0.0
        %3242 = vmatprep.subr.mxu0 0.0
        %3243 = vmatpush1.msra.mxu0 0.0
        %3244 = vmatprep.subr.mxu0 0.0
        %3245 = vmatpush1.msra.mxu0 0.0
        %3246 = vmatprep.subr.mxu0 0.0
        %3247 = vmatpush1.msra.mxu0 0.0
        %3248 = vmatprep.subr.mxu0 0.0
        %3249 = vmatpush1.msra.mxu0 0.0
        %3250 = vmatprep.subr.mxu0 0.0
        %3251 = vmatpush1.msra.mxu0 0.0
        %3252 = vmatprep.subr.mxu0 0.0
        %3253 = vmatpush1.msra.mxu0 0.0
        %3254 = vmatprep.subr.mxu0 0.0
        %3255 = vmatpush1.msra.mxu0 0.0
        %3256 = vmatprep.subr.mxu0 0.0
        %3257 = vmatpush1.msra.mxu0 0.0
        %3258 = vmatprep.subr.mxu0 0.0
        %3259 = vmatpush1.msra.mxu0 0.0
        %3260 = vmatprep.subr.mxu0 0.0
        %3261 = vmatpush1.msra.mxu0 0.0
        %3262 = vmatprep.subr.mxu0 0.0
        %3263 = vmatpush1.msra.mxu0 0.0
        %3264 = vmatprep.mubr.f32.mxu0 0.0
        %3265 = vmatmul.mubr.f32.gmra.mrb[0].mxu0 %v3072
        %v3266 = vpop.f32.mrb[0].mxu0
        %v3267 = vadd.f32 0.0, %v3266
        %v3268 = vpop.f32.mrb[0].mxu0
        %3269 = vmatprep.mubr.f32.mxu0 0.0
        %3270 = vmatmul.mubr.f32.gmra.mrb[0].mxu0 %v3073
        %v3271 = vpop.f32.mrb[0].mxu0
        %v3272 = vadd.f32 0.0, %v3271
        %v3273 = vpop.f32.mrb[0].mxu0
        %3274 = vmatprep.mubr.f32.mxu0 0.0
        %3275 = vmatmul.mubr.f32.gmra.mrb[0].mxu0 %v3074
        %v3276 = vpop.f32.mrb[0].mxu0
        %v3277 = vadd.f32 0.0, %v3276
        %v3278 = vpop.f32.mrb[0].mxu0
        %3279 = vmatprep.mubr.f32.mxu0 0.0
        %3280 = vmatmul.mubr.f32.gmra.mrb[0].mxu0 %v3075
        %v3281 = vpop.f32.mrb[0].mxu0
        %v3282 = vadd.f32 0.0, %v3281
        %v3283 = vpop.f32.mrb[0].mxu0
        %3284 = vmatprep.mubr.f32.mxu0 0.0
        %3285 = vmatmul.mubr.f32.gmra.mrb[0].mxu0 %v3076
        %v3286 = vpop.f32.mrb[0].mxu0
        %v3287 = vadd.f32 0.0, %v3286
        %v3288 = vpop.f32.mrb[0].mxu0
        %3289 = vmatprep.mubr.f32.mxu0 0.0
        %3290 = vmatmul.mubr.f32.gmra.mrb[0].mxu0 %v3077
        %v3291 = vpop.f32.mrb[0].mxu0
        %v3292 = vadd.f32 0.0, %v3291
        %v3293 = vpop.f32.mrb[0].mxu0
        %3294 = vmatprep.mubr.f32.mxu0 0.0
        %3295 = vmatmul.mubr.f32.gmra.mrb[0].mxu0 %v3078
        %v3296 = vpop.f32.mrb[0].mxu0
        %v3297 = vadd.f32 0.0, %v3296
        %v3298 = vpop.f32.mrb[0].mxu0
        %3299 = vmatprep.mubr.f32.mxu0 0.0
        %3300 = vmatmul.mubr.f32.gmra.mrb[0].mxu0 %v3079
        %v3301 = vpop.f32.mrb[0].mxu0
        %v3302 = vadd.f32 0.0, %v3301
        %v3303 = vpop.f32.mrb[0].mxu0
        %3304 = vmatprep.mubr.f32.mxu0 0.0
        %3305 = vmatmul.mubr.f32.gmra.mrb[0].mxu0 %v3080
        %v3306 = vpop.f32.mrb[0].mxu0
        %v3307 = vadd.f32 0.0, %v3306
        %v3308 = vpop.f32.mrb[0].mxu0
        %3309 = vmatprep.mubr.f32.mxu0 0.0
        %3310 = vmatmul.mubr.f32.gmra.mrb[0].mxu0 %v3081
        %v3311 = vpop.f32.mrb[0].mxu0
        %v3312 = vadd.f32 0.0, %v3311
        %v3313 = vpop.f32.mrb[0].mxu0
        %3314 = vmatprep.mubr.f32.mxu0 0.0
        %3315 = vmatmul.mubr.f32.gmra.mrb[0].mxu0 %v3082
        %v3316 = vpop.f32.mrb[0].mxu0
        %v3317 = vadd.f32 0.0, %v3316
        %v3318 = vpop.f32.mrb[0].mxu0
        %3319 = vmatprep.mubr.f32.mxu0 0.0
        %3320 = vmatmul.mubr.f32.gmra.mrb[0].mxu0 %v3083
        %v3321 = vpop.f32.mrb[0].mxu0
        %v3322 = vadd.f32 0.0, %v3321
        %v3323 = vpop.f32.mrb[0].mxu0
        %3324 = vmatprep.mubr.f32.mxu0 0.0
        %3325 = vmatmul.mubr.f32.gmra.mrb[0].mxu0 %v3084
        %v3326 = vpop.f32.mrb[0].mxu0
        %v3327 = vadd.f32 0.0, %v3326
        %v3328 = vpop.f32.mrb[0].mxu0
        %3329 = vmatprep.mubr.f32.mxu0 0.0
        %3330 = vmatmul.mubr.f32.gmra.mrb[0].mxu0 %v3085
        %v3331 = vpop.f32.mrb[0].mxu0
        %v3332 = vadd.f32 0.0, %v3331
        %v3333 = vpop.f32.mrb[0].mxu0
        %3334 = vmatprep.mubr.f32.mxu0 0.0
        %3335 = vmatmul.mubr.f32.gmra.mrb[0].mxu0 %v3086
        %v3336 = vpop.f32.mrb[0].mxu0
        %v3337 = vadd.f32 0.0, %v3336
        %v3338 = vpop.f32.mrb[0].mxu0
        %3339 = vmatprep.mubr.f32.mxu0 0.0
        %3340 = vmatmul.mubr.f32.gmra.mrb[0].mxu0 %v3087
        %v3341 = vpop.f32.mrb[0].mxu0
        %v3342 = vadd.f32 0.0, %v3341
        %v3343 = vpop.f32.mrb[0].mxu0
        %3344 = vdwg.mxu0
        %3345 = vmatprep.subr.mxu0 0.0
        %3346 = vmatpush1.msra.mxu0 %v3152
        %3347 = vmatprep.subr.mxu0 0.0
        %3348 = vmatpush1.msra.mxu0 %v3153
        %3349 = vmatprep.subr.mxu0 0.0
        %3350 = vmatpush1.msra.mxu0 %v3154
        %3351 = vmatprep.subr.mxu0 0.0
        %3352 = vmatpush1.msra.mxu0 %v3155
        %3353 = vmatprep.subr.mxu0 0.0
        %3354 = vmatpush1.msra.mxu0 %v3156
        %3355 = vmatprep.subr.mxu0 0.0
        %3356 = vmatpush1.msra.mxu0 %v3157
        %3357 = vmatprep.subr.mxu0 0.0
        %3358 = vmatpush1.msra.mxu0 %v3158
        %3359 = vmatprep.subr.mxu0 0.0
        %3360 = vmatpush1.msra.mxu0 %v3159
        %3361 = vmatprep.subr.mxu0 0.0
        %3362 = vmatpush1.msra.mxu0 %v3160
        %3363 = vmatprep.subr.mxu0 0.0
        %3364 = vmatpush1.msra.mxu0 %v3161
        %3365 = vmatprep.subr.mxu0 0.0
        %3366 = vmatpush1.msra.mxu0 %v3162
        %3367 = vmatprep.subr.mxu0 0.0
        %3368 = vmatpush1.msra.mxu0 %v3163
        %3369 = vmatprep.subr.mxu0 0.0
        %3370 = vmatpush1.msra.mxu0 %v3164
        %3371 = vmatprep.subr.mxu0 0.0
        %3372 = vmatpush1.msra.mxu0 %v3165
        %3373 = vmatprep.subr.mxu0 0.0
        %3374 = vmatpush1.msra.mxu0 %v3166
        %3375 = vmatprep.subr.mxu0 0.0
        %3376 = vmatpush1.msra.mxu0 %v3167
        %3377 = vmatprep.subr.mxu0 0.0
        %3378 = vmatpush1.msra.mxu0 0.0
        %3379 = vmatprep.subr.mxu0 0.0
        %3380 = vmatpush1.msra.mxu0 0.0
        %3381 = vmatprep.subr.mxu0 0.0
        %3382 = vmatpush1.msra.mxu0 0.0
        %3383 = vmatprep.subr.mxu0 0.0
        %3384 = vmatpush1.msra.mxu0 0.0
        %3385 = vmatprep.subr.mxu0 0.0
        %3386 = vmatpush1.msra.mxu0 0.0
        %3387 = vmatprep.subr.mxu0 0.0
        %3388 = vmatpush1.msra.mxu0 0.0
        %3389 = vmatprep.subr.mxu0 0.0
        %3390 = vmatpush1.msra.mxu0 0.0
        %3391 = vmatprep.subr.mxu0 0.0
        %3392 = vmatpush1.msra.mxu0 0.0
        %3393 = vmatprep.subr.mxu0 0.0
        %3394 = vmatpush1.msra.mxu0 0.0
        %3395 = vmatprep.subr.mxu0 0.0
        %3396 = vmatpush1.msra.mxu0 0.0
        %3397 = vmatprep.subr.mxu0 0.0
        %3398 = vmatpush1.msra.mxu0 0.0
        %3399 = vmatprep.subr.mxu0 0.0
        %3400 = vmatpush1.msra.mxu0 0.0
        %3401 = vmatprep.subr.mxu0 0.0
        %3402 = vmatpush1.msra.mxu0 0.0
        %3403 = vmatprep.subr.mxu0 0.0
        %3404 = vmatpush1.msra.mxu0 0.0
        %3405 = vmatprep.subr.mxu0 0.0
        %3406 = vmatpush1.msra.mxu0 0.0
        %3407 = vmatprep.subr.mxu0 0.0
        %3408 = vmatpush1.msra.mxu0 0.0
        %3409 = vmatprep.mubr.f32.mxu0 0.0
        %3410 = vmatmul.mubr.f32.gmra.mrb[0].mxu0 %v3088
        %v3411 = vpop.f32.mrb[0].mxu0
        %v3412 = vadd.f32 0.0, %v3411
        %v3413 = vpop.f32.mrb[0].mxu0
        %3414 = vmatprep.mubr.f32.mxu0 0.0
        %3415 = vmatmul.mubr.f32.gmra.mrb[0].mxu0 %v3089
        %v3416 = vpop.f32.mrb[0].mxu0
        %v3417 = vadd.f32 0.0, %v3416
        %v3418 = vpop.f32.mrb[0].mxu0
        %3419 = vmatprep.mubr.f32.mxu0 0.0
        %3420 = vmatmul.mubr.f32.gmra.mrb[0].mxu0 %v3090
        %v3421 = vpop.f32.mrb[0].mxu0
        %v3422 = vadd.f32 0.0, %v3421
        %v3423 = vpop.f32.mrb[0].mxu0
        %3424 = vmatprep.mubr.f32.mxu0 0.0
        %3425 = vmatmul.mubr.f32.gmra.mrb[0].mxu0 %v3091
        %v3426 = vpop.f32.mrb[0].mxu0
        %v3427 = vadd.f32 0.0, %v3426
        %v3428 = vpop.f32.mrb[0].mxu0
        %3429 = vmatprep.mubr.f32.mxu0 0.0
        %3430 = vmatmul.mubr.f32.gmra.mrb[0].mxu0 %v3092
        %v3431 = vpop.f32.mrb[0].mxu0
        %v3432 = vadd.f32 0.0, %v3431
        %v3433 = vpop.f32.mrb[0].mxu0
        %3434 = vmatprep.mubr.f32.mxu0 0.0
        %3435 = vmatmul.mubr.f32.gmra.mrb[0].mxu0 %v3093
        %v3436 = vpop.f32.mrb[0].mxu0
        %v3437 = vadd.f32 0.0, %v3436
        %v3438 = vpop.f32.mrb[0].mxu0
        %3439 = vmatprep.mubr.f32.mxu0 0.0
        %3440 = vmatmul.mubr.f32.gmra.mrb[0].mxu0 %v3094
        %v3441 = vpop.f32.mrb[0].mxu0
        %v3442 = vadd.f32 0.0, %v3441
        %v3443 = vpop.f32.mrb[0].mxu0
        %3444 = vmatprep.mubr.f32.mxu0 0.0
        %3445 = vmatmul.mubr.f32.gmra.mrb[0].mxu0 %v3095
        %v3446 = vpop.f32.mrb[0].mxu0
        %v3447 = vadd.f32 0.0, %v3446
        %v3448 = vpop.f32.mrb[0].mxu0
        %3449 = vmatprep.mubr.f32.mxu0 0.0
        %3450 = vmatmul.mubr.f32.gmra.mrb[0].mxu0 %v3096
        %v3451 = vpop.f32.mrb[0].mxu0
        %v3452 = vadd.f32 0.0, %v3451
        %v3453 = vpop.f32.mrb[0].mxu0
        %3454 = vmatprep.mubr.f32.mxu0 0.0
        %3455 = vmatmul.mubr.f32.gmra.mrb[0].mxu0 %v3097
        %v3456 = vpop.f32.mrb[0].mxu0
        %v3457 = vadd.f32 0.0, %v3456
        %v3458 = vpop.f32.mrb[0].mxu0
        %3459 = vmatprep.mubr.f32.mxu0 0.0
        %3460 = vmatmul.mubr.f32.gmra.mrb[0].mxu0 %v3098
        %v3461 = vpop.f32.mrb[0].mxu0
        %v3462 = vadd.f32 0.0, %v3461
        %v3463 = vpop.f32.mrb[0].mxu0
        %3464 = vmatprep.mubr.f32.mxu0 0.0
        %3465 = vmatmul.mubr.f32.gmra.mrb[0].mxu0 %v3099
        %v3466 = vpop.f32.mrb[0].mxu0
        %v3467 = vadd.f32 0.0, %v3466
        %v3468 = vpop.f32.mrb[0].mxu0
        %3469 = vmatprep.mubr.f32.mxu0 0.0
        %3470 = vmatmul.mubr.f32.gmra.mrb[0].mxu0 %v3100
        %v3471 = vpop.f32.mrb[0].mxu0
        %v3472 = vadd.f32 0.0, %v3471
        %v3473 = vpop.f32.mrb[0].mxu0
        %3474 = vmatprep.mubr.f32.mxu0 0.0
        %3475 = vmatmul.mubr.f32.gmra.mrb[0].mxu0 %v3101
        %v3476 = vpop.f32.mrb[0].mxu0
        %v3477 = vadd.f32 0.0, %v3476
        %v3478 = vpop.f32.mrb[0].mxu0
        %3479 = vmatprep.mubr.f32.mxu0 0.0
        %3480 = vmatmul.mubr.f32.gmra.mrb[0].mxu0 %v3102
        %v3481 = vpop.f32.mrb[0].mxu0
        %v3482 = vadd.f32 0.0, %v3481
        %v3483 = vpop.f32.mrb[0].mxu0
        %3484 = vmatprep.mubr.f32.mxu0 0.0
        %3485 = vmatmul.mubr.f32.gmra.mrb[0].mxu0 %v3103
        %v3486 = vpop.f32.mrb[0].mxu0
        %v3487 = vadd.f32 0.0, %v3486
        %v3488 = vpop.f32.mrb[0].mxu0
        %3489 = vdwg.mxu0
        %3490 = vmatprep.subr.mxu0 0.0
        %3491 = vmatpush1.msra.mxu0 %v3168
        %3492 = vmatprep.subr.mxu0 0.0
        %3493 = vmatpush1.msra.mxu0 %v3169
        %3494 = vmatprep.subr.mxu0 0.0
        %3495 = vmatpush1.msra.mxu0 %v3170
        %3496 = vmatprep.subr.mxu0 0.0
        %3497 = vmatpush1.msra.mxu0 %v3171
        %3498 = vmatprep.subr.mxu0 0.0
        %3499 = vmatpush1.msra.mxu0 %v3172
        %3500 = vmatprep.subr.mxu0 0.0
        %3501 = vmatpush1.msra.mxu0 %v3173
        %3502 = vmatprep.subr.mxu0 0.0
        %3503 = vmatpush1.msra.mxu0 %v3174
        %3504 = vmatprep.subr.mxu0 0.0
        %3505 = vmatpush1.msra.mxu0 %v3175
        %3506 = vmatprep.subr.mxu0 0.0
        %3507 = vmatpush1.msra.mxu0 %v3176
        %3508 = vmatprep.subr.mxu0 0.0
        %3509 = vmatpush1.msra.mxu0 %v3177
        %3510 = vmatprep.subr.mxu0 0.0
        %3511 = vmatpush1.msra.mxu0 %v3178
        %3512 = vmatprep.subr.mxu0 0.0
        %3513 = vmatpush1.msra.mxu0 %v3179
        %3514 = vmatprep.subr.mxu0 0.0
        %3515 = vmatpush1.msra.mxu0 %v3180
        %3516 = vmatprep.subr.mxu0 0.0
        %3517 = vmatpush1.msra.mxu0 %v3181
        %3518 = vmatprep.subr.mxu0 0.0
        %3519 = vmatpush1.msra.mxu0 %v3182
        %3520 = vmatprep.subr.mxu0 0.0
        %3521 = vmatpush1.msra.mxu0 %v3183
        %3522 = vmatprep.subr.mxu0 0.0
        %3523 = vmatpush1.msra.mxu0 0.0
        %3524 = vmatprep.subr.mxu0 0.0
        %3525 = vmatpush1.msra.mxu0 0.0
        %3526 = vmatprep.subr.mxu0 0.0
        %3527 = vmatpush1.msra.mxu0 0.0
        %3528 = vmatprep.subr.mxu0 0.0
        %3529 = vmatpush1.msra.mxu0 0.0
        %3530 = vmatprep.subr.mxu0 0.0
        %3531 = vmatpush1.msra.mxu0 0.0
        %3532 = vmatprep.subr.mxu0 0.0
        %3533 = vmatpush1.msra.mxu0 0.0
        %3534 = vmatprep.subr.mxu0 0.0
        %3535 = vmatpush1.msra.mxu0 0.0
        %3536 = vmatprep.subr.mxu0 0.0
        %3537 = vmatpush1.msra.mxu0 0.0
        %3538 = vmatprep.subr.mxu0 0.0
        %3539 = vmatpush1.msra.mxu0 0.0
        %3540 = vmatprep.subr.mxu0 0.0
        %3541 = vmatpush1.msra.mxu0 0.0
        %3542 = vmatprep.subr.mxu0 0.0
        %3543 = vmatpush1.msra.mxu0 0.0
        %3544 = vmatprep.subr.mxu0 0.0
        %3545 = vmatpush1.msra.mxu0 0.0
        %3546 = vmatprep.subr.mxu0 0.0
        %3547 = vmatpush1.msra.mxu0 0.0
        %3548 = vmatprep.subr.mxu0 0.0
        %3549 = vmatpush1.msra.mxu0 0.0
        %3550 = vmatprep.subr.mxu0 0.0
        %3551 = vmatpush1.msra.mxu0 0.0
        %3552 = vmatprep.subr.mxu0 0.0
        %3553 = vmatpush1.msra.mxu0 0.0
        %3554 = vmatprep.mubr.f32.mxu0 0.0
        %3555 = vmatmul.mubr.f32.gmra.mrb[0].mxu0 %v3104
        %v3556 = vpop.f32.mrb[0].mxu0
        %v3557 = vadd.f32 0.0, %v3556
        %v3558 = vpop.f32.mrb[0].mxu0
        %3559 = vmatprep.mubr.f32.mxu0 0.0
        %3560 = vmatmul.mubr.f32.gmra.mrb[0].mxu0 %v3105
        %v3561 = vpop.f32.mrb[0].mxu0
        %v3562 = vadd.f32 0.0, %v3561
        %v3563 = vpop.f32.mrb[0].mxu0
        %3564 = vmatprep.mubr.f32.mxu0 0.0
        %3565 = vmatmul.mubr.f32.gmra.mrb[0].mxu0 %v3106
        %v3566 = vpop.f32.mrb[0].mxu0
        %v3567 = vadd.f32 0.0, %v3566
        %v3568 = vpop.f32.mrb[0].mxu0
        %3569 = vmatprep.mubr.f32.mxu0 0.0
        %3570 = vmatmul.mubr.f32.gmra.mrb[0].mxu0 %v3107
        %v3571 = vpop.f32.mrb[0].mxu0
        %v3572 = vadd.f32 0.0, %v3571
        %v3573 = vpop.f32.mrb[0].mxu0
        %3574 = vmatprep.mubr.f32.mxu0 0.0
        %3575 = vmatmul.mubr.f32.gmra.mrb[0].mxu0 %v3108
        %v3576 = vpop.f32.mrb[0].mxu0
        %v3577 = vadd.f32 0.0, %v3576
        %v3578 = vpop.f32.mrb[0].mxu0
        %3579 = vmatprep.mubr.f32.mxu0 0.0
        %3580 = vmatmul.mubr.f32.gmra.mrb[0].mxu0 %v3109
        %v3581 = vpop.f32.mrb[0].mxu0
        %v3582 = vadd.f32 0.0, %v3581
        %v3583 = vpop.f32.mrb[0].mxu0
        %3584 = vmatprep.mubr.f32.mxu0 0.0
        %3585 = vmatmul.mubr.f32.gmra.mrb[0].mxu0 %v3110
        %v3586 = vpop.f32.mrb[0].mxu0
        %v3587 = vadd.f32 0.0, %v3586
        %v3588 = vpop.f32.mrb[0].mxu0
        %3589 = vmatprep.mubr.f32.mxu0 0.0
        %3590 = vmatmul.mubr.f32.gmra.mrb[0].mxu0 %v3111
        %v3591 = vpop.f32.mrb[0].mxu0
        %v3592 = vadd.f32 0.0, %v3591
        %v3593 = vpop.f32.mrb[0].mxu0
        %3594 = vmatprep.mubr.f32.mxu0 0.0
        %3595 = vmatmul.mubr.f32.gmra.mrb[0].mxu0 %v3112
        %v3596 = vpop.f32.mrb[0].mxu0
        %v3597 = vadd.f32 0.0, %v3596
        %v3598 = vpop.f32.mrb[0].mxu0
        %3599 = vmatprep.mubr.f32.mxu0 0.0
        %3600 = vmatmul.mubr.f32.gmra.mrb[0].mxu0 %v3113
        %v3601 = vpop.f32.mrb[0].mxu0
        %v3602 = vadd.f32 0.0, %v3601
        %v3603 = vpop.f32.mrb[0].mxu0
        %3604 = vmatprep.mubr.f32.mxu0 0.0
        %3605 = vmatmul.mubr.f32.gmra.mrb[0].mxu0 %v3114
        %v3606 = vpop.f32.mrb[0].mxu0
        %v3607 = vadd.f32 0.0, %v3606
        %v3608 = vpop.f32.mrb[0].mxu0
        %3609 = vmatprep.mubr.f32.mxu0 0.0
        %3610 = vmatmul.mubr.f32.gmra.mrb[0].mxu0 %v3115
        %v3611 = vpop.f32.mrb[0].mxu0
        %v3612 = vadd.f32 0.0, %v3611
        %v3613 = vpop.f32.mrb[0].mxu0
        %3614 = vmatprep.mubr.f32.mxu0 0.0
        %3615 = vmatmul.mubr.f32.gmra.mrb[0].mxu0 %v3116
        %v3616 = vpop.f32.mrb[0].mxu0
        %v3617 = vadd.f32 0.0, %v3616
        %v3618 = vpop.f32.mrb[0].mxu0
        %3619 = vmatprep.mubr.f32.mxu0 0.0
        %3620 = vmatmul.mubr.f32.gmra.mrb[0].mxu0 %v3117
        %v3621 = vpop.f32.mrb[0].mxu0
        %v3622 = vadd.f32 0.0, %v3621
        %v3623 = vpop.f32.mrb[0].mxu0
        %3624 = vmatprep.mubr.f32.mxu0 0.0
        %3625 = vmatmul.mubr.f32.gmra.mrb[0].mxu0 %v3118
        %v3626 = vpop.f32.mrb[0].mxu0
        %v3627 = vadd.f32 0.0, %v3626
        %v3628 = vpop.f32.mrb[0].mxu0
        %3629 = vmatprep.mubr.f32.mxu0 0.0
        %3630 = vmatmul.mubr.f32.gmra.mrb[0].mxu0 %v3119
        %v3631 = vpop.f32.mrb[0].mxu0
        %v3632 = vadd.f32 0.0, %v3631
        %v3633 = vpop.f32.mrb[0].mxu0
        %3634 = vdwg.mxu0
        %3635 = vmatprep.subr.mxu0 0.0
        %3636 = vmatpush1.msra.mxu0 %v3184
        %3637 = vmatprep.subr.mxu0 0.0
        %3638 = vmatpush1.msra.mxu0 %v3185
        %3639 = vmatprep.subr.mxu0 0.0
        %3640 = vmatpush1.msra.mxu0 %v3186
        %3641 = vmatprep.subr.mxu0 0.0
        %3642 = vmatpush1.msra.mxu0 %v3187
        %3643 = vmatprep.subr.mxu0 0.0
        %3644 = vmatpush1.msra.mxu0 %v3188
        %3645 = vmatprep.subr.mxu0 0.0
        %3646 = vmatpush1.msra.mxu0 %v3189
        %3647 = vmatprep.subr.mxu0 0.0
        %3648 = vmatpush1.msra.mxu0 %v3190
        %3649 = vmatprep.subr.mxu0 0.0
        %3650 = vmatpush1.msra.mxu0 %v3191
        %3651 = vmatprep.subr.mxu0 0.0
        %3652 = vmatpush1.msra.mxu0 %v3192
        %3653 = vmatprep.subr.mxu0 0.0
        %3654 = vmatpush1.msra.mxu0 %v3193
        %3655 = vmatprep.subr.mxu0 0.0
        %3656 = vmatpush1.msra.mxu0 %v3194
        %3657 = vmatprep.subr.mxu0 0.0
        %3658 = vmatpush1.msra.mxu0 %v3195
        %3659 = vmatprep.subr.mxu0 0.0
        %3660 = vmatpush1.msra.mxu0 %v3196
        %3661 = vmatprep.subr.mxu0 0.0
        %3662 = vmatpush1.msra.mxu0 %v3197
        %3663 = vmatprep.subr.mxu0 0.0
        %3664 = vmatpush1.msra.mxu0 %v3198
        %3665 = vmatprep.subr.mxu0 0.0
        %3666 = vmatpush1.msra.mxu0 %v3199
        %3667 = vmatprep.subr.mxu0 0.0
        %3668 = vmatpush1.msra.mxu0 0.0
        %3669 = vmatprep.subr.mxu0 0.0
        %3670 = vmatpush1.msra.mxu0 0.0
        %3671 = vmatprep.subr.mxu0 0.0
        %3672 = vmatpush1.msra.mxu0 0.0
        %3673 = vmatprep.subr.mxu0 0.0
        %3674 = vmatpush1.msra.mxu0 0.0
        %3675 = vmatprep.subr.mxu0 0.0
        %3676 = vmatpush1.msra.mxu0 0.0
        %3677 = vmatprep.subr.mxu0 0.0
        %3678 = vmatpush1.msra.mxu0 0.0
        %3679 = vmatprep.subr.mxu0 0.0
        %3680 = vmatpush1.msra.mxu0 0.0
        %3681 = vmatprep.subr.mxu0 0.0
        %3682 = vmatpush1.msra.mxu0 0.0
        %3683 = vmatprep.subr.mxu0 0.0
        %3684 = vmatpush1.msra.mxu0 0.0
        %3685 = vmatprep.subr.mxu0 0.0
        %3686 = vmatpush1.msra.mxu0 0.0
        %3687 = vmatprep.subr.mxu0 0.0
        %3688 = vmatpush1.msra.mxu0 0.0
        %3689 = vmatprep.subr.mxu0 0.0
        %3690 = vmatpush1.msra.mxu0 0.0
        %3691 = vmatprep.subr.mxu0 0.0
        %3692 = vmatpush1.msra.mxu0 0.0
        %3693 = vmatprep.subr.mxu0 0.0
        %3694 = vmatpush1.msra.mxu0 0.0
        %3695 = vmatprep.subr.mxu0 0.0
        %3696 = vmatpush1.msra.mxu0 0.0
        %3697 = vmatprep.subr.mxu0 0.0
        %3698 = vmatpush1.msra.mxu0 0.0
        %3699 = vmatprep.mubr.f32.mxu0 0.0
        %3700 = vmatmul.mubr.f32.gmra.mrb[0].mxu0 %v3120
        %v3701 = vpop.f32.mrb[0].mxu0
        %v3702 = vadd.f32 0.0, %v3701
        %v3703 = vpop.f32.mrb[0].mxu0
        %3704 = vmatprep.mubr.f32.mxu0 0.0
        %3705 = vmatmul.mubr.f32.gmra.mrb[0].mxu0 %v3121
        %v3706 = vpop.f32.mrb[0].mxu0
        %v3707 = vadd.f32 0.0, %v3706
        %v3708 = vpop.f32.mrb[0].mxu0
        %3709 = vmatprep.mubr.f32.mxu0 0.0
        %3710 = vmatmul.mubr.f32.gmra.mrb[0].mxu0 %v3122
        %v3711 = vpop.f32.mrb[0].mxu0
        %v3712 = vadd.f32 0.0, %v3711
        %v3713 = vpop.f32.mrb[0].mxu0
        %3714 = vmatprep.mubr.f32.mxu0 0.0
        %3715 = vmatmul.mubr.f32.gmra.mrb[0].mxu0 %v3123
        %v3716 = vpop.f32.mrb[0].mxu0
        %v3717 = vadd.f32 0.0, %v3716
        %v3718 = vpop.f32.mrb[0].mxu0
        %3719 = vmatprep.mubr.f32.mxu0 0.0
        %3720 = vmatmul.mubr.f32.gmra.mrb[0].mxu0 %v3124
        %v3721 = vpop.f32.mrb[0].mxu0
        %v3722 = vadd.f32 0.0, %v3721
        %v3723 = vpop.f32.mrb[0].mxu0
        %3724 = vmatprep.mubr.f32.mxu0 0.0
        %3725 = vmatmul.mubr.f32.gmra.mrb[0].mxu0 %v3125
        %v3726 = vpop.f32.mrb[0].mxu0
        %v3727 = vadd.f32 0.0, %v3726
        %v3728 = vpop.f32.mrb[0].mxu0
        %3729 = vmatprep.mubr.f32.mxu0 0.0
        %3730 = vmatmul.mubr.f32.gmra.mrb[0].mxu0 %v3126
        %v3731 = vpop.f32.mrb[0].mxu0
        %v3732 = vadd.f32 0.0, %v3731
        %v3733 = vpop.f32.mrb[0].mxu0
        %3734 = vmatprep.mubr.f32.mxu0 0.0
        %3735 = vmatmul.mubr.f32.gmra.mrb[0].mxu0 %v3127
        %v3736 = vpop.f32.mrb[0].mxu0
        %v3737 = vadd.f32 0.0, %v3736
        %v3738 = vpop.f32.mrb[0].mxu0
        %3739 = vmatprep.mubr.f32.mxu0 0.0
        %3740 = vmatmul.mubr.f32.gmra.mrb[0].mxu0 %v3128
        %v3741 = vpop.f32.mrb[0].mxu0
        %v3742 = vadd.f32 0.0, %v3741
        %v3743 = vpop.f32.mrb[0].mxu0
        %3744 = vmatprep.mubr.f32.mxu0 0.0
        %3745 = vmatmul.mubr.f32.gmra.mrb[0].mxu0 %v3129
        %v3746 = vpop.f32.mrb[0].mxu0
        %v3747 = vadd.f32 0.0, %v3746
        %v3748 = vpop.f32.mrb[0].mxu0
        %3749 = vmatprep.mubr.f32.mxu0 0.0
        %3750 = vmatmul.mubr.f32.gmra.mrb[0].mxu0 %v3130
        %v3751 = vpop.f32.mrb[0].mxu0
        %v3752 = vadd.f32 0.0, %v3751
        %v3753 = vpop.f32.mrb[0].mxu0
        %3754 = vmatprep.mubr.f32.mxu0 0.0
        %3755 = vmatmul.mubr.f32.gmra.mrb[0].mxu0 %v3131
        %v3756 = vpop.f32.mrb[0].mxu0
        %v3757 = vadd.f32 0.0, %v3756
        %v3758 = vpop.f32.mrb[0].mxu0
        %3759 = vmatprep.mubr.f32.mxu0 0.0
        %3760 = vmatmul.mubr.f32.gmra.mrb[0].mxu0 %v3132
        %v3761 = vpop.f32.mrb[0].mxu0
        %v3762 = vadd.f32 0.0, %v3761
        %v3763 = vpop.f32.mrb[0].mxu0
        %3764 = vmatprep.mubr.f32.mxu0 0.0
        %3765 = vmatmul.mubr.f32.gmra.mrb[0].mxu0 %v3133
        %v3766 = vpop.f32.mrb[0].mxu0
        %v3767 = vadd.f32 0.0, %v3766
        %v3768 = vpop.f32.mrb[0].mxu0
        %3769 = vmatprep.mubr.f32.mxu0 0.0
        %3770 = vmatmul.mubr.f32.gmra.mrb[0].mxu0 %v3134
        %v3771 = vpop.f32.mrb[0].mxu0
        %v3772 = vadd.f32 0.0, %v3771
        %v3773 = vpop.f32.mrb[0].mxu0
        %3774 = vmatprep.mubr.f32.mxu0 0.0
        %3775 = vmatmul.mubr.f32.gmra.mrb[0].mxu0 %v3135
        %v3776 = vpop.f32.mrb[0].mxu0
        %v3777 = vadd.f32 0.0, %v3776
        %v3778 = vpop.f32.mrb[0].mxu0
        %3779 = vdwg.mxu0
        %3796 = vrot.lane.b32.xlu0 %v3412, 32
        %v3797 = vpop.permute.xlu0 %3796
        %3798 = vrot.lane.b32.xlu0 %v3417, 32
        %v3799 = vpop.permute.xlu0 %3798
        %3800 = vrot.lane.b32.xlu0 %v3422, 32
        %v3801 = vpop.permute.xlu0 %3800
        %3802 = vrot.lane.b32.xlu0 %v3427, 32
        %v3803 = vpop.permute.xlu0 %3802
        %3804 = vrot.lane.b32.xlu0 %v3432, 32
        %v3805 = vpop.permute.xlu0 %3804
        %3806 = vrot.lane.b32.xlu0 %v3437, 32
        %v3807 = vpop.permute.xlu0 %3806
        %3808 = vrot.lane.b32.xlu0 %v3442, 32
        %v3809 = vpop.permute.xlu0 %3808
        %3810 = vrot.lane.b32.xlu0 %v3447, 32
        %v3811 = vpop.permute.xlu0 %3810
        %3812 = vrot.lane.b32.xlu0 %v3452, 32
        %v3813 = vpop.permute.xlu0 %3812
        %3814 = vrot.lane.b32.xlu0 %v3457, 32
        %v3815 = vpop.permute.xlu0 %3814
        %3816 = vrot.lane.b32.xlu0 %v3462, 32
        %v3817 = vpop.permute.xlu0 %3816
        %3818 = vrot.lane.b32.xlu0 %v3467, 32
        %v3819 = vpop.permute.xlu0 %3818
        %3820 = vrot.lane.b32.xlu0 %v3472, 32
        %v3821 = vpop.permute.xlu0 %3820
        %3822 = vrot.lane.b32.xlu0 %v3477, 32
        %v3823 = vpop.permute.xlu0 %3822
        %3824 = vrot.lane.b32.xlu0 %v3482, 32
        %v3825 = vpop.permute.xlu0 %3824
        %3826 = vrot.lane.b32.xlu0 %v3487, 32
        %v3827 = vpop.permute.xlu0 %3826
        %3860 = vrot.lane.b32.xlu0 %v3557, 64
        %v3861 = vpop.permute.xlu0 %3860
        %3862 = vrot.lane.b32.xlu0 %v3562, 64
        %v3863 = vpop.permute.xlu0 %3862
        %3864 = vrot.lane.b32.xlu0 %v3567, 64
        %v3865 = vpop.permute.xlu0 %3864
        %3866 = vrot.lane.b32.xlu0 %v3572, 64
        %v3867 = vpop.permute.xlu0 %3866
        %3868 = vrot.lane.b32.xlu0 %v3577, 64
        %v3869 = vpop.permute.xlu0 %3868
        %3870 = vrot.lane.b32.xlu0 %v3582, 64
        %v3871 = vpop.permute.xlu0 %3870
        %3872 = vrot.lane.b32.xlu0 %v3587, 64
        %v3873 = vpop.permute.xlu0 %3872
        %3874 = vrot.lane.b32.xlu0 %v3592, 64
        %v3875 = vpop.permute.xlu0 %3874
        %3876 = vrot.lane.b32.xlu0 %v3597, 64
        %v3877 = vpop.permute.xlu0 %3876
        %3878 = vrot.lane.b32.xlu0 %v3602, 64
        %v3879 = vpop.permute.xlu0 %3878
        %3880 = vrot.lane.b32.xlu0 %v3607, 64
        %v3881 = vpop.permute.xlu0 %3880
        %3882 = vrot.lane.b32.xlu0 %v3612, 64
        %v3883 = vpop.permute.xlu0 %3882
        %3884 = vrot.lane.b32.xlu0 %v3617, 64
        %v3885 = vpop.permute.xlu0 %3884
        %3886 = vrot.lane.b32.xlu0 %v3622, 64
        %v3887 = vpop.permute.xlu0 %3886
        %3888 = vrot.lane.b32.xlu0 %v3627, 64
        %v3889 = vpop.permute.xlu0 %3888
        %3890 = vrot.lane.b32.xlu0 %v3632, 64
        %v3891 = vpop.permute.xlu0 %3890
        %3924 = vrot.lane.b32.xlu0 %v3702, 96
        %v3925 = vpop.permute.xlu0 %3924
        %3926 = vrot.lane.b32.xlu0 %v3707, 96
        %v3927 = vpop.permute.xlu0 %3926
        %3928 = vrot.lane.b32.xlu0 %v3712, 96
        %v3929 = vpop.permute.xlu0 %3928
        %3930 = vrot.lane.b32.xlu0 %v3717, 96
        %v3931 = vpop.permute.xlu0 %3930
        %3932 = vrot.lane.b32.xlu0 %v3722, 96
        %v3933 = vpop.permute.xlu0 %3932
        %3934 = vrot.lane.b32.xlu0 %v3727, 96
        %v3935 = vpop.permute.xlu0 %3934
        %3936 = vrot.lane.b32.xlu0 %v3732, 96
        %v3937 = vpop.permute.xlu0 %3936
        %3938 = vrot.lane.b32.xlu0 %v3737, 96
        %v3939 = vpop.permute.xlu0 %3938
        %3940 = vrot.lane.b32.xlu0 %v3742, 96
        %v3941 = vpop.permute.xlu0 %3940
        %3942 = vrot.lane.b32.xlu0 %v3747, 96
        %v3943 = vpop.permute.xlu0 %3942
        %3944 = vrot.lane.b32.xlu0 %v3752, 96
        %v3945 = vpop.permute.xlu0 %3944
        %3946 = vrot.lane.b32.xlu0 %v3757, 96
        %v3947 = vpop.permute.xlu0 %3946
        %3948 = vrot.lane.b32.xlu0 %v3762, 96
        %v3949 = vpop.permute.xlu0 %3948
        %3950 = vrot.lane.b32.xlu0 %v3767, 96
        %v3951 = vpop.permute.xlu0 %3950
        %3952 = vrot.lane.b32.xlu0 %v3772, 96
        %v3953 = vpop.permute.xlu0 %3952
        %3954 = vrot.lane.b32.xlu0 %v3777, 96
        %v3955 = vpop.permute.xlu0 %3954
        %v3972 = vsel %vm1659, %v3267, %v3797
        %v3973 = vsel %vm1659, %v3272, %v3799
        %v3974 = vsel %vm1659, %v3277, %v3801
        %v3975 = vsel %vm1659, %v3282, %v3803
        %v3976 = vsel %vm1659, %v3287, %v3805
        %v3977 = vsel %vm1659, %v3292, %v3807
        %v3978 = vsel %vm1659, %v3297, %v3809
        %v3979 = vsel %vm1659, %v3302, %v3811
        %v3980 = vsel %vm1659, %v3307, %v3813
        %v3981 = vsel %vm1659, %v3312, %v3815
        %v3982 = vsel %vm1659, %v3317, %v3817
        %v3983 = vsel %vm1659, %v3322, %v3819
        %v3984 = vsel %vm1659, %v3327, %v3821
        %v3985 = vsel %vm1659, %v3332, %v3823
        %v3986 = vsel %vm1659, %v3337, %v3825
        %v3987 = vsel %vm1659, %v3342, %v3827
        %vm3988 = vcmask 523264
        %v3989 = vsel %vm3988, %v3972, %v3861
        %v3990 = vsel %vm3988, %v3973, %v3863
        %v3991 = vsel %vm3988, %v3974, %v3865
        %v3992 = vsel %vm3988, %v3975, %v3867
        %v3993 = vsel %vm3988, %v3976, %v3869
        %v3994 = vsel %vm3988, %v3977, %v3871
        %v3995 = vsel %vm3988, %v3978, %v3873
        %v3996 = vsel %vm3988, %v3979, %v3875
        %v3997 = vsel %vm3988, %v3980, %v3877
        %v3998 = vsel %vm3988, %v3981, %v3879
        %v3999 = vsel %vm3988, %v3982, %v3881
        %v4000 = vsel %vm3988, %v3983, %v3883
        %v4001 = vsel %vm3988, %v3984, %v3885
        %v4002 = vsel %vm3988, %v3985, %v3887
        %v4003 = vsel %vm3988, %v3986, %v3889
        %v4004 = vsel %vm3988, %v3987, %v3891
        %vm4005 = vcmask 785408
        %v4006 = vsel %vm4005, %v3989, %v3925
        %v4007 = vsel %vm4005, %v3990, %v3927
        %v4008 = vsel %vm4005, %v3991, %v3929
        %v4009 = vsel %vm4005, %v3992, %v3931
        %v4010 = vsel %vm4005, %v3993, %v3933
        %v4011 = vsel %vm4005, %v3994, %v3935
        %v4012 = vsel %vm4005, %v3995, %v3937
        %v4013 = vsel %vm4005, %v3996, %v3939
        %v4014 = vsel %vm4005, %v3997, %v3941
        %v4015 = vsel %vm4005, %v3998, %v3943
        %v4016 = vsel %vm4005, %v3999, %v3945
        %v4017 = vsel %vm4005, %v4000, %v3947
        %v4018 = vsel %vm4005, %v4001, %v3949
        %v4019 = vsel %vm4005, %v4002, %v3951
        %v4020 = vsel %vm4005, %v4003, %v3953
        %v4021 = vsel %vm4005, %v4004, %v3955
        %v4022 = vld [vmem:[#allocation10] sm:$0xff]
        %v4023 = vld [vmem:[#allocation10 + $0x8] sm:$0xff]
        %v4024 = vld [vmem:[#allocation10 + $0x10] sm:$0xff]
        %v4025 = vld [vmem:[#allocation10 + $0x18] sm:$0xff]
        %v4026 = vld [vmem:[#allocation10 + $0x20] sm:$0xff]
        %v4027 = vld [vmem:[#allocation10 + $0x28] sm:$0xff]
        %v4028 = vld [vmem:[#allocation10 + $0x30] sm:$0xff]
        %v4029 = vld [vmem:[#allocation10 + $0x38] sm:$0xff]
        %v4030 = vld [vmem:[#allocation10 + $0x40] sm:$0xff]
        %v4031 = vld [vmem:[#allocation10 + $0x48] sm:$0xff]
        %v4032 = vld [vmem:[#allocation10 + $0x50] sm:$0xff]
        %v4033 = vld [vmem:[#allocation10 + $0x58] sm:$0xff]
        %v4034 = vld [vmem:[#allocation10 + $0x60] sm:$0xff]
        %v4035 = vld [vmem:[#allocation10 + $0x68] sm:$0xff]
        %v4036 = vld [vmem:[#allocation10 + $0x70] sm:$0xff]
        %v4037 = vld [vmem:[#allocation10 + $0x78] sm:$0xff]
        %v4038 = vld [vmem:[%s6] sm:$0x1]
        %v4040 = vlaneseq
        %v4041 = vshrl.u32 %v4040, 7
        %v4042 = vsub.s32 0, %v4041
        %v4043 = vrot.slane %v4038, %v4042
        %4045 = vmatprep.subr.mxu0 0.0
        %4046 = vmatpush1.msra.mxu0 %v4022
        %4047 = vmatprep.subr.mxu0 0.0
        %4048 = vmatpush1.msra.mxu0 %v4023
        %4049 = vmatprep.subr.mxu0 0.0
        %4050 = vmatpush1.msra.mxu0 %v4024
        %4051 = vmatprep.subr.mxu0 0.0
        %4052 = vmatpush1.msra.mxu0 %v4025
        %4053 = vmatprep.subr.mxu0 0.0
        %4054 = vmatpush1.msra.mxu0 %v4026
        %4055 = vmatprep.subr.mxu0 0.0
        %4056 = vmatpush1.msra.mxu0 %v4027
        %4057 = vmatprep.subr.mxu0 0.0
        %4058 = vmatpush1.msra.mxu0 %v4028
        %4059 = vmatprep.subr.mxu0 0.0
        %4060 = vmatpush1.msra.mxu0 %v4029
        %4061 = vmatprep.subr.mxu0 0.0
        %4062 = vmatpush1.msra.mxu0 %v4030
        %4063 = vmatprep.subr.mxu0 0.0
        %4064 = vmatpush1.msra.mxu0 %v4031
        %4065 = vmatprep.subr.mxu0 0.0
        %4066 = vmatpush1.msra.mxu0 %v4032
        %4067 = vmatprep.subr.mxu0 0.0
        %4068 = vmatpush1.msra.mxu0 %v4033
        %4069 = vmatprep.subr.mxu0 0.0
        %4070 = vmatpush1.msra.mxu0 %v4034
        %4071 = vmatprep.subr.mxu0 0.0
        %4072 = vmatpush1.msra.mxu0 %v4035
        %4073 = vmatprep.subr.mxu0 0.0
        %4074 = vmatpush1.msra.mxu0 %v4036
        %4075 = vmatprep.subr.mxu0 0.0
        %4076 = vmatpush1.msra.mxu0 %v4037
        %4077 = vmatprep.subr.mxu0 0.0
        %4078 = vmatpush1.msra.mxu0 0.0
        %4079 = vmatprep.subr.mxu0 0.0
        %4080 = vmatpush1.msra.mxu0 0.0
        %4081 = vmatprep.subr.mxu0 0.0
        %4082 = vmatpush1.msra.mxu0 0.0
        %4083 = vmatprep.subr.mxu0 0.0
        %4084 = vmatpush1.msra.mxu0 0.0
        %4085 = vmatprep.subr.mxu0 0.0
        %4086 = vmatpush1.msra.mxu0 0.0
        %4087 = vmatprep.subr.mxu0 0.0
        %4088 = vmatpush1.msra.mxu0 0.0
        %4089 = vmatprep.subr.mxu0 0.0
        %4090 = vmatpush1.msra.mxu0 0.0
        %4091 = vmatprep.subr.mxu0 0.0
        %4092 = vmatpush1.msra.mxu0 0.0
        %4093 = vmatprep.subr.mxu0 0.0
        %4094 = vmatpush1.msra.mxu0 0.0
        %4095 = vmatprep.subr.mxu0 0.0
        %4096 = vmatpush1.msra.mxu0 0.0
        %4097 = vmatprep.subr.mxu0 0.0
        %4098 = vmatpush1.msra.mxu0 0.0
        %4099 = vmatprep.subr.mxu0 0.0
        %4100 = vmatpush1.msra.mxu0 0.0
        %4101 = vmatprep.subr.mxu0 0.0
        %4102 = vmatpush1.msra.mxu0 0.0
        %4103 = vmatprep.subr.mxu0 0.0
        %4104 = vmatpush1.msra.mxu0 0.0
        %4105 = vmatprep.subr.mxu0 0.0
        %4106 = vmatpush1.msra.mxu0 0.0
        %4107 = vmatprep.subr.mxu0 0.0
        %4108 = vmatpush1.msra.mxu0 0.0
        %4109 = vmatprep.mubr.f32.mxu0 0.0
        %4110 = vmatmul.mubr.f32.gmra.mrb[0].mxu0 %v4006
        %v4111 = vpop.f32.mrb[0].mxu0
        %v4112 = vadd.f32 %v4043, %v4111
        %v4113 = vpop.f32.mrb[0].mxu0
        %4114 = vmatprep.mubr.f32.mxu0 0.0
        %4115 = vmatmul.mubr.f32.gmra.mrb[0].mxu0 %v4007
        %v4116 = vpop.f32.mrb[0].mxu0
        %v4117 = vadd.f32 %v4043, %v4116
        %v4118 = vpop.f32.mrb[0].mxu0
        %4119 = vmatprep.mubr.f32.mxu0 0.0
        %4120 = vmatmul.mubr.f32.gmra.mrb[0].mxu0 %v4008
        %v4121 = vpop.f32.mrb[0].mxu0
        %v4122 = vadd.f32 %v4043, %v4121
        %v4123 = vpop.f32.mrb[0].mxu0
        %4124 = vmatprep.mubr.f32.mxu0 0.0
        %4125 = vmatmul.mubr.f32.gmra.mrb[0].mxu0 %v4009
        %v4126 = vpop.f32.mrb[0].mxu0
        %v4127 = vadd.f32 %v4043, %v4126
        %v4128 = vpop.f32.mrb[0].mxu0
        %4129 = vmatprep.mubr.f32.mxu0 0.0
        %4130 = vmatmul.mubr.f32.gmra.mrb[0].mxu0 %v4010
        %v4131 = vpop.f32.mrb[0].mxu0
        %v4132 = vadd.f32 %v4043, %v4131
        %v4133 = vpop.f32.mrb[0].mxu0
        %4134 = vmatprep.mubr.f32.mxu0 0.0
        %4135 = vmatmul.mubr.f32.gmra.mrb[0].mxu0 %v4011
        %v4136 = vpop.f32.mrb[0].mxu0
        %v4137 = vadd.f32 %v4043, %v4136
        %v4138 = vpop.f32.mrb[0].mxu0
        %4139 = vmatprep.mubr.f32.mxu0 0.0
        %4140 = vmatmul.mubr.f32.gmra.mrb[0].mxu0 %v4012
        %v4141 = vpop.f32.mrb[0].mxu0
        %v4142 = vadd.f32 %v4043, %v4141
        %v4143 = vpop.f32.mrb[0].mxu0
        %4144 = vmatprep.mubr.f32.mxu0 0.0
        %4145 = vmatmul.mubr.f32.gmra.mrb[0].mxu0 %v4013
        %v4146 = vpop.f32.mrb[0].mxu0
        %v4147 = vadd.f32 %v4043, %v4146
        %v4148 = vpop.f32.mrb[0].mxu0
        %4149 = vmatprep.mubr.f32.mxu0 0.0
        %4150 = vmatmul.mubr.f32.gmra.mrb[0].mxu0 %v4014
        %v4151 = vpop.f32.mrb[0].mxu0
        %v4152 = vadd.f32 %v4043, %v4151
        %v4153 = vpop.f32.mrb[0].mxu0
        %4154 = vmatprep.mubr.f32.mxu0 0.0
        %4155 = vmatmul.mubr.f32.gmra.mrb[0].mxu0 %v4015
        %v4156 = vpop.f32.mrb[0].mxu0
        %v4157 = vadd.f32 %v4043, %v4156
        %v4158 = vpop.f32.mrb[0].mxu0
        %4159 = vmatprep.mubr.f32.mxu0 0.0
        %4160 = vmatmul.mubr.f32.gmra.mrb[0].mxu0 %v4016
        %v4161 = vpop.f32.mrb[0].mxu0
        %v4162 = vadd.f32 %v4043, %v4161
        %v4163 = vpop.f32.mrb[0].mxu0
        %4164 = vmatprep.mubr.f32.mxu0 0.0
        %4165 = vmatmul.mubr.f32.gmra.mrb[0].mxu0 %v4017
        %v4166 = vpop.f32.mrb[0].mxu0
        %v4167 = vadd.f32 %v4043, %v4166
        %v4168 = vpop.f32.mrb[0].mxu0
        %4169 = vmatprep.mubr.f32.mxu0 0.0
        %4170 = vmatmul.mubr.f32.gmra.mrb[0].mxu0 %v4018
        %v4171 = vpop.f32.mrb[0].mxu0
        %v4172 = vadd.f32 %v4043, %v4171
        %v4173 = vpop.f32.mrb[0].mxu0
        %4174 = vmatprep.mubr.f32.mxu0 0.0
        %4175 = vmatmul.mubr.f32.gmra.mrb[0].mxu0 %v4019
        %v4176 = vpop.f32.mrb[0].mxu0
        %v4177 = vadd.f32 %v4043, %v4176
        %v4178 = vpop.f32.mrb[0].mxu0
        %4179 = vmatprep.mubr.f32.mxu0 0.0
        %4180 = vmatmul.mubr.f32.gmra.mrb[0].mxu0 %v4020
        %v4181 = vpop.f32.mrb[0].mxu0
        %v4182 = vadd.f32 %v4043, %v4181
        %v4183 = vpop.f32.mrb[0].mxu0
        %4184 = vmatprep.mubr.f32.mxu0 0.0
        %4185 = vmatmul.mubr.f32.gmra.mrb[0].mxu0 %v4021
        %v4186 = vpop.f32.mrb[0].mxu0
        %v4187 = vadd.f32 %v4043, %v4186
        %v4188 = vpop.f32.mrb[0].mxu0
        %4189 = vdwg.mxu0
        %v4190 = vadd.f32 %v4112, %v1283
        %v4191 = vadd.f32 %v4117, %v1284
        %v4192 = vadd.f32 %v4122, %v1285
        %v4193 = vadd.f32 %v4127, %v1286
        %v4194 = vadd.f32 %v4132, %v1287
        %v4195 = vadd.f32 %v4137, %v1288
        %v4196 = vadd.f32 %v4142, %v1289
        %v4197 = vadd.f32 %v4147, %v1290
        %v4198 = vadd.f32 %v4152, %v1291
        %v4199 = vadd.f32 %v4157, %v1292
        %v4200 = vadd.f32 %v4162, %v1293
        %v4201 = vadd.f32 %v4167, %v1294
        %v4202 = vadd.f32 %v4172, %v1295
        %v4203 = vadd.f32 %v4177, %v1296
        %v4204 = vadd.f32 %v4182, %v1297
        %v4205 = vadd.f32 %v4187, %v1298
        %v4206 = vld [vmem:[%s7] sm:$0x1]
        %v4207 = vld [vmem:[%s8] sm:$0x1]
        %4208 = vadd.xlane.f32.xlu0 %v4190
        %v4209 = vpop.xlane.xlu0 %4208
        %4210 = vadd.xlane.f32.xlu0 %v4191
        %v4211 = vpop.xlane.xlu0 %4210
        %4212 = vadd.xlane.f32.xlu0 %v4192
        %v4213 = vpop.xlane.xlu0 %4212
        %4214 = vadd.xlane.f32.xlu0 %v4193
        %v4215 = vpop.xlane.xlu0 %4214
        %4216 = vadd.xlane.f32.xlu0 %v4194
        %v4217 = vpop.xlane.xlu0 %4216
        %4218 = vadd.xlane.f32.xlu0 %v4195
        %v4219 = vpop.xlane.xlu0 %4218
        %4220 = vadd.xlane.f32.xlu0 %v4196
        %v4221 = vpop.xlane.xlu0 %4220
        %4222 = vadd.xlane.f32.xlu0 %v4197
        %v4223 = vpop.xlane.xlu0 %4222
        %4224 = vadd.xlane.f32.xlu0 %v4198
        %v4225 = vpop.xlane.xlu0 %4224
        %4226 = vadd.xlane.f32.xlu0 %v4199
        %v4227 = vpop.xlane.xlu0 %4226
        %4228 = vadd.xlane.f32.xlu0 %v4200
        %v4229 = vpop.xlane.xlu0 %4228
        %4230 = vadd.xlane.f32.xlu0 %v4201
        %v4231 = vpop.xlane.xlu0 %4230
        %4232 = vadd.xlane.f32.xlu0 %v4202
        %v4233 = vpop.xlane.xlu0 %4232
        %4234 = vadd.xlane.f32.xlu0 %v4203
        %v4235 = vpop.xlane.xlu0 %4234
        %4236 = vadd.xlane.f32.xlu0 %v4204
        %v4237 = vpop.xlane.xlu0 %4236
        %4238 = vadd.xlane.f32.xlu0 %v4205
        %v4239 = vpop.xlane.xlu0 %4238
        %v4240 = vrcp.pop 128.0
        %v4241 = vmul.f32 %v4209, %v4240
        %v4242 = vmul.f32 %v4211, %v4240
        %v4243 = vmul.f32 %v4213, %v4240
        %v4244 = vmul.f32 %v4215, %v4240
        %v4245 = vmul.f32 %v4217, %v4240
        %v4246 = vmul.f32 %v4219, %v4240
        %v4247 = vmul.f32 %v4221, %v4240
        %v4248 = vmul.f32 %v4223, %v4240
        %v4249 = vmul.f32 %v4225, %v4240
        %v4250 = vmul.f32 %v4227, %v4240
        %v4251 = vmul.f32 %v4229, %v4240
        %v4252 = vmul.f32 %v4231, %v4240
        %v4253 = vmul.f32 %v4233, %v4240
        %v4254 = vmul.f32 %v4235, %v4240
        %v4255 = vmul.f32 %v4237, %v4240
        %v4256 = vmul.f32 %v4239, %v4240
        %v4257 = vsub.f32 %v4190, %v4241
        %v4258 = vsub.f32 %v4191, %v4242
        %v4259 = vsub.f32 %v4192, %v4243
        %v4260 = vsub.f32 %v4193, %v4244
        %v4261 = vsub.f32 %v4194, %v4245
        %v4262 = vsub.f32 %v4195, %v4246
        %v4263 = vsub.f32 %v4196, %v4247
        %v4264 = vsub.f32 %v4197, %v4248
        %v4265 = vsub.f32 %v4198, %v4249
        %v4266 = vsub.f32 %v4199, %v4250
        %v4267 = vsub.f32 %v4200, %v4251
        %v4268 = vsub.f32 %v4201, %v4252
        %v4269 = vsub.f32 %v4202, %v4253
        %v4270 = vsub.f32 %v4203, %v4254
        %v4271 = vsub.f32 %v4204, %v4255
        %v4272 = vsub.f32 %v4205, %v4256
        %v4273 = vmul.f32 %v4257, %v4257
        %v4274 = vmul.f32 %v4258, %v4258
        %v4275 = vmul.f32 %v4259, %v4259
        %v4276 = vmul.f32 %v4260, %v4260
        %v4277 = vmul.f32 %v4261, %v4261
        %v4278 = vmul.f32 %v4262, %v4262
        %v4279 = vmul.f32 %v4263, %v4263
        %v4280 = vmul.f32 %v4264, %v4264
        %v4281 = vmul.f32 %v4265, %v4265
        %v4282 = vmul.f32 %v4266, %v4266
        %v4283 = vmul.f32 %v4267, %v4267
        %v4284 = vmul.f32 %v4268, %v4268
        %v4285 = vmul.f32 %v4269, %v4269
        %v4286 = vmul.f32 %v4270, %v4270
        %v4287 = vmul.f32 %v4271, %v4271
        %v4288 = vmul.f32 %v4272, %v4272
        %4289 = vadd.xlane.f32.xlu0 %v4273
        %v4290 = vpop.xlane.xlu0 %4289
        %4291 = vadd.xlane.f32.xlu0 %v4274
        %v4292 = vpop.xlane.xlu0 %4291
        %4293 = vadd.xlane.f32.xlu0 %v4275
        %v4294 = vpop.xlane.xlu0 %4293
        %4295 = vadd.xlane.f32.xlu0 %v4276
        %v4296 = vpop.xlane.xlu0 %4295
        %4297 = vadd.xlane.f32.xlu0 %v4277
        %v4298 = vpop.xlane.xlu0 %4297
        %4299 = vadd.xlane.f32.xlu0 %v4278
        %v4300 = vpop.xlane.xlu0 %4299
        %4301 = vadd.xlane.f32.xlu0 %v4279
        %v4302 = vpop.xlane.xlu0 %4301
        %4303 = vadd.xlane.f32.xlu0 %v4280
        %v4304 = vpop.xlane.xlu0 %4303
        %4305 = vadd.xlane.f32.xlu0 %v4281
        %v4306 = vpop.xlane.xlu0 %4305
        %4307 = vadd.xlane.f32.xlu0 %v4282
        %v4308 = vpop.xlane.xlu0 %4307
        %4309 = vadd.xlane.f32.xlu0 %v4283
        %v4310 = vpop.xlane.xlu0 %4309
        %4311 = vadd.xlane.f32.xlu0 %v4284
        %v4312 = vpop.xlane.xlu0 %4311
        %4313 = vadd.xlane.f32.xlu0 %v4285
        %v4314 = vpop.xlane.xlu0 %4313
        %4315 = vadd.xlane.f32.xlu0 %v4286
        %v4316 = vpop.xlane.xlu0 %4315
        %4317 = vadd.xlane.f32.xlu0 %v4287
        %v4318 = vpop.xlane.xlu0 %4317
        %4319 = vadd.xlane.f32.xlu0 %v4288
        %v4320 = vpop.xlane.xlu0 %4319
        %v4321 = vmul.f32 %v4290, %v4240
        %v4322 = vmul.f32 %v4292, %v4240
        %v4323 = vmul.f32 %v4294, %v4240
        %v4324 = vmul.f32 %v4296, %v4240
        %v4325 = vmul.f32 %v4298, %v4240
        %v4326 = vmul.f32 %v4300, %v4240
        %v4327 = vmul.f32 %v4302, %v4240
        %v4328 = vmul.f32 %v4304, %v4240
        %v4329 = vmul.f32 %v4306, %v4240
        %v4330 = vmul.f32 %v4308, %v4240
        %v4331 = vmul.f32 %v4310, %v4240
        %v4332 = vmul.f32 %v4312, %v4240
        %v4333 = vmul.f32 %v4314, %v4240
        %v4334 = vmul.f32 %v4316, %v4240
        %v4335 = vmul.f32 %v4318, %v4240
        %v4336 = vmul.f32 %v4320, %v4240
        %v4337 = vadd.f32 %v4321, 1e-12
        %v4338 = vadd.f32 %v4322, 1e-12
        %v4339 = vadd.f32 %v4323, 1e-12
        %v4340 = vadd.f32 %v4324, 1e-12
        %v4341 = vadd.f32 %v4325, 1e-12
        %v4342 = vadd.f32 %v4326, 1e-12
        %v4343 = vadd.f32 %v4327, 1e-12
        %v4344 = vadd.f32 %v4328, 1e-12
        %v4345 = vadd.f32 %v4329, 1e-12
        %v4346 = vadd.f32 %v4330, 1e-12
        %v4347 = vadd.f32 %v4331, 1e-12
        %v4348 = vadd.f32 %v4332, 1e-12
        %v4349 = vadd.f32 %v4333, 1e-12
        %v4350 = vadd.f32 %v4334, 1e-12
        %v4351 = vadd.f32 %v4335, 1e-12
        %v4352 = vadd.f32 %v4336, 1e-12
        %v4353 = vrsqrt.pop %v4337
        %v4354 = vrsqrt.pop %v4338
        %v4355 = vrsqrt.pop %v4339
        %v4356 = vrsqrt.pop %v4340
        %v4357 = vrsqrt.pop %v4341
        %v4358 = vrsqrt.pop %v4342
        %v4359 = vrsqrt.pop %v4343
        %v4360 = vrsqrt.pop %v4344
        %v4361 = vrsqrt.pop %v4345
        %v4362 = vrsqrt.pop %v4346
        %v4363 = vrsqrt.pop %v4347
        %v4364 = vrsqrt.pop %v4348
        %v4365 = vrsqrt.pop %v4349
        %v4366 = vrsqrt.pop %v4350
        %v4367 = vrsqrt.pop %v4351
        %v4368 = vrsqrt.pop %v4352
        %v4369 = vmul.f32 %v4257, %v4353
        %v4370 = vmul.f32 %v4258, %v4354
        %v4371 = vmul.f32 %v4259, %v4355
        %v4372 = vmul.f32 %v4260, %v4356
        %v4373 = vmul.f32 %v4261, %v4357
        %v4374 = vmul.f32 %v4262, %v4358
        %v4375 = vmul.f32 %v4263, %v4359
        %v4376 = vmul.f32 %v4264, %v4360
        %v4377 = vmul.f32 %v4265, %v4361
        %v4378 = vmul.f32 %v4266, %v4362
        %v4379 = vmul.f32 %v4267, %v4363
        %v4380 = vmul.f32 %v4268, %v4364
        %v4381 = vmul.f32 %v4269, %v4365
        %v4382 = vmul.f32 %v4270, %v4366
        %v4383 = vmul.f32 %v4271, %v4367
        %v4384 = vmul.f32 %v4272, %v4368
        %v4386 = vlaneseq
        %v4387 = vshrl.u32 %v4386, 7
        %v4388 = vsub.s32 0, %v4387
        %v4389 = vrot.slane %v4206, %v4388
        %v4391 = vmul.f32 %v4389, %v4369
        %v4392 = vmul.f32 %v4389, %v4370
        %v4393 = vmul.f32 %v4389, %v4371
        %v4394 = vmul.f32 %v4389, %v4372
        %v4395 = vmul.f32 %v4389, %v4373
        %v4396 = vmul.f32 %v4389, %v4374
        %v4397 = vmul.f32 %v4389, %v4375
        %v4398 = vmul.f32 %v4389, %v4376
        %v4399 = vmul.f32 %v4389, %v4377
        %v4400 = vmul.f32 %v4389, %v4378
        %v4401 = vmul.f32 %v4389, %v4379
        %v4402 = vmul.f32 %v4389, %v4380
        %v4403 = vmul.f32 %v4389, %v4381
        %v4404 = vmul.f32 %v4389, %v4382
        %v4405 = vmul.f32 %v4389, %v4383
        %v4406 = vmul.f32 %v4389, %v4384
        %v4408 = vlaneseq
        %v4409 = vshrl.u32 %v4408, 7
        %v4410 = vsub.s32 0, %v4409
        %v4411 = vrot.slane %v4207, %v4410
        %v4413 = vadd.f32 %v4391, %v4411
        %v4414 = vadd.f32 %v4392, %v4411
        %v4415 = vadd.f32 %v4393, %v4411
        %v4416 = vadd.f32 %v4394, %v4411
        %v4417 = vadd.f32 %v4395, %v4411
        %v4418 = vadd.f32 %v4396, %v4411
        %v4419 = vadd.f32 %v4397, %v4411
        %v4420 = vadd.f32 %v4398, %v4411
        %v4421 = vadd.f32 %v4399, %v4411
        %v4422 = vadd.f32 %v4400, %v4411
        %v4423 = vadd.f32 %v4401, %v4411
        %v4424 = vadd.f32 %v4402, %v4411
        %v4425 = vadd.f32 %v4403, %v4411
        %v4426 = vadd.f32 %v4404, %v4411
        %v4427 = vadd.f32 %v4405, %v4411
        %v4428 = vadd.f32 %v4406, %v4411
        %v4429 = vld [vmem:[#allocation12] sm:$0xff]
        %v4430 = vld [vmem:[#allocation12 + $0x8] sm:$0xff]
        %v4431 = vld [vmem:[#allocation12 + $0x10] sm:$0xff]
        %v4432 = vld [vmem:[#allocation12 + $0x18] sm:$0xff]
        %v4433 = vld [vmem:[#allocation12 + $0x20] sm:$0xff]
        %v4434 = vld [vmem:[#allocation12 + $0x28] sm:$0xff]
        %v4435 = vld [vmem:[#allocation12 + $0x30] sm:$0xff]
        %v4436 = vld [vmem:[#allocation12 + $0x38] sm:$0xff]
        %v4437 = vld [vmem:[#allocation12 + $0x40] sm:$0xff]
        %v4438 = vld [vmem:[#allocation12 + $0x48] sm:$0xff]
        %v4439 = vld [vmem:[#allocation12 + $0x50] sm:$0xff]
        %v4440 = vld [vmem:[#allocation12 + $0x58] sm:$0xff]
        %v4441 = vld [vmem:[#allocation12 + $0x60] sm:$0xff]
        %v4442 = vld [vmem:[#allocation12 + $0x68] sm:$0xff]
        %v4443 = vld [vmem:[#allocation12 + $0x70] sm:$0xff]
        %v4444 = vld [vmem:[#allocation12 + $0x78] sm:$0xff]
        %v4445 = vld [vmem:[#allocation12 + $0x80] sm:$0xff]
        %v4446 = vld [vmem:[#allocation12 + $0x88] sm:$0xff]
        %v4447 = vld [vmem:[#allocation12 + $0x90] sm:$0xff]
        %v4448 = vld [vmem:[#allocation12 + $0x98] sm:$0xff]
        %v4449 = vld [vmem:[#allocation12 + $0xa0] sm:$0xff]
        %v4450 = vld [vmem:[#allocation12 + $0xa8] sm:$0xff]
        %v4451 = vld [vmem:[#allocation12 + $0xb0] sm:$0xff]
        %v4452 = vld [vmem:[#allocation12 + $0xb8] sm:$0xff]
        %v4453 = vld [vmem:[#allocation12 + $0xc0] sm:$0xff]
        %v4454 = vld [vmem:[#allocation12 + $0xc8] sm:$0xff]
        %v4455 = vld [vmem:[#allocation12 + $0xd0] sm:$0xff]
        %v4456 = vld [vmem:[#allocation12 + $0xd8] sm:$0xff]
        %v4457 = vld [vmem:[#allocation12 + $0xe0] sm:$0xff]
        %v4458 = vld [vmem:[#allocation12 + $0xe8] sm:$0xff]
        %v4459 = vld [vmem:[#allocation12 + $0xf0] sm:$0xff]
        %v4460 = vld [vmem:[#allocation12 + $0xf8] sm:$0xff]
        %v4461 = vld [vmem:[%s10] sm:$0x3]
        %v4463 = vlaneseq
        %v4464 = vshrl.u32 %v4463, 7
        %v4465 = vsub.s32 0, %v4464
        %v4466 = vrot.slane %v4461, %v4465
        %v4467 = vlaneseq
        %v4468 = vshrl.u32 %v4467, 7
        %v4469 = vsub.s32 1, %v4468
        %v4470 = vrot.slane %v4461, %v4469
        %4473 = vmatprep.subr.mxu0 %v4430
        %4474 = vmatpush1.msra.mxu0 %v4429
        %4475 = vmatprep.subr.mxu0 %v4432
        %4476 = vmatpush1.msra.mxu0 %v4431
        %4477 = vmatprep.subr.mxu0 %v4434
        %4478 = vmatpush1.msra.mxu0 %v4433
        %4479 = vmatprep.subr.mxu0 %v4436
        %4480 = vmatpush1.msra.mxu0 %v4435
        %4481 = vmatprep.subr.mxu0 %v4438
        %4482 = vmatpush1.msra.mxu0 %v4437
        %4483 = vmatprep.subr.mxu0 %v4440
        %4484 = vmatpush1.msra.mxu0 %v4439
        %4485 = vmatprep.subr.mxu0 %v4442
        %4486 = vmatpush1.msra.mxu0 %v4441
        %4487 = vmatprep.subr.mxu0 %v4444
        %4488 = vmatpush1.msra.mxu0 %v4443
        %4489 = vmatprep.subr.mxu0 %v4446
        %4490 = vmatpush1.msra.mxu0 %v4445
        %4491 = vmatprep.subr.mxu0 %v4448
        %4492 = vmatpush1.msra.mxu0 %v4447
        %4493 = vmatprep.subr.mxu0 %v4450
        %4494 = vmatpush1.msra.mxu0 %v4449
        %4495 = vmatprep.subr.mxu0 %v4452
        %4496 = vmatpush1.msra.mxu0 %v4451
        %4497 = vmatprep.subr.mxu0 %v4454
        %4498 = vmatpush1.msra.mxu0 %v4453
        %4499 = vmatprep.subr.mxu0 %v4456
        %4500 = vmatpush1.msra.mxu0 %v4455
        %4501 = vmatprep.subr.mxu0 %v4458
        %4502 = vmatpush1.msra.mxu0 %v4457
        %4503 = vmatprep.subr.mxu0 %v4460
        %4504 = vmatpush1.msra.mxu0 %v4459
        %4505 = vmatprep.subr.mxu0 0.0
        %4506 = vmatpush1.msra.mxu0 0.0
        %4507 = vmatprep.subr.mxu0 0.0
        %4508 = vmatpush1.msra.mxu0 0.0
        %4509 = vmatprep.subr.mxu0 0.0
        %4510 = vmatpush1.msra.mxu0 0.0
        %4511 = vmatprep.subr.mxu0 0.0
        %4512 = vmatpush1.msra.mxu0 0.0
        %4513 = vmatprep.subr.mxu0 0.0
        %4514 = vmatpush1.msra.mxu0 0.0
        %4515 = vmatprep.subr.mxu0 0.0
        %4516 = vmatpush1.msra.mxu0 0.0
        %4517 = vmatprep.subr.mxu0 0.0
        %4518 = vmatpush1.msra.mxu0 0.0
        %4519 = vmatprep.subr.mxu0 0.0
        %4520 = vmatpush1.msra.mxu0 0.0
        %4521 = vmatprep.subr.mxu0 0.0
        %4522 = vmatpush1.msra.mxu0 0.0
        %4523 = vmatprep.subr.mxu0 0.0
        %4524 = vmatpush1.msra.mxu0 0.0
        %4525 = vmatprep.subr.mxu0 0.0
        %4526 = vmatpush1.msra.mxu0 0.0
        %4527 = vmatprep.subr.mxu0 0.0
        %4528 = vmatpush1.msra.mxu0 0.0
        %4529 = vmatprep.subr.mxu0 0.0
        %4530 = vmatpush1.msra.mxu0 0.0
        %4531 = vmatprep.subr.mxu0 0.0
        %4532 = vmatpush1.msra.mxu0 0.0
        %4533 = vmatprep.subr.mxu0 0.0
        %4534 = vmatpush1.msra.mxu0 0.0
        %4535 = vmatprep.subr.mxu0 0.0
        %4536 = vmatpush1.msra.mxu0 0.0
        %4537 = vmatprep.mubr.f32.mxu0 0.0
        %4538 = vmatmul.mubr.f32.gmra.mrb[0].mxu0 %v4413
        %v4539 = vpop.f32.mrb[0].mxu0
        %v4540 = vadd.f32 %v4466, %v4539
        %v4541 = vpop.f32.mrb[0].mxu0
        %v4542 = vadd.f32 %v4470, %v4541
        %4543 = vmatprep.mubr.f32.mxu0 0.0
        %4544 = vmatmul.mubr.f32.gmra.mrb[0].mxu0 %v4414
        %v4545 = vpop.f32.mrb[0].mxu0
        %v4546 = vadd.f32 %v4466, %v4545
        %v4547 = vpop.f32.mrb[0].mxu0
        %v4548 = vadd.f32 %v4470, %v4547
        %4549 = vmatprep.mubr.f32.mxu0 0.0
        %4550 = vmatmul.mubr.f32.gmra.mrb[0].mxu0 %v4415
        %v4551 = vpop.f32.mrb[0].mxu0
        %v4552 = vadd.f32 %v4466, %v4551
        %v4553 = vpop.f32.mrb[0].mxu0
        %v4554 = vadd.f32 %v4470, %v4553
        %4555 = vmatprep.mubr.f32.mxu0 0.0
        %4556 = vmatmul.mubr.f32.gmra.mrb[0].mxu0 %v4416
        %v4557 = vpop.f32.mrb[0].mxu0
        %v4558 = vadd.f32 %v4466, %v4557
        %v4559 = vpop.f32.mrb[0].mxu0
        %v4560 = vadd.f32 %v4470, %v4559
        %4561 = vmatprep.mubr.f32.mxu0 0.0
        %4562 = vmatmul.mubr.f32.gmra.mrb[0].mxu0 %v4417
        %v4563 = vpop.f32.mrb[0].mxu0
        %v4564 = vadd.f32 %v4466, %v4563
        %v4565 = vpop.f32.mrb[0].mxu0
        %v4566 = vadd.f32 %v4470, %v4565
        %4567 = vmatprep.mubr.f32.mxu0 0.0
        %4568 = vmatmul.mubr.f32.gmra.mrb[0].mxu0 %v4418
        %v4569 = vpop.f32.mrb[0].mxu0
        %v4570 = vadd.f32 %v4466, %v4569
        %v4571 = vpop.f32.mrb[0].mxu0
        %v4572 = vadd.f32 %v4470, %v4571
        %4573 = vmatprep.mubr.f32.mxu0 0.0
        %4574 = vmatmul.mubr.f32.gmra.mrb[0].mxu0 %v4419
        %v4575 = vpop.f32.mrb[0].mxu0
        %v4576 = vadd.f32 %v4466, %v4575
        %v4577 = vpop.f32.mrb[0].mxu0
        %v4578 = vadd.f32 %v4470, %v4577
        %4579 = vmatprep.mubr.f32.mxu0 0.0
        %4580 = vmatmul.mubr.f32.gmra.mrb[0].mxu0 %v4420
        %v4581 = vpop.f32.mrb[0].mxu0
        %v4582 = vadd.f32 %v4466, %v4581
        %v4583 = vpop.f32.mrb[0].mxu0
        %v4584 = vadd.f32 %v4470, %v4583
        %4585 = vmatprep.mubr.f32.mxu0 0.0
        %4586 = vmatmul.mubr.f32.gmra.mrb[0].mxu0 %v4421
        %v4587 = vpop.f32.mrb[0].mxu0
        %v4588 = vadd.f32 %v4466, %v4587
        %v4589 = vpop.f32.mrb[0].mxu0
        %v4590 = vadd.f32 %v4470, %v4589
        %4591 = vmatprep.mubr.f32.mxu0 0.0
        %4592 = vmatmul.mubr.f32.gmra.mrb[0].mxu0 %v4422
        %v4593 = vpop.f32.mrb[0].mxu0
        %v4594 = vadd.f32 %v4466, %v4593
        %v4595 = vpop.f32.mrb[0].mxu0
        %v4596 = vadd.f32 %v4470, %v4595
        %4597 = vmatprep.mubr.f32.mxu0 0.0
        %4598 = vmatmul.mubr.f32.gmra.mrb[0].mxu0 %v4423
        %v4599 = vpop.f32.mrb[0].mxu0
        %v4600 = vadd.f32 %v4466, %v4599
        %v4601 = vpop.f32.mrb[0].mxu0
        %v4602 = vadd.f32 %v4470, %v4601
        %4603 = vmatprep.mubr.f32.mxu0 0.0
        %4604 = vmatmul.mubr.f32.gmra.mrb[0].mxu0 %v4424
        %v4605 = vpop.f32.mrb[0].mxu0
        %v4606 = vadd.f32 %v4466, %v4605
        %v4607 = vpop.f32.mrb[0].mxu0
        %v4608 = vadd.f32 %v4470, %v4607
        %4609 = vmatprep.mubr.f32.mxu0 0.0
        %4610 = vmatmul.mubr.f32.gmra.mrb[0].mxu0 %v4425
        %v4611 = vpop.f32.mrb[0].mxu0
        %v4612 = vadd.f32 %v4466, %v4611
        %v4613 = vpop.f32.mrb[0].mxu0
        %v4614 = vadd.f32 %v4470, %v4613
        %4615 = vmatprep.mubr.f32.mxu0 0.0
        %4616 = vmatmul.mubr.f32.gmra.mrb[0].mxu0 %v4426
        %v4617 = vpop.f32.mrb[0].mxu0
        %v4618 = vadd.f32 %v4466, %v4617
        %v4619 = vpop.f32.mrb[0].mxu0
        %v4620 = vadd.f32 %v4470, %v4619
        %4621 = vmatprep.mubr.f32.mxu0 0.0
        %4622 = vmatmul.mubr.f32.gmra.mrb[0].mxu0 %v4427
        %v4623 = vpop.f32.mrb[0].mxu0
        %v4624 = vadd.f32 %v4466, %v4623
        %v4625 = vpop.f32.mrb[0].mxu0
        %v4626 = vadd.f32 %v4470, %v4625
        %4627 = vmatprep.mubr.f32.mxu0 0.0
        %4628 = vmatmul.mubr.f32.gmra.mrb[0].mxu0 %v4428
        %v4629 = vpop.f32.mrb[0].mxu0
        %v4630 = vadd.f32 %v4466, %v4629
        %v4631 = vpop.f32.mrb[0].mxu0
        %v4632 = vadd.f32 %v4470, %v4631
        %4633 = vdwg.mxu0
        %v4634 = vmax.f32 %v4540, 0.0
        %v4635 = vmax.f32 %v4542, 0.0
        %v4636 = vmax.f32 %v4546, 0.0
        %v4637 = vmax.f32 %v4548, 0.0
        %v4638 = vmax.f32 %v4552, 0.0
        %v4639 = vmax.f32 %v4554, 0.0
        %v4640 = vmax.f32 %v4558, 0.0
        %v4641 = vmax.f32 %v4560, 0.0
        %v4642 = vmax.f32 %v4564, 0.0
        %v4643 = vmax.f32 %v4566, 0.0
        %v4644 = vmax.f32 %v4570, 0.0
        %v4645 = vmax.f32 %v4572, 0.0
        %v4646 = vmax.f32 %v4576, 0.0
        %v4647 = vmax.f32 %v4578, 0.0
        %v4648 = vmax.f32 %v4582, 0.0
        %v4649 = vmax.f32 %v4584, 0.0
        %v4650 = vmax.f32 %v4588, 0.0
        %v4651 = vmax.f32 %v4590, 0.0
        %v4652 = vmax.f32 %v4594, 0.0
        %v4653 = vmax.f32 %v4596, 0.0
        %v4654 = vmax.f32 %v4600, 0.0
        %v4655 = vmax.f32 %v4602, 0.0
        %v4656 = vmax.f32 %v4606, 0.0
        %v4657 = vmax.f32 %v4608, 0.0
        %v4658 = vmax.f32 %v4612, 0.0
        %v4659 = vmax.f32 %v4614, 0.0
        %v4660 = vmax.f32 %v4618, 0.0
        %v4661 = vmax.f32 %v4620, 0.0
        %v4662 = vmax.f32 %v4624, 0.0
        %v4663 = vmax.f32 %v4626, 0.0
        %v4664 = vmax.f32 %v4630, 0.0
        %v4665 = vmax.f32 %v4632, 0.0
        %v4666 = vld [vmem:[#allocation13] sm:$0xff]
        %v4667 = vld [vmem:[#allocation13 + $0x8] sm:$0xff]
        %v4668 = vld [vmem:[#allocation13 + $0x10] sm:$0xff]
        %v4669 = vld [vmem:[#allocation13 + $0x18] sm:$0xff]
        %v4670 = vld [vmem:[#allocation13 + $0x20] sm:$0xff]
        %v4671 = vld [vmem:[#allocation13 + $0x28] sm:$0xff]
        %v4672 = vld [vmem:[#allocation13 + $0x30] sm:$0xff]
        %v4673 = vld [vmem:[#allocation13 + $0x38] sm:$0xff]
        %v4674 = vld [vmem:[#allocation13 + $0x40] sm:$0xff]
        %v4675 = vld [vmem:[#allocation13 + $0x48] sm:$0xff]
        %v4676 = vld [vmem:[#allocation13 + $0x50] sm:$0xff]
        %v4677 = vld [vmem:[#allocation13 + $0x58] sm:$0xff]
        %v4678 = vld [vmem:[#allocation13 + $0x60] sm:$0xff]
        %v4679 = vld [vmem:[#allocation13 + $0x68] sm:$0xff]
        %v4680 = vld [vmem:[#allocation13 + $0x70] sm:$0xff]
        %v4681 = vld [vmem:[#allocation13 + $0x78] sm:$0xff]
        %v4682 = vld [vmem:[#allocation13 + $0x80] sm:$0xff]
        %v4683 = vld [vmem:[#allocation13 + $0x88] sm:$0xff]
        %v4684 = vld [vmem:[#allocation13 + $0x90] sm:$0xff]
        %v4685 = vld [vmem:[#allocation13 + $0x98] sm:$0xff]
        %v4686 = vld [vmem:[#allocation13 + $0xa0] sm:$0xff]
        %v4687 = vld [vmem:[#allocation13 + $0xa8] sm:$0xff]
        %v4688 = vld [vmem:[#allocation13 + $0xb0] sm:$0xff]
        %v4689 = vld [vmem:[#allocation13 + $0xb8] sm:$0xff]
        %v4690 = vld [vmem:[#allocation13 + $0xc0] sm:$0xff]
        %v4691 = vld [vmem:[#allocation13 + $0xc8] sm:$0xff]
        %v4692 = vld [vmem:[#allocation13 + $0xd0] sm:$0xff]
        %v4693 = vld [vmem:[#allocation13 + $0xd8] sm:$0xff]
        %v4694 = vld [vmem:[#allocation13 + $0xe0] sm:$0xff]
        %v4695 = vld [vmem:[#allocation13 + $0xe8] sm:$0xff]
        %v4696 = vld [vmem:[#allocation13 + $0xf0] sm:$0xff]
        %v4697 = vld [vmem:[#allocation13 + $0xf8] sm:$0xff]
        %v4698 = vld [vmem:[%s12] sm:$0x1]
        %v4700 = vlaneseq
        %v4701 = vshrl.u32 %v4700, 7
        %v4702 = vsub.s32 0, %v4701
        %v4703 = vrot.slane %v4698, %v4702
        %4705 = vmatprep.subr.mxu0 0.0
        %4706 = vmatpush1.msra.mxu0 %v4666
        %4707 = vmatprep.subr.mxu0 0.0
        %4708 = vmatpush1.msra.mxu0 %v4667
        %4709 = vmatprep.subr.mxu0 0.0
        %4710 = vmatpush1.msra.mxu0 %v4668
        %4711 = vmatprep.subr.mxu0 0.0
        %4712 = vmatpush1.msra.mxu0 %v4669
        %4713 = vmatprep.subr.mxu0 0.0
        %4714 = vmatpush1.msra.mxu0 %v4670
        %4715 = vmatprep.subr.mxu0 0.0
        %4716 = vmatpush1.msra.mxu0 %v4671
        %4717 = vmatprep.subr.mxu0 0.0
        %4718 = vmatpush1.msra.mxu0 %v4672
        %4719 = vmatprep.subr.mxu0 0.0
        %4720 = vmatpush1.msra.mxu0 %v4673
        %4721 = vmatprep.subr.mxu0 0.0
        %4722 = vmatpush1.msra.mxu0 %v4674
        %4723 = vmatprep.subr.mxu0 0.0
        %4724 = vmatpush1.msra.mxu0 %v4675
        %4725 = vmatprep.subr.mxu0 0.0
        %4726 = vmatpush1.msra.mxu0 %v4676
        %4727 = vmatprep.subr.mxu0 0.0
        %4728 = vmatpush1.msra.mxu0 %v4677
        %4729 = vmatprep.subr.mxu0 0.0
        %4730 = vmatpush1.msra.mxu0 %v4678
        %4731 = vmatprep.subr.mxu0 0.0
        %4732 = vmatpush1.msra.mxu0 %v4679
        %4733 = vmatprep.subr.mxu0 0.0
        %4734 = vmatpush1.msra.mxu0 %v4680
        %4735 = vmatprep.subr.mxu0 0.0
        %4736 = vmatpush1.msra.mxu0 %v4681
        %4737 = vmatprep.subr.mxu0 0.0
        %4738 = vmatpush1.msra.mxu0 %v4682
        %4739 = vmatprep.subr.mxu0 0.0
        %4740 = vmatpush1.msra.mxu0 %v4683
        %4741 = vmatprep.subr.mxu0 0.0
        %4742 = vmatpush1.msra.mxu0 %v4684
        %4743 = vmatprep.subr.mxu0 0.0
        %4744 = vmatpush1.msra.mxu0 %v4685
        %4745 = vmatprep.subr.mxu0 0.0
        %4746 = vmatpush1.msra.mxu0 %v4686
        %4747 = vmatprep.subr.mxu0 0.0
        %4748 = vmatpush1.msra.mxu0 %v4687
        %4749 = vmatprep.subr.mxu0 0.0
        %4750 = vmatpush1.msra.mxu0 %v4688
        %4751 = vmatprep.subr.mxu0 0.0
        %4752 = vmatpush1.msra.mxu0 %v4689
        %4753 = vmatprep.subr.mxu0 0.0
        %4754 = vmatpush1.msra.mxu0 %v4690
        %4755 = vmatprep.subr.mxu0 0.0
        %4756 = vmatpush1.msra.mxu0 %v4691
        %4757 = vmatprep.subr.mxu0 0.0
        %4758 = vmatpush1.msra.mxu0 %v4692
        %4759 = vmatprep.subr.mxu0 0.0
        %4760 = vmatpush1.msra.mxu0 %v4693
        %4761 = vmatprep.subr.mxu0 0.0
        %4762 = vmatpush1.msra.mxu0 %v4694
        %4763 = vmatprep.subr.mxu0 0.0
        %4764 = vmatpush1.msra.mxu0 %v4695
        %4765 = vmatprep.subr.mxu0 0.0
        %4766 = vmatpush1.msra.mxu0 %v4696
        %4767 = vmatprep.subr.mxu0 0.0
        %4768 = vmatpush1.msra.mxu0 %v4697
        %4769 = vmatprep.mubr.f32.mxu0 %v4635
        %4770 = vmatmul.mubr.f32.gmra.mrb[0].mxu0 %v4634
        %v4771 = vpop.f32.mrb[0].mxu0
        %v4772 = vadd.f32 %v4703, %v4771
        %v4773 = vpop.f32.mrb[0].mxu0
        %4774 = vmatprep.mubr.f32.mxu0 %v4637
        %4775 = vmatmul.mubr.f32.gmra.mrb[0].mxu0 %v4636
        %v4776 = vpop.f32.mrb[0].mxu0
        %v4777 = vadd.f32 %v4703, %v4776
        %v4778 = vpop.f32.mrb[0].mxu0
        %4779 = vmatprep.mubr.f32.mxu0 %v4639
        %4780 = vmatmul.mubr.f32.gmra.mrb[0].mxu0 %v4638
        %v4781 = vpop.f32.mrb[0].mxu0
        %v4782 = vadd.f32 %v4703, %v4781
        %v4783 = vpop.f32.mrb[0].mxu0
        %4784 = vmatprep.mubr.f32.mxu0 %v4641
        %4785 = vmatmul.mubr.f32.gmra.mrb[0].mxu0 %v4640
        %v4786 = vpop.f32.mrb[0].mxu0
        %v4787 = vadd.f32 %v4703, %v4786
        %v4788 = vpop.f32.mrb[0].mxu0
        %4789 = vmatprep.mubr.f32.mxu0 %v4643
        %4790 = vmatmul.mubr.f32.gmra.mrb[0].mxu0 %v4642
        %v4791 = vpop.f32.mrb[0].mxu0
        %v4792 = vadd.f32 %v4703, %v4791
        %v4793 = vpop.f32.mrb[0].mxu0
        %4794 = vmatprep.mubr.f32.mxu0 %v4645
        %4795 = vmatmul.mubr.f32.gmra.mrb[0].mxu0 %v4644
        %v4796 = vpop.f32.mrb[0].mxu0
        %v4797 = vadd.f32 %v4703, %v4796
        %v4798 = vpop.f32.mrb[0].mxu0
        %4799 = vmatprep.mubr.f32.mxu0 %v4647
        %4800 = vmatmul.mubr.f32.gmra.mrb[0].mxu0 %v4646
        %v4801 = vpop.f32.mrb[0].mxu0
        %v4802 = vadd.f32 %v4703, %v4801
        %v4803 = vpop.f32.mrb[0].mxu0
        %4804 = vmatprep.mubr.f32.mxu0 %v4649
        %4805 = vmatmul.mubr.f32.gmra.mrb[0].mxu0 %v4648
        %v4806 = vpop.f32.mrb[0].mxu0
        %v4807 = vadd.f32 %v4703, %v4806
        %v4808 = vpop.f32.mrb[0].mxu0
        %4809 = vmatprep.mubr.f32.mxu0 %v4651
        %4810 = vmatmul.mubr.f32.gmra.mrb[0].mxu0 %v4650
        %v4811 = vpop.f32.mrb[0].mxu0
        %v4812 = vadd.f32 %v4703, %v4811
        %v4813 = vpop.f32.mrb[0].mxu0
        %4814 = vmatprep.mubr.f32.mxu0 %v4653
        %4815 = vmatmul.mubr.f32.gmra.mrb[0].mxu0 %v4652
        %v4816 = vpop.f32.mrb[0].mxu0
        %v4817 = vadd.f32 %v4703, %v4816
        %v4818 = vpop.f32.mrb[0].mxu0
        %4819 = vmatprep.mubr.f32.mxu0 %v4655
        %4820 = vmatmul.mubr.f32.gmra.mrb[0].mxu0 %v4654
        %v4821 = vpop.f32.mrb[0].mxu0
        %v4822 = vadd.f32 %v4703, %v4821
        %v4823 = vpop.f32.mrb[0].mxu0
        %4824 = vmatprep.mubr.f32.mxu0 %v4657
        %4825 = vmatmul.mubr.f32.gmra.mrb[0].mxu0 %v4656
        %v4826 = vpop.f32.mrb[0].mxu0
        %v4827 = vadd.f32 %v4703, %v4826
        %v4828 = vpop.f32.mrb[0].mxu0
        %4829 = vmatprep.mubr.f32.mxu0 %v4659
        %4830 = vmatmul.mubr.f32.gmra.mrb[0].mxu0 %v4658
        %v4831 = vpop.f32.mrb[0].mxu0
        %v4832 = vadd.f32 %v4703, %v4831
        %v4833 = vpop.f32.mrb[0].mxu0
        %4834 = vmatprep.mubr.f32.mxu0 %v4661
        %4835 = vmatmul.mubr.f32.gmra.mrb[0].mxu0 %v4660
        %v4836 = vpop.f32.mrb[0].mxu0
        %v4837 = vadd.f32 %v4703, %v4836
        %v4838 = vpop.f32.mrb[0].mxu0
        %4839 = vmatprep.mubr.f32.mxu0 %v4663
        %4840 = vmatmul.mubr.f32.gmra.mrb[0].mxu0 %v4662
        %v4841 = vpop.f32.mrb[0].mxu0
        %v4842 = vadd.f32 %v4703, %v4841
        %v4843 = vpop.f32.mrb[0].mxu0
        %4844 = vmatprep.mubr.f32.mxu0 %v4665
        %4845 = vmatmul.mubr.f32.gmra.mrb[0].mxu0 %v4664
        %v4846 = vpop.f32.mrb[0].mxu0
        %v4847 = vadd.f32 %v4703, %v4846
        %v4848 = vpop.f32.mrb[0].mxu0
        %4849 = vdwg.mxu0
        %v4850 = vadd.f32 %v4772, %v4413
        %v4851 = vadd.f32 %v4777, %v4414
        %v4852 = vadd.f32 %v4782, %v4415
        %v4853 = vadd.f32 %v4787, %v4416
        %v4854 = vadd.f32 %v4792, %v4417
        %v4855 = vadd.f32 %v4797, %v4418
        %v4856 = vadd.f32 %v4802, %v4419
        %v4857 = vadd.f32 %v4807, %v4420
        %v4858 = vadd.f32 %v4812, %v4421
        %v4859 = vadd.f32 %v4817, %v4422
        %v4860 = vadd.f32 %v4822, %v4423
        %v4861 = vadd.f32 %v4827, %v4424
        %v4862 = vadd.f32 %v4832, %v4425
        %v4863 = vadd.f32 %v4837, %v4426
        %v4864 = vadd.f32 %v4842, %v4427
        %v4865 = vadd.f32 %v4847, %v4428
        %v4866 = vld [vmem:[%s13] sm:$0x1]
        %v4867 = vld [vmem:[%s14] sm:$0x1]
        %4868 = vadd.xlane.f32.xlu0 %v4850
        %v4869 = vpop.xlane.xlu0 %4868
        %4870 = vadd.xlane.f32.xlu0 %v4851
        %v4871 = vpop.xlane.xlu0 %4870
        %4872 = vadd.xlane.f32.xlu0 %v4852
        %v4873 = vpop.xlane.xlu0 %4872
        %4874 = vadd.xlane.f32.xlu0 %v4853
        %v4875 = vpop.xlane.xlu0 %4874
        %4876 = vadd.xlane.f32.xlu0 %v4854
        %v4877 = vpop.xlane.xlu0 %4876
        %4878 = vadd.xlane.f32.xlu0 %v4855
        %v4879 = vpop.xlane.xlu0 %4878
        %4880 = vadd.xlane.f32.xlu0 %v4856
        %v4881 = vpop.xlane.xlu0 %4880
        %4882 = vadd.xlane.f32.xlu0 %v4857
        %v4883 = vpop.xlane.xlu0 %4882
        %4884 = vadd.xlane.f32.xlu0 %v4858
        %v4885 = vpop.xlane.xlu0 %4884
        %4886 = vadd.xlane.f32.xlu0 %v4859
        %v4887 = vpop.xlane.xlu0 %4886
        %4888 = vadd.xlane.f32.xlu0 %v4860
        %v4889 = vpop.xlane.xlu0 %4888
        %4890 = vadd.xlane.f32.xlu0 %v4861
        %v4891 = vpop.xlane.xlu0 %4890
        %4892 = vadd.xlane.f32.xlu0 %v4862
        %v4893 = vpop.xlane.xlu0 %4892
        %4894 = vadd.xlane.f32.xlu0 %v4863
        %v4895 = vpop.xlane.xlu0 %4894
        %4896 = vadd.xlane.f32.xlu0 %v4864
        %v4897 = vpop.xlane.xlu0 %4896
        %4898 = vadd.xlane.f32.xlu0 %v4865
        %v4899 = vpop.xlane.xlu0 %4898
        %v4900 = vmul.f32 %v4869, %v4240
        %v4901 = vmul.f32 %v4871, %v4240
        %v4902 = vmul.f32 %v4873, %v4240
        %v4903 = vmul.f32 %v4875, %v4240
        %v4904 = vmul.f32 %v4877, %v4240
        %v4905 = vmul.f32 %v4879, %v4240
        %v4906 = vmul.f32 %v4881, %v4240
        %v4907 = vmul.f32 %v4883, %v4240
        %v4908 = vmul.f32 %v4885, %v4240
        %v4909 = vmul.f32 %v4887, %v4240
        %v4910 = vmul.f32 %v4889, %v4240
        %v4911 = vmul.f32 %v4891, %v4240
        %v4912 = vmul.f32 %v4893, %v4240
        %v4913 = vmul.f32 %v4895, %v4240
        %v4914 = vmul.f32 %v4897, %v4240
        %v4915 = vmul.f32 %v4899, %v4240
        %v4916 = vsub.f32 %v4850, %v4900
        %v4917 = vsub.f32 %v4851, %v4901
        %v4918 = vsub.f32 %v4852, %v4902
        %v4919 = vsub.f32 %v4853, %v4903
        %v4920 = vsub.f32 %v4854, %v4904
        %v4921 = vsub.f32 %v4855, %v4905
        %v4922 = vsub.f32 %v4856, %v4906
        %v4923 = vsub.f32 %v4857, %v4907
        %v4924 = vsub.f32 %v4858, %v4908
        %v4925 = vsub.f32 %v4859, %v4909
        %v4926 = vsub.f32 %v4860, %v4910
        %v4927 = vsub.f32 %v4861, %v4911
        %v4928 = vsub.f32 %v4862, %v4912
        %v4929 = vsub.f32 %v4863, %v4913
        %v4930 = vsub.f32 %v4864, %v4914
        %v4931 = vsub.f32 %v4865, %v4915
        %v4932 = vmul.f32 %v4916, %v4916
        %v4933 = vmul.f32 %v4917, %v4917
        %v4934 = vmul.f32 %v4918, %v4918
        %v4935 = vmul.f32 %v4919, %v4919
        %v4936 = vmul.f32 %v4920, %v4920
        %v4937 = vmul.f32 %v4921, %v4921
        %v4938 = vmul.f32 %v4922, %v4922
        %v4939 = vmul.f32 %v4923, %v4923
        %v4940 = vmul.f32 %v4924, %v4924
        %v4941 = vmul.f32 %v4925, %v4925
        %v4942 = vmul.f32 %v4926, %v4926
        %v4943 = vmul.f32 %v4927, %v4927
        %v4944 = vmul.f32 %v4928, %v4928
        %v4945 = vmul.f32 %v4929, %v4929
        %v4946 = vmul.f32 %v4930, %v4930
        %v4947 = vmul.f32 %v4931, %v4931
        %4948 = vadd.xlane.f32.xlu0 %v4932
        %v4949 = vpop.xlane.xlu0 %4948
        %4950 = vadd.xlane.f32.xlu0 %v4933
        %v4951 = vpop.xlane.xlu0 %4950
        %4952 = vadd.xlane.f32.xlu0 %v4934
        %v4953 = vpop.xlane.xlu0 %4952
        %4954 = vadd.xlane.f32.xlu0 %v4935
        %v4955 = vpop.xlane.xlu0 %4954
        %4956 = vadd.xlane.f32.xlu0 %v4936
        %v4957 = vpop.xlane.xlu0 %4956
        %4958 = vadd.xlane.f32.xlu0 %v4937
        %v4959 = vpop.xlane.xlu0 %4958
        %4960 = vadd.xlane.f32.xlu0 %v4938
        %v4961 = vpop.xlane.xlu0 %4960
        %4962 = vadd.xlane.f32.xlu0 %v4939
        %v4963 = vpop.xlane.xlu0 %4962
        %4964 = vadd.xlane.f32.xlu0 %v4940
        %v4965 = vpop.xlane.xlu0 %4964
        %4966 = vadd.xlane.f32.xlu0 %v4941
        %v4967 = vpop.xlane.xlu0 %4966
        %4968 = vadd.xlane.f32.xlu0 %v4942
        %v4969 = vpop.xlane.xlu0 %4968
        %4970 = vadd.xlane.f32.xlu0 %v4943
        %v4971 = vpop.xlane.xlu0 %4970
        %4972 = vadd.xlane.f32.xlu0 %v4944
        %v4973 = vpop.xlane.xlu0 %4972
        %4974 = vadd.xlane.f32.xlu0 %v4945
        %v4975 = vpop.xlane.xlu0 %4974
        %4976 = vadd.xlane.f32.xlu0 %v4946
        %v4977 = vpop.xlane.xlu0 %4976
        %4978 = vadd.xlane.f32.xlu0 %v4947
        %v4979 = vpop.xlane.xlu0 %4978
        %v4980 = vmul.f32 %v4949, %v4240
        %v4981 = vmul.f32 %v4951, %v4240
        %v4982 = vmul.f32 %v4953, %v4240
        %v4983 = vmul.f32 %v4955, %v4240
        %v4984 = vmul.f32 %v4957, %v4240
        %v4985 = vmul.f32 %v4959, %v4240
        %v4986 = vmul.f32 %v4961, %v4240
        %v4987 = vmul.f32 %v4963, %v4240
        %v4988 = vmul.f32 %v4965, %v4240
        %v4989 = vmul.f32 %v4967, %v4240
        %v4990 = vmul.f32 %v4969, %v4240
        %v4991 = vmul.f32 %v4971, %v4240
        %v4992 = vmul.f32 %v4973, %v4240
        %v4993 = vmul.f32 %v4975, %v4240
        %v4994 = vmul.f32 %v4977, %v4240
        %v4995 = vmul.f32 %v4979, %v4240
        %v4996 = vadd.f32 %v4980, 1e-12
        %v4997 = vadd.f32 %v4981, 1e-12
        %v4998 = vadd.f32 %v4982, 1e-12
        %v4999 = vadd.f32 %v4983, 1e-12
        %v5000 = vadd.f32 %v4984, 1e-12
        %v5001 = vadd.f32 %v4985, 1e-12
        %v5002 = vadd.f32 %v4986, 1e-12
        %v5003 = vadd.f32 %v4987, 1e-12
        %v5004 = vadd.f32 %v4988, 1e-12
        %v5005 = vadd.f32 %v4989, 1e-12
        %v5006 = vadd.f32 %v4990, 1e-12
        %v5007 = vadd.f32 %v4991, 1e-12
        %v5008 = vadd.f32 %v4992, 1e-12
        %v5009 = vadd.f32 %v4993, 1e-12
        %v5010 = vadd.f32 %v4994, 1e-12
        %v5011 = vadd.f32 %v4995, 1e-12
        %v5012 = vrsqrt.pop %v4996
        %v5013 = vrsqrt.pop %v4997
        %v5014 = vrsqrt.pop %v4998
        %v5015 = vrsqrt.pop %v4999
        %v5016 = vrsqrt.pop %v5000
        %v5017 = vrsqrt.pop %v5001
        %v5018 = vrsqrt.pop %v5002
        %v5019 = vrsqrt.pop %v5003
        %v5020 = vrsqrt.pop %v5004
        %v5021 = vrsqrt.pop %v5005
        %v5022 = vrsqrt.pop %v5006
        %v5023 = vrsqrt.pop %v5007
        %v5024 = vrsqrt.pop %v5008
        %v5025 = vrsqrt.pop %v5009
        %v5026 = vrsqrt.pop %v5010
        %v5027 = vrsqrt.pop %v5011
        %v5028 = vmul.f32 %v4916, %v5012
        %v5029 = vmul.f32 %v4917, %v5013
        %v5030 = vmul.f32 %v4918, %v5014
        %v5031 = vmul.f32 %v4919, %v5015
        %v5032 = vmul.f32 %v4920, %v5016
        %v5033 = vmul.f32 %v4921, %v5017
        %v5034 = vmul.f32 %v4922, %v5018
        %v5035 = vmul.f32 %v4923, %v5019
        %v5036 = vmul.f32 %v4924, %v5020
        %v5037 = vmul.f32 %v4925, %v5021
        %v5038 = vmul.f32 %v4926, %v5022
        %v5039 = vmul.f32 %v4927, %v5023
        %v5040 = vmul.f32 %v4928, %v5024
        %v5041 = vmul.f32 %v4929, %v5025
        %v5042 = vmul.f32 %v4930, %v5026
        %v5043 = vmul.f32 %v4931, %v5027
        %v5045 = vlaneseq
        %v5046 = vshrl.u32 %v5045, 7
        %v5047 = vsub.s32 0, %v5046
        %v5048 = vrot.slane %v4866, %v5047
        %v5050 = vmul.f32 %v5048, %v5028
        %v5051 = vmul.f32 %v5048, %v5029
        %v5052 = vmul.f32 %v5048, %v5030
        %v5053 = vmul.f32 %v5048, %v5031
        %v5054 = vmul.f32 %v5048, %v5032
        %v5055 = vmul.f32 %v5048, %v5033
        %v5056 = vmul.f32 %v5048, %v5034
        %v5057 = vmul.f32 %v5048, %v5035
        %v5058 = vmul.f32 %v5048, %v5036
        %v5059 = vmul.f32 %v5048, %v5037
        %v5060 = vmul.f32 %v5048, %v5038
        %v5061 = vmul.f32 %v5048, %v5039
        %v5062 = vmul.f32 %v5048, %v5040
        %v5063 = vmul.f32 %v5048, %v5041
        %v5064 = vmul.f32 %v5048, %v5042
        %v5065 = vmul.f32 %v5048, %v5043
        %v5067 = vlaneseq
        %v5068 = vshrl.u32 %v5067, 7
        %v5069 = vsub.s32 0, %v5068
        %v5070 = vrot.slane %v4867, %v5069
        %v5072 = vadd.f32 %v5050, %v5070
        %v5073 = vadd.f32 %v5051, %v5070
        %v5074 = vadd.f32 %v5052, %v5070
        %v5075 = vadd.f32 %v5053, %v5070
        %v5076 = vadd.f32 %v5054, %v5070
        %v5077 = vadd.f32 %v5055, %v5070
        %v5078 = vadd.f32 %v5056, %v5070
        %v5079 = vadd.f32 %v5057, %v5070
        %v5080 = vadd.f32 %v5058, %v5070
        %v5081 = vadd.f32 %v5059, %v5070
        %v5082 = vadd.f32 %v5060, %v5070
        %v5083 = vadd.f32 %v5061, %v5070
        %v5084 = vadd.f32 %v5062, %v5070
        %v5085 = vadd.f32 %v5063, %v5070
        %v5086 = vadd.f32 %v5064, %v5070
        %v5087 = vadd.f32 %v5065, %v5070
        %5088 = vst [vmem:[%s599] sm:$0xff] %v5072
        %5089 = vst [vmem:[%s599 + $0x8] sm:$0xff] %v5073
        %5090 = vst [vmem:[%s599 + $0x10] sm:$0xff] %v5074
        %5091 = vst [vmem:[%s599 + $0x18] sm:$0xff] %v5075
        %5092 = vst [vmem:[%s599 + $0x20] sm:$0xff] %v5076
        %5093 = vst [vmem:[%s599 + $0x28] sm:$0xff] %v5077
        %5094 = vst [vmem:[%s599 + $0x30] sm:$0xff] %v5078
        %5095 = vst [vmem:[%s599 + $0x38] sm:$0xff] %v5079
        %5096 = vst [vmem:[%s599 + $0x40] sm:$0xff] %v5080
        %5097 = vst [vmem:[%s599 + $0x48] sm:$0xff] %v5081
        %5098 = vst [vmem:[%s599 + $0x50] sm:$0xff] %v5082
        %5099 = vst [vmem:[%s599 + $0x58] sm:$0xff] %v5083
        %5100 = vst [vmem:[%s599 + $0x60] sm:$0xff] %v5084
        %5101 = vst [vmem:[%s599 + $0x68] sm:$0xff] %v5085
        %5102 = vst [vmem:[%s599 + $0x70] sm:$0xff] %v5086
        %5103 = vst [vmem:[%s599 + $0x78] sm:$0xff] %v5087
        %s5104 = sand.u32 %s377, 1
        %s5105 = scalar_lea.sflag [#allocation6], %s5104
        %s5106 = sand.u32 %s377, 1
        %s5107 = smul.addr %s5106, 128
        %s5108 = scalar_lea.vmem [#allocation15], %s5107
        // Predicated region
        $region109: #{tpu_custom_call.1} parent=79 // pred_check
          %p5109 = pneg %p387
        $region110: #{tpu_custom_call.1} parent=79 // pred_check_branch
          %5111 = sbr.rel (%p5109) target = $region112
        $region111: #{tpu_custom_call.1} parent=79 // pred_region
          %s5112 = smul.u32 16, %s40
          %s5114 = ssub.s32 2048, 2048
          %5115 = vsyncadd %s5105, %s5114
          %s5116 = smul.addr %s39, 16
          %s5117 = sadd.s32 %s5112, %s5116
          %s5118 = smul.addr %s5117, 128
          %s5119 = scalar_lea.hbm %s15, %s5118
          %s5120 = sshll.u32 %s5108, 4
          %s5121 = int_to_ptr.vmem [resolvable:$true] %s5120
          %5126 = dma.vmem_to_hbm [thread:$0]  %s5121, 2048, %s5119, %s5105, 128, 128, 8
        $region112: #{tpu_custom_call.1} parent=79 // pred_fallthru
          _
      $region80: #{tpu_custom_call.1} parent=5 // pred_fallthru
        _
      %p5127 = scmp.le.s32.totalorder 2, %s30
      // Predicated region
      $region113: #{tpu_custom_call.1} parent=5 // pred_check
        %p5128 = pneg %p5127
      $region114: #{tpu_custom_call.1} parent=5 // pred_check_branch
        %5130 = sbr.rel (%p5128) target = $region116
      $region115: #{tpu_custom_call.1} parent=5 // pred_region
        %s5131 = ssub.s32 %s30, 2
        // Predicated region
        $region117: #{tpu_custom_call.1} parent=115 // pred_check
          %p5132 = pneg %p393
        $region118: #{tpu_custom_call.1} parent=115 // pred_check_branch
          %5134 = sbr.rel (%p5132) target = $region120
        $region119: #{tpu_custom_call.1} parent=115 // pred_region
          %s5135 = sand.u32 %s378, 1
          %s5136 = scalar_lea.sflag [#allocation6], %s5135
          %s5137 = sand.u32 %s378, 1
          %s5138 = smul.addr %s5137, 128
          %s5139 = scalar_lea.vmem [#allocation15], %s5138
          %5140 = dma.done %s5136, 2048
        $region120: #{tpu_custom_call.1} parent=115 // pred_fallthru
          _
      $region116: #{tpu_custom_call.1} parent=5 // pred_fallthru
        _
    $region6: #{tpu_custom_call.1} parent=1 // loop_footer
      %s34 = sadd.s32 1, %s30
    $region7: #{tpu_custom_call.1} parent=1 // loop_footer_branch
      %29 = sbr.rel target = $region3
    $region8: #{tpu_custom_call.1} parent=1 // loop_exit
      _
    %5141 = vsyncpa [#allocation5], 1
    %s5142 = scalar_lea.sflag [#allocation5], 1
    %5143 = vsyncpa %s5142, 1
    %5144 = vsyncpa [#allocation8], 1
    %5145 = vsyncpa [#allocation11], 1
    %5146 = vsyncpa [#allocation14], 1
    %5147 = vsyncpa [#allocation6], 1
    %s5148 = scalar_lea.sflag [#allocation6], 1
    %5149 = vsyncpa %s5148, 1

</llo_original>
